<compile_context>
chip_gen: v7x
topology: tpu7x:2x2x1
jax: 0.10.0
libtpu: 0.0.40
codegen_flags: <defaults>
</compile_context>

<pallas_src>
import jax
import jax.numpy as jnp
from jax.experimental import pallas as pl
from jax.experimental.pallas import tpu as pltpu

Z_DIM = 100
NUM_CLASSES = 10
K_RAW = Z_DIM + NUM_CLASSES          # 110
K_PAD = 128                          # padded contraction dim (full MXU K)
H1, H2, H3 = 256, 512, 1024
OUT_DIM = 28 * 28                    # 784 (ragged)
OUT_PAD = 896                        # 7*128, lane-dense output slab
MAX_TB = 512                         # max batch tile
W4_PREFETCH_MAX_ROWS = 256           # small-batch regime -> manual W4 prefetch


def _round_up(x, m):
    return ((x + m - 1) // m) * m


def _cdiv(a, b):
    return (a + b - 1) // b


def _select_batch_tile(b, max_tb=MAX_TB):
    """Pick a batch tile that minimizes padding and (for b >= 32) yields an
    even number of grid steps so v7x megacore can shard the batch axis."""
    n_steps = _cdiv(b, max_tb)
    if b >= 32 and n_steps % 2 == 1:
        n_steps += 1                      # guarantee >= 2 (even) grid steps
    tb = _round_up(_cdiv(b, n_steps), 16)  # multiple of 16: bf16 sublane tile
    return max(tb, 16)


# ---------------------------------------------------------------------------
# Kernels
# ---------------------------------------------------------------------------

def _mlp_body(x_ref, w1_ref, b1_ref, w2_ref, b2_ref, w3_ref, b3_ref,
              get_w4, b4_ref, out_ref):
    """Fused 4-layer MLP on one batch tile. Matmul operands bf16, f32 MXU
    accumulation; bias add / ReLU / tanh stay f32 (correct & fastest on v5e).
    `get_w4()` returns the layer-4 weight tile (lazily, so a manual DMA can be
    waited on only right before the final dot)."""
    x = x_ref[...]                                                     # bf16 (TB, 128)

    h = jnp.dot(x, w1_ref[...], preferred_element_type=jnp.float32)
    h = jnp.maximum(h + b1_ref[...], 0.0)

    h = jnp.dot(h.astype(jnp.bfloat16), w2_ref[...],
                preferred_element_type=jnp.float32)
    h = jnp.maximum(h + b2_ref[...], 0.0)

    h = jnp.dot(h.astype(jnp.bfloat16), w3_ref[...],
                preferred_element_type=jnp.float32)
    h = jnp.maximum(h + b3_ref[...], 0.0)

    h = jnp.dot(h.astype(jnp.bfloat16), get_w4(),
                preferred_element_type=jnp.float32)
    out_ref[...] = jnp.tanh(h + b4_ref[...]).astype(out_ref.dtype)     # bf16 store


def generator_kernel_resident(x_ref, w1_ref, b1_ref, w2_ref, b2_ref,
                              w3_ref, b3_ref, w4_ref, b4_ref, out_ref):
    """W4 VMEM-resident (constant index_map) — large-batch path."""
    _mlp_body(x_ref, w1_ref, b1_ref, w2_ref, b2_ref, w3_ref, b3_ref,
              lambda: w4_ref[...], b4_ref, out_ref)


def generator_kernel_prefetch_w4(x_ref, w1_ref, b1_ref, w2_ref, b2_ref,
                                 w3_ref, b3_ref, w4_hbm_ref, b4_ref, out_ref,
                                 w4_buf, w4_sem):
    """Small-batch path: start the W4 HBM->VMEM DMA at kernel entry, overlap it
    with layers 1-3, and wait only right before the layer-4 matmul."""
    w4_copy = pltpu.make_async_copy(w4_hbm_ref, w4_buf, w4_sem)
    w4_copy.start()

    def get_w4():
        w4_copy.wait()
        return w4_buf[...]

    _mlp_body(x_ref, w1_ref, b1_ref, w2_ref, b2_ref, w3_ref, b3_ref,
              get_w4, b4_ref, out_ref)


# ---------------------------------------------------------------------------
# Params & wrapper
# ---------------------------------------------------------------------------

def init_params(key):
    """Deterministic init (PyTorch Linear default-ish uniform).

    Weights are bf16 (halves HBM traffic / VMEM residency; f32 MXU accumulation
    keeps accuracy well within the generator's needs), stored
    (in_features, out_features) so the kernel computes x @ W (== torch x @ W.T).
    W1 is zero-padded 110->128 rows; W4/b4 are zero-padded 784->896 cols.
    Biases stay f32 with shape (1, out_features).
    """
    dims = [(K_RAW, H1), (H1, H2), (H2, H3), (H3, OUT_DIM)]
    pads = [(K_PAD - K_RAW, 0), (0, 0), (0, 0), (0, OUT_PAD - OUT_DIM)]
    params = []
    for i, ((fan_in, fan_out), (pad_in, pad_out)) in enumerate(zip(dims, pads)):
        kw, kb = jax.random.split(jax.random.fold_in(key, i))
        bound = 1.0 / jnp.sqrt(fan_in)
        w = jax.random.uniform(kw, (fan_in, fan_out), jnp.float32, -bound, bound)
        b = jax.random.uniform(kb, (1, fan_out), jnp.float32, -bound, bound)
        if pad_in or pad_out:
            w = jnp.pad(w, ((0, pad_in), (0, pad_out)))
            b = jnp.pad(b, ((0, 0), (0, pad_out)))
        params.extend([w.astype(jnp.bfloat16), b])
    return params


def generator_forward(z, labels, params, *, out_dtype=jnp.float32,
                      w4_prefetch_max_rows=W4_PREFETCH_MAX_ROWS):
    """z: (B, z_dim) f32, labels: (B, num_classes) f32 (one-hot or embedding)."""
    b = z.shape[0]

    # Glue: concat, pad contraction dim 110 -> 128, pad batch to a tile multiple.
    x = jnp.concatenate([z, labels], axis=1)                  # (B, 110)
    x = jnp.pad(x, ((0, 0), (0, K_PAD - K_RAW)))              # (B, 128)
    tb = _select_batch_tile(b)
    b_pad = _round_up(b, tb)
    if b_pad != b:
        x = jnp.pad(x, ((0, b_pad - b), (0, 0)))
    x = x.astype(jnp.bfloat16)

    grid = (b_pad // tb,)
    prefetch_w4 = b_pad <= w4_prefetch_max_rows

    w1, b1, w2, b2, w3, b3, w4, b4 = params

    def tile_map(i):
        return (i, 0)

    def const_map(i):
        return (0, 0)

    weight_bytes = sum(p.size * p.dtype.itemsize for p in params)
    cost = pl.CostEstimate(
        flops=2 * b_pad * (K_PAD * H1 + H1 * H2 + H2 * H3 + H3 * OUT_PAD),
        transcendentals=b_pad * OUT_PAD,
        bytes_accessed=weight_bytes + b_pad * K_PAD * 2 + b_pad * OUT_PAD * 2,
    )

    def make_call(weight_buffering):
        # Grid-invariant weights/biases: constant index_map (DMA'd once, VMEM
        # resident). Single-buffer them (Buffered(1)) when supported -> ~3 MiB
        # instead of ~6 MiB of VMEM per core.
        wkw = ({} if weight_buffering is None
               else dict(pipeline_mode=pl.Buffered(weight_buffering)))
        resident_specs = [
            pl.BlockSpec((K_PAD, H1), const_map, **wkw),
            pl.BlockSpec((1, H1), const_map, **wkw),
            pl.BlockSpec((H1, H2), const_map, **wkw),
            pl.BlockSpec((1, H2), const_map, **wkw),
            pl.BlockSpec((H2, H3), const_map, **wkw),
            pl.BlockSpec((1, H3), const_map, **wkw),
        ]
        if prefetch_w4:
            kernel = generator_kernel_prefetch_w4
            w4_spec = pl.BlockSpec(memory_space=pl.ANY)       # raw HBM ref
            scratch = [pltpu.VMEM((H3, OUT_PAD), jnp.bfloat16),
                       pltpu.SemaphoreType.DMA(())]
        else:
            kernel = generator_kernel_resident
            w4_spec = pl.BlockSpec((H3, OUT_PAD), const_map, **wkw)
            scratch = []

        in_specs = ([pl.BlockSpec((tb, K_PAD), tile_map)]
                    + resident_specs
                    + [w4_spec, pl.BlockSpec((1, OUT_PAD), const_map, **wkw)])
        out_spec = pl.BlockSpec((tb, OUT_PAD), tile_map)

        return pl.pallas_call(
            kernel,
            out_shape=jax.ShapeDtypeStruct((b_pad, OUT_PAD), jnp.bfloat16),
            grid=grid,
            in_specs=in_specs,
            out_specs=out_spec,
            scratch_shapes=scratch,
            compiler_params=pltpu.CompilerParams(
                dimension_semantics=("parallel",),
                vmem_limit_bytes=32 << 20,
            ),
            cost_estimate=cost,
        )

    args = (x, w1, b1, w2, b2, w3, b3, w4, b4)
    try:
        out_flat = make_call(weight_buffering=1)(*args)
    except Exception:
        # Defensive fallback for JAX builds where BlockSpec(pipeline_mode=
        # pl.Buffered(1)) is not supported by the TPU pipeliner; identical
        # semantics, just default double-buffered weights.
        out_flat = make_call(weight_buffering=None)(*args)

    # Strip batch/output padding, upcast (bf16 -> requested dtype), then
    # PyTorch's .view(-1, 1, 28, 28) (NCHW).
    out = out_flat[:b, :OUT_DIM].astype(out_dtype)
    return out.reshape(b, 1, 28, 28)


def _reference_forward(z, labels, params):
    """Pure-JAX reference (same bf16 weights, f32 math) for validation."""
    x = jnp.concatenate([z, labels], axis=1)
    x = jnp.pad(x, ((0, 0), (0, K_PAD - K_RAW)))
    w1, b1, w2, b2, w3, b3, w4, b4 = params
    h = jnp.maximum(x @ w1.astype(jnp.float32) + b1, 0.0)
    h = jnp.maximum(h @ w2.astype(jnp.float32) + b2, 0.0)
    h = jnp.maximum(h @ w3.astype(jnp.float32) + b3, 0.0)
    h = jnp.tanh(h @ w4.astype(jnp.float32) + b4)
    return h[:, :OUT_DIM].reshape(z.shape[0], 1, 28, 28)


if __name__ == "__main__":
    key = jax.random.PRNGKey(0)
    k_params, k_z, k_lbl = jax.random.split(key, 3)

    params = init_params(k_params)

    B = 8
    z = jax.random.normal(k_z, (B, Z_DIM), dtype=jnp.float32)
    labels_idx = jax.random.randint(k_lbl, (B,), 0, NUM_CLASSES)
    labels = jax.nn.one_hot(labels_idx, NUM_CLASSES, dtype=jnp.float32)

    ref = _reference_forward(z, labels, params)

    # Small-batch path (manual W4 prefetch DMA).
    out = generator_forward(z, labels, params)
    out = jax.block_until_ready(out)
    assert out.shape == (B, 1, 28, 28), out.shape
    assert bool(jnp.all(jnp.isfinite(out)))
    assert bool(jnp.all(jnp.abs(out) <= 1.0))  # tanh range
    max_err = float(jnp.max(jnp.abs(out - ref)))
    assert max_err < 5e-2, f"prefetch path: max abs err vs reference: {max_err}"

    # Large-batch (VMEM-resident W4) path, forced at small shape for coverage.
    out_res = generator_forward(z, labels, params, w4_prefetch_max_rows=0)
    out_res = jax.block_until_ready(out_res)
    max_err_res = float(jnp.max(jnp.abs(out_res - ref)))
    assert max_err_res < 5e-2, f"resident path: max abs err vs reference: {max_err_res}"

    print("KERNEL_OK")
</pallas_src>

<mosaic_0001>
module attributes {stable_mosaic.version = 11 : i64} {
  func.func @generator_kernel_prefetch_w4(%arg0: i32, %arg1: memref<16x128xbf16, #tpu.memory_space<vmem>>, %arg2: memref<128x256xbf16, #tpu.memory_space<vmem>>, %arg3: memref<1x256xf32, #tpu.memory_space<vmem>>, %arg4: memref<256x512xbf16, #tpu.memory_space<vmem>>, %arg5: memref<1x512xf32, #tpu.memory_space<vmem>>, %arg6: memref<512x1024xbf16, #tpu.memory_space<vmem>>, %arg7: memref<1x1024xf32, #tpu.memory_space<vmem>>, %arg8: memref<1024x896xbf16, #tpu.memory_space<any>>, %arg9: memref<1x896xf32, #tpu.memory_space<vmem>>, %arg10: memref<16x896xbf16, #tpu.memory_space<vmem>>, %arg11: memref<1024x896xbf16, #tpu.memory_space<vmem>>, %arg12: memref<!tpu.dma_semaphore, #tpu.memory_space<semaphore_mem>>) attributes {dimension_semantics = [#tpu.dimension_semantics<parallel>], iteration_bounds = array<i64: 1>, scalar_prefetch = 0 : i64, scratch_operands = 2 : i64, tpu.core_type = #tpu.core_type<tc>, window_params = [{transform_indices = @transform_0, window_bounds = array<i64: 16, 128>}, {pipeline_mode = #tpu.pipeline_mode<synchronous>, transform_indices = @transform_1, window_bounds = array<i64: 128, 256>}, {pipeline_mode = #tpu.pipeline_mode<synchronous>, transform_indices = @transform_2, window_bounds = array<i64: 1, 256>}, {pipeline_mode = #tpu.pipeline_mode<synchronous>, transform_indices = @transform_3, window_bounds = array<i64: 256, 512>}, {pipeline_mode = #tpu.pipeline_mode<synchronous>, transform_indices = @transform_4, window_bounds = array<i64: 1, 512>}, {pipeline_mode = #tpu.pipeline_mode<synchronous>, transform_indices = @transform_5, window_bounds = array<i64: 512, 1024>}, {pipeline_mode = #tpu.pipeline_mode<synchronous>, transform_indices = @transform_6, window_bounds = array<i64: 1, 1024>}, {}, {pipeline_mode = #tpu.pipeline_mode<synchronous>, transform_indices = @transform_8, window_bounds = array<i64: 1, 896>}, {transform_indices = @transform_9, window_bounds = array<i64: 16, 896>}]} {
    tpu.enqueue_dma source(%arg8 : memref<1024x896xbf16, #tpu.memory_space<any>>) target(%arg11 : memref<1024x896xbf16, #tpu.memory_space<vmem>>) target_semaphore(%arg12 : memref<!tpu.dma_semaphore, #tpu.memory_space<semaphore_mem>>)
    %c0 = arith.constant 0 : index
    %c0_0 = arith.constant 0 : index
    %0 = vector.load %arg1[%c0, %c0_0] : memref<16x128xbf16, #tpu.memory_space<vmem>>, vector<16x128xbf16>
    %c0_1 = arith.constant 0 : index
    %c0_2 = arith.constant 0 : index
    %1 = vector.load %arg2[%c0_1, %c0_2] : memref<128x256xbf16, #tpu.memory_space<vmem>>, vector<128x256xbf16>
    %cst = arith.constant dense<0.000000e+00> : vector<16x256xf32>
    %2 = tpu.matmul %0, %1, %cst {dimension_numbers = #tpu.dot_dimension_numbers<[1], [0], [0], [1], [0, 0, 1, 1], [], []>} : vector<16x128xbf16>, vector<128x256xbf16>, vector<16x256xf32> -> vector<16x256xf32>
    %c0_3 = arith.constant 0 : index
    %c0_4 = arith.constant 0 : index
    %3 = vector.load %arg3[%c0_3, %c0_4] : memref<1x256xf32, #tpu.memory_space<vmem>>, vector<1x256xf32>
    %4 = vector.broadcast %3 : vector<1x256xf32> to vector<16x256xf32>
    %5 = arith.addf %2, %4 : vector<16x256xf32>
    %cst_5 = arith.constant 0.000000e+00 : f32
    %6 = vector.broadcast %cst_5 : f32 to vector<16x256xf32>
    %7 = arith.maximumf %5, %6 : vector<16x256xf32>
    %8 = arith.truncf %7 : vector<16x256xf32> to vector<16x256xbf16>
    %c0_6 = arith.constant 0 : index
    %c0_7 = arith.constant 0 : index
    %9 = vector.load %arg4[%c0_6, %c0_7] : memref<256x512xbf16, #tpu.memory_space<vmem>>, vector<256x512xbf16>
    %cst_8 = arith.constant dense<0.000000e+00> : vector<16x512xf32>
    %10 = tpu.matmul %8, %9, %cst_8 {dimension_numbers = #tpu.dot_dimension_numbers<[1], [0], [0], [1], [0, 0, 1, 1], [], []>} : vector<16x256xbf16>, vector<256x512xbf16>, vector<16x512xf32> -> vector<16x512xf32>
    %c0_9 = arith.constant 0 : index
    %c0_10 = arith.constant 0 : index
    %11 = vector.load %arg5[%c0_9, %c0_10] : memref<1x512xf32, #tpu.memory_space<vmem>>, vector<1x512xf32>
    %12 = vector.broadcast %11 : vector<1x512xf32> to vector<16x512xf32>
    %13 = arith.addf %10, %12 : vector<16x512xf32>
    %cst_11 = arith.constant 0.000000e+00 : f32
    %14 = vector.broadcast %cst_11 : f32 to vector<16x512xf32>
    %15 = arith.maximumf %13, %14 : vector<16x512xf32>
    %16 = arith.truncf %15 : vector<16x512xf32> to vector<16x512xbf16>
    %c0_12 = arith.constant 0 : index
    %c0_13 = arith.constant 0 : index
    %17 = vector.load %arg6[%c0_12, %c0_13] : memref<512x1024xbf16, #tpu.memory_space<vmem>>, vector<512x1024xbf16>
    %cst_14 = arith.constant dense<0.000000e+00> : vector<16x1024xf32>
    %18 = tpu.matmul %16, %17, %cst_14 {dimension_numbers = #tpu.dot_dimension_numbers<[1], [0], [0], [1], [0, 0, 1, 1], [], []>} : vector<16x512xbf16>, vector<512x1024xbf16>, vector<16x1024xf32> -> vector<16x1024xf32>
    %c0_15 = arith.constant 0 : index
    %c0_16 = arith.constant 0 : index
    %19 = vector.load %arg7[%c0_15, %c0_16] : memref<1x1024xf32, #tpu.memory_space<vmem>>, vector<1x1024xf32>
    %20 = vector.broadcast %19 : vector<1x1024xf32> to vector<16x1024xf32>
    %21 = arith.addf %18, %20 : vector<16x1024xf32>
    %cst_17 = arith.constant 0.000000e+00 : f32
    %22 = vector.broadcast %cst_17 : f32 to vector<16x1024xf32>
    %23 = arith.maximumf %21, %22 : vector<16x1024xf32>
    %24 = arith.truncf %23 : vector<16x1024xf32> to vector<16x1024xbf16>
    tpu.wait_dma2 semaphore(%arg12 : memref<!tpu.dma_semaphore, #tpu.memory_space<semaphore_mem>>) src(%arg8 : memref<1024x896xbf16, #tpu.memory_space<any>>) dst(%arg11 : memref<1024x896xbf16, #tpu.memory_space<vmem>>)
    %c0_18 = arith.constant 0 : index
    %c0_19 = arith.constant 0 : index
    %25 = vector.load %arg11[%c0_18, %c0_19] : memref<1024x896xbf16, #tpu.memory_space<vmem>>, vector<1024x896xbf16>
    %cst_20 = arith.constant dense<0.000000e+00> : vector<16x896xf32>
    %26 = tpu.matmul %24, %25, %cst_20 {dimension_numbers = #tpu.dot_dimension_numbers<[1], [0], [0], [1], [0, 0, 1, 1], [], []>} : vector<16x1024xbf16>, vector<1024x896xbf16>, vector<16x896xf32> -> vector<16x896xf32>
    %c0_21 = arith.constant 0 : index
    %c0_22 = arith.constant 0 : index
    %27 = vector.load %arg9[%c0_21, %c0_22] : memref<1x896xf32, #tpu.memory_space<vmem>>, vector<1x896xf32>
    %28 = vector.broadcast %27 : vector<1x896xf32> to vector<16x896xf32>
    %29 = arith.addf %26, %28 : vector<16x896xf32>
    %30 = math.tanh %29 : vector<16x896xf32>
    %31 = arith.truncf %30 : vector<16x896xf32> to vector<16x896xbf16>
    %c0_23 = arith.constant 0 : index
    %c0_24 = arith.constant 0 : index
    %32 = vector.load %arg10[%c0_23, %c0_24] : memref<16x896xbf16, #tpu.memory_space<vmem>>, vector<16x896xbf16>
    tpu.vector_store %arg10[%c0_23, %c0_24], %31 {strides = array<i32>} : memref<16x896xbf16, #tpu.memory_space<vmem>>, vector<16x896xbf16>,
    return
  }
  func.func @transform_0(%arg0: i32) -> (i32, i32) {
    %c0_i32 = arith.constant 0 : i32
    %c0_i32_0 = arith.constant 0 : i32
    return %arg0, %c0_i32 : i32, i32
  }
  func.func @transform_1(%arg0: i32) -> (i32, i32) {
    %c0_i32 = arith.constant 0 : i32
    %c0_i32_0 = arith.constant 0 : i32
    %c0_i32_1 = arith.constant 0 : i32
    return %c0_i32, %c0_i32_0 : i32, i32
  }
  func.func @transform_2(%arg0: i32) -> (i32, i32) {
    %c0_i32 = arith.constant 0 : i32
    %c0_i32_0 = arith.constant 0 : i32
    %c0_i32_1 = arith.constant 0 : i32
    return %c0_i32, %c0_i32_0 : i32, i32
  }
  func.func @transform_3(%arg0: i32) -> (i32, i32) {
    %c0_i32 = arith.constant 0 : i32
    %c0_i32_0 = arith.constant 0 : i32
    %c0_i32_1 = arith.constant 0 : i32
    return %c0_i32, %c0_i32_0 : i32, i32
  }
  func.func @transform_4(%arg0: i32) -> (i32, i32) {
    %c0_i32 = arith.constant 0 : i32
    %c0_i32_0 = arith.constant 0 : i32
    %c0_i32_1 = arith.constant 0 : i32
    return %c0_i32, %c0_i32_0 : i32, i32
  }
  func.func @transform_5(%arg0: i32) -> (i32, i32) {
    %c0_i32 = arith.constant 0 : i32
    %c0_i32_0 = arith.constant 0 : i32
    %c0_i32_1 = arith.constant 0 : i32
    return %c0_i32, %c0_i32_0 : i32, i32
  }
  func.func @transform_6(%arg0: i32) -> (i32, i32) {
    %c0_i32 = arith.constant 0 : i32
    %c0_i32_0 = arith.constant 0 : i32
    %c0_i32_1 = arith.constant 0 : i32
    return %c0_i32, %c0_i32_0 : i32, i32
  }
  func.func @transform_8(%arg0: i32) -> (i32, i32) {
    %c0_i32 = arith.constant 0 : i32
    %c0_i32_0 = arith.constant 0 : i32
    %c0_i32_1 = arith.constant 0 : i32
    return %c0_i32, %c0_i32_0 : i32, i32
  }
  func.func @transform_9(%arg0: i32) -> (i32, i32) {
    %c0_i32 = arith.constant 0 : i32
    %c0_i32_0 = arith.constant 0 : i32
    return %arg0, %c0_i32 : i32, i32
  }
}

module attributes {stable_mosaic.version = 11 : i64} {
  func.func @generator_kernel_prefetch_w4(%arg0: i32, %arg1: memref<16x128xbf16, #tpu.memory_space<vmem>>, %arg2: memref<128x256xbf16, #tpu.memory_space<vmem>>, %arg3: memref<1x256xf32, #tpu.memory_space<vmem>>, %arg4: memref<256x512xbf16, #tpu.memory_space<vmem>>, %arg5: memref<1x512xf32, #tpu.memory_space<vmem>>, %arg6: memref<512x1024xbf16, #tpu.memory_space<vmem>>, %arg7: memref<1x1024xf32, #tpu.memory_space<vmem>>, %arg8: memref<1024x896xbf16, #tpu.memory_space<any>>, %arg9: memref<1x896xf32, #tpu.memory_space<vmem>>, %arg10: memref<16x896xbf16, #tpu.memory_space<vmem>>, %arg11: memref<1024x896xbf16, #tpu.memory_space<vmem>>, %arg12: memref<!tpu.dma_semaphore, #tpu.memory_space<semaphore_mem>>) attributes {dimension_semantics = [#tpu.dimension_semantics<parallel>], iteration_bounds = array<i64: 1>, scalar_prefetch = 0 : i64, scratch_operands = 2 : i64, tpu.core_type = #tpu.core_type<tc>, window_params = [{transform_indices = @transform_0, window_bounds = array<i64: 16, 128>}, {pipeline_mode = #tpu.pipeline_mode<synchronous>, transform_indices = @transform_1, window_bounds = array<i64: 128, 256>}, {pipeline_mode = #tpu.pipeline_mode<synchronous>, transform_indices = @transform_2, window_bounds = array<i64: 1, 256>}, {pipeline_mode = #tpu.pipeline_mode<synchronous>, transform_indices = @transform_3, window_bounds = array<i64: 256, 512>}, {pipeline_mode = #tpu.pipeline_mode<synchronous>, transform_indices = @transform_4, window_bounds = array<i64: 1, 512>}, {pipeline_mode = #tpu.pipeline_mode<synchronous>, transform_indices = @transform_5, window_bounds = array<i64: 512, 1024>}, {pipeline_mode = #tpu.pipeline_mode<synchronous>, transform_indices = @transform_6, window_bounds = array<i64: 1, 1024>}, {}, {pipeline_mode = #tpu.pipeline_mode<synchronous>, transform_indices = @transform_8, window_bounds = array<i64: 1, 896>}, {transform_indices = @transform_9, window_bounds = array<i64: 16, 896>}]} {
    tpu.enqueue_dma source(%arg8 : memref<1024x896xbf16, #tpu.memory_space<any>>) target(%arg11 : memref<1024x896xbf16, #tpu.memory_space<vmem>>) target_semaphore(%arg12 : memref<!tpu.dma_semaphore, #tpu.memory_space<semaphore_mem>>)
    %c0 = arith.constant 0 : index
    %c0_0 = arith.constant 0 : index
    %0 = vector.load %arg1[%c0, %c0_0] : memref<16x128xbf16, #tpu.memory_space<vmem>>, vector<16x128xbf16>
    %c0_1 = arith.constant 0 : index
    %c0_2 = arith.constant 0 : index
    %1 = vector.load %arg2[%c0_1, %c0_2] : memref<128x256xbf16, #tpu.memory_space<vmem>>, vector<128x256xbf16>
    %cst = arith.constant dense<0.000000e+00> : vector<16x256xf32>
    %2 = tpu.matmul %0, %1, %cst {dimension_numbers = #tpu.dot_dimension_numbers<[1], [0], [0], [1], [0, 0, 1, 1], [], []>} : vector<16x128xbf16>, vector<128x256xbf16>, vector<16x256xf32> -> vector<16x256xf32>
    %c0_3 = arith.constant 0 : index
    %c0_4 = arith.constant 0 : index
    %3 = vector.load %arg3[%c0_3, %c0_4] : memref<1x256xf32, #tpu.memory_space<vmem>>, vector<1x256xf32>
    %4 = vector.broadcast %3 : vector<1x256xf32> to vector<16x256xf32>
    %5 = arith.addf %2, %4 : vector<16x256xf32>
    %cst_5 = arith.constant 0.000000e+00 : f32
    %6 = vector.broadcast %cst_5 : f32 to vector<16x256xf32>
    %7 = arith.maximumf %5, %6 : vector<16x256xf32>
    %8 = arith.truncf %7 : vector<16x256xf32> to vector<16x256xbf16>
    %c0_6 = arith.constant 0 : index
    %c0_7 = arith.constant 0 : index
    %9 = vector.load %arg4[%c0_6, %c0_7] : memref<256x512xbf16, #tpu.memory_space<vmem>>, vector<256x512xbf16>
    %cst_8 = arith.constant dense<0.000000e+00> : vector<16x512xf32>
    %10 = tpu.matmul %8, %9, %cst_8 {dimension_numbers = #tpu.dot_dimension_numbers<[1], [0], [0], [1], [0, 0, 1, 1], [], []>} : vector<16x256xbf16>, vector<256x512xbf16>, vector<16x512xf32> -> vector<16x512xf32>
    %c0_9 = arith.constant 0 : index
    %c0_10 = arith.constant 0 : index
    %11 = vector.load %arg5[%c0_9, %c0_10] : memref<1x512xf32, #tpu.memory_space<vmem>>, vector<1x512xf32>
    %12 = vector.broadcast %11 : vector<1x512xf32> to vector<16x512xf32>
    %13 = arith.addf %10, %12 : vector<16x512xf32>
    %cst_11 = arith.constant 0.000000e+00 : f32
    %14 = vector.broadcast %cst_11 : f32 to vector<16x512xf32>
    %15 = arith.maximumf %13, %14 : vector<16x512xf32>
    %16 = arith.truncf %15 : vector<16x512xf32> to vector<16x512xbf16>
    %c0_12 = arith.constant 0 : index
    %c0_13 = arith.constant 0 : index
    %17 = vector.load %arg6[%c0_12, %c0_13] : memref<512x1024xbf16, #tpu.memory_space<vmem>>, vector<512x1024xbf16>
    %cst_14 = arith.constant dense<0.000000e+00> : vector<16x1024xf32>
    %18 = tpu.matmul %16, %17, %cst_14 {dimension_numbers = #tpu.dot_dimension_numbers<[1], [0], [0], [1], [0, 0, 1, 1], [], []>} : vector<16x512xbf16>, vector<512x1024xbf16>, vector<16x1024xf32> -> vector<16x1024xf32>
    %c0_15 = arith.constant 0 : index
    %c0_16 = arith.constant 0 : index
    %19 = vector.load %arg7[%c0_15, %c0_16] : memref<1x1024xf32, #tpu.memory_space<vmem>>, vector<1x1024xf32>
    %20 = vector.broadcast %19 : vector<1x1024xf32> to vector<16x1024xf32>
    %21 = arith.addf %18, %20 : vector<16x1024xf32>
    %cst_17 = arith.constant 0.000000e+00 : f32
    %22 = vector.broadcast %cst_17 : f32 to vector<16x1024xf32>
    %23 = arith.maximumf %21, %22 : vector<16x1024xf32>
    %24 = arith.truncf %23 : vector<16x1024xf32> to vector<16x1024xbf16>
    tpu.wait_dma2 semaphore(%arg12 : memref<!tpu.dma_semaphore, #tpu.memory_space<semaphore_mem>>) src(%arg8 : memref<1024x896xbf16, #tpu.memory_space<any>>) dst(%arg11 : memref<1024x896xbf16, #tpu.memory_space<vmem>>)
    %c0_18 = arith.constant 0 : index
    %c0_19 = arith.constant 0 : index
    %25 = vector.load %arg11[%c0_18, %c0_19] : memref<1024x896xbf16, #tpu.memory_space<vmem>>, vector<1024x896xbf16>
    %cst_20 = arith.constant dense<0.000000e+00> : vector<16x896xf32>
    %26 = tpu.matmul %24, %25, %cst_20 {dimension_numbers = #tpu.dot_dimension_numbers<[1], [0], [0], [1], [0, 0, 1, 1], [], []>} : vector<16x1024xbf16>, vector<1024x896xbf16>, vector<16x896xf32> -> vector<16x896xf32>
    %c0_21 = arith.constant 0 : index
    %c0_22 = arith.constant 0 : index
    %27 = vector.load %arg9[%c0_21, %c0_22] : memref<1x896xf32, #tpu.memory_space<vmem>>, vector<1x896xf32>
    %28 = vector.broadcast %27 : vector<1x896xf32> to vector<16x896xf32>
    %29 = arith.addf %26, %28 : vector<16x896xf32>
    %30 = math.tanh %29 : vector<16x896xf32>
    %31 = arith.truncf %30 : vector<16x896xf32> to vector<16x896xbf16>
    %c0_23 = arith.constant 0 : index
    %c0_24 = arith.constant 0 : index
    %32 = vector.load %arg10[%c0_23, %c0_24] : memref<16x896xbf16, #tpu.memory_space<vmem>>, vector<16x896xbf16>
    tpu.vector_store %arg10[%c0_23, %c0_24], %31 {strides = array<i32>} : memref<16x896xbf16, #tpu.memory_space<vmem>>, vector<16x896xbf16>,
    return
  }
  func.func @transform_0(%arg0: i32) -> (i32, i32) {
    %c0_i32 = arith.constant 0 : i32
    %c0_i32_0 = arith.constant 0 : i32
    return %arg0, %c0_i32 : i32, i32
  }
  func.func @transform_1(%arg0: i32) -> (i32, i32) {
    %c0_i32 = arith.constant 0 : i32
    %c0_i32_0 = arith.constant 0 : i32
    %c0_i32_1 = arith.constant 0 : i32
    return %c0_i32, %c0_i32_0 : i32, i32
  }
  func.func @transform_2(%arg0: i32) -> (i32, i32) {
    %c0_i32 = arith.constant 0 : i32
    %c0_i32_0 = arith.constant 0 : i32
    %c0_i32_1 = arith.constant 0 : i32
    return %c0_i32, %c0_i32_0 : i32, i32
  }
  func.func @transform_3(%arg0: i32) -> (i32, i32) {
    %c0_i32 = arith.constant 0 : i32
    %c0_i32_0 = arith.constant 0 : i32
    %c0_i32_1 = arith.constant 0 : i32
    return %c0_i32, %c0_i32_0 : i32, i32
  }
  func.func @transform_4(%arg0: i32) -> (i32, i32) {
    %c0_i32 = arith.constant 0 : i32
    %c0_i32_0 = arith.constant 0 : i32
    %c0_i32_1 = arith.constant 0 : i32
    return %c0_i32, %c0_i32_0 : i32, i32
  }
  func.func @transform_5(%arg0: i32) -> (i32, i32) {
    %c0_i32 = arith.constant 0 : i32
    %c0_i32_0 = arith.constant 0 : i32
    %c0_i32_1 = arith.constant 0 : i32
    return %c0_i32, %c0_i32_0 : i32, i32
  }
  func.func @transform_6(%arg0: i32) -> (i32, i32) {
    %c0_i32 = arith.constant 0 : i32
    %c0_i32_0 = arith.constant 0 : i32
    %c0_i32_1 = arith.constant 0 : i32
    return %c0_i32, %c0_i32_0 : i32, i32
  }
  func.func @transform_8(%arg0: i32) -> (i32, i32) {
    %c0_i32 = arith.constant 0 : i32
    %c0_i32_0 = arith.constant 0 : i32
    %c0_i32_1 = arith.constant 0 : i32
    return %c0_i32, %c0_i32_0 : i32, i32
  }
  func.func @transform_9(%arg0: i32) -> (i32, i32) {
    %c0_i32 = arith.constant 0 : i32
    %c0_i32_0 = arith.constant 0 : i32
    return %arg0, %c0_i32 : i32, i32
  }
}

</mosaic_0001>

<llo_original>
// kernel: tpu_custom_call.1
$region0: #{tpu_custom_call.1}
  #allocation0 [shape = 'u32[]', space=smem, size = 0x4, offset = 0x4, fixed_abs, tag = 'smem constant byte address 0x4 - core index']
  #allocation1 [shape = 'u32[144,128]{1,0:T(1,128)}', space=vmem, size = 0x12000, scoped, tag = 'internal scratch']
  #allocation2 [shape = 'bf16[1024,896]{1,0:T(16,128)(2,1)}', space=vmem, size = 0x1c0000, scoped, tag = 'scratch operand']
  #allocation3 [shape = 's32[1]{0}', space=sflag, size = 0x4, scoped, tag = 'scratch operand']
  #allocation19 [shape = 's32[]', space=sflag, size = 0x4, offset = 0, fixed_abs, tag = 'sflag constant byte address 0x0 - dummy sync flag']
  %s0 = inlined_call_operand.hbm [shape: bf16[16,128], index: 0, kind: input, shape index: {}]
  %s1 = inlined_call_operand.hbm [shape: bf16[128,256], index: 1, kind: input, shape index: {}]
  %s2 = inlined_call_operand.hbm [shape: f32[1,256], index: 2, kind: input, shape index: {}]
  %s3 = inlined_call_operand.hbm [shape: bf16[256,512], index: 3, kind: input, shape index: {}]
  %s4 = inlined_call_operand.hbm [shape: f32[1,512], index: 4, kind: input, shape index: {}]
  %s5 = inlined_call_operand.hbm [shape: bf16[512,1024], index: 5, kind: input, shape index: {}]
  %s6 = inlined_call_operand.hbm [shape: f32[1,1024], index: 6, kind: input, shape index: {}]
  %s7 = inlined_call_operand.hbm [shape: bf16[1024,896], index: 7, kind: input, shape index: {}]
  %s8 = inlined_call_operand.hbm [shape: f32[1,896], index: 8, kind: input, shape index: {}]
  %s9 = inlined_call_operand.hbm [shape: bf16[16,896], index: 9, kind: output, shape index: {}]
  %s10 = sld [smem:[#allocation0]]
  $region74: #{tpu_custom_call.1} parent=0
    _
  %s12 = ssub.s32 1, %s10
  %s13 = scalar_select 0, %s12, %s10
  $region1: #{tpu_custom_call.1} parent=0
    #allocation4 [shape = 'u8[4096]{0}', space=vmem, size = 0x1000, scoped, tag = 'input window, operand 0, single buffered']
    #allocation5 [shape = 's32[1]{0}', space=sflag, size = 0x4, scoped, tag = 'scoped memory for tpu_custom_call.1']
    #allocation6 [shape = 's32[1]{0}', space=sflag, size = 0x4, scoped, tag = 'scoped memory for tpu_custom_call.1']
    #allocation7 [shape = 'u8[65536]{0}', space=vmem, size = 0x10000, scoped, tag = 'input window, operand 1, single buffered']
    #allocation8 [shape = 's32[1]{0}', space=sflag, size = 0x4, scoped, tag = 'scoped memory for tpu_custom_call.1']
    #allocation9 [shape = 'u8[1024]{0}', space=vmem, size = 0x400, scoped, tag = 'input window, operand 2, single buffered']
    #allocation10 [shape = 'u8[262144]{0}', space=vmem, size = 0x40000, scoped, tag = 'input window, operand 3, single buffered']
    #allocation11 [shape = 's32[1]{0}', space=sflag, size = 0x4, scoped, tag = 'scoped memory for tpu_custom_call.1']
    #allocation12 [shape = 'u8[2048]{0}', space=vmem, size = 0x800, scoped, tag = 'input window, operand 4, single buffered']
    #allocation13 [shape = 'u8[1048576]{0}', space=vmem, size = 0x100000, scoped, tag = 'input window, operand 5, single buffered']
    #allocation14 [shape = 's32[1]{0}', space=sflag, size = 0x4, scoped, tag = 'scoped memory for tpu_custom_call.1']
    #allocation15 [shape = 'u8[4096]{0}', space=vmem, size = 0x1000, scoped, tag = 'input window, operand 6, single buffered']
    #allocation16 [shape = 'u8[3584]{0}', space=vmem, size = 0x1000, scoped, tag = 'input window, operand 8, single buffered']
    #allocation17 [shape = 's32[1]{0}', space=sflag, size = 0x4, scoped, tag = 'scoped memory for tpu_custom_call.1']
    #allocation18 [shape = 'u8[28672]{0}', space=vmem, size = 0x7000, scoped, tag = 'output window, operand 0, single buffered']
    #allocation20 [shape = 'u32[9]{0}', space=smem, size = 0x24, scoped, tag = 'DMA stride descriptor']
    %14 = vsyncpa [#allocation5], 0
    %15 = vsyncpa [#allocation8], 0
    %16 = vsyncpa [#allocation11], 0
    %17 = vsyncpa [#allocation14], 0
    %18 = vsyncpa [#allocation17], 0
    %19 = vsyncpa [#allocation6], 0
    // Predicated region
    $region2: #{tpu_custom_call.1} parent=1 // pred_check
      _
    $region3: #{tpu_custom_call.1} parent=1 // pred_check_branch
      %21 = sbr.rel (0) target = $region5
    $region4: #{tpu_custom_call.1} parent=1 // pred_region
      %s23 = ssub.s32 128, 128
      %24 = vsyncadd [#allocation5], %s23
      %s25 = sshll.u32 [#allocation4], 4
      %s26 = int_to_ptr.vmem [resolvable:$true] %s25
      %31 = dma.hbm_to_vmem [thread:$0]  %s0, 128, %s26, [#allocation5], 64, 64, 4
    $region5: #{tpu_custom_call.1} parent=1 // pred_fallthru
      _
    // Predicated region
    $region6: #{tpu_custom_call.1} parent=1 // pred_check
      _
    $region7: #{tpu_custom_call.1} parent=1 // pred_check_branch
      %33 = sbr.rel (0) target = $region9
    $region8: #{tpu_custom_call.1} parent=1 // pred_region
      %s35 = ssub.s32 2048, 2048
      %36 = vsyncadd [#allocation8], %s35
      %s37 = sshll.u32 [#allocation7], 4
      %s38 = int_to_ptr.vmem [resolvable:$true] %s37
      %43 = dma.hbm_to_vmem [thread:$0]  %s1, 2048, %s38, [#allocation8], 128, 128, 8
    $region9: #{tpu_custom_call.1} parent=1 // pred_fallthru
      _
    // Predicated region
    $region10: #{tpu_custom_call.1} parent=1 // pred_check
      _
    $region11: #{tpu_custom_call.1} parent=1 // pred_check_branch
      %45 = sbr.rel (0) target = $region13
    $region12: #{tpu_custom_call.1} parent=1 // pred_region
      %s47 = ssub.s32 32, 32
      %48 = vsyncadd [#allocation8], %s47
      %s50 = sshll.u32 [#allocation9], 4
      %s51 = int_to_ptr.vmem [resolvable:$true] %s50
      %53 = dma.hbm_to_vmem [thread:$0]  %s2, 32, %s51, [#allocation8]
    $region13: #{tpu_custom_call.1} parent=1 // pred_fallthru
      _
    // Predicated region
    $region14: #{tpu_custom_call.1} parent=1 // pred_check
      _
    $region15: #{tpu_custom_call.1} parent=1 // pred_check_branch
      %55 = sbr.rel (0) target = $region17
    $region16: #{tpu_custom_call.1} parent=1 // pred_region
      %s57 = ssub.s32 8192, 8192
      %58 = vsyncadd [#allocation11], %s57
      %s59 = sshll.u32 [#allocation10], 4
      %s60 = int_to_ptr.vmem [resolvable:$true] %s59
      %65 = dma.hbm_to_vmem [thread:$0]  %s3, 8192, %s60, [#allocation11], 256, 256, 16
    $region17: #{tpu_custom_call.1} parent=1 // pred_fallthru
      _
    // Predicated region
    $region18: #{tpu_custom_call.1} parent=1 // pred_check
      _
    $region19: #{tpu_custom_call.1} parent=1 // pred_check_branch
      %67 = sbr.rel (0) target = $region21
    $region20: #{tpu_custom_call.1} parent=1 // pred_region
      %s69 = ssub.s32 64, 64
      %70 = vsyncadd [#allocation11], %s69
      %s72 = sshll.u32 [#allocation12], 4
      %s73 = int_to_ptr.vmem [resolvable:$true] %s72
      %75 = dma.hbm_to_vmem [thread:$0]  %s4, 64, %s73, [#allocation11]
    $region21: #{tpu_custom_call.1} parent=1 // pred_fallthru
      _
    // Predicated region
    $region22: #{tpu_custom_call.1} parent=1 // pred_check
      _
    $region23: #{tpu_custom_call.1} parent=1 // pred_check_branch
      %77 = sbr.rel (0) target = $region25
    $region24: #{tpu_custom_call.1} parent=1 // pred_region
      %s79 = ssub.s32 32768, 32768
      %80 = vsyncadd [#allocation14], %s79
      %s81 = sshll.u32 [#allocation13], 4
      %s82 = int_to_ptr.vmem [resolvable:$true] %s81
      %87 = dma.hbm_to_vmem [thread:$0]  %s5, 32768, %s82, [#allocation14], 512, 512, 32
    $region25: #{tpu_custom_call.1} parent=1 // pred_fallthru
      _
    // Predicated region
    $region26: #{tpu_custom_call.1} parent=1 // pred_check
      _
    $region27: #{tpu_custom_call.1} parent=1 // pred_check_branch
      %89 = sbr.rel (0) target = $region29
    $region28: #{tpu_custom_call.1} parent=1 // pred_region
      %s91 = ssub.s32 128, 128
      %92 = vsyncadd [#allocation14], %s91
      %s94 = sshll.u32 [#allocation15], 4
      %s95 = int_to_ptr.vmem [resolvable:$true] %s94
      %97 = dma.hbm_to_vmem [thread:$0]  %s6, 128, %s95, [#allocation14]
    $region29: #{tpu_custom_call.1} parent=1 // pred_fallthru
      _
    // Predicated region
    $region30: #{tpu_custom_call.1} parent=1 // pred_check
      _
    $region31: #{tpu_custom_call.1} parent=1 // pred_check_branch
      %99 = sbr.rel (0) target = $region33
    $region32: #{tpu_custom_call.1} parent=1 // pred_region
      %s101 = ssub.s32 112, 112
      %102 = vsyncadd [#allocation17], %s101
      %s104 = sshll.u32 [#allocation16], 4
      %s105 = int_to_ptr.vmem [resolvable:$true] %s104
      %107 = dma.hbm_to_vmem [thread:$0]  %s8, 112, %s105, [#allocation17]
    $region33: #{tpu_custom_call.1} parent=1 // pred_fallthru
      _
    // Predicated region
    $region34: #{tpu_custom_call.1} parent=1 // pred_check
      _
    $region35: #{tpu_custom_call.1} parent=1 // pred_check_branch
      %109 = sbr.rel (0) target = $region37
    $region36: #{tpu_custom_call.1} parent=1 // pred_region
      %110 = dma.done [#allocation5], 128
    $region37: #{tpu_custom_call.1} parent=1 // pred_fallthru
      _
    // Predicated region
    $region38: #{tpu_custom_call.1} parent=1 // pred_check
      _
    $region39: #{tpu_custom_call.1} parent=1 // pred_check_branch
      %112 = sbr.rel (0) target = $region41
    $region40: #{tpu_custom_call.1} parent=1 // pred_region
      %113 = dma.done [#allocation8], 2048
    $region41: #{tpu_custom_call.1} parent=1 // pred_fallthru
      _
    // Predicated region
    $region42: #{tpu_custom_call.1} parent=1 // pred_check
      _
    $region43: #{tpu_custom_call.1} parent=1 // pred_check_branch
      %115 = sbr.rel (0) target = $region45
    $region44: #{tpu_custom_call.1} parent=1 // pred_region
      %116 = dma.done [#allocation8], 32
    $region45: #{tpu_custom_call.1} parent=1 // pred_fallthru
      _
    // Predicated region
    $region46: #{tpu_custom_call.1} parent=1 // pred_check
      _
    $region47: #{tpu_custom_call.1} parent=1 // pred_check_branch
      %118 = sbr.rel (0) target = $region49
    $region48: #{tpu_custom_call.1} parent=1 // pred_region
      %119 = dma.done [#allocation11], 8192
    $region49: #{tpu_custom_call.1} parent=1 // pred_fallthru
      _
    // Predicated region
    $region50: #{tpu_custom_call.1} parent=1 // pred_check
      _
    $region51: #{tpu_custom_call.1} parent=1 // pred_check_branch
      %121 = sbr.rel (0) target = $region53
    $region52: #{tpu_custom_call.1} parent=1 // pred_region
      %122 = dma.done [#allocation11], 64
    $region53: #{tpu_custom_call.1} parent=1 // pred_fallthru
      _
    // Predicated region
    $region54: #{tpu_custom_call.1} parent=1 // pred_check
      _
    $region55: #{tpu_custom_call.1} parent=1 // pred_check_branch
      %124 = sbr.rel (0) target = $region57
    $region56: #{tpu_custom_call.1} parent=1 // pred_region
      %125 = dma.done [#allocation14], 32768
    $region57: #{tpu_custom_call.1} parent=1 // pred_fallthru
      _
    // Predicated region
    $region58: #{tpu_custom_call.1} parent=1 // pred_check
      _
    $region59: #{tpu_custom_call.1} parent=1 // pred_check_branch
      %127 = sbr.rel (0) target = $region61
    $region60: #{tpu_custom_call.1} parent=1 // pred_region
      %128 = dma.done [#allocation14], 128
    $region61: #{tpu_custom_call.1} parent=1 // pred_fallthru
      _
    // Predicated region
    $region62: #{tpu_custom_call.1} parent=1 // pred_check
      _
    $region63: #{tpu_custom_call.1} parent=1 // pred_check_branch
      %130 = sbr.rel (0) target = $region65
    $region64: #{tpu_custom_call.1} parent=1 // pred_region
      %131 = dma.done [#allocation17], 112
    $region65: #{tpu_custom_call.1} parent=1 // pred_fallthru
      _
    %s134 = sshll.u32 1, 14
    %s135 = sxor.u32 4294967295, %s134
    %s137 = sld [smem:[#allocation0]]
    %s138 = sadd.s32 2, %s137
    %s140 = sshll.u32 7, 26
    %s141 = sxor.u32 4294967295, %s140
    %s142 = sand.u32 0, %s141
    %s143 = sshll.u32 %s138, 26
    %s144 = sor.u32 %s142, %s143
    %s145 = sshll.u32 [#allocation2], 4
    %s146 = int_to_ptr.vmem [resolvable:$true] %s145
    %149 = sst [smem:[#allocation20]] 896
    %s150 = scalar_lea.smem [#allocation20], 1
    %151 = sst [smem:[%s150]] 896
    %s152 = scalar_lea.smem [#allocation20], 2
    %153 = sst [smem:[%s152]] 7
    %s154 = scalar_lea.smem [#allocation20], 3
    %155 = sst [smem:[%s154]] 64
    %s156 = scalar_lea.smem [#allocation20], 4
    %157 = sst [smem:[%s156]] 128
    %s158 = scalar_lea.smem [#allocation20], 5
    %159 = sst [smem:[%s158]] 2
    %s160 = scalar_lea.smem [#allocation20], 6
    %161 = sst [smem:[%s160]] 448
    %s162 = scalar_lea.smem [#allocation20], 7
    %163 = sst [smem:[%s162]] 64
    %s164 = scalar_lea.smem [#allocation20], 8
    %165 = sst [smem:[%s164]] 4
    %167 = dma.general %s7, 57344, %s146, [#allocation3], [#allocation19], [#allocation20], %s144, 0
    %v168 = vld [vmem:[#allocation4] sm:$0xf]
    %v169 = vld [vmem:[#allocation4 + $0x4] sm:$0xf]
    %v170 = vld [vmem:[#allocation7] sm:$0xff]
    %v171 = vld [vmem:[#allocation7 + $0x8] sm:$0xff]
    %v172 = vld [vmem:[#allocation7 + $0x10] sm:$0xff]
    %v173 = vld [vmem:[#allocation7 + $0x18] sm:$0xff]
    %v174 = vld [vmem:[#allocation7 + $0x20] sm:$0xff]
    %v175 = vld [vmem:[#allocation7 + $0x28] sm:$0xff]
    %v176 = vld [vmem:[#allocation7 + $0x30] sm:$0xff]
    %v177 = vld [vmem:[#allocation7 + $0x38] sm:$0xff]
    %v178 = vld [vmem:[#allocation7 + $0x40] sm:$0xff]
    %v179 = vld [vmem:[#allocation7 + $0x48] sm:$0xff]
    %v180 = vld [vmem:[#allocation7 + $0x50] sm:$0xff]
    %v181 = vld [vmem:[#allocation7 + $0x58] sm:$0xff]
    %v182 = vld [vmem:[#allocation7 + $0x60] sm:$0xff]
    %v183 = vld [vmem:[#allocation7 + $0x68] sm:$0xff]
    %v184 = vld [vmem:[#allocation7 + $0x70] sm:$0xff]
    %v185 = vld [vmem:[#allocation7 + $0x78] sm:$0xff]
    %v186 = vld [vmem:[#allocation9] sm:$0x3]
    %v188 = vlaneseq
    %v189 = vshrl.u32 %v188, 7
    %v190 = vsub.s32 0, %v189
    %v191 = vrot.slane %v186, %v190
    %v192 = vlaneseq
    %v193 = vshrl.u32 %v192, 7
    %v194 = vsub.s32 1, %v193
    %v195 = vrot.slane %v186, %v194
    %v200 = vunpack.c.l.b16 %v168
    %v201 = vunpack.c.l.b16 %v169
    %v202 = vpack.c.b16 %v201, %v200
    %v220 = vunpack.c.l.b16 %v170
    %v221 = vunpack.c.h.b16 %v170
    %v222 = vunpack.c.l.b16 %v171
    %v223 = vunpack.c.h.b16 %v171
    %v224 = vunpack.c.l.b16 %v172
    %v225 = vunpack.c.h.b16 %v172
    %v226 = vunpack.c.l.b16 %v173
    %v227 = vunpack.c.h.b16 %v173
    %v228 = vunpack.c.l.b16 %v174
    %v229 = vunpack.c.h.b16 %v174
    %v230 = vunpack.c.l.b16 %v175
    %v231 = vunpack.c.h.b16 %v175
    %v232 = vunpack.c.l.b16 %v176
    %v233 = vunpack.c.h.b16 %v176
    %v234 = vunpack.c.l.b16 %v177
    %v235 = vunpack.c.h.b16 %v177
    %v236 = vunpack.c.l.b16 %v178
    %v237 = vunpack.c.h.b16 %v178
    %v238 = vunpack.c.l.b16 %v179
    %v239 = vunpack.c.h.b16 %v179
    %v240 = vunpack.c.l.b16 %v180
    %v241 = vunpack.c.h.b16 %v180
    %v242 = vunpack.c.l.b16 %v181
    %v243 = vunpack.c.h.b16 %v181
    %v244 = vunpack.c.l.b16 %v182
    %v245 = vunpack.c.h.b16 %v182
    %v246 = vunpack.c.l.b16 %v183
    %v247 = vunpack.c.h.b16 %v183
    %v248 = vunpack.c.l.b16 %v184
    %v249 = vunpack.c.h.b16 %v184
    %v250 = vunpack.c.l.b16 %v185
    %v251 = vunpack.c.h.b16 %v185
    %v252 = vpack.c.b16 %v222, %v220
    %v253 = vpack.c.b16 %v223, %v221
    %v254 = vpack.c.b16 %v226, %v224
    %v255 = vpack.c.b16 %v227, %v225
    %v256 = vpack.c.b16 %v230, %v228
    %v257 = vpack.c.b16 %v231, %v229
    %v258 = vpack.c.b16 %v234, %v232
    %v259 = vpack.c.b16 %v235, %v233
    %v260 = vpack.c.b16 %v238, %v236
    %v261 = vpack.c.b16 %v239, %v237
    %v262 = vpack.c.b16 %v242, %v240
    %v263 = vpack.c.b16 %v243, %v241
    %v264 = vpack.c.b16 %v246, %v244
    %v265 = vpack.c.b16 %v247, %v245
    %v266 = vpack.c.b16 %v250, %v248
    %v267 = vpack.c.b16 %v251, %v249
    %284 = vmatprep.subr.bf16.mxu0 %v253
    %285 = vmatpush1.bf16.msra.mxu0 %v252
    %286 = vmatprep.subr.bf16.mxu0 %v255
    %287 = vmatpush1.bf16.msra.mxu0 %v254
    %288 = vmatprep.subr.bf16.mxu0 %v257
    %289 = vmatpush1.bf16.msra.mxu0 %v256
    %290 = vmatprep.subr.bf16.mxu0 %v259
    %291 = vmatpush1.bf16.msra.mxu0 %v258
    %292 = vmatprep.subr.bf16.mxu0 %v261
    %293 = vmatpush1.bf16.msra.mxu0 %v260
    %294 = vmatprep.subr.bf16.mxu0 %v263
    %295 = vmatpush1.bf16.msra.mxu0 %v262
    %296 = vmatprep.subr.bf16.mxu0 %v265
    %297 = vmatpush1.bf16.msra.mxu0 %v264
    %298 = vmatprep.subr.bf16.mxu0 %v267
    %299 = vmatpush1.bf16.msra.mxu0 %v266
    %300 = vmatprep.subr.bf16.mxu0 0
    %301 = vmatpush1.bf16.msra.mxu0 0
    %302 = vmatprep.subr.bf16.mxu0 0
    %303 = vmatpush1.bf16.msra.mxu0 0
    %304 = vmatprep.subr.bf16.mxu0 0
    %305 = vmatpush1.bf16.msra.mxu0 0
    %306 = vmatprep.subr.bf16.mxu0 0
    %307 = vmatpush1.bf16.msra.mxu0 0
    %308 = vmatprep.subr.bf16.mxu0 0
    %309 = vmatpush1.bf16.msra.mxu0 0
    %310 = vmatprep.subr.bf16.mxu0 0
    %311 = vmatpush1.bf16.msra.mxu0 0
    %312 = vmatprep.subr.bf16.mxu0 0
    %313 = vmatpush1.bf16.msra.mxu0 0
    %314 = vmatprep.subr.bf16.mxu0 0
    %315 = vmatpush1.bf16.msra.mxu0 0
    %316 = vmatprep.mubr.bf16.mxu0 0
    %317 = vmatmul.mubr.bf16.gmra.mrb[0].mxu0 %v202
    %v318 = vpop.f32.mrb[0].mxu0
    %v319 = vadd.f32 %v191, %v318
    %v320 = vpop.f32.mrb[0].mxu0
    %v321 = vadd.f32 %v195, %v320
    %v322 = vpop.f32.mrb[0].mxu0
    %v323 = vadd.f32 %v191, %v322
    %v324 = vpop.f32.mrb[0].mxu0
    %v325 = vadd.f32 %v195, %v324
    %326 = vdwg.mxu0
    %v327 = vmax.f32 %v319, 0.0
    %v328 = vmax.f32 %v321, 0.0
    %v329 = vmax.f32 %v323, 0.0
    %v330 = vmax.f32 %v325, 0.0
    %v331 = vpack.c.bf16 %v329, %v327
    %v332 = vpack.c.bf16 %v330, %v328
    %v333 = vld [vmem:[#allocation10] sm:$0xff]
    %v334 = vld [vmem:[#allocation10 + $0x8] sm:$0xff]
    %v335 = vld [vmem:[#allocation10 + $0x10] sm:$0xff]
    %v336 = vld [vmem:[#allocation10 + $0x18] sm:$0xff]
    %v337 = vld [vmem:[#allocation10 + $0x20] sm:$0xff]
    %v338 = vld [vmem:[#allocation10 + $0x28] sm:$0xff]
    %v339 = vld [vmem:[#allocation10 + $0x30] sm:$0xff]
    %v340 = vld [vmem:[#allocation10 + $0x38] sm:$0xff]
    %v341 = vld [vmem:[#allocation10 + $0x40] sm:$0xff]
    %v342 = vld [vmem:[#allocation10 + $0x48] sm:$0xff]
    %v343 = vld [vmem:[#allocation10 + $0x50] sm:$0xff]
    %v344 = vld [vmem:[#allocation10 + $0x58] sm:$0xff]
    %v345 = vld [vmem:[#allocation10 + $0x60] sm:$0xff]
    %v346 = vld [vmem:[#allocation10 + $0x68] sm:$0xff]
    %v347 = vld [vmem:[#allocation10 + $0x70] sm:$0xff]
    %v348 = vld [vmem:[#allocation10 + $0x78] sm:$0xff]
    %v349 = vld [vmem:[#allocation10 + $0x80] sm:$0xff]
    %v350 = vld [vmem:[#allocation10 + $0x88] sm:$0xff]
    %v351 = vld [vmem:[#allocation10 + $0x90] sm:$0xff]
    %v352 = vld [vmem:[#allocation10 + $0x98] sm:$0xff]
    %v353 = vld [vmem:[#allocation10 + $0xa0] sm:$0xff]
    %v354 = vld [vmem:[#allocation10 + $0xa8] sm:$0xff]
    %v355 = vld [vmem:[#allocation10 + $0xb0] sm:$0xff]
    %v356 = vld [vmem:[#allocation10 + $0xb8] sm:$0xff]
    %v357 = vld [vmem:[#allocation10 + $0xc0] sm:$0xff]
    %v358 = vld [vmem:[#allocation10 + $0xc8] sm:$0xff]
    %v359 = vld [vmem:[#allocation10 + $0xd0] sm:$0xff]
    %v360 = vld [vmem:[#allocation10 + $0xd8] sm:$0xff]
    %v361 = vld [vmem:[#allocation10 + $0xe0] sm:$0xff]
    %v362 = vld [vmem:[#allocation10 + $0xe8] sm:$0xff]
    %v363 = vld [vmem:[#allocation10 + $0xf0] sm:$0xff]
    %v364 = vld [vmem:[#allocation10 + $0xf8] sm:$0xff]
    %v365 = vld [vmem:[#allocation10 + $0x100] sm:$0xff]
    %v366 = vld [vmem:[#allocation10 + $0x108] sm:$0xff]
    %v367 = vld [vmem:[#allocation10 + $0x110] sm:$0xff]
    %v368 = vld [vmem:[#allocation10 + $0x118] sm:$0xff]
    %v369 = vld [vmem:[#allocation10 + $0x120] sm:$0xff]
    %v370 = vld [vmem:[#allocation10 + $0x128] sm:$0xff]
    %v371 = vld [vmem:[#allocation10 + $0x130] sm:$0xff]
    %v372 = vld [vmem:[#allocation10 + $0x138] sm:$0xff]
    %v373 = vld [vmem:[#allocation10 + $0x140] sm:$0xff]
    %v374 = vld [vmem:[#allocation10 + $0x148] sm:$0xff]
    %v375 = vld [vmem:[#allocation10 + $0x150] sm:$0xff]
    %v376 = vld [vmem:[#allocation10 + $0x158] sm:$0xff]
    %v377 = vld [vmem:[#allocation10 + $0x160] sm:$0xff]
    %v378 = vld [vmem:[#allocation10 + $0x168] sm:$0xff]
    %v379 = vld [vmem:[#allocation10 + $0x170] sm:$0xff]
    %v380 = vld [vmem:[#allocation10 + $0x178] sm:$0xff]
    %v381 = vld [vmem:[#allocation10 + $0x180] sm:$0xff]
    %v382 = vld [vmem:[#allocation10 + $0x188] sm:$0xff]
    %v383 = vld [vmem:[#allocation10 + $0x190] sm:$0xff]
    %v384 = vld [vmem:[#allocation10 + $0x198] sm:$0xff]
    %v385 = vld [vmem:[#allocation10 + $0x1a0] sm:$0xff]
    %v386 = vld [vmem:[#allocation10 + $0x1a8] sm:$0xff]
    %v387 = vld [vmem:[#allocation10 + $0x1b0] sm:$0xff]
    %v388 = vld [vmem:[#allocation10 + $0x1b8] sm:$0xff]
    %v389 = vld [vmem:[#allocation10 + $0x1c0] sm:$0xff]
    %v390 = vld [vmem:[#allocation10 + $0x1c8] sm:$0xff]
    %v391 = vld [vmem:[#allocation10 + $0x1d0] sm:$0xff]
    %v392 = vld [vmem:[#allocation10 + $0x1d8] sm:$0xff]
    %v393 = vld [vmem:[#allocation10 + $0x1e0] sm:$0xff]
    %v394 = vld [vmem:[#allocation10 + $0x1e8] sm:$0xff]
    %v395 = vld [vmem:[#allocation10 + $0x1f0] sm:$0xff]
    %v396 = vld [vmem:[#allocation10 + $0x1f8] sm:$0xff]
    %v397 = vld [vmem:[#allocation12] sm:$0xf]
    %v399 = vlaneseq
    %v400 = vshrl.u32 %v399, 7
    %v401 = vsub.s32 0, %v400
    %v402 = vrot.slane %v397, %v401
    %v403 = vlaneseq
    %v404 = vshrl.u32 %v403, 7
    %v405 = vsub.s32 1, %v404
    %v406 = vrot.slane %v397, %v405
    %v407 = vlaneseq
    %v408 = vshrl.u32 %v407, 7
    %v409 = vsub.s32 2, %v408
    %v410 = vrot.slane %v397, %v409
    %v411 = vlaneseq
    %v412 = vshrl.u32 %v411, 7
    %v413 = vsub.s32 3, %v412
    %v414 = vrot.slane %v397, %v413
    %v483 = vunpack.c.l.b16 %v333
    %v484 = vunpack.c.h.b16 %v333
    %v485 = vunpack.c.l.b16 %v334
    %v486 = vunpack.c.h.b16 %v334
    %v487 = vunpack.c.l.b16 %v335
    %v488 = vunpack.c.h.b16 %v335
    %v489 = vunpack.c.l.b16 %v336
    %v490 = vunpack.c.h.b16 %v336
    %v491 = vunpack.c.l.b16 %v337
    %v492 = vunpack.c.h.b16 %v337
    %v493 = vunpack.c.l.b16 %v338
    %v494 = vunpack.c.h.b16 %v338
    %v495 = vunpack.c.l.b16 %v339
    %v496 = vunpack.c.h.b16 %v339
    %v497 = vunpack.c.l.b16 %v340
    %v498 = vunpack.c.h.b16 %v340
    %v499 = vunpack.c.l.b16 %v341
    %v500 = vunpack.c.h.b16 %v341
    %v501 = vunpack.c.l.b16 %v342
    %v502 = vunpack.c.h.b16 %v342
    %v503 = vunpack.c.l.b16 %v343
    %v504 = vunpack.c.h.b16 %v343
    %v505 = vunpack.c.l.b16 %v344
    %v506 = vunpack.c.h.b16 %v344
    %v507 = vunpack.c.l.b16 %v345
    %v508 = vunpack.c.h.b16 %v345
    %v509 = vunpack.c.l.b16 %v346
    %v510 = vunpack.c.h.b16 %v346
    %v511 = vunpack.c.l.b16 %v347
    %v512 = vunpack.c.h.b16 %v347
    %v513 = vunpack.c.l.b16 %v348
    %v514 = vunpack.c.h.b16 %v348
    %v515 = vunpack.c.l.b16 %v349
    %v516 = vunpack.c.h.b16 %v349
    %v517 = vunpack.c.l.b16 %v350
    %v518 = vunpack.c.h.b16 %v350
    %v519 = vunpack.c.l.b16 %v351
    %v520 = vunpack.c.h.b16 %v351
    %v521 = vunpack.c.l.b16 %v352
    %v522 = vunpack.c.h.b16 %v352
    %v523 = vunpack.c.l.b16 %v353
    %v524 = vunpack.c.h.b16 %v353
    %v525 = vunpack.c.l.b16 %v354
    %v526 = vunpack.c.h.b16 %v354
    %v527 = vunpack.c.l.b16 %v355
    %v528 = vunpack.c.h.b16 %v355
    %v529 = vunpack.c.l.b16 %v356
    %v530 = vunpack.c.h.b16 %v356
    %v531 = vunpack.c.l.b16 %v357
    %v532 = vunpack.c.h.b16 %v357
    %v533 = vunpack.c.l.b16 %v358
    %v534 = vunpack.c.h.b16 %v358
    %v535 = vunpack.c.l.b16 %v359
    %v536 = vunpack.c.h.b16 %v359
    %v537 = vunpack.c.l.b16 %v360
    %v538 = vunpack.c.h.b16 %v360
    %v539 = vunpack.c.l.b16 %v361
    %v540 = vunpack.c.h.b16 %v361
    %v541 = vunpack.c.l.b16 %v362
    %v542 = vunpack.c.h.b16 %v362
    %v543 = vunpack.c.l.b16 %v363
    %v544 = vunpack.c.h.b16 %v363
    %v545 = vunpack.c.l.b16 %v364
    %v546 = vunpack.c.h.b16 %v364
    %v547 = vunpack.c.l.b16 %v365
    %v548 = vunpack.c.h.b16 %v365
    %v549 = vunpack.c.l.b16 %v366
    %v550 = vunpack.c.h.b16 %v366
    %v551 = vunpack.c.l.b16 %v367
    %v552 = vunpack.c.h.b16 %v367
    %v553 = vunpack.c.l.b16 %v368
    %v554 = vunpack.c.h.b16 %v368
    %v555 = vunpack.c.l.b16 %v369
    %v556 = vunpack.c.h.b16 %v369
    %v557 = vunpack.c.l.b16 %v370
    %v558 = vunpack.c.h.b16 %v370
    %v559 = vunpack.c.l.b16 %v371
    %v560 = vunpack.c.h.b16 %v371
    %v561 = vunpack.c.l.b16 %v372
    %v562 = vunpack.c.h.b16 %v372
    %v563 = vunpack.c.l.b16 %v373
    %v564 = vunpack.c.h.b16 %v373
    %v565 = vunpack.c.l.b16 %v374
    %v566 = vunpack.c.h.b16 %v374
    %v567 = vunpack.c.l.b16 %v375
    %v568 = vunpack.c.h.b16 %v375
    %v569 = vunpack.c.l.b16 %v376
    %v570 = vunpack.c.h.b16 %v376
    %v571 = vunpack.c.l.b16 %v377
    %v572 = vunpack.c.h.b16 %v377
    %v573 = vunpack.c.l.b16 %v378
    %v574 = vunpack.c.h.b16 %v378
    %v575 = vunpack.c.l.b16 %v379
    %v576 = vunpack.c.h.b16 %v379
    %v577 = vunpack.c.l.b16 %v380
    %v578 = vunpack.c.h.b16 %v380
    %v579 = vunpack.c.l.b16 %v381
    %v580 = vunpack.c.h.b16 %v381
    %v581 = vunpack.c.l.b16 %v382
    %v582 = vunpack.c.h.b16 %v382
    %v583 = vunpack.c.l.b16 %v383
    %v584 = vunpack.c.h.b16 %v383
    %v585 = vunpack.c.l.b16 %v384
    %v586 = vunpack.c.h.b16 %v384
    %v587 = vunpack.c.l.b16 %v385
    %v588 = vunpack.c.h.b16 %v385
    %v589 = vunpack.c.l.b16 %v386
    %v590 = vunpack.c.h.b16 %v386
    %v591 = vunpack.c.l.b16 %v387
    %v592 = vunpack.c.h.b16 %v387
    %v593 = vunpack.c.l.b16 %v388
    %v594 = vunpack.c.h.b16 %v388
    %v595 = vunpack.c.l.b16 %v389
    %v596 = vunpack.c.h.b16 %v389
    %v597 = vunpack.c.l.b16 %v390
    %v598 = vunpack.c.h.b16 %v390
    %v599 = vunpack.c.l.b16 %v391
    %v600 = vunpack.c.h.b16 %v391
    %v601 = vunpack.c.l.b16 %v392
    %v602 = vunpack.c.h.b16 %v392
    %v603 = vunpack.c.l.b16 %v393
    %v604 = vunpack.c.h.b16 %v393
    %v605 = vunpack.c.l.b16 %v394
    %v606 = vunpack.c.h.b16 %v394
    %v607 = vunpack.c.l.b16 %v395
    %v608 = vunpack.c.h.b16 %v395
    %v609 = vunpack.c.l.b16 %v396
    %v610 = vunpack.c.h.b16 %v396
    %v611 = vpack.c.b16 %v487, %v483
    %v612 = vpack.c.b16 %v488, %v484
    %v613 = vpack.c.b16 %v489, %v485
    %v614 = vpack.c.b16 %v490, %v486
    %v615 = vpack.c.b16 %v495, %v491
    %v616 = vpack.c.b16 %v496, %v492
    %v617 = vpack.c.b16 %v497, %v493
    %v618 = vpack.c.b16 %v498, %v494
    %v619 = vpack.c.b16 %v503, %v499
    %v620 = vpack.c.b16 %v504, %v500
    %v621 = vpack.c.b16 %v505, %v501
    %v622 = vpack.c.b16 %v506, %v502
    %v623 = vpack.c.b16 %v511, %v507
    %v624 = vpack.c.b16 %v512, %v508
    %v625 = vpack.c.b16 %v513, %v509
    %v626 = vpack.c.b16 %v514, %v510
    %v627 = vpack.c.b16 %v519, %v515
    %v628 = vpack.c.b16 %v520, %v516
    %v629 = vpack.c.b16 %v521, %v517
    %v630 = vpack.c.b16 %v522, %v518
    %v631 = vpack.c.b16 %v527, %v523
    %v632 = vpack.c.b16 %v528, %v524
    %v633 = vpack.c.b16 %v529, %v525
    %v634 = vpack.c.b16 %v530, %v526
    %v635 = vpack.c.b16 %v535, %v531
    %v636 = vpack.c.b16 %v536, %v532
    %v637 = vpack.c.b16 %v537, %v533
    %v638 = vpack.c.b16 %v538, %v534
    %v639 = vpack.c.b16 %v543, %v539
    %v640 = vpack.c.b16 %v544, %v540
    %v641 = vpack.c.b16 %v545, %v541
    %v642 = vpack.c.b16 %v546, %v542
    %v643 = vpack.c.b16 %v551, %v547
    %v644 = vpack.c.b16 %v552, %v548
    %v645 = vpack.c.b16 %v553, %v549
    %v646 = vpack.c.b16 %v554, %v550
    %v647 = vpack.c.b16 %v559, %v555
    %v648 = vpack.c.b16 %v560, %v556
    %v649 = vpack.c.b16 %v561, %v557
    %v650 = vpack.c.b16 %v562, %v558
    %v651 = vpack.c.b16 %v567, %v563
    %v652 = vpack.c.b16 %v568, %v564
    %v653 = vpack.c.b16 %v569, %v565
    %v654 = vpack.c.b16 %v570, %v566
    %v655 = vpack.c.b16 %v575, %v571
    %v656 = vpack.c.b16 %v576, %v572
    %v657 = vpack.c.b16 %v577, %v573
    %v658 = vpack.c.b16 %v578, %v574
    %v659 = vpack.c.b16 %v583, %v579
    %v660 = vpack.c.b16 %v584, %v580
    %v661 = vpack.c.b16 %v585, %v581
    %v662 = vpack.c.b16 %v586, %v582
    %v663 = vpack.c.b16 %v591, %v587
    %v664 = vpack.c.b16 %v592, %v588
    %v665 = vpack.c.b16 %v593, %v589
    %v666 = vpack.c.b16 %v594, %v590
    %v667 = vpack.c.b16 %v599, %v595
    %v668 = vpack.c.b16 %v600, %v596
    %v669 = vpack.c.b16 %v601, %v597
    %v670 = vpack.c.b16 %v602, %v598
    %v671 = vpack.c.b16 %v607, %v603
    %v672 = vpack.c.b16 %v608, %v604
    %v673 = vpack.c.b16 %v609, %v605
    %v674 = vpack.c.b16 %v610, %v606
    %739 = vmatprep.subr.bf16.mxu0 %v612
    %740 = vmatpush1.bf16.msra.mxu0 %v611
    %741 = vmatprep.subr.bf16.mxu0 %v616
    %742 = vmatpush1.bf16.msra.mxu0 %v615
    %743 = vmatprep.subr.bf16.mxu0 %v620
    %744 = vmatpush1.bf16.msra.mxu0 %v619
    %745 = vmatprep.subr.bf16.mxu0 %v624
    %746 = vmatpush1.bf16.msra.mxu0 %v623
    %747 = vmatprep.subr.bf16.mxu0 %v628
    %748 = vmatpush1.bf16.msra.mxu0 %v627
    %749 = vmatprep.subr.bf16.mxu0 %v632
    %750 = vmatpush1.bf16.msra.mxu0 %v631
    %751 = vmatprep.subr.bf16.mxu0 %v636
    %752 = vmatpush1.bf16.msra.mxu0 %v635
    %753 = vmatprep.subr.bf16.mxu0 %v640
    %754 = vmatpush1.bf16.msra.mxu0 %v639
    %755 = vmatprep.subr.bf16.mxu0 %v644
    %756 = vmatpush1.bf16.msra.mxu0 %v643
    %757 = vmatprep.subr.bf16.mxu0 %v648
    %758 = vmatpush1.bf16.msra.mxu0 %v647
    %759 = vmatprep.subr.bf16.mxu0 %v652
    %760 = vmatpush1.bf16.msra.mxu0 %v651
    %761 = vmatprep.subr.bf16.mxu0 %v656
    %762 = vmatpush1.bf16.msra.mxu0 %v655
    %763 = vmatprep.subr.bf16.mxu0 %v660
    %764 = vmatpush1.bf16.msra.mxu0 %v659
    %765 = vmatprep.subr.bf16.mxu0 %v664
    %766 = vmatpush1.bf16.msra.mxu0 %v663
    %767 = vmatprep.subr.bf16.mxu0 %v668
    %768 = vmatpush1.bf16.msra.mxu0 %v667
    %769 = vmatprep.subr.bf16.mxu0 %v672
    %770 = vmatpush1.bf16.msra.mxu0 %v671
    %771 = vmatprep.mubr.bf16.mxu0 %v332
    %772 = vmatmul.mubr.bf16.gmra.mrb[0].mxu0 %v331
    %v773 = vpop.f32.mrb[0].mxu0
    %v774 = vadd.f32 %v402, %v773
    %v775 = vpop.f32.mrb[0].mxu0
    %v776 = vadd.f32 %v406, %v775
    %v777 = vpop.f32.mrb[0].mxu0
    %v778 = vadd.f32 %v402, %v777
    %v779 = vpop.f32.mrb[0].mxu0
    %v780 = vadd.f32 %v406, %v779
    %781 = vdwg.mxu0
    %782 = vmatprep.subr.bf16.mxu0 %v614
    %783 = vmatpush1.bf16.msra.mxu0 %v613
    %784 = vmatprep.subr.bf16.mxu0 %v618
    %785 = vmatpush1.bf16.msra.mxu0 %v617
    %786 = vmatprep.subr.bf16.mxu0 %v622
    %787 = vmatpush1.bf16.msra.mxu0 %v621
    %788 = vmatprep.subr.bf16.mxu0 %v626
    %789 = vmatpush1.bf16.msra.mxu0 %v625
    %790 = vmatprep.subr.bf16.mxu0 %v630
    %791 = vmatpush1.bf16.msra.mxu0 %v629
    %792 = vmatprep.subr.bf16.mxu0 %v634
    %793 = vmatpush1.bf16.msra.mxu0 %v633
    %794 = vmatprep.subr.bf16.mxu0 %v638
    %795 = vmatpush1.bf16.msra.mxu0 %v637
    %796 = vmatprep.subr.bf16.mxu0 %v642
    %797 = vmatpush1.bf16.msra.mxu0 %v641
    %798 = vmatprep.subr.bf16.mxu0 %v646
    %799 = vmatpush1.bf16.msra.mxu0 %v645
    %800 = vmatprep.subr.bf16.mxu0 %v650
    %801 = vmatpush1.bf16.msra.mxu0 %v649
    %802 = vmatprep.subr.bf16.mxu0 %v654
    %803 = vmatpush1.bf16.msra.mxu0 %v653
    %804 = vmatprep.subr.bf16.mxu0 %v658
    %805 = vmatpush1.bf16.msra.mxu0 %v657
    %806 = vmatprep.subr.bf16.mxu0 %v662
    %807 = vmatpush1.bf16.msra.mxu0 %v661
    %808 = vmatprep.subr.bf16.mxu0 %v666
    %809 = vmatpush1.bf16.msra.mxu0 %v665
    %810 = vmatprep.subr.bf16.mxu0 %v670
    %811 = vmatpush1.bf16.msra.mxu0 %v669
    %812 = vmatprep.subr.bf16.mxu0 %v674
    %813 = vmatpush1.bf16.msra.mxu0 %v673
    %814 = vmatprep.mubr.bf16.mxu0 %v332
    %815 = vmatmul.mubr.bf16.gmra.mrb[0].mxu0 %v331
    %v816 = vpop.f32.mrb[0].mxu0
    %v817 = vadd.f32 %v410, %v816
    %v818 = vpop.f32.mrb[0].mxu0
    %v819 = vadd.f32 %v414, %v818
    %v820 = vpop.f32.mrb[0].mxu0
    %v821 = vadd.f32 %v410, %v820
    %v822 = vpop.f32.mrb[0].mxu0
    %v823 = vadd.f32 %v414, %v822
    %824 = vdwg.mxu0
    %v825 = vmax.f32 %v774, 0.0
    %v826 = vmax.f32 %v776, 0.0
    %v827 = vmax.f32 %v817, 0.0
    %v828 = vmax.f32 %v819, 0.0
    %v829 = vmax.f32 %v778, 0.0
    %v830 = vmax.f32 %v780, 0.0
    %v831 = vmax.f32 %v821, 0.0
    %v832 = vmax.f32 %v823, 0.0
    %v833 = vpack.c.bf16 %v829, %v825
    %v834 = vpack.c.bf16 %v830, %v826
    %v835 = vpack.c.bf16 %v831, %v827
    %v836 = vpack.c.bf16 %v832, %v828
    %v837 = vld [vmem:[#allocation13] sm:$0xff]
    %v838 = vld [vmem:[#allocation13 + $0x8] sm:$0xff]
    %v839 = vld [vmem:[#allocation13 + $0x10] sm:$0xff]
    %v840 = vld [vmem:[#allocation13 + $0x18] sm:$0xff]
    %v841 = vld [vmem:[#allocation13 + $0x20] sm:$0xff]
    %v842 = vld [vmem:[#allocation13 + $0x28] sm:$0xff]
    %v843 = vld [vmem:[#allocation13 + $0x30] sm:$0xff]
    %v844 = vld [vmem:[#allocation13 + $0x38] sm:$0xff]
    %v845 = vld [vmem:[#allocation13 + $0x40] sm:$0xff]
    %v846 = vld [vmem:[#allocation13 + $0x48] sm:$0xff]
    %v847 = vld [vmem:[#allocation13 + $0x50] sm:$0xff]
    %v848 = vld [vmem:[#allocation13 + $0x58] sm:$0xff]
    %v849 = vld [vmem:[#allocation13 + $0x60] sm:$0xff]
    %v850 = vld [vmem:[#allocation13 + $0x68] sm:$0xff]
    %v851 = vld [vmem:[#allocation13 + $0x70] sm:$0xff]
    %v852 = vld [vmem:[#allocation13 + $0x78] sm:$0xff]
    %v853 = vld [vmem:[#allocation13 + $0x80] sm:$0xff]
    %v854 = vld [vmem:[#allocation13 + $0x88] sm:$0xff]
    %v855 = vld [vmem:[#allocation13 + $0x90] sm:$0xff]
    %v856 = vld [vmem:[#allocation13 + $0x98] sm:$0xff]
    %v857 = vld [vmem:[#allocation13 + $0xa0] sm:$0xff]
    %v858 = vld [vmem:[#allocation13 + $0xa8] sm:$0xff]
    %v859 = vld [vmem:[#allocation13 + $0xb0] sm:$0xff]
    %v860 = vld [vmem:[#allocation13 + $0xb8] sm:$0xff]
    %v861 = vld [vmem:[#allocation13 + $0xc0] sm:$0xff]
    %v862 = vld [vmem:[#allocation13 + $0xc8] sm:$0xff]
    %v863 = vld [vmem:[#allocation13 + $0xd0] sm:$0xff]
    %v864 = vld [vmem:[#allocation13 + $0xd8] sm:$0xff]
    %v865 = vld [vmem:[#allocation13 + $0xe0] sm:$0xff]
    %v866 = vld [vmem:[#allocation13 + $0xe8] sm:$0xff]
    %v867 = vld [vmem:[#allocation13 + $0xf0] sm:$0xff]
    %v868 = vld [vmem:[#allocation13 + $0xf8] sm:$0xff]
    %v869 = vld [vmem:[#allocation13 + $0x100] sm:$0xff]
    %v870 = vld [vmem:[#allocation13 + $0x108] sm:$0xff]
    %v871 = vld [vmem:[#allocation13 + $0x110] sm:$0xff]
    %v872 = vld [vmem:[#allocation13 + $0x118] sm:$0xff]
    %v873 = vld [vmem:[#allocation13 + $0x120] sm:$0xff]
    %v874 = vld [vmem:[#allocation13 + $0x128] sm:$0xff]
    %v875 = vld [vmem:[#allocation13 + $0x130] sm:$0xff]
    %v876 = vld [vmem:[#allocation13 + $0x138] sm:$0xff]
    %v877 = vld [vmem:[#allocation13 + $0x140] sm:$0xff]
    %v878 = vld [vmem:[#allocation13 + $0x148] sm:$0xff]
    %v879 = vld [vmem:[#allocation13 + $0x150] sm:$0xff]
    %v880 = vld [vmem:[#allocation13 + $0x158] sm:$0xff]
    %v881 = vld [vmem:[#allocation13 + $0x160] sm:$0xff]
    %v882 = vld [vmem:[#allocation13 + $0x168] sm:$0xff]
    %v883 = vld [vmem:[#allocation13 + $0x170] sm:$0xff]
    %v884 = vld [vmem:[#allocation13 + $0x178] sm:$0xff]
    %v885 = vld [vmem:[#allocation13 + $0x180] sm:$0xff]
    %v886 = vld [vmem:[#allocation13 + $0x188] sm:$0xff]
    %v887 = vld [vmem:[#allocation13 + $0x190] sm:$0xff]
    %v888 = vld [vmem:[#allocation13 + $0x198] sm:$0xff]
    %v889 = vld [vmem:[#allocation13 + $0x1a0] sm:$0xff]
    %v890 = vld [vmem:[#allocation13 + $0x1a8] sm:$0xff]
    %v891 = vld [vmem:[#allocation13 + $0x1b0] sm:$0xff]
    %v892 = vld [vmem:[#allocation13 + $0x1b8] sm:$0xff]
    %v893 = vld [vmem:[#allocation13 + $0x1c0] sm:$0xff]
    %v894 = vld [vmem:[#allocation13 + $0x1c8] sm:$0xff]
    %v895 = vld [vmem:[#allocation13 + $0x1d0] sm:$0xff]
    %v896 = vld [vmem:[#allocation13 + $0x1d8] sm:$0xff]
    %v897 = vld [vmem:[#allocation13 + $0x1e0] sm:$0xff]
    %v898 = vld [vmem:[#allocation13 + $0x1e8] sm:$0xff]
    %v899 = vld [vmem:[#allocation13 + $0x1f0] sm:$0xff]
    %v900 = vld [vmem:[#allocation13 + $0x1f8] sm:$0xff]
    %v901 = vld [vmem:[#allocation13 + $0x200] sm:$0xff]
    %v902 = vld [vmem:[#allocation13 + $0x208] sm:$0xff]
    %v903 = vld [vmem:[#allocation13 + $0x210] sm:$0xff]
    %v904 = vld [vmem:[#allocation13 + $0x218] sm:$0xff]
    %v905 = vld [vmem:[#allocation13 + $0x220] sm:$0xff]
    %v906 = vld [vmem:[#allocation13 + $0x228] sm:$0xff]
    %v907 = vld [vmem:[#allocation13 + $0x230] sm:$0xff]
    %v908 = vld [vmem:[#allocation13 + $0x238] sm:$0xff]
    %v909 = vld [vmem:[#allocation13 + $0x240] sm:$0xff]
    %v910 = vld [vmem:[#allocation13 + $0x248] sm:$0xff]
    %v911 = vld [vmem:[#allocation13 + $0x250] sm:$0xff]
    %v912 = vld [vmem:[#allocation13 + $0x258] sm:$0xff]
    %v913 = vld [vmem:[#allocation13 + $0x260] sm:$0xff]
    %v914 = vld [vmem:[#allocation13 + $0x268] sm:$0xff]
    %v915 = vld [vmem:[#allocation13 + $0x270] sm:$0xff]
    %v916 = vld [vmem:[#allocation13 + $0x278] sm:$0xff]
    %v917 = vld [vmem:[#allocation13 + $0x280] sm:$0xff]
    %v918 = vld [vmem:[#allocation13 + $0x288] sm:$0xff]
    %v919 = vld [vmem:[#allocation13 + $0x290] sm:$0xff]
    %v920 = vld [vmem:[#allocation13 + $0x298] sm:$0xff]
    %v921 = vld [vmem:[#allocation13 + $0x2a0] sm:$0xff]
    %v922 = vld [vmem:[#allocation13 + $0x2a8] sm:$0xff]
    %v923 = vld [vmem:[#allocation13 + $0x2b0] sm:$0xff]
    %v924 = vld [vmem:[#allocation13 + $0x2b8] sm:$0xff]
    %v925 = vld [vmem:[#allocation13 + $0x2c0] sm:$0xff]
    %v926 = vld [vmem:[#allocation13 + $0x2c8] sm:$0xff]
    %v927 = vld [vmem:[#allocation13 + $0x2d0] sm:$0xff]
    %v928 = vld [vmem:[#allocation13 + $0x2d8] sm:$0xff]
    %v929 = vld [vmem:[#allocation13 + $0x2e0] sm:$0xff]
    %v930 = vld [vmem:[#allocation13 + $0x2e8] sm:$0xff]
    %v931 = vld [vmem:[#allocation13 + $0x2f0] sm:$0xff]
    %v932 = vld [vmem:[#allocation13 + $0x2f8] sm:$0xff]
    %v933 = vld [vmem:[#allocation13 + $0x300] sm:$0xff]
    %v934 = vld [vmem:[#allocation13 + $0x308] sm:$0xff]
    %v935 = vld [vmem:[#allocation13 + $0x310] sm:$0xff]
    %v936 = vld [vmem:[#allocation13 + $0x318] sm:$0xff]
    %v937 = vld [vmem:[#allocation13 + $0x320] sm:$0xff]
    %v938 = vld [vmem:[#allocation13 + $0x328] sm:$0xff]
    %v939 = vld [vmem:[#allocation13 + $0x330] sm:$0xff]
    %v940 = vld [vmem:[#allocation13 + $0x338] sm:$0xff]
    %v941 = vld [vmem:[#allocation13 + $0x340] sm:$0xff]
    %v942 = vld [vmem:[#allocation13 + $0x348] sm:$0xff]
    %v943 = vld [vmem:[#allocation13 + $0x350] sm:$0xff]
    %v944 = vld [vmem:[#allocation13 + $0x358] sm:$0xff]
    %v945 = vld [vmem:[#allocation13 + $0x360] sm:$0xff]
    %v946 = vld [vmem:[#allocation13 + $0x368] sm:$0xff]
    %v947 = vld [vmem:[#allocation13 + $0x370] sm:$0xff]
    %v948 = vld [vmem:[#allocation13 + $0x378] sm:$0xff]
    %v949 = vld [vmem:[#allocation13 + $0x380] sm:$0xff]
    %v950 = vld [vmem:[#allocation13 + $0x388] sm:$0xff]
    %v951 = vld [vmem:[#allocation13 + $0x390] sm:$0xff]
    %v952 = vld [vmem:[#allocation13 + $0x398] sm:$0xff]
    %v953 = vld [vmem:[#allocation13 + $0x3a0] sm:$0xff]
    %v954 = vld [vmem:[#allocation13 + $0x3a8] sm:$0xff]
    %v955 = vld [vmem:[#allocation13 + $0x3b0] sm:$0xff]
    %v956 = vld [vmem:[#allocation13 + $0x3b8] sm:$0xff]
    %v957 = vld [vmem:[#allocation13 + $0x3c0] sm:$0xff]
    %v958 = vld [vmem:[#allocation13 + $0x3c8] sm:$0xff]
    %v959 = vld [vmem:[#allocation13 + $0x3d0] sm:$0xff]
    %v960 = vld [vmem:[#allocation13 + $0x3d8] sm:$0xff]
    %v961 = vld [vmem:[#allocation13 + $0x3e0] sm:$0xff]
    %v962 = vld [vmem:[#allocation13 + $0x3e8] sm:$0xff]
    %v963 = vld [vmem:[#allocation13 + $0x3f0] sm:$0xff]
    %v964 = vld [vmem:[#allocation13 + $0x3f8] sm:$0xff]
    %v965 = vld [vmem:[#allocation13 + $0x400] sm:$0xff]
    %v966 = vld [vmem:[#allocation13 + $0x408] sm:$0xff]
    %v967 = vld [vmem:[#allocation13 + $0x410] sm:$0xff]
    %v968 = vld [vmem:[#allocation13 + $0x418] sm:$0xff]
    %v969 = vld [vmem:[#allocation13 + $0x420] sm:$0xff]
    %v970 = vld [vmem:[#allocation13 + $0x428] sm:$0xff]
    %v971 = vld [vmem:[#allocation13 + $0x430] sm:$0xff]
    %v972 = vld [vmem:[#allocation13 + $0x438] sm:$0xff]
    %v973 = vld [vmem:[#allocation13 + $0x440] sm:$0xff]
    %v974 = vld [vmem:[#allocation13 + $0x448] sm:$0xff]
    %v975 = vld [vmem:[#allocation13 + $0x450] sm:$0xff]
    %v976 = vld [vmem:[#allocation13 + $0x458] sm:$0xff]
    %v977 = vld [vmem:[#allocation13 + $0x460] sm:$0xff]
    %v978 = vld [vmem:[#allocation13 + $0x468] sm:$0xff]
    %v979 = vld [vmem:[#allocation13 + $0x470] sm:$0xff]
    %v980 = vld [vmem:[#allocation13 + $0x478] sm:$0xff]
    %v981 = vld [vmem:[#allocation13 + $0x480] sm:$0xff]
    %v982 = vld [vmem:[#allocation13 + $0x488] sm:$0xff]
    %v983 = vld [vmem:[#allocation13 + $0x490] sm:$0xff]
    %v984 = vld [vmem:[#allocation13 + $0x498] sm:$0xff]
    %v985 = vld [vmem:[#allocation13 + $0x4a0] sm:$0xff]
    %v986 = vld [vmem:[#allocation13 + $0x4a8] sm:$0xff]
    %v987 = vld [vmem:[#allocation13 + $0x4b0] sm:$0xff]
    %v988 = vld [vmem:[#allocation13 + $0x4b8] sm:$0xff]
    %v989 = vld [vmem:[#allocation13 + $0x4c0] sm:$0xff]
    %v990 = vld [vmem:[#allocation13 + $0x4c8] sm:$0xff]
    %v991 = vld [vmem:[#allocation13 + $0x4d0] sm:$0xff]
    %v992 = vld [vmem:[#allocation13 + $0x4d8] sm:$0xff]
    %v993 = vld [vmem:[#allocation13 + $0x4e0] sm:$0xff]
    %v994 = vld [vmem:[#allocation13 + $0x4e8] sm:$0xff]
    %v995 = vld [vmem:[#allocation13 + $0x4f0] sm:$0xff]
    %v996 = vld [vmem:[#allocation13 + $0x4f8] sm:$0xff]
    %v997 = vld [vmem:[#allocation13 + $0x500] sm:$0xff]
    %v998 = vld [vmem:[#allocation13 + $0x508] sm:$0xff]
    %v999 = vld [vmem:[#allocation13 + $0x510] sm:$0xff]
    %v1000 = vld [vmem:[#allocation13 + $0x518] sm:$0xff]
    %v1001 = vld [vmem:[#allocation13 + $0x520] sm:$0xff]
    %v1002 = vld [vmem:[#allocation13 + $0x528] sm:$0xff]
    %v1003 = vld [vmem:[#allocation13 + $0x530] sm:$0xff]
    %v1004 = vld [vmem:[#allocation13 + $0x538] sm:$0xff]
    %v1005 = vld [vmem:[#allocation13 + $0x540] sm:$0xff]
    %v1006 = vld [vmem:[#allocation13 + $0x548] sm:$0xff]
    %v1007 = vld [vmem:[#allocation13 + $0x550] sm:$0xff]
    %v1008 = vld [vmem:[#allocation13 + $0x558] sm:$0xff]
    %v1009 = vld [vmem:[#allocation13 + $0x560] sm:$0xff]
    %v1010 = vld [vmem:[#allocation13 + $0x568] sm:$0xff]
    %v1011 = vld [vmem:[#allocation13 + $0x570] sm:$0xff]
    %v1012 = vld [vmem:[#allocation13 + $0x578] sm:$0xff]
    %v1013 = vld [vmem:[#allocation13 + $0x580] sm:$0xff]
    %v1014 = vld [vmem:[#allocation13 + $0x588] sm:$0xff]
    %v1015 = vld [vmem:[#allocation13 + $0x590] sm:$0xff]
    %v1016 = vld [vmem:[#allocation13 + $0x598] sm:$0xff]
    %v1017 = vld [vmem:[#allocation13 + $0x5a0] sm:$0xff]
    %v1018 = vld [vmem:[#allocation13 + $0x5a8] sm:$0xff]
    %v1019 = vld [vmem:[#allocation13 + $0x5b0] sm:$0xff]
    %v1020 = vld [vmem:[#allocation13 + $0x5b8] sm:$0xff]
    %v1021 = vld [vmem:[#allocation13 + $0x5c0] sm:$0xff]
    %v1022 = vld [vmem:[#allocation13 + $0x5c8] sm:$0xff]
    %v1023 = vld [vmem:[#allocation13 + $0x5d0] sm:$0xff]
    %v1024 = vld [vmem:[#allocation13 + $0x5d8] sm:$0xff]
    %v1025 = vld [vmem:[#allocation13 + $0x5e0] sm:$0xff]
    %v1026 = vld [vmem:[#allocation13 + $0x5e8] sm:$0xff]
    %v1027 = vld [vmem:[#allocation13 + $0x5f0] sm:$0xff]
    %v1028 = vld [vmem:[#allocation13 + $0x5f8] sm:$0xff]
    %v1029 = vld [vmem:[#allocation13 + $0x600] sm:$0xff]
    %v1030 = vld [vmem:[#allocation13 + $0x608] sm:$0xff]
    %v1031 = vld [vmem:[#allocation13 + $0x610] sm:$0xff]
    %v1032 = vld [vmem:[#allocation13 + $0x618] sm:$0xff]
    %v1033 = vld [vmem:[#allocation13 + $0x620] sm:$0xff]
    %v1034 = vld [vmem:[#allocation13 + $0x628] sm:$0xff]
    %v1035 = vld [vmem:[#allocation13 + $0x630] sm:$0xff]
    %v1036 = vld [vmem:[#allocation13 + $0x638] sm:$0xff]
    %v1037 = vld [vmem:[#allocation13 + $0x640] sm:$0xff]
    %v1038 = vld [vmem:[#allocation13 + $0x648] sm:$0xff]
    %v1039 = vld [vmem:[#allocation13 + $0x650] sm:$0xff]
    %v1040 = vld [vmem:[#allocation13 + $0x658] sm:$0xff]
    %v1041 = vld [vmem:[#allocation13 + $0x660] sm:$0xff]
    %v1042 = vld [vmem:[#allocation13 + $0x668] sm:$0xff]
    %v1043 = vld [vmem:[#allocation13 + $0x670] sm:$0xff]
    %v1044 = vld [vmem:[#allocation13 + $0x678] sm:$0xff]
    %v1045 = vld [vmem:[#allocation13 + $0x680] sm:$0xff]
    %v1046 = vld [vmem:[#allocation13 + $0x688] sm:$0xff]
    %v1047 = vld [vmem:[#allocation13 + $0x690] sm:$0xff]
    %v1048 = vld [vmem:[#allocation13 + $0x698] sm:$0xff]
    %v1049 = vld [vmem:[#allocation13 + $0x6a0] sm:$0xff]
    %v1050 = vld [vmem:[#allocation13 + $0x6a8] sm:$0xff]
    %v1051 = vld [vmem:[#allocation13 + $0x6b0] sm:$0xff]
    %v1052 = vld [vmem:[#allocation13 + $0x6b8] sm:$0xff]
    %v1053 = vld [vmem:[#allocation13 + $0x6c0] sm:$0xff]
    %v1054 = vld [vmem:[#allocation13 + $0x6c8] sm:$0xff]
    %v1055 = vld [vmem:[#allocation13 + $0x6d0] sm:$0xff]
    %v1056 = vld [vmem:[#allocation13 + $0x6d8] sm:$0xff]
    %v1057 = vld [vmem:[#allocation13 + $0x6e0] sm:$0xff]
    %v1058 = vld [vmem:[#allocation13 + $0x6e8] sm:$0xff]
    %v1059 = vld [vmem:[#allocation13 + $0x6f0] sm:$0xff]
    %v1060 = vld [vmem:[#allocation13 + $0x6f8] sm:$0xff]
    %v1061 = vld [vmem:[#allocation13 + $0x700] sm:$0xff]
    %v1062 = vld [vmem:[#allocation13 + $0x708] sm:$0xff]
    %v1063 = vld [vmem:[#allocation13 + $0x710] sm:$0xff]
    %v1064 = vld [vmem:[#allocation13 + $0x718] sm:$0xff]
    %v1065 = vld [vmem:[#allocation13 + $0x720] sm:$0xff]
    %v1066 = vld [vmem:[#allocation13 + $0x728] sm:$0xff]
    %v1067 = vld [vmem:[#allocation13 + $0x730] sm:$0xff]
    %v1068 = vld [vmem:[#allocation13 + $0x738] sm:$0xff]
    %v1069 = vld [vmem:[#allocation13 + $0x740] sm:$0xff]
    %v1070 = vld [vmem:[#allocation13 + $0x748] sm:$0xff]
    %v1071 = vld [vmem:[#allocation13 + $0x750] sm:$0xff]
    %v1072 = vld [vmem:[#allocation13 + $0x758] sm:$0xff]
    %v1073 = vld [vmem:[#allocation13 + $0x760] sm:$0xff]
    %v1074 = vld [vmem:[#allocation13 + $0x768] sm:$0xff]
    %v1075 = vld [vmem:[#allocation13 + $0x770] sm:$0xff]
    %v1076 = vld [vmem:[#allocation13 + $0x778] sm:$0xff]
    %v1077 = vld [vmem:[#allocation13 + $0x780] sm:$0xff]
    %v1078 = vld [vmem:[#allocation13 + $0x788] sm:$0xff]
    %v1079 = vld [vmem:[#allocation13 + $0x790] sm:$0xff]
    %v1080 = vld [vmem:[#allocation13 + $0x798] sm:$0xff]
    %v1081 = vld [vmem:[#allocation13 + $0x7a0] sm:$0xff]
    %v1082 = vld [vmem:[#allocation13 + $0x7a8] sm:$0xff]
    %v1083 = vld [vmem:[#allocation13 + $0x7b0] sm:$0xff]
    %v1084 = vld [vmem:[#allocation13 + $0x7b8] sm:$0xff]
    %v1085 = vld [vmem:[#allocation13 + $0x7c0] sm:$0xff]
    %v1086 = vld [vmem:[#allocation13 + $0x7c8] sm:$0xff]
    %v1087 = vld [vmem:[#allocation13 + $0x7d0] sm:$0xff]
    %v1088 = vld [vmem:[#allocation13 + $0x7d8] sm:$0xff]
    %v1089 = vld [vmem:[#allocation13 + $0x7e0] sm:$0xff]
    %v1090 = vld [vmem:[#allocation13 + $0x7e8] sm:$0xff]
    %v1091 = vld [vmem:[#allocation13 + $0x7f0] sm:$0xff]
    %v1092 = vld [vmem:[#allocation13 + $0x7f8] sm:$0xff]
    %v1093 = vld [vmem:[#allocation15] sm:$0xff]
    %v1095 = vlaneseq
    %v1096 = vshrl.u32 %v1095, 7
    %v1097 = vsub.s32 0, %v1096
    %v1098 = vrot.slane %v1093, %v1097
    %v1099 = vlaneseq
    %v1100 = vshrl.u32 %v1099, 7
    %v1101 = vsub.s32 1, %v1100
    %v1102 = vrot.slane %v1093, %v1101
    %v1103 = vlaneseq
    %v1104 = vshrl.u32 %v1103, 7
    %v1105 = vsub.s32 2, %v1104
    %v1106 = vrot.slane %v1093, %v1105
    %v1107 = vlaneseq
    %v1108 = vshrl.u32 %v1107, 7
    %v1109 = vsub.s32 3, %v1108
    %v1110 = vrot.slane %v1093, %v1109
    %v1111 = vlaneseq
    %v1112 = vshrl.u32 %v1111, 7
    %v1113 = vsub.s32 4, %v1112
    %v1114 = vrot.slane %v1093, %v1113
    %v1115 = vlaneseq
    %v1116 = vshrl.u32 %v1115, 7
    %v1117 = vsub.s32 5, %v1116
    %v1118 = vrot.slane %v1093, %v1117
    %v1119 = vlaneseq
    %v1120 = vshrl.u32 %v1119, 7
    %v1121 = vsub.s32 6, %v1120
    %v1122 = vrot.slane %v1093, %v1121
    %v1123 = vlaneseq
    %v1124 = vshrl.u32 %v1123, 7
    %v1125 = vsub.s32 7, %v1124
    %v1126 = vrot.slane %v1093, %v1125
    %v1391 = vunpack.c.l.b16 %v837
    %v1392 = vunpack.c.h.b16 %v837
    %v1393 = vunpack.c.l.b16 %v838
    %v1394 = vunpack.c.h.b16 %v838
    %v1395 = vunpack.c.l.b16 %v839
    %v1396 = vunpack.c.h.b16 %v839
    %v1397 = vunpack.c.l.b16 %v840
    %v1398 = vunpack.c.h.b16 %v840
    %v1399 = vunpack.c.l.b16 %v841
    %v1400 = vunpack.c.h.b16 %v841
    %v1401 = vunpack.c.l.b16 %v842
    %v1402 = vunpack.c.h.b16 %v842
    %v1403 = vunpack.c.l.b16 %v843
    %v1404 = vunpack.c.h.b16 %v843
    %v1405 = vunpack.c.l.b16 %v844
    %v1406 = vunpack.c.h.b16 %v844
    %v1407 = vunpack.c.l.b16 %v845
    %v1408 = vunpack.c.h.b16 %v845
    %v1409 = vunpack.c.l.b16 %v846
    %v1410 = vunpack.c.h.b16 %v846
    %v1411 = vunpack.c.l.b16 %v847
    %v1412 = vunpack.c.h.b16 %v847
    %v1413 = vunpack.c.l.b16 %v848
    %v1414 = vunpack.c.h.b16 %v848
    %v1415 = vunpack.c.l.b16 %v849
    %v1416 = vunpack.c.h.b16 %v849
    %v1417 = vunpack.c.l.b16 %v850
    %v1418 = vunpack.c.h.b16 %v850
    %v1419 = vunpack.c.l.b16 %v851
    %v1420 = vunpack.c.h.b16 %v851
    %v1421 = vunpack.c.l.b16 %v852
    %v1422 = vunpack.c.h.b16 %v852
    %v1423 = vunpack.c.l.b16 %v853
    %v1424 = vunpack.c.h.b16 %v853
    %v1425 = vunpack.c.l.b16 %v854
    %v1426 = vunpack.c.h.b16 %v854
    %v1427 = vunpack.c.l.b16 %v855
    %v1428 = vunpack.c.h.b16 %v855
    %v1429 = vunpack.c.l.b16 %v856
    %v1430 = vunpack.c.h.b16 %v856
    %v1431 = vunpack.c.l.b16 %v857
    %v1432 = vunpack.c.h.b16 %v857
    %v1433 = vunpack.c.l.b16 %v858
    %v1434 = vunpack.c.h.b16 %v858
    %v1435 = vunpack.c.l.b16 %v859
    %v1436 = vunpack.c.h.b16 %v859
    %v1437 = vunpack.c.l.b16 %v860
    %v1438 = vunpack.c.h.b16 %v860
    %v1439 = vunpack.c.l.b16 %v861
    %v1440 = vunpack.c.h.b16 %v861
    %v1441 = vunpack.c.l.b16 %v862
    %v1442 = vunpack.c.h.b16 %v862
    %v1443 = vunpack.c.l.b16 %v863
    %v1444 = vunpack.c.h.b16 %v863
    %v1445 = vunpack.c.l.b16 %v864
    %v1446 = vunpack.c.h.b16 %v864
    %v1447 = vunpack.c.l.b16 %v865
    %v1448 = vunpack.c.h.b16 %v865
    %v1449 = vunpack.c.l.b16 %v866
    %v1450 = vunpack.c.h.b16 %v866
    %v1451 = vunpack.c.l.b16 %v867
    %v1452 = vunpack.c.h.b16 %v867
    %v1453 = vunpack.c.l.b16 %v868
    %v1454 = vunpack.c.h.b16 %v868
    %v1455 = vunpack.c.l.b16 %v869
    %v1456 = vunpack.c.h.b16 %v869
    %v1457 = vunpack.c.l.b16 %v870
    %v1458 = vunpack.c.h.b16 %v870
    %v1459 = vunpack.c.l.b16 %v871
    %v1460 = vunpack.c.h.b16 %v871
    %v1461 = vunpack.c.l.b16 %v872
    %v1462 = vunpack.c.h.b16 %v872
    %v1463 = vunpack.c.l.b16 %v873
    %v1464 = vunpack.c.h.b16 %v873
    %v1465 = vunpack.c.l.b16 %v874
    %v1466 = vunpack.c.h.b16 %v874
    %v1467 = vunpack.c.l.b16 %v875
    %v1468 = vunpack.c.h.b16 %v875
    %v1469 = vunpack.c.l.b16 %v876
    %v1470 = vunpack.c.h.b16 %v876
    %v1471 = vunpack.c.l.b16 %v877
    %v1472 = vunpack.c.h.b16 %v877
    %v1473 = vunpack.c.l.b16 %v878
    %v1474 = vunpack.c.h.b16 %v878
    %v1475 = vunpack.c.l.b16 %v879
    %v1476 = vunpack.c.h.b16 %v879
    %v1477 = vunpack.c.l.b16 %v880
    %v1478 = vunpack.c.h.b16 %v880
    %v1479 = vunpack.c.l.b16 %v881
    %v1480 = vunpack.c.h.b16 %v881
    %v1481 = vunpack.c.l.b16 %v882
    %v1482 = vunpack.c.h.b16 %v882
    %v1483 = vunpack.c.l.b16 %v883
    %v1484 = vunpack.c.h.b16 %v883
    %v1485 = vunpack.c.l.b16 %v884
    %v1486 = vunpack.c.h.b16 %v884
    %v1487 = vunpack.c.l.b16 %v885
    %v1488 = vunpack.c.h.b16 %v885
    %v1489 = vunpack.c.l.b16 %v886
    %v1490 = vunpack.c.h.b16 %v886
    %v1491 = vunpack.c.l.b16 %v887
    %v1492 = vunpack.c.h.b16 %v887
    %v1493 = vunpack.c.l.b16 %v888
    %v1494 = vunpack.c.h.b16 %v888
    %v1495 = vunpack.c.l.b16 %v889
    %v1496 = vunpack.c.h.b16 %v889
    %v1497 = vunpack.c.l.b16 %v890
    %v1498 = vunpack.c.h.b16 %v890
    %v1499 = vunpack.c.l.b16 %v891
    %v1500 = vunpack.c.h.b16 %v891
    %v1501 = vunpack.c.l.b16 %v892
    %v1502 = vunpack.c.h.b16 %v892
    %v1503 = vunpack.c.l.b16 %v893
    %v1504 = vunpack.c.h.b16 %v893
    %v1505 = vunpack.c.l.b16 %v894
    %v1506 = vunpack.c.h.b16 %v894
    %v1507 = vunpack.c.l.b16 %v895
    %v1508 = vunpack.c.h.b16 %v895
    %v1509 = vunpack.c.l.b16 %v896
    %v1510 = vunpack.c.h.b16 %v896
    %v1511 = vunpack.c.l.b16 %v897
    %v1512 = vunpack.c.h.b16 %v897
    %v1513 = vunpack.c.l.b16 %v898
    %v1514 = vunpack.c.h.b16 %v898
    %v1515 = vunpack.c.l.b16 %v899
    %v1516 = vunpack.c.h.b16 %v899
    %v1517 = vunpack.c.l.b16 %v900
    %v1518 = vunpack.c.h.b16 %v900
    %v1519 = vunpack.c.l.b16 %v901
    %v1520 = vunpack.c.h.b16 %v901
    %v1521 = vunpack.c.l.b16 %v902
    %v1522 = vunpack.c.h.b16 %v902
    %v1523 = vunpack.c.l.b16 %v903
    %v1524 = vunpack.c.h.b16 %v903
    %v1525 = vunpack.c.l.b16 %v904
    %v1526 = vunpack.c.h.b16 %v904
    %v1527 = vunpack.c.l.b16 %v905
    %v1528 = vunpack.c.h.b16 %v905
    %v1529 = vunpack.c.l.b16 %v906
    %v1530 = vunpack.c.h.b16 %v906
    %v1531 = vunpack.c.l.b16 %v907
    %v1532 = vunpack.c.h.b16 %v907
    %v1533 = vunpack.c.l.b16 %v908
    %v1534 = vunpack.c.h.b16 %v908
    %v1535 = vunpack.c.l.b16 %v909
    %v1536 = vunpack.c.h.b16 %v909
    %v1537 = vunpack.c.l.b16 %v910
    %v1538 = vunpack.c.h.b16 %v910
    %v1539 = vunpack.c.l.b16 %v911
    %v1540 = vunpack.c.h.b16 %v911
    %v1541 = vunpack.c.l.b16 %v912
    %v1542 = vunpack.c.h.b16 %v912
    %v1543 = vunpack.c.l.b16 %v913
    %v1544 = vunpack.c.h.b16 %v913
    %v1545 = vunpack.c.l.b16 %v914
    %v1546 = vunpack.c.h.b16 %v914
    %v1547 = vunpack.c.l.b16 %v915
    %v1548 = vunpack.c.h.b16 %v915
    %v1549 = vunpack.c.l.b16 %v916
    %v1550 = vunpack.c.h.b16 %v916
    %v1551 = vunpack.c.l.b16 %v917
    %v1552 = vunpack.c.h.b16 %v917
    %v1553 = vunpack.c.l.b16 %v918
    %v1554 = vunpack.c.h.b16 %v918
    %v1555 = vunpack.c.l.b16 %v919
    %v1556 = vunpack.c.h.b16 %v919
    %v1557 = vunpack.c.l.b16 %v920
    %v1558 = vunpack.c.h.b16 %v920
    %v1559 = vunpack.c.l.b16 %v921
    %v1560 = vunpack.c.h.b16 %v921
    %v1561 = vunpack.c.l.b16 %v922
    %v1562 = vunpack.c.h.b16 %v922
    %v1563 = vunpack.c.l.b16 %v923
    %v1564 = vunpack.c.h.b16 %v923
    %v1565 = vunpack.c.l.b16 %v924
    %v1566 = vunpack.c.h.b16 %v924
    %v1567 = vunpack.c.l.b16 %v925
    %v1568 = vunpack.c.h.b16 %v925
    %v1569 = vunpack.c.l.b16 %v926
    %v1570 = vunpack.c.h.b16 %v926
    %v1571 = vunpack.c.l.b16 %v927
    %v1572 = vunpack.c.h.b16 %v927
    %v1573 = vunpack.c.l.b16 %v928
    %v1574 = vunpack.c.h.b16 %v928
    %v1575 = vunpack.c.l.b16 %v929
    %v1576 = vunpack.c.h.b16 %v929
    %v1577 = vunpack.c.l.b16 %v930
    %v1578 = vunpack.c.h.b16 %v930
    %v1579 = vunpack.c.l.b16 %v931
    %v1580 = vunpack.c.h.b16 %v931
    %v1581 = vunpack.c.l.b16 %v932
    %v1582 = vunpack.c.h.b16 %v932
    %v1583 = vunpack.c.l.b16 %v933
    %v1584 = vunpack.c.h.b16 %v933
    %v1585 = vunpack.c.l.b16 %v934
    %v1586 = vunpack.c.h.b16 %v934
    %v1587 = vunpack.c.l.b16 %v935
    %v1588 = vunpack.c.h.b16 %v935
    %v1589 = vunpack.c.l.b16 %v936
    %v1590 = vunpack.c.h.b16 %v936
    %v1591 = vunpack.c.l.b16 %v937
    %v1592 = vunpack.c.h.b16 %v937
    %v1593 = vunpack.c.l.b16 %v938
    %v1594 = vunpack.c.h.b16 %v938
    %v1595 = vunpack.c.l.b16 %v939
    %v1596 = vunpack.c.h.b16 %v939
    %v1597 = vunpack.c.l.b16 %v940
    %v1598 = vunpack.c.h.b16 %v940
    %v1599 = vunpack.c.l.b16 %v941
    %v1600 = vunpack.c.h.b16 %v941
    %v1601 = vunpack.c.l.b16 %v942
    %v1602 = vunpack.c.h.b16 %v942
    %v1603 = vunpack.c.l.b16 %v943
    %v1604 = vunpack.c.h.b16 %v943
    %v1605 = vunpack.c.l.b16 %v944
    %v1606 = vunpack.c.h.b16 %v944
    %v1607 = vunpack.c.l.b16 %v945
    %v1608 = vunpack.c.h.b16 %v945
    %v1609 = vunpack.c.l.b16 %v946
    %v1610 = vunpack.c.h.b16 %v946
    %v1611 = vunpack.c.l.b16 %v947
    %v1612 = vunpack.c.h.b16 %v947
    %v1613 = vunpack.c.l.b16 %v948
    %v1614 = vunpack.c.h.b16 %v948
    %v1615 = vunpack.c.l.b16 %v949
    %v1616 = vunpack.c.h.b16 %v949
    %v1617 = vunpack.c.l.b16 %v950
    %v1618 = vunpack.c.h.b16 %v950
    %v1619 = vunpack.c.l.b16 %v951
    %v1620 = vunpack.c.h.b16 %v951
    %v1621 = vunpack.c.l.b16 %v952
    %v1622 = vunpack.c.h.b16 %v952
    %v1623 = vunpack.c.l.b16 %v953
    %v1624 = vunpack.c.h.b16 %v953
    %v1625 = vunpack.c.l.b16 %v954
    %v1626 = vunpack.c.h.b16 %v954
    %v1627 = vunpack.c.l.b16 %v955
    %v1628 = vunpack.c.h.b16 %v955
    %v1629 = vunpack.c.l.b16 %v956
    %v1630 = vunpack.c.h.b16 %v956
    %v1631 = vunpack.c.l.b16 %v957
    %v1632 = vunpack.c.h.b16 %v957
    %v1633 = vunpack.c.l.b16 %v958
    %v1634 = vunpack.c.h.b16 %v958
    %v1635 = vunpack.c.l.b16 %v959
    %v1636 = vunpack.c.h.b16 %v959
    %v1637 = vunpack.c.l.b16 %v960
    %v1638 = vunpack.c.h.b16 %v960
    %v1639 = vunpack.c.l.b16 %v961
    %v1640 = vunpack.c.h.b16 %v961
    %v1641 = vunpack.c.l.b16 %v962
    %v1642 = vunpack.c.h.b16 %v962
    %v1643 = vunpack.c.l.b16 %v963
    %v1644 = vunpack.c.h.b16 %v963
    %v1645 = vunpack.c.l.b16 %v964
    %v1646 = vunpack.c.h.b16 %v964
    %v1647 = vunpack.c.l.b16 %v965
    %v1648 = vunpack.c.h.b16 %v965
    %v1649 = vunpack.c.l.b16 %v966
    %v1650 = vunpack.c.h.b16 %v966
    %v1651 = vunpack.c.l.b16 %v967
    %v1652 = vunpack.c.h.b16 %v967
    %v1653 = vunpack.c.l.b16 %v968
    %v1654 = vunpack.c.h.b16 %v968
    %v1655 = vunpack.c.l.b16 %v969
    %v1656 = vunpack.c.h.b16 %v969
    %v1657 = vunpack.c.l.b16 %v970
    %v1658 = vunpack.c.h.b16 %v970
    %v1659 = vunpack.c.l.b16 %v971
    %v1660 = vunpack.c.h.b16 %v971
    %v1661 = vunpack.c.l.b16 %v972
    %v1662 = vunpack.c.h.b16 %v972
    %v1663 = vunpack.c.l.b16 %v973
    %v1664 = vunpack.c.h.b16 %v973
    %v1665 = vunpack.c.l.b16 %v974
    %v1666 = vunpack.c.h.b16 %v974
    %v1667 = vunpack.c.l.b16 %v975
    %v1668 = vunpack.c.h.b16 %v975
    %v1669 = vunpack.c.l.b16 %v976
    %v1670 = vunpack.c.h.b16 %v976
    %v1671 = vunpack.c.l.b16 %v977
    %v1672 = vunpack.c.h.b16 %v977
    %v1673 = vunpack.c.l.b16 %v978
    %v1674 = vunpack.c.h.b16 %v978
    %v1675 = vunpack.c.l.b16 %v979
    %v1676 = vunpack.c.h.b16 %v979
    %v1677 = vunpack.c.l.b16 %v980
    %v1678 = vunpack.c.h.b16 %v980
    %v1679 = vunpack.c.l.b16 %v981
    %v1680 = vunpack.c.h.b16 %v981
    %v1681 = vunpack.c.l.b16 %v982
    %v1682 = vunpack.c.h.b16 %v982
    %v1683 = vunpack.c.l.b16 %v983
    %v1684 = vunpack.c.h.b16 %v983
    %v1685 = vunpack.c.l.b16 %v984
    %v1686 = vunpack.c.h.b16 %v984
    %v1687 = vunpack.c.l.b16 %v985
    %v1688 = vunpack.c.h.b16 %v985
    %v1689 = vunpack.c.l.b16 %v986
    %v1690 = vunpack.c.h.b16 %v986
    %v1691 = vunpack.c.l.b16 %v987
    %v1692 = vunpack.c.h.b16 %v987
    %v1693 = vunpack.c.l.b16 %v988
    %v1694 = vunpack.c.h.b16 %v988
    %v1695 = vunpack.c.l.b16 %v989
    %v1696 = vunpack.c.h.b16 %v989
    %v1697 = vunpack.c.l.b16 %v990
    %v1698 = vunpack.c.h.b16 %v990
    %v1699 = vunpack.c.l.b16 %v991
    %v1700 = vunpack.c.h.b16 %v991
    %v1701 = vunpack.c.l.b16 %v992
    %v1702 = vunpack.c.h.b16 %v992
    %v1703 = vunpack.c.l.b16 %v993
    %v1704 = vunpack.c.h.b16 %v993
    %v1705 = vunpack.c.l.b16 %v994
    %v1706 = vunpack.c.h.b16 %v994
    %v1707 = vunpack.c.l.b16 %v995
    %v1708 = vunpack.c.h.b16 %v995
    %v1709 = vunpack.c.l.b16 %v996
    %v1710 = vunpack.c.h.b16 %v996
    %v1711 = vunpack.c.l.b16 %v997
    %v1712 = vunpack.c.h.b16 %v997
    %v1713 = vunpack.c.l.b16 %v998
    %v1714 = vunpack.c.h.b16 %v998
    %v1715 = vunpack.c.l.b16 %v999
    %v1716 = vunpack.c.h.b16 %v999
    %v1717 = vunpack.c.l.b16 %v1000
    %v1718 = vunpack.c.h.b16 %v1000
    %v1719 = vunpack.c.l.b16 %v1001
    %v1720 = vunpack.c.h.b16 %v1001
    %v1721 = vunpack.c.l.b16 %v1002
    %v1722 = vunpack.c.h.b16 %v1002
    %v1723 = vunpack.c.l.b16 %v1003
    %v1724 = vunpack.c.h.b16 %v1003
    %v1725 = vunpack.c.l.b16 %v1004
    %v1726 = vunpack.c.h.b16 %v1004
    %v1727 = vunpack.c.l.b16 %v1005
    %v1728 = vunpack.c.h.b16 %v1005
    %v1729 = vunpack.c.l.b16 %v1006
    %v1730 = vunpack.c.h.b16 %v1006
    %v1731 = vunpack.c.l.b16 %v1007
    %v1732 = vunpack.c.h.b16 %v1007
    %v1733 = vunpack.c.l.b16 %v1008
    %v1734 = vunpack.c.h.b16 %v1008
    %v1735 = vunpack.c.l.b16 %v1009
    %v1736 = vunpack.c.h.b16 %v1009
    %v1737 = vunpack.c.l.b16 %v1010
    %v1738 = vunpack.c.h.b16 %v1010
    %v1739 = vunpack.c.l.b16 %v1011
    %v1740 = vunpack.c.h.b16 %v1011
    %v1741 = vunpack.c.l.b16 %v1012
    %v1742 = vunpack.c.h.b16 %v1012
    %v1743 = vunpack.c.l.b16 %v1013
    %v1744 = vunpack.c.h.b16 %v1013
    %v1745 = vunpack.c.l.b16 %v1014
    %v1746 = vunpack.c.h.b16 %v1014
    %v1747 = vunpack.c.l.b16 %v1015
    %v1748 = vunpack.c.h.b16 %v1015
    %v1749 = vunpack.c.l.b16 %v1016
    %v1750 = vunpack.c.h.b16 %v1016
    %v1751 = vunpack.c.l.b16 %v1017
    %v1752 = vunpack.c.h.b16 %v1017
    %v1753 = vunpack.c.l.b16 %v1018
    %v1754 = vunpack.c.h.b16 %v1018
    %v1755 = vunpack.c.l.b16 %v1019
    %v1756 = vunpack.c.h.b16 %v1019
    %v1757 = vunpack.c.l.b16 %v1020
    %v1758 = vunpack.c.h.b16 %v1020
    %v1759 = vunpack.c.l.b16 %v1021
    %v1760 = vunpack.c.h.b16 %v1021
    %v1761 = vunpack.c.l.b16 %v1022
    %v1762 = vunpack.c.h.b16 %v1022
    %v1763 = vunpack.c.l.b16 %v1023
    %v1764 = vunpack.c.h.b16 %v1023
    %v1765 = vunpack.c.l.b16 %v1024
    %v1766 = vunpack.c.h.b16 %v1024
    %v1767 = vunpack.c.l.b16 %v1025
    %v1768 = vunpack.c.h.b16 %v1025
    %v1769 = vunpack.c.l.b16 %v1026
    %v1770 = vunpack.c.h.b16 %v1026
    %v1771 = vunpack.c.l.b16 %v1027
    %v1772 = vunpack.c.h.b16 %v1027
    %v1773 = vunpack.c.l.b16 %v1028
    %v1774 = vunpack.c.h.b16 %v1028
    %v1775 = vunpack.c.l.b16 %v1029
    %v1776 = vunpack.c.h.b16 %v1029
    %v1777 = vunpack.c.l.b16 %v1030
    %v1778 = vunpack.c.h.b16 %v1030
    %v1779 = vunpack.c.l.b16 %v1031
    %v1780 = vunpack.c.h.b16 %v1031
    %v1781 = vunpack.c.l.b16 %v1032
    %v1782 = vunpack.c.h.b16 %v1032
    %v1783 = vunpack.c.l.b16 %v1033
    %v1784 = vunpack.c.h.b16 %v1033
    %v1785 = vunpack.c.l.b16 %v1034
    %v1786 = vunpack.c.h.b16 %v1034
    %v1787 = vunpack.c.l.b16 %v1035
    %v1788 = vunpack.c.h.b16 %v1035
    %v1789 = vunpack.c.l.b16 %v1036
    %v1790 = vunpack.c.h.b16 %v1036
    %v1791 = vunpack.c.l.b16 %v1037
    %v1792 = vunpack.c.h.b16 %v1037
    %v1793 = vunpack.c.l.b16 %v1038
    %v1794 = vunpack.c.h.b16 %v1038
    %v1795 = vunpack.c.l.b16 %v1039
    %v1796 = vunpack.c.h.b16 %v1039
    %v1797 = vunpack.c.l.b16 %v1040
    %v1798 = vunpack.c.h.b16 %v1040
    %v1799 = vunpack.c.l.b16 %v1041
    %v1800 = vunpack.c.h.b16 %v1041
    %v1801 = vunpack.c.l.b16 %v1042
    %v1802 = vunpack.c.h.b16 %v1042
    %v1803 = vunpack.c.l.b16 %v1043
    %v1804 = vunpack.c.h.b16 %v1043
    %v1805 = vunpack.c.l.b16 %v1044
    %v1806 = vunpack.c.h.b16 %v1044
    %v1807 = vunpack.c.l.b16 %v1045
    %v1808 = vunpack.c.h.b16 %v1045
    %v1809 = vunpack.c.l.b16 %v1046
    %v1810 = vunpack.c.h.b16 %v1046
    %v1811 = vunpack.c.l.b16 %v1047
    %v1812 = vunpack.c.h.b16 %v1047
    %v1813 = vunpack.c.l.b16 %v1048
    %v1814 = vunpack.c.h.b16 %v1048
    %v1815 = vunpack.c.l.b16 %v1049
    %v1816 = vunpack.c.h.b16 %v1049
    %v1817 = vunpack.c.l.b16 %v1050
    %v1818 = vunpack.c.h.b16 %v1050
    %v1819 = vunpack.c.l.b16 %v1051
    %v1820 = vunpack.c.h.b16 %v1051
    %v1821 = vunpack.c.l.b16 %v1052
    %v1822 = vunpack.c.h.b16 %v1052
    %v1823 = vunpack.c.l.b16 %v1053
    %v1824 = vunpack.c.h.b16 %v1053
    %v1825 = vunpack.c.l.b16 %v1054
    %v1826 = vunpack.c.h.b16 %v1054
    %v1827 = vunpack.c.l.b16 %v1055
    %v1828 = vunpack.c.h.b16 %v1055
    %v1829 = vunpack.c.l.b16 %v1056
    %v1830 = vunpack.c.h.b16 %v1056
    %v1831 = vunpack.c.l.b16 %v1057
    %v1832 = vunpack.c.h.b16 %v1057
    %v1833 = vunpack.c.l.b16 %v1058
    %v1834 = vunpack.c.h.b16 %v1058
    %v1835 = vunpack.c.l.b16 %v1059
    %v1836 = vunpack.c.h.b16 %v1059
    %v1837 = vunpack.c.l.b16 %v1060
    %v1838 = vunpack.c.h.b16 %v1060
    %v1839 = vunpack.c.l.b16 %v1061
    %v1840 = vunpack.c.h.b16 %v1061
    %v1841 = vunpack.c.l.b16 %v1062
    %v1842 = vunpack.c.h.b16 %v1062
    %v1843 = vunpack.c.l.b16 %v1063
    %v1844 = vunpack.c.h.b16 %v1063
    %v1845 = vunpack.c.l.b16 %v1064
    %v1846 = vunpack.c.h.b16 %v1064
    %v1847 = vunpack.c.l.b16 %v1065
    %v1848 = vunpack.c.h.b16 %v1065
    %v1849 = vunpack.c.l.b16 %v1066
    %v1850 = vunpack.c.h.b16 %v1066
    %v1851 = vunpack.c.l.b16 %v1067
    %v1852 = vunpack.c.h.b16 %v1067
    %v1853 = vunpack.c.l.b16 %v1068
    %v1854 = vunpack.c.h.b16 %v1068
    %v1855 = vunpack.c.l.b16 %v1069
    %v1856 = vunpack.c.h.b16 %v1069
    %v1857 = vunpack.c.l.b16 %v1070
    %v1858 = vunpack.c.h.b16 %v1070
    %v1859 = vunpack.c.l.b16 %v1071
    %v1860 = vunpack.c.h.b16 %v1071
    %v1861 = vunpack.c.l.b16 %v1072
    %v1862 = vunpack.c.h.b16 %v1072
    %v1863 = vunpack.c.l.b16 %v1073
    %v1864 = vunpack.c.h.b16 %v1073
    %v1865 = vunpack.c.l.b16 %v1074
    %v1866 = vunpack.c.h.b16 %v1074
    %v1867 = vunpack.c.l.b16 %v1075
    %v1868 = vunpack.c.h.b16 %v1075
    %v1869 = vunpack.c.l.b16 %v1076
    %v1870 = vunpack.c.h.b16 %v1076
    %v1871 = vunpack.c.l.b16 %v1077
    %v1872 = vunpack.c.h.b16 %v1077
    %v1873 = vunpack.c.l.b16 %v1078
    %v1874 = vunpack.c.h.b16 %v1078
    %v1875 = vunpack.c.l.b16 %v1079
    %v1876 = vunpack.c.h.b16 %v1079
    %v1877 = vunpack.c.l.b16 %v1080
    %v1878 = vunpack.c.h.b16 %v1080
    %v1879 = vunpack.c.l.b16 %v1081
    %v1880 = vunpack.c.h.b16 %v1081
    %v1881 = vunpack.c.l.b16 %v1082
    %v1882 = vunpack.c.h.b16 %v1082
    %v1883 = vunpack.c.l.b16 %v1083
    %v1884 = vunpack.c.h.b16 %v1083
    %v1885 = vunpack.c.l.b16 %v1084
    %v1886 = vunpack.c.h.b16 %v1084
    %v1887 = vunpack.c.l.b16 %v1085
    %v1888 = vunpack.c.h.b16 %v1085
    %v1889 = vunpack.c.l.b16 %v1086
    %v1890 = vunpack.c.h.b16 %v1086
    %v1891 = vunpack.c.l.b16 %v1087
    %v1892 = vunpack.c.h.b16 %v1087
    %v1893 = vunpack.c.l.b16 %v1088
    %v1894 = vunpack.c.h.b16 %v1088
    %v1895 = vunpack.c.l.b16 %v1089
    %v1896 = vunpack.c.h.b16 %v1089
    %v1897 = vunpack.c.l.b16 %v1090
    %v1898 = vunpack.c.h.b16 %v1090
    %v1899 = vunpack.c.l.b16 %v1091
    %v1900 = vunpack.c.h.b16 %v1091
    %v1901 = vunpack.c.l.b16 %v1092
    %v1902 = vunpack.c.h.b16 %v1092
    %v1903 = vpack.c.b16 %v1399, %v1391
    %v1904 = vpack.c.b16 %v1400, %v1392
    %v1905 = vpack.c.b16 %v1401, %v1393
    %v1906 = vpack.c.b16 %v1402, %v1394
    %v1907 = vpack.c.b16 %v1403, %v1395
    %v1908 = vpack.c.b16 %v1404, %v1396
    %v1909 = vpack.c.b16 %v1405, %v1397
    %v1910 = vpack.c.b16 %v1406, %v1398
    %v1911 = vpack.c.b16 %v1415, %v1407
    %v1912 = vpack.c.b16 %v1416, %v1408
    %v1913 = vpack.c.b16 %v1417, %v1409
    %v1914 = vpack.c.b16 %v1418, %v1410
    %v1915 = vpack.c.b16 %v1419, %v1411
    %v1916 = vpack.c.b16 %v1420, %v1412
    %v1917 = vpack.c.b16 %v1421, %v1413
    %v1918 = vpack.c.b16 %v1422, %v1414
    %v1919 = vpack.c.b16 %v1431, %v1423
    %v1920 = vpack.c.b16 %v1432, %v1424
    %v1921 = vpack.c.b16 %v1433, %v1425
    %v1922 = vpack.c.b16 %v1434, %v1426
    %v1923 = vpack.c.b16 %v1435, %v1427
    %v1924 = vpack.c.b16 %v1436, %v1428
    %v1925 = vpack.c.b16 %v1437, %v1429
    %v1926 = vpack.c.b16 %v1438, %v1430
    %v1927 = vpack.c.b16 %v1447, %v1439
    %v1928 = vpack.c.b16 %v1448, %v1440
    %v1929 = vpack.c.b16 %v1449, %v1441
    %v1930 = vpack.c.b16 %v1450, %v1442
    %v1931 = vpack.c.b16 %v1451, %v1443
    %v1932 = vpack.c.b16 %v1452, %v1444
    %v1933 = vpack.c.b16 %v1453, %v1445
    %v1934 = vpack.c.b16 %v1454, %v1446
    %v1935 = vpack.c.b16 %v1463, %v1455
    %v1936 = vpack.c.b16 %v1464, %v1456
    %v1937 = vpack.c.b16 %v1465, %v1457
    %v1938 = vpack.c.b16 %v1466, %v1458
    %v1939 = vpack.c.b16 %v1467, %v1459
    %v1940 = vpack.c.b16 %v1468, %v1460
    %v1941 = vpack.c.b16 %v1469, %v1461
    %v1942 = vpack.c.b16 %v1470, %v1462
    %v1943 = vpack.c.b16 %v1479, %v1471
    %v1944 = vpack.c.b16 %v1480, %v1472
    %v1945 = vpack.c.b16 %v1481, %v1473
    %v1946 = vpack.c.b16 %v1482, %v1474
    %v1947 = vpack.c.b16 %v1483, %v1475
    %v1948 = vpack.c.b16 %v1484, %v1476
    %v1949 = vpack.c.b16 %v1485, %v1477
    %v1950 = vpack.c.b16 %v1486, %v1478
    %v1951 = vpack.c.b16 %v1495, %v1487
    %v1952 = vpack.c.b16 %v1496, %v1488
    %v1953 = vpack.c.b16 %v1497, %v1489
    %v1954 = vpack.c.b16 %v1498, %v1490
    %v1955 = vpack.c.b16 %v1499, %v1491
    %v1956 = vpack.c.b16 %v1500, %v1492
    %v1957 = vpack.c.b16 %v1501, %v1493
    %v1958 = vpack.c.b16 %v1502, %v1494
    %v1959 = vpack.c.b16 %v1511, %v1503
    %v1960 = vpack.c.b16 %v1512, %v1504
    %v1961 = vpack.c.b16 %v1513, %v1505
    %v1962 = vpack.c.b16 %v1514, %v1506
    %v1963 = vpack.c.b16 %v1515, %v1507
    %v1964 = vpack.c.b16 %v1516, %v1508
    %v1965 = vpack.c.b16 %v1517, %v1509
    %v1966 = vpack.c.b16 %v1518, %v1510
    %v1967 = vpack.c.b16 %v1527, %v1519
    %v1968 = vpack.c.b16 %v1528, %v1520
    %v1969 = vpack.c.b16 %v1529, %v1521
    %v1970 = vpack.c.b16 %v1530, %v1522
    %v1971 = vpack.c.b16 %v1531, %v1523
    %v1972 = vpack.c.b16 %v1532, %v1524
    %v1973 = vpack.c.b16 %v1533, %v1525
    %v1974 = vpack.c.b16 %v1534, %v1526
    %v1975 = vpack.c.b16 %v1543, %v1535
    %v1976 = vpack.c.b16 %v1544, %v1536
    %v1977 = vpack.c.b16 %v1545, %v1537
    %v1978 = vpack.c.b16 %v1546, %v1538
    %v1979 = vpack.c.b16 %v1547, %v1539
    %v1980 = vpack.c.b16 %v1548, %v1540
    %v1981 = vpack.c.b16 %v1549, %v1541
    %v1982 = vpack.c.b16 %v1550, %v1542
    %v1983 = vpack.c.b16 %v1559, %v1551
    %v1984 = vpack.c.b16 %v1560, %v1552
    %v1985 = vpack.c.b16 %v1561, %v1553
    %v1986 = vpack.c.b16 %v1562, %v1554
    %v1987 = vpack.c.b16 %v1563, %v1555
    %v1988 = vpack.c.b16 %v1564, %v1556
    %v1989 = vpack.c.b16 %v1565, %v1557
    %v1990 = vpack.c.b16 %v1566, %v1558
    %v1991 = vpack.c.b16 %v1575, %v1567
    %v1992 = vpack.c.b16 %v1576, %v1568
    %v1993 = vpack.c.b16 %v1577, %v1569
    %v1994 = vpack.c.b16 %v1578, %v1570
    %v1995 = vpack.c.b16 %v1579, %v1571
    %v1996 = vpack.c.b16 %v1580, %v1572
    %v1997 = vpack.c.b16 %v1581, %v1573
    %v1998 = vpack.c.b16 %v1582, %v1574
    %v1999 = vpack.c.b16 %v1591, %v1583
    %v2000 = vpack.c.b16 %v1592, %v1584
    %v2001 = vpack.c.b16 %v1593, %v1585
    %v2002 = vpack.c.b16 %v1594, %v1586
    %v2003 = vpack.c.b16 %v1595, %v1587
    %v2004 = vpack.c.b16 %v1596, %v1588
    %v2005 = vpack.c.b16 %v1597, %v1589
    %v2006 = vpack.c.b16 %v1598, %v1590
    %v2007 = vpack.c.b16 %v1607, %v1599
    %v2008 = vpack.c.b16 %v1608, %v1600
    %v2009 = vpack.c.b16 %v1609, %v1601
    %v2010 = vpack.c.b16 %v1610, %v1602
    %v2011 = vpack.c.b16 %v1611, %v1603
    %v2012 = vpack.c.b16 %v1612, %v1604
    %v2013 = vpack.c.b16 %v1613, %v1605
    %v2014 = vpack.c.b16 %v1614, %v1606
    %v2015 = vpack.c.b16 %v1623, %v1615
    %v2016 = vpack.c.b16 %v1624, %v1616
    %v2017 = vpack.c.b16 %v1625, %v1617
    %v2018 = vpack.c.b16 %v1626, %v1618
    %v2019 = vpack.c.b16 %v1627, %v1619
    %v2020 = vpack.c.b16 %v1628, %v1620
    %v2021 = vpack.c.b16 %v1629, %v1621
    %v2022 = vpack.c.b16 %v1630, %v1622
    %v2023 = vpack.c.b16 %v1639, %v1631
    %v2024 = vpack.c.b16 %v1640, %v1632
    %v2025 = vpack.c.b16 %v1641, %v1633
    %v2026 = vpack.c.b16 %v1642, %v1634
    %v2027 = vpack.c.b16 %v1643, %v1635
    %v2028 = vpack.c.b16 %v1644, %v1636
    %v2029 = vpack.c.b16 %v1645, %v1637
    %v2030 = vpack.c.b16 %v1646, %v1638
    %v2031 = vpack.c.b16 %v1655, %v1647
    %v2032 = vpack.c.b16 %v1656, %v1648
    %v2033 = vpack.c.b16 %v1657, %v1649
    %v2034 = vpack.c.b16 %v1658, %v1650
    %v2035 = vpack.c.b16 %v1659, %v1651
    %v2036 = vpack.c.b16 %v1660, %v1652
    %v2037 = vpack.c.b16 %v1661, %v1653
    %v2038 = vpack.c.b16 %v1662, %v1654
    %v2039 = vpack.c.b16 %v1671, %v1663
    %v2040 = vpack.c.b16 %v1672, %v1664
    %v2041 = vpack.c.b16 %v1673, %v1665
    %v2042 = vpack.c.b16 %v1674, %v1666
    %v2043 = vpack.c.b16 %v1675, %v1667
    %v2044 = vpack.c.b16 %v1676, %v1668
    %v2045 = vpack.c.b16 %v1677, %v1669
    %v2046 = vpack.c.b16 %v1678, %v1670
    %v2047 = vpack.c.b16 %v1687, %v1679
    %v2048 = vpack.c.b16 %v1688, %v1680
    %v2049 = vpack.c.b16 %v1689, %v1681
    %v2050 = vpack.c.b16 %v1690, %v1682
    %v2051 = vpack.c.b16 %v1691, %v1683
    %v2052 = vpack.c.b16 %v1692, %v1684
    %v2053 = vpack.c.b16 %v1693, %v1685
    %v2054 = vpack.c.b16 %v1694, %v1686
    %v2055 = vpack.c.b16 %v1703, %v1695
    %v2056 = vpack.c.b16 %v1704, %v1696
    %v2057 = vpack.c.b16 %v1705, %v1697
    %v2058 = vpack.c.b16 %v1706, %v1698
    %v2059 = vpack.c.b16 %v1707, %v1699
    %v2060 = vpack.c.b16 %v1708, %v1700
    %v2061 = vpack.c.b16 %v1709, %v1701
    %v2062 = vpack.c.b16 %v1710, %v1702
    %v2063 = vpack.c.b16 %v1719, %v1711
    %v2064 = vpack.c.b16 %v1720, %v1712
    %v2065 = vpack.c.b16 %v1721, %v1713
    %v2066 = vpack.c.b16 %v1722, %v1714
    %v2067 = vpack.c.b16 %v1723, %v1715
    %v2068 = vpack.c.b16 %v1724, %v1716
    %v2069 = vpack.c.b16 %v1725, %v1717
    %v2070 = vpack.c.b16 %v1726, %v1718
    %v2071 = vpack.c.b16 %v1735, %v1727
    %v2072 = vpack.c.b16 %v1736, %v1728
    %v2073 = vpack.c.b16 %v1737, %v1729
    %v2074 = vpack.c.b16 %v1738, %v1730
    %v2075 = vpack.c.b16 %v1739, %v1731
    %v2076 = vpack.c.b16 %v1740, %v1732
    %v2077 = vpack.c.b16 %v1741, %v1733
    %v2078 = vpack.c.b16 %v1742, %v1734
    %v2079 = vpack.c.b16 %v1751, %v1743
    %v2080 = vpack.c.b16 %v1752, %v1744
    %v2081 = vpack.c.b16 %v1753, %v1745
    %v2082 = vpack.c.b16 %v1754, %v1746
    %v2083 = vpack.c.b16 %v1755, %v1747
    %v2084 = vpack.c.b16 %v1756, %v1748
    %v2085 = vpack.c.b16 %v1757, %v1749
    %v2086 = vpack.c.b16 %v1758, %v1750
    %v2087 = vpack.c.b16 %v1767, %v1759
    %v2088 = vpack.c.b16 %v1768, %v1760
    %v2089 = vpack.c.b16 %v1769, %v1761
    %v2090 = vpack.c.b16 %v1770, %v1762
    %v2091 = vpack.c.b16 %v1771, %v1763
    %v2092 = vpack.c.b16 %v1772, %v1764
    %v2093 = vpack.c.b16 %v1773, %v1765
    %v2094 = vpack.c.b16 %v1774, %v1766
    %v2095 = vpack.c.b16 %v1783, %v1775
    %v2096 = vpack.c.b16 %v1784, %v1776
    %v2097 = vpack.c.b16 %v1785, %v1777
    %v2098 = vpack.c.b16 %v1786, %v1778
    %v2099 = vpack.c.b16 %v1787, %v1779
    %v2100 = vpack.c.b16 %v1788, %v1780
    %v2101 = vpack.c.b16 %v1789, %v1781
    %v2102 = vpack.c.b16 %v1790, %v1782
    %v2103 = vpack.c.b16 %v1799, %v1791
    %v2104 = vpack.c.b16 %v1800, %v1792
    %v2105 = vpack.c.b16 %v1801, %v1793
    %v2106 = vpack.c.b16 %v1802, %v1794
    %v2107 = vpack.c.b16 %v1803, %v1795
    %v2108 = vpack.c.b16 %v1804, %v1796
    %v2109 = vpack.c.b16 %v1805, %v1797
    %v2110 = vpack.c.b16 %v1806, %v1798
    %v2111 = vpack.c.b16 %v1815, %v1807
    %v2112 = vpack.c.b16 %v1816, %v1808
    %v2113 = vpack.c.b16 %v1817, %v1809
    %v2114 = vpack.c.b16 %v1818, %v1810
    %v2115 = vpack.c.b16 %v1819, %v1811
    %v2116 = vpack.c.b16 %v1820, %v1812
    %v2117 = vpack.c.b16 %v1821, %v1813
    %v2118 = vpack.c.b16 %v1822, %v1814
    %v2119 = vpack.c.b16 %v1831, %v1823
    %v2120 = vpack.c.b16 %v1832, %v1824
    %v2121 = vpack.c.b16 %v1833, %v1825
    %v2122 = vpack.c.b16 %v1834, %v1826
    %v2123 = vpack.c.b16 %v1835, %v1827
    %v2124 = vpack.c.b16 %v1836, %v1828
    %v2125 = vpack.c.b16 %v1837, %v1829
    %v2126 = vpack.c.b16 %v1838, %v1830
    %v2127 = vpack.c.b16 %v1847, %v1839
    %v2128 = vpack.c.b16 %v1848, %v1840
    %v2129 = vpack.c.b16 %v1849, %v1841
    %v2130 = vpack.c.b16 %v1850, %v1842
    %v2131 = vpack.c.b16 %v1851, %v1843
    %v2132 = vpack.c.b16 %v1852, %v1844
    %v2133 = vpack.c.b16 %v1853, %v1845
    %v2134 = vpack.c.b16 %v1854, %v1846
    %v2135 = vpack.c.b16 %v1863, %v1855
    %v2136 = vpack.c.b16 %v1864, %v1856
    %v2137 = vpack.c.b16 %v1865, %v1857
    %v2138 = vpack.c.b16 %v1866, %v1858
    %v2139 = vpack.c.b16 %v1867, %v1859
    %v2140 = vpack.c.b16 %v1868, %v1860
    %v2141 = vpack.c.b16 %v1869, %v1861
    %v2142 = vpack.c.b16 %v1870, %v1862
    %v2143 = vpack.c.b16 %v1879, %v1871
    %v2144 = vpack.c.b16 %v1880, %v1872
    %v2145 = vpack.c.b16 %v1881, %v1873
    %v2146 = vpack.c.b16 %v1882, %v1874
    %v2147 = vpack.c.b16 %v1883, %v1875
    %v2148 = vpack.c.b16 %v1884, %v1876
    %v2149 = vpack.c.b16 %v1885, %v1877
    %v2150 = vpack.c.b16 %v1886, %v1878
    %v2151 = vpack.c.b16 %v1895, %v1887
    %v2152 = vpack.c.b16 %v1896, %v1888
    %v2153 = vpack.c.b16 %v1897, %v1889
    %v2154 = vpack.c.b16 %v1898, %v1890
    %v2155 = vpack.c.b16 %v1899, %v1891
    %v2156 = vpack.c.b16 %v1900, %v1892
    %v2157 = vpack.c.b16 %v1901, %v1893
    %v2158 = vpack.c.b16 %v1902, %v1894
    %2415 = vmatprep.subr.bf16.mxu0 %v1904
    %2416 = vmatpush1.bf16.msra.mxu0 %v1903
    %2417 = vmatprep.subr.bf16.mxu0 %v1912
    %2418 = vmatpush1.bf16.msra.mxu0 %v1911
    %2419 = vmatprep.subr.bf16.mxu0 %v1920
    %2420 = vmatpush1.bf16.msra.mxu0 %v1919
    %2421 = vmatprep.subr.bf16.mxu0 %v1928
    %2422 = vmatpush1.bf16.msra.mxu0 %v1927
    %2423 = vmatprep.subr.bf16.mxu0 %v1936
    %2424 = vmatpush1.bf16.msra.mxu0 %v1935
    %2425 = vmatprep.subr.bf16.mxu0 %v1944
    %2426 = vmatpush1.bf16.msra.mxu0 %v1943
    %2427 = vmatprep.subr.bf16.mxu0 %v1952
    %2428 = vmatpush1.bf16.msra.mxu0 %v1951
    %2429 = vmatprep.subr.bf16.mxu0 %v1960
    %2430 = vmatpush1.bf16.msra.mxu0 %v1959
    %2431 = vmatprep.subr.bf16.mxu0 %v1968
    %2432 = vmatpush1.bf16.msra.mxu0 %v1967
    %2433 = vmatprep.subr.bf16.mxu0 %v1976
    %2434 = vmatpush1.bf16.msra.mxu0 %v1975
    %2435 = vmatprep.subr.bf16.mxu0 %v1984
    %2436 = vmatpush1.bf16.msra.mxu0 %v1983
    %2437 = vmatprep.subr.bf16.mxu0 %v1992
    %2438 = vmatpush1.bf16.msra.mxu0 %v1991
    %2439 = vmatprep.subr.bf16.mxu0 %v2000
    %2440 = vmatpush1.bf16.msra.mxu0 %v1999
    %2441 = vmatprep.subr.bf16.mxu0 %v2008
    %2442 = vmatpush1.bf16.msra.mxu0 %v2007
    %2443 = vmatprep.subr.bf16.mxu0 %v2016
    %2444 = vmatpush1.bf16.msra.mxu0 %v2015
    %2445 = vmatprep.subr.bf16.mxu0 %v2024
    %2446 = vmatpush1.bf16.msra.mxu0 %v2023
    %2447 = vmatprep.mubr.bf16.mxu0 %v834
    %2448 = vmatmul.mubr.bf16.gmra.mrb[0].mxu0 %v833
    %v2449 = vpop.f32.mrb[0].mxu0
    %v2450 = vadd.f32 %v1098, %v2449
    %v2451 = vpop.f32.mrb[0].mxu0
    %v2452 = vadd.f32 %v1102, %v2451
    %v2453 = vpop.f32.mrb[0].mxu0
    %v2454 = vadd.f32 %v1098, %v2453
    %v2455 = vpop.f32.mrb[0].mxu0
    %v2456 = vadd.f32 %v1102, %v2455
    %2457 = vdwg.mxu0
    %2458 = vmatprep.subr.bf16.mxu0 %v2032
    %2459 = vmatpush1.bf16.msra.mxu0 %v2031
    %2460 = vmatprep.subr.bf16.mxu0 %v2040
    %2461 = vmatpush1.bf16.msra.mxu0 %v2039
    %2462 = vmatprep.subr.bf16.mxu0 %v2048
    %2463 = vmatpush1.bf16.msra.mxu0 %v2047
    %2464 = vmatprep.subr.bf16.mxu0 %v2056
    %2465 = vmatpush1.bf16.msra.mxu0 %v2055
    %2466 = vmatprep.subr.bf16.mxu0 %v2064
    %2467 = vmatpush1.bf16.msra.mxu0 %v2063
    %2468 = vmatprep.subr.bf16.mxu0 %v2072
    %2469 = vmatpush1.bf16.msra.mxu0 %v2071
    %2470 = vmatprep.subr.bf16.mxu0 %v2080
    %2471 = vmatpush1.bf16.msra.mxu0 %v2079
    %2472 = vmatprep.subr.bf16.mxu0 %v2088
    %2473 = vmatpush1.bf16.msra.mxu0 %v2087
    %2474 = vmatprep.subr.bf16.mxu0 %v2096
    %2475 = vmatpush1.bf16.msra.mxu0 %v2095
    %2476 = vmatprep.subr.bf16.mxu0 %v2104
    %2477 = vmatpush1.bf16.msra.mxu0 %v2103
    %2478 = vmatprep.subr.bf16.mxu0 %v2112
    %2479 = vmatpush1.bf16.msra.mxu0 %v2111
    %2480 = vmatprep.subr.bf16.mxu0 %v2120
    %2481 = vmatpush1.bf16.msra.mxu0 %v2119
    %2482 = vmatprep.subr.bf16.mxu0 %v2128
    %2483 = vmatpush1.bf16.msra.mxu0 %v2127
    %2484 = vmatprep.subr.bf16.mxu0 %v2136
    %2485 = vmatpush1.bf16.msra.mxu0 %v2135
    %2486 = vmatprep.subr.bf16.mxu0 %v2144
    %2487 = vmatpush1.bf16.msra.mxu0 %v2143
    %2488 = vmatprep.subr.bf16.mxu0 %v2152
    %2489 = vmatpush1.bf16.msra.mxu0 %v2151
    %2490 = vmatprep.mubr.bf16.mxu0 %v836
    %2491 = vmatmul.mubr.bf16.gmra.mrb[0].mxu0 %v835
    %v2492 = vpop.f32.mrb[0].mxu0
    %v2493 = vadd.f32 %v2450, %v2492
    %v2494 = vpop.f32.mrb[0].mxu0
    %v2495 = vadd.f32 %v2452, %v2494
    %v2496 = vpop.f32.mrb[0].mxu0
    %v2497 = vadd.f32 %v2454, %v2496
    %v2498 = vpop.f32.mrb[0].mxu0
    %v2499 = vadd.f32 %v2456, %v2498
    %2500 = vdwg.mxu0
    %2501 = vmatprep.subr.bf16.mxu0 %v1906
    %2502 = vmatpush1.bf16.msra.mxu0 %v1905
    %2503 = vmatprep.subr.bf16.mxu0 %v1914
    %2504 = vmatpush1.bf16.msra.mxu0 %v1913
    %2505 = vmatprep.subr.bf16.mxu0 %v1922
    %2506 = vmatpush1.bf16.msra.mxu0 %v1921
    %2507 = vmatprep.subr.bf16.mxu0 %v1930
    %2508 = vmatpush1.bf16.msra.mxu0 %v1929
    %2509 = vmatprep.subr.bf16.mxu0 %v1938
    %2510 = vmatpush1.bf16.msra.mxu0 %v1937
    %2511 = vmatprep.subr.bf16.mxu0 %v1946
    %2512 = vmatpush1.bf16.msra.mxu0 %v1945
    %2513 = vmatprep.subr.bf16.mxu0 %v1954
    %2514 = vmatpush1.bf16.msra.mxu0 %v1953
    %2515 = vmatprep.subr.bf16.mxu0 %v1962
    %2516 = vmatpush1.bf16.msra.mxu0 %v1961
    %2517 = vmatprep.subr.bf16.mxu0 %v1970
    %2518 = vmatpush1.bf16.msra.mxu0 %v1969
    %2519 = vmatprep.subr.bf16.mxu0 %v1978
    %2520 = vmatpush1.bf16.msra.mxu0 %v1977
    %2521 = vmatprep.subr.bf16.mxu0 %v1986
    %2522 = vmatpush1.bf16.msra.mxu0 %v1985
    %2523 = vmatprep.subr.bf16.mxu0 %v1994
    %2524 = vmatpush1.bf16.msra.mxu0 %v1993
    %2525 = vmatprep.subr.bf16.mxu0 %v2002
    %2526 = vmatpush1.bf16.msra.mxu0 %v2001
    %2527 = vmatprep.subr.bf16.mxu0 %v2010
    %2528 = vmatpush1.bf16.msra.mxu0 %v2009
    %2529 = vmatprep.subr.bf16.mxu0 %v2018
    %2530 = vmatpush1.bf16.msra.mxu0 %v2017
    %2531 = vmatprep.subr.bf16.mxu0 %v2026
    %2532 = vmatpush1.bf16.msra.mxu0 %v2025
    %2533 = vmatprep.mubr.bf16.mxu0 %v834
    %2534 = vmatmul.mubr.bf16.gmra.mrb[0].mxu0 %v833
    %v2535 = vpop.f32.mrb[0].mxu0
    %v2536 = vadd.f32 %v1106, %v2535
    %v2537 = vpop.f32.mrb[0].mxu0
    %v2538 = vadd.f32 %v1110, %v2537
    %v2539 = vpop.f32.mrb[0].mxu0
    %v2540 = vadd.f32 %v1106, %v2539
    %v2541 = vpop.f32.mrb[0].mxu0
    %v2542 = vadd.f32 %v1110, %v2541
    %2543 = vdwg.mxu0
    %2544 = vmatprep.subr.bf16.mxu0 %v2034
    %2545 = vmatpush1.bf16.msra.mxu0 %v2033
    %2546 = vmatprep.subr.bf16.mxu0 %v2042
    %2547 = vmatpush1.bf16.msra.mxu0 %v2041
    %2548 = vmatprep.subr.bf16.mxu0 %v2050
    %2549 = vmatpush1.bf16.msra.mxu0 %v2049
    %2550 = vmatprep.subr.bf16.mxu0 %v2058
    %2551 = vmatpush1.bf16.msra.mxu0 %v2057
    %2552 = vmatprep.subr.bf16.mxu0 %v2066
    %2553 = vmatpush1.bf16.msra.mxu0 %v2065
    %2554 = vmatprep.subr.bf16.mxu0 %v2074
    %2555 = vmatpush1.bf16.msra.mxu0 %v2073
    %2556 = vmatprep.subr.bf16.mxu0 %v2082
    %2557 = vmatpush1.bf16.msra.mxu0 %v2081
    %2558 = vmatprep.subr.bf16.mxu0 %v2090
    %2559 = vmatpush1.bf16.msra.mxu0 %v2089
    %2560 = vmatprep.subr.bf16.mxu0 %v2098
    %2561 = vmatpush1.bf16.msra.mxu0 %v2097
    %2562 = vmatprep.subr.bf16.mxu0 %v2106
    %2563 = vmatpush1.bf16.msra.mxu0 %v2105
    %2564 = vmatprep.subr.bf16.mxu0 %v2114
    %2565 = vmatpush1.bf16.msra.mxu0 %v2113
    %2566 = vmatprep.subr.bf16.mxu0 %v2122
    %2567 = vmatpush1.bf16.msra.mxu0 %v2121
    %2568 = vmatprep.subr.bf16.mxu0 %v2130
    %2569 = vmatpush1.bf16.msra.mxu0 %v2129
    %2570 = vmatprep.subr.bf16.mxu0 %v2138
    %2571 = vmatpush1.bf16.msra.mxu0 %v2137
    %2572 = vmatprep.subr.bf16.mxu0 %v2146
    %2573 = vmatpush1.bf16.msra.mxu0 %v2145
    %2574 = vmatprep.subr.bf16.mxu0 %v2154
    %2575 = vmatpush1.bf16.msra.mxu0 %v2153
    %2576 = vmatprep.mubr.bf16.mxu0 %v836
    %2577 = vmatmul.mubr.bf16.gmra.mrb[0].mxu0 %v835
    %v2578 = vpop.f32.mrb[0].mxu0
    %v2579 = vadd.f32 %v2536, %v2578
    %v2580 = vpop.f32.mrb[0].mxu0
    %v2581 = vadd.f32 %v2538, %v2580
    %v2582 = vpop.f32.mrb[0].mxu0
    %v2583 = vadd.f32 %v2540, %v2582
    %v2584 = vpop.f32.mrb[0].mxu0
    %v2585 = vadd.f32 %v2542, %v2584
    %2586 = vdwg.mxu0
    %2587 = vmatprep.subr.bf16.mxu0 %v1908
    %2588 = vmatpush1.bf16.msra.mxu0 %v1907
    %2589 = vmatprep.subr.bf16.mxu0 %v1916
    %2590 = vmatpush1.bf16.msra.mxu0 %v1915
    %2591 = vmatprep.subr.bf16.mxu0 %v1924
    %2592 = vmatpush1.bf16.msra.mxu0 %v1923
    %2593 = vmatprep.subr.bf16.mxu0 %v1932
    %2594 = vmatpush1.bf16.msra.mxu0 %v1931
    %2595 = vmatprep.subr.bf16.mxu0 %v1940
    %2596 = vmatpush1.bf16.msra.mxu0 %v1939
    %2597 = vmatprep.subr.bf16.mxu0 %v1948
    %2598 = vmatpush1.bf16.msra.mxu0 %v1947
    %2599 = vmatprep.subr.bf16.mxu0 %v1956
    %2600 = vmatpush1.bf16.msra.mxu0 %v1955
    %2601 = vmatprep.subr.bf16.mxu0 %v1964
    %2602 = vmatpush1.bf16.msra.mxu0 %v1963
    %2603 = vmatprep.subr.bf16.mxu0 %v1972
    %2604 = vmatpush1.bf16.msra.mxu0 %v1971
    %2605 = vmatprep.subr.bf16.mxu0 %v1980
    %2606 = vmatpush1.bf16.msra.mxu0 %v1979
    %2607 = vmatprep.subr.bf16.mxu0 %v1988
    %2608 = vmatpush1.bf16.msra.mxu0 %v1987
    %2609 = vmatprep.subr.bf16.mxu0 %v1996
    %2610 = vmatpush1.bf16.msra.mxu0 %v1995
    %2611 = vmatprep.subr.bf16.mxu0 %v2004
    %2612 = vmatpush1.bf16.msra.mxu0 %v2003
    %2613 = vmatprep.subr.bf16.mxu0 %v2012
    %2614 = vmatpush1.bf16.msra.mxu0 %v2011
    %2615 = vmatprep.subr.bf16.mxu0 %v2020
    %2616 = vmatpush1.bf16.msra.mxu0 %v2019
    %2617 = vmatprep.subr.bf16.mxu0 %v2028
    %2618 = vmatpush1.bf16.msra.mxu0 %v2027
    %2619 = vmatprep.mubr.bf16.mxu0 %v834
    %2620 = vmatmul.mubr.bf16.gmra.mrb[0].mxu0 %v833
    %v2621 = vpop.f32.mrb[0].mxu0
    %v2622 = vadd.f32 %v1114, %v2621
    %v2623 = vpop.f32.mrb[0].mxu0
    %v2624 = vadd.f32 %v1118, %v2623
    %v2625 = vpop.f32.mrb[0].mxu0
    %v2626 = vadd.f32 %v1114, %v2625
    %v2627 = vpop.f32.mrb[0].mxu0
    %v2628 = vadd.f32 %v1118, %v2627
    %2629 = vdwg.mxu0
    %2630 = vmatprep.subr.bf16.mxu0 %v2036
    %2631 = vmatpush1.bf16.msra.mxu0 %v2035
    %2632 = vmatprep.subr.bf16.mxu0 %v2044
    %2633 = vmatpush1.bf16.msra.mxu0 %v2043
    %2634 = vmatprep.subr.bf16.mxu0 %v2052
    %2635 = vmatpush1.bf16.msra.mxu0 %v2051
    %2636 = vmatprep.subr.bf16.mxu0 %v2060
    %2637 = vmatpush1.bf16.msra.mxu0 %v2059
    %2638 = vmatprep.subr.bf16.mxu0 %v2068
    %2639 = vmatpush1.bf16.msra.mxu0 %v2067
    %2640 = vmatprep.subr.bf16.mxu0 %v2076
    %2641 = vmatpush1.bf16.msra.mxu0 %v2075
    %2642 = vmatprep.subr.bf16.mxu0 %v2084
    %2643 = vmatpush1.bf16.msra.mxu0 %v2083
    %2644 = vmatprep.subr.bf16.mxu0 %v2092
    %2645 = vmatpush1.bf16.msra.mxu0 %v2091
    %2646 = vmatprep.subr.bf16.mxu0 %v2100
    %2647 = vmatpush1.bf16.msra.mxu0 %v2099
    %2648 = vmatprep.subr.bf16.mxu0 %v2108
    %2649 = vmatpush1.bf16.msra.mxu0 %v2107
    %2650 = vmatprep.subr.bf16.mxu0 %v2116
    %2651 = vmatpush1.bf16.msra.mxu0 %v2115
    %2652 = vmatprep.subr.bf16.mxu0 %v2124
    %2653 = vmatpush1.bf16.msra.mxu0 %v2123
    %2654 = vmatprep.subr.bf16.mxu0 %v2132
    %2655 = vmatpush1.bf16.msra.mxu0 %v2131
    %2656 = vmatprep.subr.bf16.mxu0 %v2140
    %2657 = vmatpush1.bf16.msra.mxu0 %v2139
    %2658 = vmatprep.subr.bf16.mxu0 %v2148
    %2659 = vmatpush1.bf16.msra.mxu0 %v2147
    %2660 = vmatprep.subr.bf16.mxu0 %v2156
    %2661 = vmatpush1.bf16.msra.mxu0 %v2155
    %2662 = vmatprep.mubr.bf16.mxu0 %v836
    %2663 = vmatmul.mubr.bf16.gmra.mrb[0].mxu0 %v835
    %v2664 = vpop.f32.mrb[0].mxu0
    %v2665 = vadd.f32 %v2622, %v2664
    %v2666 = vpop.f32.mrb[0].mxu0
    %v2667 = vadd.f32 %v2624, %v2666
    %v2668 = vpop.f32.mrb[0].mxu0
    %v2669 = vadd.f32 %v2626, %v2668
    %v2670 = vpop.f32.mrb[0].mxu0
    %v2671 = vadd.f32 %v2628, %v2670
    %2672 = vdwg.mxu0
    %2673 = vmatprep.subr.bf16.mxu0 %v1910
    %2674 = vmatpush1.bf16.msra.mxu0 %v1909
    %2675 = vmatprep.subr.bf16.mxu0 %v1918
    %2676 = vmatpush1.bf16.msra.mxu0 %v1917
    %2677 = vmatprep.subr.bf16.mxu0 %v1926
    %2678 = vmatpush1.bf16.msra.mxu0 %v1925
    %2679 = vmatprep.subr.bf16.mxu0 %v1934
    %2680 = vmatpush1.bf16.msra.mxu0 %v1933
    %2681 = vmatprep.subr.bf16.mxu0 %v1942
    %2682 = vmatpush1.bf16.msra.mxu0 %v1941
    %2683 = vmatprep.subr.bf16.mxu0 %v1950
    %2684 = vmatpush1.bf16.msra.mxu0 %v1949
    %2685 = vmatprep.subr.bf16.mxu0 %v1958
    %2686 = vmatpush1.bf16.msra.mxu0 %v1957
    %2687 = vmatprep.subr.bf16.mxu0 %v1966
    %2688 = vmatpush1.bf16.msra.mxu0 %v1965
    %2689 = vmatprep.subr.bf16.mxu0 %v1974
    %2690 = vmatpush1.bf16.msra.mxu0 %v1973
    %2691 = vmatprep.subr.bf16.mxu0 %v1982
    %2692 = vmatpush1.bf16.msra.mxu0 %v1981
    %2693 = vmatprep.subr.bf16.mxu0 %v1990
    %2694 = vmatpush1.bf16.msra.mxu0 %v1989
    %2695 = vmatprep.subr.bf16.mxu0 %v1998
    %2696 = vmatpush1.bf16.msra.mxu0 %v1997
    %2697 = vmatprep.subr.bf16.mxu0 %v2006
    %2698 = vmatpush1.bf16.msra.mxu0 %v2005
    %2699 = vmatprep.subr.bf16.mxu0 %v2014
    %2700 = vmatpush1.bf16.msra.mxu0 %v2013
    %2701 = vmatprep.subr.bf16.mxu0 %v2022
    %2702 = vmatpush1.bf16.msra.mxu0 %v2021
    %2703 = vmatprep.subr.bf16.mxu0 %v2030
    %2704 = vmatpush1.bf16.msra.mxu0 %v2029
    %2705 = vmatprep.mubr.bf16.mxu0 %v834
    %2706 = vmatmul.mubr.bf16.gmra.mrb[0].mxu0 %v833
    %v2707 = vpop.f32.mrb[0].mxu0
    %v2708 = vadd.f32 %v1122, %v2707
    %v2709 = vpop.f32.mrb[0].mxu0
    %v2710 = vadd.f32 %v1126, %v2709
    %v2711 = vpop.f32.mrb[0].mxu0
    %v2712 = vadd.f32 %v1122, %v2711
    %v2713 = vpop.f32.mrb[0].mxu0
    %v2714 = vadd.f32 %v1126, %v2713
    %2715 = vdwg.mxu0
    %2716 = vmatprep.subr.bf16.mxu0 %v2038
    %2717 = vmatpush1.bf16.msra.mxu0 %v2037
    %2718 = vmatprep.subr.bf16.mxu0 %v2046
    %2719 = vmatpush1.bf16.msra.mxu0 %v2045
    %2720 = vmatprep.subr.bf16.mxu0 %v2054
    %2721 = vmatpush1.bf16.msra.mxu0 %v2053
    %2722 = vmatprep.subr.bf16.mxu0 %v2062
    %2723 = vmatpush1.bf16.msra.mxu0 %v2061
    %2724 = vmatprep.subr.bf16.mxu0 %v2070
    %2725 = vmatpush1.bf16.msra.mxu0 %v2069
    %2726 = vmatprep.subr.bf16.mxu0 %v2078
    %2727 = vmatpush1.bf16.msra.mxu0 %v2077
    %2728 = vmatprep.subr.bf16.mxu0 %v2086
    %2729 = vmatpush1.bf16.msra.mxu0 %v2085
    %2730 = vmatprep.subr.bf16.mxu0 %v2094
    %2731 = vmatpush1.bf16.msra.mxu0 %v2093
    %2732 = vmatprep.subr.bf16.mxu0 %v2102
    %2733 = vmatpush1.bf16.msra.mxu0 %v2101
    %2734 = vmatprep.subr.bf16.mxu0 %v2110
    %2735 = vmatpush1.bf16.msra.mxu0 %v2109
    %2736 = vmatprep.subr.bf16.mxu0 %v2118
    %2737 = vmatpush1.bf16.msra.mxu0 %v2117
    %2738 = vmatprep.subr.bf16.mxu0 %v2126
    %2739 = vmatpush1.bf16.msra.mxu0 %v2125
    %2740 = vmatprep.subr.bf16.mxu0 %v2134
    %2741 = vmatpush1.bf16.msra.mxu0 %v2133
    %2742 = vmatprep.subr.bf16.mxu0 %v2142
    %2743 = vmatpush1.bf16.msra.mxu0 %v2141
    %2744 = vmatprep.subr.bf16.mxu0 %v2150
    %2745 = vmatpush1.bf16.msra.mxu0 %v2149
    %2746 = vmatprep.subr.bf16.mxu0 %v2158
    %2747 = vmatpush1.bf16.msra.mxu0 %v2157
    %2748 = vmatprep.mubr.bf16.mxu0 %v836
    %2749 = vmatmul.mubr.bf16.gmra.mrb[0].mxu0 %v835
    %v2750 = vpop.f32.mrb[0].mxu0
    %v2751 = vadd.f32 %v2708, %v2750
    %v2752 = vpop.f32.mrb[0].mxu0
    %v2753 = vadd.f32 %v2710, %v2752
    %v2754 = vpop.f32.mrb[0].mxu0
    %v2755 = vadd.f32 %v2712, %v2754
    %v2756 = vpop.f32.mrb[0].mxu0
    %v2757 = vadd.f32 %v2714, %v2756
    %2758 = vdwg.mxu0
    %v2759 = vmax.f32 %v2493, 0.0
    %v2760 = vmax.f32 %v2495, 0.0
    %v2761 = vmax.f32 %v2579, 0.0
    %v2762 = vmax.f32 %v2581, 0.0
    %v2763 = vmax.f32 %v2665, 0.0
    %v2764 = vmax.f32 %v2667, 0.0
    %v2765 = vmax.f32 %v2751, 0.0
    %v2766 = vmax.f32 %v2753, 0.0
    %v2767 = vmax.f32 %v2497, 0.0
    %v2768 = vmax.f32 %v2499, 0.0
    %v2769 = vmax.f32 %v2583, 0.0
    %v2770 = vmax.f32 %v2585, 0.0
    %v2771 = vmax.f32 %v2669, 0.0
    %v2772 = vmax.f32 %v2671, 0.0
    %v2773 = vmax.f32 %v2755, 0.0
    %v2774 = vmax.f32 %v2757, 0.0
    %v2775 = vpack.c.bf16 %v2767, %v2759
    %v2776 = vpack.c.bf16 %v2768, %v2760
    %v2777 = vpack.c.bf16 %v2769, %v2761
    %v2778 = vpack.c.bf16 %v2770, %v2762
    %v2779 = vpack.c.bf16 %v2771, %v2763
    %v2780 = vpack.c.bf16 %v2772, %v2764
    %v2781 = vpack.c.bf16 %v2773, %v2765
    %v2782 = vpack.c.bf16 %v2774, %v2766
    %s2783 = smul.u32 4, 128
    %s2784 = smul.u32 %s2783, 7
    %s2785 = sshll.u32 %s2784, 4
    %2786 = dma.done [#allocation3], %s2785
    %v2787 = vld [vmem:[#allocation2] sm:$0xff]
    %v2788 = vld [vmem:[#allocation2 + $0x8] sm:$0xff]
    %v2789 = vld [vmem:[#allocation2 + $0x10] sm:$0xff]
    %v2790 = vld [vmem:[#allocation2 + $0x18] sm:$0xff]
    %v2791 = vld [vmem:[#allocation2 + $0x20] sm:$0xff]
    %v2792 = vld [vmem:[#allocation2 + $0x28] sm:$0xff]
    %v2793 = vld [vmem:[#allocation2 + $0x30] sm:$0xff]
    %v2794 = vld [vmem:[#allocation2 + $0x38] sm:$0xff]
    %v2795 = vld [vmem:[#allocation2 + $0x40] sm:$0xff]
    %v2796 = vld [vmem:[#allocation2 + $0x48] sm:$0xff]
    %v2797 = vld [vmem:[#allocation2 + $0x50] sm:$0xff]
    %v2798 = vld [vmem:[#allocation2 + $0x58] sm:$0xff]
    %v2799 = vld [vmem:[#allocation2 + $0x60] sm:$0xff]
    %v2800 = vld [vmem:[#allocation2 + $0x68] sm:$0xff]
    %v2801 = vld [vmem:[#allocation2 + $0x70] sm:$0xff]
    %v2802 = vld [vmem:[#allocation2 + $0x78] sm:$0xff]
    %v2803 = vld [vmem:[#allocation2 + $0x80] sm:$0xff]
    %v2804 = vld [vmem:[#allocation2 + $0x88] sm:$0xff]
    %v2805 = vld [vmem:[#allocation2 + $0x90] sm:$0xff]
    %v2806 = vld [vmem:[#allocation2 + $0x98] sm:$0xff]
    %v2807 = vld [vmem:[#allocation2 + $0xa0] sm:$0xff]
    %v2808 = vld [vmem:[#allocation2 + $0xa8] sm:$0xff]
    %v2809 = vld [vmem:[#allocation2 + $0xb0] sm:$0xff]
    %v2810 = vld [vmem:[#allocation2 + $0xb8] sm:$0xff]
    %v2811 = vld [vmem:[#allocation2 + $0xc0] sm:$0xff]
    %v2812 = vld [vmem:[#allocation2 + $0xc8] sm:$0xff]
    %v2813 = vld [vmem:[#allocation2 + $0xd0] sm:$0xff]
    %v2814 = vld [vmem:[#allocation2 + $0xd8] sm:$0xff]
    %v2815 = vld [vmem:[#allocation2 + $0xe0] sm:$0xff]
    %v2816 = vld [vmem:[#allocation2 + $0xe8] sm:$0xff]
    %v2817 = vld [vmem:[#allocation2 + $0xf0] sm:$0xff]
    %v2818 = vld [vmem:[#allocation2 + $0xf8] sm:$0xff]
    %v2819 = vld [vmem:[#allocation2 + $0x100] sm:$0xff]
    %v2820 = vld [vmem:[#allocation2 + $0x108] sm:$0xff]
    %v2821 = vld [vmem:[#allocation2 + $0x110] sm:$0xff]
    %v2822 = vld [vmem:[#allocation2 + $0x118] sm:$0xff]
    %v2823 = vld [vmem:[#allocation2 + $0x120] sm:$0xff]
    %v2824 = vld [vmem:[#allocation2 + $0x128] sm:$0xff]
    %v2825 = vld [vmem:[#allocation2 + $0x130] sm:$0xff]
    %v2826 = vld [vmem:[#allocation2 + $0x138] sm:$0xff]
    %v2827 = vld [vmem:[#allocation2 + $0x140] sm:$0xff]
    %v2828 = vld [vmem:[#allocation2 + $0x148] sm:$0xff]
    %v2829 = vld [vmem:[#allocation2 + $0x150] sm:$0xff]
    %v2830 = vld [vmem:[#allocation2 + $0x158] sm:$0xff]
    %v2831 = vld [vmem:[#allocation2 + $0x160] sm:$0xff]
    %v2832 = vld [vmem:[#allocation2 + $0x168] sm:$0xff]
    %v2833 = vld [vmem:[#allocation2 + $0x170] sm:$0xff]
    %v2834 = vld [vmem:[#allocation2 + $0x178] sm:$0xff]
    %v2835 = vld [vmem:[#allocation2 + $0x180] sm:$0xff]
    %v2836 = vld [vmem:[#allocation2 + $0x188] sm:$0xff]
    %v2837 = vld [vmem:[#allocation2 + $0x190] sm:$0xff]
    %v2838 = vld [vmem:[#allocation2 + $0x198] sm:$0xff]
    %v2839 = vld [vmem:[#allocation2 + $0x1a0] sm:$0xff]
    %v2840 = vld [vmem:[#allocation2 + $0x1a8] sm:$0xff]
    %v2841 = vld [vmem:[#allocation2 + $0x1b0] sm:$0xff]
    %v2842 = vld [vmem:[#allocation2 + $0x1b8] sm:$0xff]
    %v2843 = vld [vmem:[#allocation2 + $0x1c0] sm:$0xff]
    %v2844 = vld [vmem:[#allocation2 + $0x1c8] sm:$0xff]
    %v2845 = vld [vmem:[#allocation2 + $0x1d0] sm:$0xff]
    %v2846 = vld [vmem:[#allocation2 + $0x1d8] sm:$0xff]
    %v2847 = vld [vmem:[#allocation2 + $0x1e0] sm:$0xff]
    %v2848 = vld [vmem:[#allocation2 + $0x1e8] sm:$0xff]
    %v2849 = vld [vmem:[#allocation2 + $0x1f0] sm:$0xff]
    %v2850 = vld [vmem:[#allocation2 + $0x1f8] sm:$0xff]
    %v2851 = vld [vmem:[#allocation2 + $0x200] sm:$0xff]
    %v2852 = vld [vmem:[#allocation2 + $0x208] sm:$0xff]
    %v2853 = vld [vmem:[#allocation2 + $0x210] sm:$0xff]
    %v2854 = vld [vmem:[#allocation2 + $0x218] sm:$0xff]
    %v2855 = vld [vmem:[#allocation2 + $0x220] sm:$0xff]
    %v2856 = vld [vmem:[#allocation2 + $0x228] sm:$0xff]
    %v2857 = vld [vmem:[#allocation2 + $0x230] sm:$0xff]
    %v2858 = vld [vmem:[#allocation2 + $0x238] sm:$0xff]
    %v2859 = vld [vmem:[#allocation2 + $0x240] sm:$0xff]
    %v2860 = vld [vmem:[#allocation2 + $0x248] sm:$0xff]
    %v2861 = vld [vmem:[#allocation2 + $0x250] sm:$0xff]
    %v2862 = vld [vmem:[#allocation2 + $0x258] sm:$0xff]
    %v2863 = vld [vmem:[#allocation2 + $0x260] sm:$0xff]
    %v2864 = vld [vmem:[#allocation2 + $0x268] sm:$0xff]
    %v2865 = vld [vmem:[#allocation2 + $0x270] sm:$0xff]
    %v2866 = vld [vmem:[#allocation2 + $0x278] sm:$0xff]
    %v2867 = vld [vmem:[#allocation2 + $0x280] sm:$0xff]
    %v2868 = vld [vmem:[#allocation2 + $0x288] sm:$0xff]
    %v2869 = vld [vmem:[#allocation2 + $0x290] sm:$0xff]
    %v2870 = vld [vmem:[#allocation2 + $0x298] sm:$0xff]
    %v2871 = vld [vmem:[#allocation2 + $0x2a0] sm:$0xff]
    %v2872 = vld [vmem:[#allocation2 + $0x2a8] sm:$0xff]
    %v2873 = vld [vmem:[#allocation2 + $0x2b0] sm:$0xff]
    %v2874 = vld [vmem:[#allocation2 + $0x2b8] sm:$0xff]
    %v2875 = vld [vmem:[#allocation2 + $0x2c0] sm:$0xff]
    %v2876 = vld [vmem:[#allocation2 + $0x2c8] sm:$0xff]
    %v2877 = vld [vmem:[#allocation2 + $0x2d0] sm:$0xff]
    %v2878 = vld [vmem:[#allocation2 + $0x2d8] sm:$0xff]
    %v2879 = vld [vmem:[#allocation2 + $0x2e0] sm:$0xff]
    %v2880 = vld [vmem:[#allocation2 + $0x2e8] sm:$0xff]
    %v2881 = vld [vmem:[#allocation2 + $0x2f0] sm:$0xff]
    %v2882 = vld [vmem:[#allocation2 + $0x2f8] sm:$0xff]
    %v2883 = vld [vmem:[#allocation2 + $0x300] sm:$0xff]
    %v2884 = vld [vmem:[#allocation2 + $0x308] sm:$0xff]
    %v2885 = vld [vmem:[#allocation2 + $0x310] sm:$0xff]
    %v2886 = vld [vmem:[#allocation2 + $0x318] sm:$0xff]
    %v2887 = vld [vmem:[#allocation2 + $0x320] sm:$0xff]
    %v2888 = vld [vmem:[#allocation2 + $0x328] sm:$0xff]
    %v2889 = vld [vmem:[#allocation2 + $0x330] sm:$0xff]
    %v2890 = vld [vmem:[#allocation2 + $0x338] sm:$0xff]
    %v2891 = vld [vmem:[#allocation2 + $0x340] sm:$0xff]
    %v2892 = vld [vmem:[#allocation2 + $0x348] sm:$0xff]
    %v2893 = vld [vmem:[#allocation2 + $0x350] sm:$0xff]
    %v2894 = vld [vmem:[#allocation2 + $0x358] sm:$0xff]
    %v2895 = vld [vmem:[#allocation2 + $0x360] sm:$0xff]
    %v2896 = vld [vmem:[#allocation2 + $0x368] sm:$0xff]
    %v2897 = vld [vmem:[#allocation2 + $0x370] sm:$0xff]
    %v2898 = vld [vmem:[#allocation2 + $0x378] sm:$0xff]
    %v2899 = vld [vmem:[#allocation2 + $0x380] sm:$0xff]
    %v2900 = vld [vmem:[#allocation2 + $0x388] sm:$0xff]
    %v2901 = vld [vmem:[#allocation2 + $0x390] sm:$0xff]
    %v2902 = vld [vmem:[#allocation2 + $0x398] sm:$0xff]
    %v2903 = vld [vmem:[#allocation2 + $0x3a0] sm:$0xff]
    %v2904 = vld [vmem:[#allocation2 + $0x3a8] sm:$0xff]
    %v2905 = vld [vmem:[#allocation2 + $0x3b0] sm:$0xff]
    %v2906 = vld [vmem:[#allocation2 + $0x3b8] sm:$0xff]
    %v2907 = vld [vmem:[#allocation2 + $0x3c0] sm:$0xff]
    %v2908 = vld [vmem:[#allocation2 + $0x3c8] sm:$0xff]
    %v2909 = vld [vmem:[#allocation2 + $0x3d0] sm:$0xff]
    %v2910 = vld [vmem:[#allocation2 + $0x3d8] sm:$0xff]
    %v2911 = vld [vmem:[#allocation2 + $0x3e0] sm:$0xff]
    %v2912 = vld [vmem:[#allocation2 + $0x3e8] sm:$0xff]
    %v2913 = vld [vmem:[#allocation2 + $0x3f0] sm:$0xff]
    %v2914 = vld [vmem:[#allocation2 + $0x3f8] sm:$0xff]
    %v2915 = vld [vmem:[#allocation2 + $0x400] sm:$0xff]
    %v2916 = vld [vmem:[#allocation2 + $0x408] sm:$0xff]
    %v2917 = vld [vmem:[#allocation2 + $0x410] sm:$0xff]
    %v2918 = vld [vmem:[#allocation2 + $0x418] sm:$0xff]
    %v2919 = vld [vmem:[#allocation2 + $0x420] sm:$0xff]
    %v2920 = vld [vmem:[#allocation2 + $0x428] sm:$0xff]
    %v2921 = vld [vmem:[#allocation2 + $0x430] sm:$0xff]
    %v2922 = vld [vmem:[#allocation2 + $0x438] sm:$0xff]
    %v2923 = vld [vmem:[#allocation2 + $0x440] sm:$0xff]
    %v2924 = vld [vmem:[#allocation2 + $0x448] sm:$0xff]
    %v2925 = vld [vmem:[#allocation2 + $0x450] sm:$0xff]
    %v2926 = vld [vmem:[#allocation2 + $0x458] sm:$0xff]
    %v2927 = vld [vmem:[#allocation2 + $0x460] sm:$0xff]
    %v2928 = vld [vmem:[#allocation2 + $0x468] sm:$0xff]
    %v2929 = vld [vmem:[#allocation2 + $0x470] sm:$0xff]
    %v2930 = vld [vmem:[#allocation2 + $0x478] sm:$0xff]
    %v2931 = vld [vmem:[#allocation2 + $0x480] sm:$0xff]
    %v2932 = vld [vmem:[#allocation2 + $0x488] sm:$0xff]
    %v2933 = vld [vmem:[#allocation2 + $0x490] sm:$0xff]
    %v2934 = vld [vmem:[#allocation2 + $0x498] sm:$0xff]
    %v2935 = vld [vmem:[#allocation2 + $0x4a0] sm:$0xff]
    %v2936 = vld [vmem:[#allocation2 + $0x4a8] sm:$0xff]
    %v2937 = vld [vmem:[#allocation2 + $0x4b0] sm:$0xff]
    %v2938 = vld [vmem:[#allocation2 + $0x4b8] sm:$0xff]
    %v2939 = vld [vmem:[#allocation2 + $0x4c0] sm:$0xff]
    %v2940 = vld [vmem:[#allocation2 + $0x4c8] sm:$0xff]
    %v2941 = vld [vmem:[#allocation2 + $0x4d0] sm:$0xff]
    %v2942 = vld [vmem:[#allocation2 + $0x4d8] sm:$0xff]
    %v2943 = vld [vmem:[#allocation2 + $0x4e0] sm:$0xff]
    %v2944 = vld [vmem:[#allocation2 + $0x4e8] sm:$0xff]
    %v2945 = vld [vmem:[#allocation2 + $0x4f0] sm:$0xff]
    %v2946 = vld [vmem:[#allocation2 + $0x4f8] sm:$0xff]
    %v2947 = vld [vmem:[#allocation2 + $0x500] sm:$0xff]
    %v2948 = vld [vmem:[#allocation2 + $0x508] sm:$0xff]
    %v2949 = vld [vmem:[#allocation2 + $0x510] sm:$0xff]
    %v2950 = vld [vmem:[#allocation2 + $0x518] sm:$0xff]
    %v2951 = vld [vmem:[#allocation2 + $0x520] sm:$0xff]
    %v2952 = vld [vmem:[#allocation2 + $0x528] sm:$0xff]
    %v2953 = vld [vmem:[#allocation2 + $0x530] sm:$0xff]
    %v2954 = vld [vmem:[#allocation2 + $0x538] sm:$0xff]
    %v2955 = vld [vmem:[#allocation2 + $0x540] sm:$0xff]
    %v2956 = vld [vmem:[#allocation2 + $0x548] sm:$0xff]
    %v2957 = vld [vmem:[#allocation2 + $0x550] sm:$0xff]
    %v2958 = vld [vmem:[#allocation2 + $0x558] sm:$0xff]
    %v2959 = vld [vmem:[#allocation2 + $0x560] sm:$0xff]
    %v2960 = vld [vmem:[#allocation2 + $0x568] sm:$0xff]
    %v2961 = vld [vmem:[#allocation2 + $0x570] sm:$0xff]
    %v2962 = vld [vmem:[#allocation2 + $0x578] sm:$0xff]
    %v2963 = vld [vmem:[#allocation2 + $0x580] sm:$0xff]
    %v2964 = vld [vmem:[#allocation2 + $0x588] sm:$0xff]
    %v2965 = vld [vmem:[#allocation2 + $0x590] sm:$0xff]
    %v2966 = vld [vmem:[#allocation2 + $0x598] sm:$0xff]
    %v2967 = vld [vmem:[#allocation2 + $0x5a0] sm:$0xff]
    %v2968 = vld [vmem:[#allocation2 + $0x5a8] sm:$0xff]
    %v2969 = vld [vmem:[#allocation2 + $0x5b0] sm:$0xff]
    %v2970 = vld [vmem:[#allocation2 + $0x5b8] sm:$0xff]
    %v2971 = vld [vmem:[#allocation2 + $0x5c0] sm:$0xff]
    %v2972 = vld [vmem:[#allocation2 + $0x5c8] sm:$0xff]
    %v2973 = vld [vmem:[#allocation2 + $0x5d0] sm:$0xff]
    %v2974 = vld [vmem:[#allocation2 + $0x5d8] sm:$0xff]
    %v2975 = vld [vmem:[#allocation2 + $0x5e0] sm:$0xff]
    %v2976 = vld [vmem:[#allocation2 + $0x5e8] sm:$0xff]
    %v2977 = vld [vmem:[#allocation2 + $0x5f0] sm:$0xff]
    %v2978 = vld [vmem:[#allocation2 + $0x5f8] sm:$0xff]
    %v2979 = vld [vmem:[#allocation2 + $0x600] sm:$0xff]
    %v2980 = vld [vmem:[#allocation2 + $0x608] sm:$0xff]
    %v2981 = vld [vmem:[#allocation2 + $0x610] sm:$0xff]
    %v2982 = vld [vmem:[#allocation2 + $0x618] sm:$0xff]
    %v2983 = vld [vmem:[#allocation2 + $0x620] sm:$0xff]
    %v2984 = vld [vmem:[#allocation2 + $0x628] sm:$0xff]
    %v2985 = vld [vmem:[#allocation2 + $0x630] sm:$0xff]
    %v2986 = vld [vmem:[#allocation2 + $0x638] sm:$0xff]
    %v2987 = vld [vmem:[#allocation2 + $0x640] sm:$0xff]
    %v2988 = vld [vmem:[#allocation2 + $0x648] sm:$0xff]
    %v2989 = vld [vmem:[#allocation2 + $0x650] sm:$0xff]
    %v2990 = vld [vmem:[#allocation2 + $0x658] sm:$0xff]
    %v2991 = vld [vmem:[#allocation2 + $0x660] sm:$0xff]
    %v2992 = vld [vmem:[#allocation2 + $0x668] sm:$0xff]
    %v2993 = vld [vmem:[#allocation2 + $0x670] sm:$0xff]
    %v2994 = vld [vmem:[#allocation2 + $0x678] sm:$0xff]
    %v2995 = vld [vmem:[#allocation2 + $0x680] sm:$0xff]
    %v2996 = vld [vmem:[#allocation2 + $0x688] sm:$0xff]
    %v2997 = vld [vmem:[#allocation2 + $0x690] sm:$0xff]
    %v2998 = vld [vmem:[#allocation2 + $0x698] sm:$0xff]
    %v2999 = vld [vmem:[#allocation2 + $0x6a0] sm:$0xff]
    %v3000 = vld [vmem:[#allocation2 + $0x6a8] sm:$0xff]
    %v3001 = vld [vmem:[#allocation2 + $0x6b0] sm:$0xff]
    %v3002 = vld [vmem:[#allocation2 + $0x6b8] sm:$0xff]
    %v3003 = vld [vmem:[#allocation2 + $0x6c0] sm:$0xff]
    %v3004 = vld [vmem:[#allocation2 + $0x6c8] sm:$0xff]
    %v3005 = vld [vmem:[#allocation2 + $0x6d0] sm:$0xff]
    %v3006 = vld [vmem:[#allocation2 + $0x6d8] sm:$0xff]
    %v3007 = vld [vmem:[#allocation2 + $0x6e0] sm:$0xff]
    %v3008 = vld [vmem:[#allocation2 + $0x6e8] sm:$0xff]
    %v3009 = vld [vmem:[#allocation2 + $0x6f0] sm:$0xff]
    %v3010 = vld [vmem:[#allocation2 + $0x6f8] sm:$0xff]
    %v3011 = vld [vmem:[#allocation2 + $0x700] sm:$0xff]
    %v3012 = vld [vmem:[#allocation2 + $0x708] sm:$0xff]
    %v3013 = vld [vmem:[#allocation2 + $0x710] sm:$0xff]
    %v3014 = vld [vmem:[#allocation2 + $0x718] sm:$0xff]
    %v3015 = vld [vmem:[#allocation2 + $0x720] sm:$0xff]
    %v3016 = vld [vmem:[#allocation2 + $0x728] sm:$0xff]
    %v3017 = vld [vmem:[#allocation2 + $0x730] sm:$0xff]
    %v3018 = vld [vmem:[#allocation2 + $0x738] sm:$0xff]
    %v3019 = vld [vmem:[#allocation2 + $0x740] sm:$0xff]
    %v3020 = vld [vmem:[#allocation2 + $0x748] sm:$0xff]
    %v3021 = vld [vmem:[#allocation2 + $0x750] sm:$0xff]
    %v3022 = vld [vmem:[#allocation2 + $0x758] sm:$0xff]
    %v3023 = vld [vmem:[#allocation2 + $0x760] sm:$0xff]
    %v3024 = vld [vmem:[#allocation2 + $0x768] sm:$0xff]
    %v3025 = vld [vmem:[#allocation2 + $0x770] sm:$0xff]
    %v3026 = vld [vmem:[#allocation2 + $0x778] sm:$0xff]
    %v3027 = vld [vmem:[#allocation2 + $0x780] sm:$0xff]
    %v3028 = vld [vmem:[#allocation2 + $0x788] sm:$0xff]
    %v3029 = vld [vmem:[#allocation2 + $0x790] sm:$0xff]
    %v3030 = vld [vmem:[#allocation2 + $0x798] sm:$0xff]
    %v3031 = vld [vmem:[#allocation2 + $0x7a0] sm:$0xff]
    %v3032 = vld [vmem:[#allocation2 + $0x7a8] sm:$0xff]
    %v3033 = vld [vmem:[#allocation2 + $0x7b0] sm:$0xff]
    %v3034 = vld [vmem:[#allocation2 + $0x7b8] sm:$0xff]
    %v3035 = vld [vmem:[#allocation2 + $0x7c0] sm:$0xff]
    %v3036 = vld [vmem:[#allocation2 + $0x7c8] sm:$0xff]
    %v3037 = vld [vmem:[#allocation2 + $0x7d0] sm:$0xff]
    %v3038 = vld [vmem:[#allocation2 + $0x7d8] sm:$0xff]
    %v3039 = vld [vmem:[#allocation2 + $0x7e0] sm:$0xff]
    %v3040 = vld [vmem:[#allocation2 + $0x7e8] sm:$0xff]
    %v3041 = vld [vmem:[#allocation2 + $0x7f0] sm:$0xff]
    %v3042 = vld [vmem:[#allocation2 + $0x7f8] sm:$0xff]
    %v3043 = vld [vmem:[#allocation2 + $0x800] sm:$0xff]
    %v3044 = vld [vmem:[#allocation2 + $0x808] sm:$0xff]
    %v3045 = vld [vmem:[#allocation2 + $0x810] sm:$0xff]
    %v3046 = vld [vmem:[#allocation2 + $0x818] sm:$0xff]
    %v3047 = vld [vmem:[#allocation2 + $0x820] sm:$0xff]
    %v3048 = vld [vmem:[#allocation2 + $0x828] sm:$0xff]
    %v3049 = vld [vmem:[#allocation2 + $0x830] sm:$0xff]
    %v3050 = vld [vmem:[#allocation2 + $0x838] sm:$0xff]
    %v3051 = vld [vmem:[#allocation2 + $0x840] sm:$0xff]
    %v3052 = vld [vmem:[#allocation2 + $0x848] sm:$0xff]
    %v3053 = vld [vmem:[#allocation2 + $0x850] sm:$0xff]
    %v3054 = vld [vmem:[#allocation2 + $0x858] sm:$0xff]
    %v3055 = vld [vmem:[#allocation2 + $0x860] sm:$0xff]
    %v3056 = vld [vmem:[#allocation2 + $0x868] sm:$0xff]
    %v3057 = vld [vmem:[#allocation2 + $0x870] sm:$0xff]
    %v3058 = vld [vmem:[#allocation2 + $0x878] sm:$0xff]
    %v3059 = vld [vmem:[#allocation2 + $0x880] sm:$0xff]
    %v3060 = vld [vmem:[#allocation2 + $0x888] sm:$0xff]
    %v3061 = vld [vmem:[#allocation2 + $0x890] sm:$0xff]
    %v3062 = vld [vmem:[#allocation2 + $0x898] sm:$0xff]
    %v3063 = vld [vmem:[#allocation2 + $0x8a0] sm:$0xff]
    %v3064 = vld [vmem:[#allocation2 + $0x8a8] sm:$0xff]
    %v3065 = vld [vmem:[#allocation2 + $0x8b0] sm:$0xff]
    %v3066 = vld [vmem:[#allocation2 + $0x8b8] sm:$0xff]
    %v3067 = vld [vmem:[#allocation2 + $0x8c0] sm:$0xff]
    %v3068 = vld [vmem:[#allocation2 + $0x8c8] sm:$0xff]
    %v3069 = vld [vmem:[#allocation2 + $0x8d0] sm:$0xff]
    %v3070 = vld [vmem:[#allocation2 + $0x8d8] sm:$0xff]
    %v3071 = vld [vmem:[#allocation2 + $0x8e0] sm:$0xff]
    %v3072 = vld [vmem:[#allocation2 + $0x8e8] sm:$0xff]
    %v3073 = vld [vmem:[#allocation2 + $0x8f0] sm:$0xff]
    %v3074 = vld [vmem:[#allocation2 + $0x8f8] sm:$0xff]
    %v3075 = vld [vmem:[#allocation2 + $0x900] sm:$0xff]
    %v3076 = vld [vmem:[#allocation2 + $0x908] sm:$0xff]
    %v3077 = vld [vmem:[#allocation2 + $0x910] sm:$0xff]
    %v3078 = vld [vmem:[#allocation2 + $0x918] sm:$0xff]
    %v3079 = vld [vmem:[#allocation2 + $0x920] sm:$0xff]
    %v3080 = vld [vmem:[#allocation2 + $0x928] sm:$0xff]
    %v3081 = vld [vmem:[#allocation2 + $0x930] sm:$0xff]
    %v3082 = vld [vmem:[#allocation2 + $0x938] sm:$0xff]
    %v3083 = vld [vmem:[#allocation2 + $0x940] sm:$0xff]
    %v3084 = vld [vmem:[#allocation2 + $0x948] sm:$0xff]
    %v3085 = vld [vmem:[#allocation2 + $0x950] sm:$0xff]
    %v3086 = vld [vmem:[#allocation2 + $0x958] sm:$0xff]
    %v3087 = vld [vmem:[#allocation2 + $0x960] sm:$0xff]
    %v3088 = vld [vmem:[#allocation2 + $0x968] sm:$0xff]
    %v3089 = vld [vmem:[#allocation2 + $0x970] sm:$0xff]
    %v3090 = vld [vmem:[#allocation2 + $0x978] sm:$0xff]
    %v3091 = vld [vmem:[#allocation2 + $0x980] sm:$0xff]
    %v3092 = vld [vmem:[#allocation2 + $0x988] sm:$0xff]
    %v3093 = vld [vmem:[#allocation2 + $0x990] sm:$0xff]
    %v3094 = vld [vmem:[#allocation2 + $0x998] sm:$0xff]
    %v3095 = vld [vmem:[#allocation2 + $0x9a0] sm:$0xff]
    %v3096 = vld [vmem:[#allocation2 + $0x9a8] sm:$0xff]
    %v3097 = vld [vmem:[#allocation2 + $0x9b0] sm:$0xff]
    %v3098 = vld [vmem:[#allocation2 + $0x9b8] sm:$0xff]
    %v3099 = vld [vmem:[#allocation2 + $0x9c0] sm:$0xff]
    %v3100 = vld [vmem:[#allocation2 + $0x9c8] sm:$0xff]
    %v3101 = vld [vmem:[#allocation2 + $0x9d0] sm:$0xff]
    %v3102 = vld [vmem:[#allocation2 + $0x9d8] sm:$0xff]
    %v3103 = vld [vmem:[#allocation2 + $0x9e0] sm:$0xff]
    %v3104 = vld [vmem:[#allocation2 + $0x9e8] sm:$0xff]
    %v3105 = vld [vmem:[#allocation2 + $0x9f0] sm:$0xff]
    %v3106 = vld [vmem:[#allocation2 + $0x9f8] sm:$0xff]
    %v3107 = vld [vmem:[#allocation2 + $0xa00] sm:$0xff]
    %v3108 = vld [vmem:[#allocation2 + $0xa08] sm:$0xff]
    %v3109 = vld [vmem:[#allocation2 + $0xa10] sm:$0xff]
    %v3110 = vld [vmem:[#allocation2 + $0xa18] sm:$0xff]
    %v3111 = vld [vmem:[#allocation2 + $0xa20] sm:$0xff]
    %v3112 = vld [vmem:[#allocation2 + $0xa28] sm:$0xff]
    %v3113 = vld [vmem:[#allocation2 + $0xa30] sm:$0xff]
    %v3114 = vld [vmem:[#allocation2 + $0xa38] sm:$0xff]
    %v3115 = vld [vmem:[#allocation2 + $0xa40] sm:$0xff]
    %v3116 = vld [vmem:[#allocation2 + $0xa48] sm:$0xff]
    %v3117 = vld [vmem:[#allocation2 + $0xa50] sm:$0xff]
    %v3118 = vld [vmem:[#allocation2 + $0xa58] sm:$0xff]
    %v3119 = vld [vmem:[#allocation2 + $0xa60] sm:$0xff]
    %v3120 = vld [vmem:[#allocation2 + $0xa68] sm:$0xff]
    %v3121 = vld [vmem:[#allocation2 + $0xa70] sm:$0xff]
    %v3122 = vld [vmem:[#allocation2 + $0xa78] sm:$0xff]
    %v3123 = vld [vmem:[#allocation2 + $0xa80] sm:$0xff]
    %v3124 = vld [vmem:[#allocation2 + $0xa88] sm:$0xff]
    %v3125 = vld [vmem:[#allocation2 + $0xa90] sm:$0xff]
    %v3126 = vld [vmem:[#allocation2 + $0xa98] sm:$0xff]
    %v3127 = vld [vmem:[#allocation2 + $0xaa0] sm:$0xff]
    %v3128 = vld [vmem:[#allocation2 + $0xaa8] sm:$0xff]
    %v3129 = vld [vmem:[#allocation2 + $0xab0] sm:$0xff]
    %v3130 = vld [vmem:[#allocation2 + $0xab8] sm:$0xff]
    %v3131 = vld [vmem:[#allocation2 + $0xac0] sm:$0xff]
    %v3132 = vld [vmem:[#allocation2 + $0xac8] sm:$0xff]
    %v3133 = vld [vmem:[#allocation2 + $0xad0] sm:$0xff]
    %v3134 = vld [vmem:[#allocation2 + $0xad8] sm:$0xff]
    %v3135 = vld [vmem:[#allocation2 + $0xae0] sm:$0xff]
    %v3136 = vld [vmem:[#allocation2 + $0xae8] sm:$0xff]
    %v3137 = vld [vmem:[#allocation2 + $0xaf0] sm:$0xff]
    %v3138 = vld [vmem:[#allocation2 + $0xaf8] sm:$0xff]
    %v3139 = vld [vmem:[#allocation2 + $0xb00] sm:$0xff]
    %v3140 = vld [vmem:[#allocation2 + $0xb08] sm:$0xff]
    %v3141 = vld [vmem:[#allocation2 + $0xb10] sm:$0xff]
    %v3142 = vld [vmem:[#allocation2 + $0xb18] sm:$0xff]
    %v3143 = vld [vmem:[#allocation2 + $0xb20] sm:$0xff]
    %v3144 = vld [vmem:[#allocation2 + $0xb28] sm:$0xff]
    %v3145 = vld [vmem:[#allocation2 + $0xb30] sm:$0xff]
    %v3146 = vld [vmem:[#allocation2 + $0xb38] sm:$0xff]
    %v3147 = vld [vmem:[#allocation2 + $0xb40] sm:$0xff]
    %v3148 = vld [vmem:[#allocation2 + $0xb48] sm:$0xff]
    %v3149 = vld [vmem:[#allocation2 + $0xb50] sm:$0xff]
    %v3150 = vld [vmem:[#allocation2 + $0xb58] sm:$0xff]
    %v3151 = vld [vmem:[#allocation2 + $0xb60] sm:$0xff]
    %v3152 = vld [vmem:[#allocation2 + $0xb68] sm:$0xff]
    %v3153 = vld [vmem:[#allocation2 + $0xb70] sm:$0xff]
    %v3154 = vld [vmem:[#allocation2 + $0xb78] sm:$0xff]
    %v3155 = vld [vmem:[#allocation2 + $0xb80] sm:$0xff]
    %v3156 = vld [vmem:[#allocation2 + $0xb88] sm:$0xff]
    %v3157 = vld [vmem:[#allocation2 + $0xb90] sm:$0xff]
    %v3158 = vld [vmem:[#allocation2 + $0xb98] sm:$0xff]
    %v3159 = vld [vmem:[#allocation2 + $0xba0] sm:$0xff]
    %v3160 = vld [vmem:[#allocation2 + $0xba8] sm:$0xff]
    %v3161 = vld [vmem:[#allocation2 + $0xbb0] sm:$0xff]
    %v3162 = vld [vmem:[#allocation2 + $0xbb8] sm:$0xff]
    %v3163 = vld [vmem:[#allocation2 + $0xbc0] sm:$0xff]
    %v3164 = vld [vmem:[#allocation2 + $0xbc8] sm:$0xff]
    %v3165 = vld [vmem:[#allocation2 + $0xbd0] sm:$0xff]
    %v3166 = vld [vmem:[#allocation2 + $0xbd8] sm:$0xff]
    %v3167 = vld [vmem:[#allocation2 + $0xbe0] sm:$0xff]
    %v3168 = vld [vmem:[#allocation2 + $0xbe8] sm:$0xff]
    %v3169 = vld [vmem:[#allocation2 + $0xbf0] sm:$0xff]
    %v3170 = vld [vmem:[#allocation2 + $0xbf8] sm:$0xff]
    %v3171 = vld [vmem:[#allocation2 + $0xc00] sm:$0xff]
    %v3172 = vld [vmem:[#allocation2 + $0xc08] sm:$0xff]
    %v3173 = vld [vmem:[#allocation2 + $0xc10] sm:$0xff]
    %v3174 = vld [vmem:[#allocation2 + $0xc18] sm:$0xff]
    %v3175 = vld [vmem:[#allocation2 + $0xc20] sm:$0xff]
    %v3176 = vld [vmem:[#allocation2 + $0xc28] sm:$0xff]
    %v3177 = vld [vmem:[#allocation2 + $0xc30] sm:$0xff]
    %v3178 = vld [vmem:[#allocation2 + $0xc38] sm:$0xff]
    %v3179 = vld [vmem:[#allocation2 + $0xc40] sm:$0xff]
    %v3180 = vld [vmem:[#allocation2 + $0xc48] sm:$0xff]
    %v3181 = vld [vmem:[#allocation2 + $0xc50] sm:$0xff]
    %v3182 = vld [vmem:[#allocation2 + $0xc58] sm:$0xff]
    %v3183 = vld [vmem:[#allocation2 + $0xc60] sm:$0xff]
    %v3184 = vld [vmem:[#allocation2 + $0xc68] sm:$0xff]
    %v3185 = vld [vmem:[#allocation2 + $0xc70] sm:$0xff]
    %v3186 = vld [vmem:[#allocation2 + $0xc78] sm:$0xff]
    %v3187 = vld [vmem:[#allocation2 + $0xc80] sm:$0xff]
    %v3188 = vld [vmem:[#allocation2 + $0xc88] sm:$0xff]
    %v3189 = vld [vmem:[#allocation2 + $0xc90] sm:$0xff]
    %v3190 = vld [vmem:[#allocation2 + $0xc98] sm:$0xff]
    %v3191 = vld [vmem:[#allocation2 + $0xca0] sm:$0xff]
    %v3192 = vld [vmem:[#allocation2 + $0xca8] sm:$0xff]
    %v3193 = vld [vmem:[#allocation2 + $0xcb0] sm:$0xff]
    %v3194 = vld [vmem:[#allocation2 + $0xcb8] sm:$0xff]
    %v3195 = vld [vmem:[#allocation2 + $0xcc0] sm:$0xff]
    %v3196 = vld [vmem:[#allocation2 + $0xcc8] sm:$0xff]
    %v3197 = vld [vmem:[#allocation2 + $0xcd0] sm:$0xff]
    %v3198 = vld [vmem:[#allocation2 + $0xcd8] sm:$0xff]
    %v3199 = vld [vmem:[#allocation2 + $0xce0] sm:$0xff]
    %v3200 = vld [vmem:[#allocation2 + $0xce8] sm:$0xff]
    %v3201 = vld [vmem:[#allocation2 + $0xcf0] sm:$0xff]
    %v3202 = vld [vmem:[#allocation2 + $0xcf8] sm:$0xff]
    %v3203 = vld [vmem:[#allocation2 + $0xd00] sm:$0xff]
    %v3204 = vld [vmem:[#allocation2 + $0xd08] sm:$0xff]
    %v3205 = vld [vmem:[#allocation2 + $0xd10] sm:$0xff]
    %v3206 = vld [vmem:[#allocation2 + $0xd18] sm:$0xff]
    %v3207 = vld [vmem:[#allocation2 + $0xd20] sm:$0xff]
    %v3208 = vld [vmem:[#allocation2 + $0xd28] sm:$0xff]
    %v3209 = vld [vmem:[#allocation2 + $0xd30] sm:$0xff]
    %v3210 = vld [vmem:[#allocation2 + $0xd38] sm:$0xff]
    %v3211 = vld [vmem:[#allocation2 + $0xd40] sm:$0xff]
    %v3212 = vld [vmem:[#allocation2 + $0xd48] sm:$0xff]
    %v3213 = vld [vmem:[#allocation2 + $0xd50] sm:$0xff]
    %v3214 = vld [vmem:[#allocation2 + $0xd58] sm:$0xff]
    %v3215 = vld [vmem:[#allocation2 + $0xd60] sm:$0xff]
    %v3216 = vld [vmem:[#allocation2 + $0xd68] sm:$0xff]
    %v3217 = vld [vmem:[#allocation2 + $0xd70] sm:$0xff]
    %v3218 = vld [vmem:[#allocation2 + $0xd78] sm:$0xff]
    %v3219 = vld [vmem:[#allocation2 + $0xd80] sm:$0xff]
    %v3220 = vld [vmem:[#allocation2 + $0xd88] sm:$0xff]
    %v3221 = vld [vmem:[#allocation2 + $0xd90] sm:$0xff]
    %v3222 = vld [vmem:[#allocation2 + $0xd98] sm:$0xff]
    %v3223 = vld [vmem:[#allocation2 + $0xda0] sm:$0xff]
    %v3224 = vld [vmem:[#allocation2 + $0xda8] sm:$0xff]
    %v3225 = vld [vmem:[#allocation2 + $0xdb0] sm:$0xff]
    %v3226 = vld [vmem:[#allocation2 + $0xdb8] sm:$0xff]
    %v3227 = vld [vmem:[#allocation2 + $0xdc0] sm:$0xff]
    %v3228 = vld [vmem:[#allocation2 + $0xdc8] sm:$0xff]
    %v3229 = vld [vmem:[#allocation2 + $0xdd0] sm:$0xff]
    %v3230 = vld [vmem:[#allocation2 + $0xdd8] sm:$0xff]
    %v3231 = vld [vmem:[#allocation2 + $0xde0] sm:$0xff]
    %v3232 = vld [vmem:[#allocation2 + $0xde8] sm:$0xff]
    %v3233 = vld [vmem:[#allocation2 + $0xdf0] sm:$0xff]
    %v3234 = vld [vmem:[#allocation2 + $0xdf8] sm:$0xff]
    %v3235 = vld [vmem:[#allocation16] sm:$0xff]
    %v3237 = vlaneseq
    %v3238 = vshrl.u32 %v3237, 7
    %v3239 = vsub.s32 0, %v3238
    %v3240 = vrot.slane %v3235, %v3239
    %v3241 = vlaneseq
    %v3242 = vshrl.u32 %v3241, 7
    %v3243 = vsub.s32 1, %v3242
    %v3244 = vrot.slane %v3235, %v3243
    %v3245 = vlaneseq
    %v3246 = vshrl.u32 %v3245, 7
    %v3247 = vsub.s32 2, %v3246
    %v3248 = vrot.slane %v3235, %v3247
    %v3249 = vlaneseq
    %v3250 = vshrl.u32 %v3249, 7
    %v3251 = vsub.s32 3, %v3250
    %v3252 = vrot.slane %v3235, %v3251
    %v3253 = vlaneseq
    %v3254 = vshrl.u32 %v3253, 7
    %v3255 = vsub.s32 4, %v3254
    %v3256 = vrot.slane %v3235, %v3255
    %v3257 = vlaneseq
    %v3258 = vshrl.u32 %v3257, 7
    %v3259 = vsub.s32 5, %v3258
    %v3260 = vrot.slane %v3235, %v3259
    %v3261 = vlaneseq
    %v3262 = vshrl.u32 %v3261, 7
    %v3263 = vsub.s32 6, %v3262
    %v3264 = vrot.slane %v3235, %v3263
    %3272 = vmatprep.subr.bf16.mxu0 %v2788
    %3273 = vmatpush1.bf16.msra.mxu0 %v2787
    %3274 = vmatprep.subr.bf16.mxu0 %v2795
    %3275 = vmatpush1.bf16.msra.mxu0 %v2794
    %3276 = vmatprep.subr.bf16.mxu0 %v2802
    %3277 = vmatpush1.bf16.msra.mxu0 %v2801
    %3278 = vmatprep.subr.bf16.mxu0 %v2809
    %3279 = vmatpush1.bf16.msra.mxu0 %v2808
    %3280 = vmatprep.subr.bf16.mxu0 %v2816
    %3281 = vmatpush1.bf16.msra.mxu0 %v2815
    %3282 = vmatprep.subr.bf16.mxu0 %v2823
    %3283 = vmatpush1.bf16.msra.mxu0 %v2822
    %3284 = vmatprep.subr.bf16.mxu0 %v2830
    %3285 = vmatpush1.bf16.msra.mxu0 %v2829
    %3286 = vmatprep.subr.bf16.mxu0 %v2837
    %3287 = vmatpush1.bf16.msra.mxu0 %v2836
    %3288 = vmatprep.subr.bf16.mxu0 %v2844
    %3289 = vmatpush1.bf16.msra.mxu0 %v2843
    %3290 = vmatprep.subr.bf16.mxu0 %v2851
    %3291 = vmatpush1.bf16.msra.mxu0 %v2850
    %3292 = vmatprep.subr.bf16.mxu0 %v2858
    %3293 = vmatpush1.bf16.msra.mxu0 %v2857
    %3294 = vmatprep.subr.bf16.mxu0 %v2865
    %3295 = vmatpush1.bf16.msra.mxu0 %v2864
    %3296 = vmatprep.subr.bf16.mxu0 %v2872
    %3297 = vmatpush1.bf16.msra.mxu0 %v2871
    %3298 = vmatprep.subr.bf16.mxu0 %v2879
    %3299 = vmatpush1.bf16.msra.mxu0 %v2878
    %3300 = vmatprep.subr.bf16.mxu0 %v2886
    %3301 = vmatpush1.bf16.msra.mxu0 %v2885
    %3302 = vmatprep.subr.bf16.mxu0 %v2893
    %3303 = vmatpush1.bf16.msra.mxu0 %v2892
    %3304 = vmatprep.mubr.bf16.mxu0 %v2776
    %3305 = vmatmul.mubr.bf16.gmra.mrb[0].mxu0 %v2775
    %v3306 = vpop.f32.mrb[0].mxu0
    %v3307 = vadd.f32 %v3240, %v3306
    %v3308 = vpop.f32.mrb[0].mxu0
    %v3309 = vadd.f32 %v3244, %v3308
    %v3310 = vpop.f32.mrb[0].mxu0
    %v3311 = vadd.f32 %v3240, %v3310
    %v3312 = vpop.f32.mrb[0].mxu0
    %v3313 = vadd.f32 %v3244, %v3312
    %3314 = vdwg.mxu0
    %3315 = vmatprep.subr.bf16.mxu0 %v2900
    %3316 = vmatpush1.bf16.msra.mxu0 %v2899
    %3317 = vmatprep.subr.bf16.mxu0 %v2907
    %3318 = vmatpush1.bf16.msra.mxu0 %v2906
    %3319 = vmatprep.subr.bf16.mxu0 %v2914
    %3320 = vmatpush1.bf16.msra.mxu0 %v2913
    %3321 = vmatprep.subr.bf16.mxu0 %v2921
    %3322 = vmatpush1.bf16.msra.mxu0 %v2920
    %3323 = vmatprep.subr.bf16.mxu0 %v2928
    %3324 = vmatpush1.bf16.msra.mxu0 %v2927
    %3325 = vmatprep.subr.bf16.mxu0 %v2935
    %3326 = vmatpush1.bf16.msra.mxu0 %v2934
    %3327 = vmatprep.subr.bf16.mxu0 %v2942
    %3328 = vmatpush1.bf16.msra.mxu0 %v2941
    %3329 = vmatprep.subr.bf16.mxu0 %v2949
    %3330 = vmatpush1.bf16.msra.mxu0 %v2948
    %3331 = vmatprep.subr.bf16.mxu0 %v2956
    %3332 = vmatpush1.bf16.msra.mxu0 %v2955
    %3333 = vmatprep.subr.bf16.mxu0 %v2963
    %3334 = vmatpush1.bf16.msra.mxu0 %v2962
    %3335 = vmatprep.subr.bf16.mxu0 %v2970
    %3336 = vmatpush1.bf16.msra.mxu0 %v2969
    %3337 = vmatprep.subr.bf16.mxu0 %v2977
    %3338 = vmatpush1.bf16.msra.mxu0 %v2976
    %3339 = vmatprep.subr.bf16.mxu0 %v2984
    %3340 = vmatpush1.bf16.msra.mxu0 %v2983
    %3341 = vmatprep.subr.bf16.mxu0 %v2991
    %3342 = vmatpush1.bf16.msra.mxu0 %v2990
    %3343 = vmatprep.subr.bf16.mxu0 %v2998
    %3344 = vmatpush1.bf16.msra.mxu0 %v2997
    %3345 = vmatprep.subr.bf16.mxu0 %v3005
    %3346 = vmatpush1.bf16.msra.mxu0 %v3004
    %3347 = vmatprep.mubr.bf16.mxu0 %v2778
    %3348 = vmatmul.mubr.bf16.gmra.mrb[0].mxu0 %v2777
    %v3349 = vpop.f32.mrb[0].mxu0
    %v3350 = vadd.f32 %v3307, %v3349
    %v3351 = vpop.f32.mrb[0].mxu0
    %v3352 = vadd.f32 %v3309, %v3351
    %v3353 = vpop.f32.mrb[0].mxu0
    %v3354 = vadd.f32 %v3311, %v3353
    %v3355 = vpop.f32.mrb[0].mxu0
    %v3356 = vadd.f32 %v3313, %v3355
    %3357 = vdwg.mxu0
    %3358 = vmatprep.subr.bf16.mxu0 %v3012
    %3359 = vmatpush1.bf16.msra.mxu0 %v3011
    %3360 = vmatprep.subr.bf16.mxu0 %v3019
    %3361 = vmatpush1.bf16.msra.mxu0 %v3018
    %3362 = vmatprep.subr.bf16.mxu0 %v3026
    %3363 = vmatpush1.bf16.msra.mxu0 %v3025
    %3364 = vmatprep.subr.bf16.mxu0 %v3033
    %3365 = vmatpush1.bf16.msra.mxu0 %v3032
    %3366 = vmatprep.subr.bf16.mxu0 %v3040
    %3367 = vmatpush1.bf16.msra.mxu0 %v3039
    %3368 = vmatprep.subr.bf16.mxu0 %v3047
    %3369 = vmatpush1.bf16.msra.mxu0 %v3046
    %3370 = vmatprep.subr.bf16.mxu0 %v3054
    %3371 = vmatpush1.bf16.msra.mxu0 %v3053
    %3372 = vmatprep.subr.bf16.mxu0 %v3061
    %3373 = vmatpush1.bf16.msra.mxu0 %v3060
    %3374 = vmatprep.subr.bf16.mxu0 %v3068
    %3375 = vmatpush1.bf16.msra.mxu0 %v3067
    %3376 = vmatprep.subr.bf16.mxu0 %v3075
    %3377 = vmatpush1.bf16.msra.mxu0 %v3074
    %3378 = vmatprep.subr.bf16.mxu0 %v3082
    %3379 = vmatpush1.bf16.msra.mxu0 %v3081
    %3380 = vmatprep.subr.bf16.mxu0 %v3089
    %3381 = vmatpush1.bf16.msra.mxu0 %v3088
    %3382 = vmatprep.subr.bf16.mxu0 %v3096
    %3383 = vmatpush1.bf16.msra.mxu0 %v3095
    %3384 = vmatprep.subr.bf16.mxu0 %v3103
    %3385 = vmatpush1.bf16.msra.mxu0 %v3102
    %3386 = vmatprep.subr.bf16.mxu0 %v3110
    %3387 = vmatpush1.bf16.msra.mxu0 %v3109
    %3388 = vmatprep.subr.bf16.mxu0 %v3117
    %3389 = vmatpush1.bf16.msra.mxu0 %v3116
    %3390 = vmatprep.mubr.bf16.mxu0 %v2780
    %3391 = vmatmul.mubr.bf16.gmra.mrb[0].mxu0 %v2779
    %v3392 = vpop.f32.mrb[0].mxu0
    %v3393 = vadd.f32 %v3350, %v3392
    %v3394 = vpop.f32.mrb[0].mxu0
    %v3395 = vadd.f32 %v3352, %v3394
    %v3396 = vpop.f32.mrb[0].mxu0
    %v3397 = vadd.f32 %v3354, %v3396
    %v3398 = vpop.f32.mrb[0].mxu0
    %v3399 = vadd.f32 %v3356, %v3398
    %3400 = vdwg.mxu0
    %3401 = vmatprep.subr.bf16.mxu0 %v3124
    %3402 = vmatpush1.bf16.msra.mxu0 %v3123
    %3403 = vmatprep.subr.bf16.mxu0 %v3131
    %3404 = vmatpush1.bf16.msra.mxu0 %v3130
    %3405 = vmatprep.subr.bf16.mxu0 %v3138
    %3406 = vmatpush1.bf16.msra.mxu0 %v3137
    %3407 = vmatprep.subr.bf16.mxu0 %v3145
    %3408 = vmatpush1.bf16.msra.mxu0 %v3144
    %3409 = vmatprep.subr.bf16.mxu0 %v3152
    %3410 = vmatpush1.bf16.msra.mxu0 %v3151
    %3411 = vmatprep.subr.bf16.mxu0 %v3159
    %3412 = vmatpush1.bf16.msra.mxu0 %v3158
    %3413 = vmatprep.subr.bf16.mxu0 %v3166
    %3414 = vmatpush1.bf16.msra.mxu0 %v3165
    %3415 = vmatprep.subr.bf16.mxu0 %v3173
    %3416 = vmatpush1.bf16.msra.mxu0 %v3172
    %3417 = vmatprep.subr.bf16.mxu0 %v3180
    %3418 = vmatpush1.bf16.msra.mxu0 %v3179
    %3419 = vmatprep.subr.bf16.mxu0 %v3187
    %3420 = vmatpush1.bf16.msra.mxu0 %v3186
    %3421 = vmatprep.subr.bf16.mxu0 %v3194
    %3422 = vmatpush1.bf16.msra.mxu0 %v3193
    %3423 = vmatprep.subr.bf16.mxu0 %v3201
    %3424 = vmatpush1.bf16.msra.mxu0 %v3200
    %3425 = vmatprep.subr.bf16.mxu0 %v3208
    %3426 = vmatpush1.bf16.msra.mxu0 %v3207
    %3427 = vmatprep.subr.bf16.mxu0 %v3215
    %3428 = vmatpush1.bf16.msra.mxu0 %v3214
    %3429 = vmatprep.subr.bf16.mxu0 %v3222
    %3430 = vmatpush1.bf16.msra.mxu0 %v3221
    %3431 = vmatprep.subr.bf16.mxu0 %v3229
    %3432 = vmatpush1.bf16.msra.mxu0 %v3228
    %3433 = vmatprep.mubr.bf16.mxu0 %v2782
    %3434 = vmatmul.mubr.bf16.gmra.mrb[0].mxu0 %v2781
    %v3435 = vpop.f32.mrb[0].mxu0
    %v3436 = vadd.f32 %v3393, %v3435
    %v3437 = vpop.f32.mrb[0].mxu0
    %v3438 = vadd.f32 %v3395, %v3437
    %v3439 = vpop.f32.mrb[0].mxu0
    %v3440 = vadd.f32 %v3397, %v3439
    %v3441 = vpop.f32.mrb[0].mxu0
    %v3442 = vadd.f32 %v3399, %v3441
    %3443 = vdwg.mxu0
    %3444 = vmatprep.subr.bf16.mxu0 %v2790
    %3445 = vmatpush1.bf16.msra.mxu0 %v2789
    %3446 = vmatprep.subr.bf16.mxu0 %v2797
    %3447 = vmatpush1.bf16.msra.mxu0 %v2796
    %3448 = vmatprep.subr.bf16.mxu0 %v2804
    %3449 = vmatpush1.bf16.msra.mxu0 %v2803
    %3450 = vmatprep.subr.bf16.mxu0 %v2811
    %3451 = vmatpush1.bf16.msra.mxu0 %v2810
    %3452 = vmatprep.subr.bf16.mxu0 %v2818
    %3453 = vmatpush1.bf16.msra.mxu0 %v2817
    %3454 = vmatprep.subr.bf16.mxu0 %v2825
    %3455 = vmatpush1.bf16.msra.mxu0 %v2824
    %3456 = vmatprep.subr.bf16.mxu0 %v2832
    %3457 = vmatpush1.bf16.msra.mxu0 %v2831
    %3458 = vmatprep.subr.bf16.mxu0 %v2839
    %3459 = vmatpush1.bf16.msra.mxu0 %v2838
    %3460 = vmatprep.subr.bf16.mxu0 %v2846
    %3461 = vmatpush1.bf16.msra.mxu0 %v2845
    %3462 = vmatprep.subr.bf16.mxu0 %v2853
    %3463 = vmatpush1.bf16.msra.mxu0 %v2852
    %3464 = vmatprep.subr.bf16.mxu0 %v2860
    %3465 = vmatpush1.bf16.msra.mxu0 %v2859
    %3466 = vmatprep.subr.bf16.mxu0 %v2867
    %3467 = vmatpush1.bf16.msra.mxu0 %v2866
    %3468 = vmatprep.subr.bf16.mxu0 %v2874
    %3469 = vmatpush1.bf16.msra.mxu0 %v2873
    %3470 = vmatprep.subr.bf16.mxu0 %v2881
    %3471 = vmatpush1.bf16.msra.mxu0 %v2880
    %3472 = vmatprep.subr.bf16.mxu0 %v2888
    %3473 = vmatpush1.bf16.msra.mxu0 %v2887
    %3474 = vmatprep.subr.bf16.mxu0 %v2895
    %3475 = vmatpush1.bf16.msra.mxu0 %v2894
    %3476 = vmatprep.mubr.bf16.mxu0 %v2776
    %3477 = vmatmul.mubr.bf16.gmra.mrb[0].mxu0 %v2775
    %v3478 = vpop.f32.mrb[0].mxu0
    %v3479 = vadd.f32 %v3248, %v3478
    %v3480 = vpop.f32.mrb[0].mxu0
    %v3481 = vadd.f32 %v3252, %v3480
    %v3482 = vpop.f32.mrb[0].mxu0
    %v3483 = vadd.f32 %v3248, %v3482
    %v3484 = vpop.f32.mrb[0].mxu0
    %v3485 = vadd.f32 %v3252, %v3484
    %3486 = vdwg.mxu0
    %3487 = vmatprep.subr.bf16.mxu0 %v2902
    %3488 = vmatpush1.bf16.msra.mxu0 %v2901
    %3489 = vmatprep.subr.bf16.mxu0 %v2909
    %3490 = vmatpush1.bf16.msra.mxu0 %v2908
    %3491 = vmatprep.subr.bf16.mxu0 %v2916
    %3492 = vmatpush1.bf16.msra.mxu0 %v2915
    %3493 = vmatprep.subr.bf16.mxu0 %v2923
    %3494 = vmatpush1.bf16.msra.mxu0 %v2922
    %3495 = vmatprep.subr.bf16.mxu0 %v2930
    %3496 = vmatpush1.bf16.msra.mxu0 %v2929
    %3497 = vmatprep.subr.bf16.mxu0 %v2937
    %3498 = vmatpush1.bf16.msra.mxu0 %v2936
    %3499 = vmatprep.subr.bf16.mxu0 %v2944
    %3500 = vmatpush1.bf16.msra.mxu0 %v2943
    %3501 = vmatprep.subr.bf16.mxu0 %v2951
    %3502 = vmatpush1.bf16.msra.mxu0 %v2950
    %3503 = vmatprep.subr.bf16.mxu0 %v2958
    %3504 = vmatpush1.bf16.msra.mxu0 %v2957
    %3505 = vmatprep.subr.bf16.mxu0 %v2965
    %3506 = vmatpush1.bf16.msra.mxu0 %v2964
    %3507 = vmatprep.subr.bf16.mxu0 %v2972
    %3508 = vmatpush1.bf16.msra.mxu0 %v2971
    %3509 = vmatprep.subr.bf16.mxu0 %v2979
    %3510 = vmatpush1.bf16.msra.mxu0 %v2978
    %3511 = vmatprep.subr.bf16.mxu0 %v2986
    %3512 = vmatpush1.bf16.msra.mxu0 %v2985
    %3513 = vmatprep.subr.bf16.mxu0 %v2993
    %3514 = vmatpush1.bf16.msra.mxu0 %v2992
    %3515 = vmatprep.subr.bf16.mxu0 %v3000
    %3516 = vmatpush1.bf16.msra.mxu0 %v2999
    %3517 = vmatprep.subr.bf16.mxu0 %v3007
    %3518 = vmatpush1.bf16.msra.mxu0 %v3006
    %3519 = vmatprep.mubr.bf16.mxu0 %v2778
    %3520 = vmatmul.mubr.bf16.gmra.mrb[0].mxu0 %v2777
    %v3521 = vpop.f32.mrb[0].mxu0
    %v3522 = vadd.f32 %v3479, %v3521
    %v3523 = vpop.f32.mrb[0].mxu0
    %v3524 = vadd.f32 %v3481, %v3523
    %v3525 = vpop.f32.mrb[0].mxu0
    %v3526 = vadd.f32 %v3483, %v3525
    %v3527 = vpop.f32.mrb[0].mxu0
    %v3528 = vadd.f32 %v3485, %v3527
    %3529 = vdwg.mxu0
    %3530 = vmatprep.subr.bf16.mxu0 %v3014
    %3531 = vmatpush1.bf16.msra.mxu0 %v3013
    %3532 = vmatprep.subr.bf16.mxu0 %v3021
    %3533 = vmatpush1.bf16.msra.mxu0 %v3020
    %3534 = vmatprep.subr.bf16.mxu0 %v3028
    %3535 = vmatpush1.bf16.msra.mxu0 %v3027
    %3536 = vmatprep.subr.bf16.mxu0 %v3035
    %3537 = vmatpush1.bf16.msra.mxu0 %v3034
    %3538 = vmatprep.subr.bf16.mxu0 %v3042
    %3539 = vmatpush1.bf16.msra.mxu0 %v3041
    %3540 = vmatprep.subr.bf16.mxu0 %v3049
    %3541 = vmatpush1.bf16.msra.mxu0 %v3048
    %3542 = vmatprep.subr.bf16.mxu0 %v3056
    %3543 = vmatpush1.bf16.msra.mxu0 %v3055
    %3544 = vmatprep.subr.bf16.mxu0 %v3063
    %3545 = vmatpush1.bf16.msra.mxu0 %v3062
    %3546 = vmatprep.subr.bf16.mxu0 %v3070
    %3547 = vmatpush1.bf16.msra.mxu0 %v3069
    %3548 = vmatprep.subr.bf16.mxu0 %v3077
    %3549 = vmatpush1.bf16.msra.mxu0 %v3076
    %3550 = vmatprep.subr.bf16.mxu0 %v3084
    %3551 = vmatpush1.bf16.msra.mxu0 %v3083
    %3552 = vmatprep.subr.bf16.mxu0 %v3091
    %3553 = vmatpush1.bf16.msra.mxu0 %v3090
    %3554 = vmatprep.subr.bf16.mxu0 %v3098
    %3555 = vmatpush1.bf16.msra.mxu0 %v3097
    %3556 = vmatprep.subr.bf16.mxu0 %v3105
    %3557 = vmatpush1.bf16.msra.mxu0 %v3104
    %3558 = vmatprep.subr.bf16.mxu0 %v3112
    %3559 = vmatpush1.bf16.msra.mxu0 %v3111
    %3560 = vmatprep.subr.bf16.mxu0 %v3119
    %3561 = vmatpush1.bf16.msra.mxu0 %v3118
    %3562 = vmatprep.mubr.bf16.mxu0 %v2780
    %3563 = vmatmul.mubr.bf16.gmra.mrb[0].mxu0 %v2779
    %v3564 = vpop.f32.mrb[0].mxu0
    %v3565 = vadd.f32 %v3522, %v3564
    %v3566 = vpop.f32.mrb[0].mxu0
    %v3567 = vadd.f32 %v3524, %v3566
    %v3568 = vpop.f32.mrb[0].mxu0
    %v3569 = vadd.f32 %v3526, %v3568
    %v3570 = vpop.f32.mrb[0].mxu0
    %v3571 = vadd.f32 %v3528, %v3570
    %3572 = vdwg.mxu0
    %3573 = vmatprep.subr.bf16.mxu0 %v3126
    %3574 = vmatpush1.bf16.msra.mxu0 %v3125
    %3575 = vmatprep.subr.bf16.mxu0 %v3133
    %3576 = vmatpush1.bf16.msra.mxu0 %v3132
    %3577 = vmatprep.subr.bf16.mxu0 %v3140
    %3578 = vmatpush1.bf16.msra.mxu0 %v3139
    %3579 = vmatprep.subr.bf16.mxu0 %v3147
    %3580 = vmatpush1.bf16.msra.mxu0 %v3146
    %3581 = vmatprep.subr.bf16.mxu0 %v3154
    %3582 = vmatpush1.bf16.msra.mxu0 %v3153
    %3583 = vmatprep.subr.bf16.mxu0 %v3161
    %3584 = vmatpush1.bf16.msra.mxu0 %v3160
    %3585 = vmatprep.subr.bf16.mxu0 %v3168
    %3586 = vmatpush1.bf16.msra.mxu0 %v3167
    %3587 = vmatprep.subr.bf16.mxu0 %v3175
    %3588 = vmatpush1.bf16.msra.mxu0 %v3174
    %3589 = vmatprep.subr.bf16.mxu0 %v3182
    %3590 = vmatpush1.bf16.msra.mxu0 %v3181
    %3591 = vmatprep.subr.bf16.mxu0 %v3189
    %3592 = vmatpush1.bf16.msra.mxu0 %v3188
    %3593 = vmatprep.subr.bf16.mxu0 %v3196
    %3594 = vmatpush1.bf16.msra.mxu0 %v3195
    %3595 = vmatprep.subr.bf16.mxu0 %v3203
    %3596 = vmatpush1.bf16.msra.mxu0 %v3202
    %3597 = vmatprep.subr.bf16.mxu0 %v3210
    %3598 = vmatpush1.bf16.msra.mxu0 %v3209
    %3599 = vmatprep.subr.bf16.mxu0 %v3217
    %3600 = vmatpush1.bf16.msra.mxu0 %v3216
    %3601 = vmatprep.subr.bf16.mxu0 %v3224
    %3602 = vmatpush1.bf16.msra.mxu0 %v3223
    %3603 = vmatprep.subr.bf16.mxu0 %v3231
    %3604 = vmatpush1.bf16.msra.mxu0 %v3230
    %3605 = vmatprep.mubr.bf16.mxu0 %v2782
    %3606 = vmatmul.mubr.bf16.gmra.mrb[0].mxu0 %v2781
    %v3607 = vpop.f32.mrb[0].mxu0
    %v3608 = vadd.f32 %v3565, %v3607
    %v3609 = vpop.f32.mrb[0].mxu0
    %v3610 = vadd.f32 %v3567, %v3609
    %v3611 = vpop.f32.mrb[0].mxu0
    %v3612 = vadd.f32 %v3569, %v3611
    %v3613 = vpop.f32.mrb[0].mxu0
    %v3614 = vadd.f32 %v3571, %v3613
    %3615 = vdwg.mxu0
    %3616 = vmatprep.subr.bf16.mxu0 %v2792
    %3617 = vmatpush1.bf16.msra.mxu0 %v2791
    %3618 = vmatprep.subr.bf16.mxu0 %v2799
    %3619 = vmatpush1.bf16.msra.mxu0 %v2798
    %3620 = vmatprep.subr.bf16.mxu0 %v2806
    %3621 = vmatpush1.bf16.msra.mxu0 %v2805
    %3622 = vmatprep.subr.bf16.mxu0 %v2813
    %3623 = vmatpush1.bf16.msra.mxu0 %v2812
    %3624 = vmatprep.subr.bf16.mxu0 %v2820
    %3625 = vmatpush1.bf16.msra.mxu0 %v2819
    %3626 = vmatprep.subr.bf16.mxu0 %v2827
    %3627 = vmatpush1.bf16.msra.mxu0 %v2826
    %3628 = vmatprep.subr.bf16.mxu0 %v2834
    %3629 = vmatpush1.bf16.msra.mxu0 %v2833
    %3630 = vmatprep.subr.bf16.mxu0 %v2841
    %3631 = vmatpush1.bf16.msra.mxu0 %v2840
    %3632 = vmatprep.subr.bf16.mxu0 %v2848
    %3633 = vmatpush1.bf16.msra.mxu0 %v2847
    %3634 = vmatprep.subr.bf16.mxu0 %v2855
    %3635 = vmatpush1.bf16.msra.mxu0 %v2854
    %3636 = vmatprep.subr.bf16.mxu0 %v2862
    %3637 = vmatpush1.bf16.msra.mxu0 %v2861
    %3638 = vmatprep.subr.bf16.mxu0 %v2869
    %3639 = vmatpush1.bf16.msra.mxu0 %v2868
    %3640 = vmatprep.subr.bf16.mxu0 %v2876
    %3641 = vmatpush1.bf16.msra.mxu0 %v2875
    %3642 = vmatprep.subr.bf16.mxu0 %v2883
    %3643 = vmatpush1.bf16.msra.mxu0 %v2882
    %3644 = vmatprep.subr.bf16.mxu0 %v2890
    %3645 = vmatpush1.bf16.msra.mxu0 %v2889
    %3646 = vmatprep.subr.bf16.mxu0 %v2897
    %3647 = vmatpush1.bf16.msra.mxu0 %v2896
    %3648 = vmatprep.mubr.bf16.mxu0 %v2776
    %3649 = vmatmul.mubr.bf16.gmra.mrb[0].mxu0 %v2775
    %v3650 = vpop.f32.mrb[0].mxu0
    %v3651 = vadd.f32 %v3256, %v3650
    %v3652 = vpop.f32.mrb[0].mxu0
    %v3653 = vadd.f32 %v3260, %v3652
    %v3654 = vpop.f32.mrb[0].mxu0
    %v3655 = vadd.f32 %v3256, %v3654
    %v3656 = vpop.f32.mrb[0].mxu0
    %v3657 = vadd.f32 %v3260, %v3656
    %3658 = vdwg.mxu0
    %3659 = vmatprep.subr.bf16.mxu0 %v2904
    %3660 = vmatpush1.bf16.msra.mxu0 %v2903
    %3661 = vmatprep.subr.bf16.mxu0 %v2911
    %3662 = vmatpush1.bf16.msra.mxu0 %v2910
    %3663 = vmatprep.subr.bf16.mxu0 %v2918
    %3664 = vmatpush1.bf16.msra.mxu0 %v2917
    %3665 = vmatprep.subr.bf16.mxu0 %v2925
    %3666 = vmatpush1.bf16.msra.mxu0 %v2924
    %3667 = vmatprep.subr.bf16.mxu0 %v2932
    %3668 = vmatpush1.bf16.msra.mxu0 %v2931
    %3669 = vmatprep.subr.bf16.mxu0 %v2939
    %3670 = vmatpush1.bf16.msra.mxu0 %v2938
    %3671 = vmatprep.subr.bf16.mxu0 %v2946
    %3672 = vmatpush1.bf16.msra.mxu0 %v2945
    %3673 = vmatprep.subr.bf16.mxu0 %v2953
    %3674 = vmatpush1.bf16.msra.mxu0 %v2952
    %3675 = vmatprep.subr.bf16.mxu0 %v2960
    %3676 = vmatpush1.bf16.msra.mxu0 %v2959
    %3677 = vmatprep.subr.bf16.mxu0 %v2967
    %3678 = vmatpush1.bf16.msra.mxu0 %v2966
    %3679 = vmatprep.subr.bf16.mxu0 %v2974
    %3680 = vmatpush1.bf16.msra.mxu0 %v2973
    %3681 = vmatprep.subr.bf16.mxu0 %v2981
    %3682 = vmatpush1.bf16.msra.mxu0 %v2980
    %3683 = vmatprep.subr.bf16.mxu0 %v2988
    %3684 = vmatpush1.bf16.msra.mxu0 %v2987
    %3685 = vmatprep.subr.bf16.mxu0 %v2995
    %3686 = vmatpush1.bf16.msra.mxu0 %v2994
    %3687 = vmatprep.subr.bf16.mxu0 %v3002
    %3688 = vmatpush1.bf16.msra.mxu0 %v3001
    %3689 = vmatprep.subr.bf16.mxu0 %v3009
    %3690 = vmatpush1.bf16.msra.mxu0 %v3008
    %3691 = vmatprep.mubr.bf16.mxu0 %v2778
    %3692 = vmatmul.mubr.bf16.gmra.mrb[0].mxu0 %v2777
    %v3693 = vpop.f32.mrb[0].mxu0
    %v3694 = vadd.f32 %v3651, %v3693
    %v3695 = vpop.f32.mrb[0].mxu0
    %v3696 = vadd.f32 %v3653, %v3695
    %v3697 = vpop.f32.mrb[0].mxu0
    %v3698 = vadd.f32 %v3655, %v3697
    %v3699 = vpop.f32.mrb[0].mxu0
    %v3700 = vadd.f32 %v3657, %v3699
    %3701 = vdwg.mxu0
    %3702 = vmatprep.subr.bf16.mxu0 %v3016
    %3703 = vmatpush1.bf16.msra.mxu0 %v3015
    %3704 = vmatprep.subr.bf16.mxu0 %v3023
    %3705 = vmatpush1.bf16.msra.mxu0 %v3022
    %3706 = vmatprep.subr.bf16.mxu0 %v3030
    %3707 = vmatpush1.bf16.msra.mxu0 %v3029
    %3708 = vmatprep.subr.bf16.mxu0 %v3037
    %3709 = vmatpush1.bf16.msra.mxu0 %v3036
    %3710 = vmatprep.subr.bf16.mxu0 %v3044
    %3711 = vmatpush1.bf16.msra.mxu0 %v3043
    %3712 = vmatprep.subr.bf16.mxu0 %v3051
    %3713 = vmatpush1.bf16.msra.mxu0 %v3050
    %3714 = vmatprep.subr.bf16.mxu0 %v3058
    %3715 = vmatpush1.bf16.msra.mxu0 %v3057
    %3716 = vmatprep.subr.bf16.mxu0 %v3065
    %3717 = vmatpush1.bf16.msra.mxu0 %v3064
    %3718 = vmatprep.subr.bf16.mxu0 %v3072
    %3719 = vmatpush1.bf16.msra.mxu0 %v3071
    %3720 = vmatprep.subr.bf16.mxu0 %v3079
    %3721 = vmatpush1.bf16.msra.mxu0 %v3078
    %3722 = vmatprep.subr.bf16.mxu0 %v3086
    %3723 = vmatpush1.bf16.msra.mxu0 %v3085
    %3724 = vmatprep.subr.bf16.mxu0 %v3093
    %3725 = vmatpush1.bf16.msra.mxu0 %v3092
    %3726 = vmatprep.subr.bf16.mxu0 %v3100
    %3727 = vmatpush1.bf16.msra.mxu0 %v3099
    %3728 = vmatprep.subr.bf16.mxu0 %v3107
    %3729 = vmatpush1.bf16.msra.mxu0 %v3106
    %3730 = vmatprep.subr.bf16.mxu0 %v3114
    %3731 = vmatpush1.bf16.msra.mxu0 %v3113
    %3732 = vmatprep.subr.bf16.mxu0 %v3121
    %3733 = vmatpush1.bf16.msra.mxu0 %v3120
    %3734 = vmatprep.mubr.bf16.mxu0 %v2780
    %3735 = vmatmul.mubr.bf16.gmra.mrb[0].mxu0 %v2779
    %v3736 = vpop.f32.mrb[0].mxu0
    %v3737 = vadd.f32 %v3694, %v3736
    %v3738 = vpop.f32.mrb[0].mxu0
    %v3739 = vadd.f32 %v3696, %v3738
    %v3740 = vpop.f32.mrb[0].mxu0
    %v3741 = vadd.f32 %v3698, %v3740
    %v3742 = vpop.f32.mrb[0].mxu0
    %v3743 = vadd.f32 %v3700, %v3742
    %3744 = vdwg.mxu0
    %3745 = vmatprep.subr.bf16.mxu0 %v3128
    %3746 = vmatpush1.bf16.msra.mxu0 %v3127
    %3747 = vmatprep.subr.bf16.mxu0 %v3135
    %3748 = vmatpush1.bf16.msra.mxu0 %v3134
    %3749 = vmatprep.subr.bf16.mxu0 %v3142
    %3750 = vmatpush1.bf16.msra.mxu0 %v3141
    %3751 = vmatprep.subr.bf16.mxu0 %v3149
    %3752 = vmatpush1.bf16.msra.mxu0 %v3148
    %3753 = vmatprep.subr.bf16.mxu0 %v3156
    %3754 = vmatpush1.bf16.msra.mxu0 %v3155
    %3755 = vmatprep.subr.bf16.mxu0 %v3163
    %3756 = vmatpush1.bf16.msra.mxu0 %v3162
    %3757 = vmatprep.subr.bf16.mxu0 %v3170
    %3758 = vmatpush1.bf16.msra.mxu0 %v3169
    %3759 = vmatprep.subr.bf16.mxu0 %v3177
    %3760 = vmatpush1.bf16.msra.mxu0 %v3176
    %3761 = vmatprep.subr.bf16.mxu0 %v3184
    %3762 = vmatpush1.bf16.msra.mxu0 %v3183
    %3763 = vmatprep.subr.bf16.mxu0 %v3191
    %3764 = vmatpush1.bf16.msra.mxu0 %v3190
    %3765 = vmatprep.subr.bf16.mxu0 %v3198
    %3766 = vmatpush1.bf16.msra.mxu0 %v3197
    %3767 = vmatprep.subr.bf16.mxu0 %v3205
    %3768 = vmatpush1.bf16.msra.mxu0 %v3204
    %3769 = vmatprep.subr.bf16.mxu0 %v3212
    %3770 = vmatpush1.bf16.msra.mxu0 %v3211
    %3771 = vmatprep.subr.bf16.mxu0 %v3219
    %3772 = vmatpush1.bf16.msra.mxu0 %v3218
    %3773 = vmatprep.subr.bf16.mxu0 %v3226
    %3774 = vmatpush1.bf16.msra.mxu0 %v3225
    %3775 = vmatprep.subr.bf16.mxu0 %v3233
    %3776 = vmatpush1.bf16.msra.mxu0 %v3232
    %3777 = vmatprep.mubr.bf16.mxu0 %v2782
    %3778 = vmatmul.mubr.bf16.gmra.mrb[0].mxu0 %v2781
    %v3779 = vpop.f32.mrb[0].mxu0
    %v3780 = vadd.f32 %v3737, %v3779
    %v3781 = vpop.f32.mrb[0].mxu0
    %v3782 = vadd.f32 %v3739, %v3781
    %v3783 = vpop.f32.mrb[0].mxu0
    %v3784 = vadd.f32 %v3741, %v3783
    %v3785 = vpop.f32.mrb[0].mxu0
    %v3786 = vadd.f32 %v3743, %v3785
    %3787 = vdwg.mxu0
    %3788 = vmatprep.subr.bf16.mxu0 0
    %3789 = vmatpush1.bf16.msra.mxu0 %v2793
    %3790 = vmatprep.subr.bf16.mxu0 0
    %3791 = vmatpush1.bf16.msra.mxu0 %v2800
    %3792 = vmatprep.subr.bf16.mxu0 0
    %3793 = vmatpush1.bf16.msra.mxu0 %v2807
    %3794 = vmatprep.subr.bf16.mxu0 0
    %3795 = vmatpush1.bf16.msra.mxu0 %v2814
    %3796 = vmatprep.subr.bf16.mxu0 0
    %3797 = vmatpush1.bf16.msra.mxu0 %v2821
    %3798 = vmatprep.subr.bf16.mxu0 0
    %3799 = vmatpush1.bf16.msra.mxu0 %v2828
    %3800 = vmatprep.subr.bf16.mxu0 0
    %3801 = vmatpush1.bf16.msra.mxu0 %v2835
    %3802 = vmatprep.subr.bf16.mxu0 0
    %3803 = vmatpush1.bf16.msra.mxu0 %v2842
    %3804 = vmatprep.subr.bf16.mxu0 0
    %3805 = vmatpush1.bf16.msra.mxu0 %v2849
    %3806 = vmatprep.subr.bf16.mxu0 0
    %3807 = vmatpush1.bf16.msra.mxu0 %v2856
    %3808 = vmatprep.subr.bf16.mxu0 0
    %3809 = vmatpush1.bf16.msra.mxu0 %v2863
    %3810 = vmatprep.subr.bf16.mxu0 0
    %3811 = vmatpush1.bf16.msra.mxu0 %v2870
    %3812 = vmatprep.subr.bf16.mxu0 0
    %3813 = vmatpush1.bf16.msra.mxu0 %v2877
    %3814 = vmatprep.subr.bf16.mxu0 0
    %3815 = vmatpush1.bf16.msra.mxu0 %v2884
    %3816 = vmatprep.subr.bf16.mxu0 0
    %3817 = vmatpush1.bf16.msra.mxu0 %v2891
    %3818 = vmatprep.subr.bf16.mxu0 0
    %3819 = vmatpush1.bf16.msra.mxu0 %v2898
    %3820 = vmatprep.mubr.bf16.mxu0 %v2776
    %3821 = vmatmul.mubr.bf16.gmra.mrb[0].mxu0 %v2775
    %v3822 = vpop.f32.mrb[0].mxu0
    %v3823 = vadd.f32 %v3264, %v3822
    %v3824 = vpop.f32.mrb[0].mxu0
    %v3825 = vpop.f32.mrb[0].mxu0
    %v3826 = vadd.f32 %v3264, %v3825
    %v3827 = vpop.f32.mrb[0].mxu0
    %3828 = vdwg.mxu0
    %3829 = vmatprep.subr.bf16.mxu0 0
    %3830 = vmatpush1.bf16.msra.mxu0 %v2905
    %3831 = vmatprep.subr.bf16.mxu0 0
    %3832 = vmatpush1.bf16.msra.mxu0 %v2912
    %3833 = vmatprep.subr.bf16.mxu0 0
    %3834 = vmatpush1.bf16.msra.mxu0 %v2919
    %3835 = vmatprep.subr.bf16.mxu0 0
    %3836 = vmatpush1.bf16.msra.mxu0 %v2926
    %3837 = vmatprep.subr.bf16.mxu0 0
    %3838 = vmatpush1.bf16.msra.mxu0 %v2933
    %3839 = vmatprep.subr.bf16.mxu0 0
    %3840 = vmatpush1.bf16.msra.mxu0 %v2940
    %3841 = vmatprep.subr.bf16.mxu0 0
    %3842 = vmatpush1.bf16.msra.mxu0 %v2947
    %3843 = vmatprep.subr.bf16.mxu0 0
    %3844 = vmatpush1.bf16.msra.mxu0 %v2954
    %3845 = vmatprep.subr.bf16.mxu0 0
    %3846 = vmatpush1.bf16.msra.mxu0 %v2961
    %3847 = vmatprep.subr.bf16.mxu0 0
    %3848 = vmatpush1.bf16.msra.mxu0 %v2968
    %3849 = vmatprep.subr.bf16.mxu0 0
    %3850 = vmatpush1.bf16.msra.mxu0 %v2975
    %3851 = vmatprep.subr.bf16.mxu0 0
    %3852 = vmatpush1.bf16.msra.mxu0 %v2982
    %3853 = vmatprep.subr.bf16.mxu0 0
    %3854 = vmatpush1.bf16.msra.mxu0 %v2989
    %3855 = vmatprep.subr.bf16.mxu0 0
    %3856 = vmatpush1.bf16.msra.mxu0 %v2996
    %3857 = vmatprep.subr.bf16.mxu0 0
    %3858 = vmatpush1.bf16.msra.mxu0 %v3003
    %3859 = vmatprep.subr.bf16.mxu0 0
    %3860 = vmatpush1.bf16.msra.mxu0 %v3010
    %3861 = vmatprep.mubr.bf16.mxu0 %v2778
    %3862 = vmatmul.mubr.bf16.gmra.mrb[0].mxu0 %v2777
    %v3863 = vpop.f32.mrb[0].mxu0
    %v3864 = vadd.f32 %v3823, %v3863
    %v3865 = vpop.f32.mrb[0].mxu0
    %v3866 = vpop.f32.mrb[0].mxu0
    %v3867 = vadd.f32 %v3826, %v3866
    %v3868 = vpop.f32.mrb[0].mxu0
    %3869 = vdwg.mxu0
    %3870 = vmatprep.subr.bf16.mxu0 0
    %3871 = vmatpush1.bf16.msra.mxu0 %v3017
    %3872 = vmatprep.subr.bf16.mxu0 0
    %3873 = vmatpush1.bf16.msra.mxu0 %v3024
    %3874 = vmatprep.subr.bf16.mxu0 0
    %3875 = vmatpush1.bf16.msra.mxu0 %v3031
    %3876 = vmatprep.subr.bf16.mxu0 0
    %3877 = vmatpush1.bf16.msra.mxu0 %v3038
    %3878 = vmatprep.subr.bf16.mxu0 0
    %3879 = vmatpush1.bf16.msra.mxu0 %v3045
    %3880 = vmatprep.subr.bf16.mxu0 0
    %3881 = vmatpush1.bf16.msra.mxu0 %v3052
    %3882 = vmatprep.subr.bf16.mxu0 0
    %3883 = vmatpush1.bf16.msra.mxu0 %v3059
    %3884 = vmatprep.subr.bf16.mxu0 0
    %3885 = vmatpush1.bf16.msra.mxu0 %v3066
    %3886 = vmatprep.subr.bf16.mxu0 0
    %3887 = vmatpush1.bf16.msra.mxu0 %v3073
    %3888 = vmatprep.subr.bf16.mxu0 0
    %3889 = vmatpush1.bf16.msra.mxu0 %v3080
    %3890 = vmatprep.subr.bf16.mxu0 0
    %3891 = vmatpush1.bf16.msra.mxu0 %v3087
    %3892 = vmatprep.subr.bf16.mxu0 0
    %3893 = vmatpush1.bf16.msra.mxu0 %v3094
    %3894 = vmatprep.subr.bf16.mxu0 0
    %3895 = vmatpush1.bf16.msra.mxu0 %v3101
    %3896 = vmatprep.subr.bf16.mxu0 0
    %3897 = vmatpush1.bf16.msra.mxu0 %v3108
    %3898 = vmatprep.subr.bf16.mxu0 0
    %3899 = vmatpush1.bf16.msra.mxu0 %v3115
    %3900 = vmatprep.subr.bf16.mxu0 0
    %3901 = vmatpush1.bf16.msra.mxu0 %v3122
    %3902 = vmatprep.mubr.bf16.mxu0 %v2780
    %3903 = vmatmul.mubr.bf16.gmra.mrb[0].mxu0 %v2779
    %v3904 = vpop.f32.mrb[0].mxu0
    %v3905 = vadd.f32 %v3864, %v3904
    %v3906 = vpop.f32.mrb[0].mxu0
    %v3907 = vpop.f32.mrb[0].mxu0
    %v3908 = vadd.f32 %v3867, %v3907
    %v3909 = vpop.f32.mrb[0].mxu0
    %3910 = vdwg.mxu0
    %3911 = vmatprep.subr.bf16.mxu0 0
    %3912 = vmatpush1.bf16.msra.mxu0 %v3129
    %3913 = vmatprep.subr.bf16.mxu0 0
    %3914 = vmatpush1.bf16.msra.mxu0 %v3136
    %3915 = vmatprep.subr.bf16.mxu0 0
    %3916 = vmatpush1.bf16.msra.mxu0 %v3143
    %3917 = vmatprep.subr.bf16.mxu0 0
    %3918 = vmatpush1.bf16.msra.mxu0 %v3150
    %3919 = vmatprep.subr.bf16.mxu0 0
    %3920 = vmatpush1.bf16.msra.mxu0 %v3157
    %3921 = vmatprep.subr.bf16.mxu0 0
    %3922 = vmatpush1.bf16.msra.mxu0 %v3164
    %3923 = vmatprep.subr.bf16.mxu0 0
    %3924 = vmatpush1.bf16.msra.mxu0 %v3171
    %3925 = vmatprep.subr.bf16.mxu0 0
    %3926 = vmatpush1.bf16.msra.mxu0 %v3178
    %3927 = vmatprep.subr.bf16.mxu0 0
    %3928 = vmatpush1.bf16.msra.mxu0 %v3185
    %3929 = vmatprep.subr.bf16.mxu0 0
    %3930 = vmatpush1.bf16.msra.mxu0 %v3192
    %3931 = vmatprep.subr.bf16.mxu0 0
    %3932 = vmatpush1.bf16.msra.mxu0 %v3199
    %3933 = vmatprep.subr.bf16.mxu0 0
    %3934 = vmatpush1.bf16.msra.mxu0 %v3206
    %3935 = vmatprep.subr.bf16.mxu0 0
    %3936 = vmatpush1.bf16.msra.mxu0 %v3213
    %3937 = vmatprep.subr.bf16.mxu0 0
    %3938 = vmatpush1.bf16.msra.mxu0 %v3220
    %3939 = vmatprep.subr.bf16.mxu0 0
    %3940 = vmatpush1.bf16.msra.mxu0 %v3227
    %3941 = vmatprep.subr.bf16.mxu0 0
    %3942 = vmatpush1.bf16.msra.mxu0 %v3234
    %3943 = vmatprep.mubr.bf16.mxu0 %v2782
    %3944 = vmatmul.mubr.bf16.gmra.mrb[0].mxu0 %v2781
    %v3945 = vpop.f32.mrb[0].mxu0
    %v3946 = vadd.f32 %v3905, %v3945
    %v3947 = vpop.f32.mrb[0].mxu0
    %v3948 = vpop.f32.mrb[0].mxu0
    %v3949 = vadd.f32 %v3908, %v3948
    %v3950 = vpop.f32.mrb[0].mxu0
    %3951 = vdwg.mxu0
    %v3952 = vtanh.pop %v3436
    %v3953 = vtanh.pop %v3438
    %v3954 = vtanh.pop %v3608
    %v3955 = vtanh.pop %v3610
    %v3956 = vtanh.pop %v3780
    %v3957 = vtanh.pop %v3782
    %v3958 = vtanh.pop %v3946
    %v3959 = vtanh.pop %v3440
    %v3960 = vtanh.pop %v3442
    %v3961 = vtanh.pop %v3612
    %v3962 = vtanh.pop %v3614
    %v3963 = vtanh.pop %v3784
    %v3964 = vtanh.pop %v3786
    %v3965 = vtanh.pop %v3949
    %v3966 = vpack.c.bf16 %v3959, %v3952
    %v3967 = vpack.c.bf16 %v3960, %v3953
    %v3968 = vpack.c.bf16 %v3961, %v3954
    %v3969 = vpack.c.bf16 %v3962, %v3955
    %v3970 = vpack.c.bf16 %v3963, %v3956
    %v3971 = vpack.c.bf16 %v3964, %v3957
    %v3972 = vpack.c.bf16 %v3965, %v3958
    %v3980 = vunpack.c.l.b16 %v3966
    %v3981 = vunpack.c.l.b16 %v3967
    %v3982 = vunpack.c.l.b16 %v3968
    %v3983 = vunpack.c.l.b16 %v3969
    %v3984 = vunpack.c.l.b16 %v3970
    %v3985 = vunpack.c.l.b16 %v3971
    %v3986 = vunpack.c.l.b16 %v3972
    %v3987 = vunpack.c.h.b16 %v3966
    %v3988 = vunpack.c.h.b16 %v3967
    %v3989 = vunpack.c.h.b16 %v3968
    %v3990 = vunpack.c.h.b16 %v3969
    %v3991 = vunpack.c.h.b16 %v3970
    %v3992 = vunpack.c.h.b16 %v3971
    %v3993 = vunpack.c.h.b16 %v3972
    %v3994 = vpack.c.b16 %v3981, %v3980
    %v3995 = vpack.c.b16 %v3983, %v3982
    %v3996 = vpack.c.b16 %v3985, %v3984
    %v3997 = vpack.c.b16 %v3986, %v3986
    %v3998 = vpack.c.b16 %v3988, %v3987
    %v3999 = vpack.c.b16 %v3990, %v3989
    %v4000 = vpack.c.b16 %v3992, %v3991
    %v4001 = vpack.c.b16 %v3993, %v3993
    %4010 = vst [vmem:[#allocation18] sm:$0xff] %v3994
    %4011 = vst [vmem:[#allocation18 + $0x8] sm:$0xff] %v3995
    %4012 = vst [vmem:[#allocation18 + $0x10] sm:$0xff] %v3996
    %4013 = vst [vmem:[#allocation18 + $0x18] sm:$0xf] %v3997
    %4014 = vst [vmem:[#allocation18 + $0x1c] sm:$0xff] %v3998
    %4015 = vst [vmem:[#allocation18 + $0x24] sm:$0xff] %v3999
    %4016 = vst [vmem:[#allocation18 + $0x2c] sm:$0xff] %v4000
    %4017 = vst [vmem:[#allocation18 + $0x34] sm:$0xf] %v4001
    // Predicated region
    $region66: #{tpu_custom_call.1} parent=1 // pred_check
      _
    $region67: #{tpu_custom_call.1} parent=1 // pred_check_branch
      %4019 = sbr.rel (0) target = $region69
    $region68: #{tpu_custom_call.1} parent=1 // pred_region
      %s4021 = ssub.s32 896, 896
      %4022 = vsyncadd [#allocation6], %s4021
      %s4023 = sshll.u32 [#allocation18], 4
      %s4024 = int_to_ptr.vmem [resolvable:$true] %s4023
      %4029 = dma.vmem_to_hbm [thread:$0]  %s4024, 896, %s9, [#allocation6], 448, 448, 28
    $region69: #{tpu_custom_call.1} parent=1 // pred_fallthru
      _
    // Predicated region
    $region70: #{tpu_custom_call.1} parent=1 // pred_check
      _
    $region71: #{tpu_custom_call.1} parent=1 // pred_check_branch
      %4031 = sbr.rel (0) target = $region73
    $region72: #{tpu_custom_call.1} parent=1 // pred_region
      %4032 = dma.done [#allocation6], 896
    $region73: #{tpu_custom_call.1} parent=1 // pred_fallthru
      _
    %4033 = vsyncpa [#allocation5], 1
    %4034 = vsyncpa [#allocation8], 1
    %4035 = vsyncpa [#allocation11], 1
    %4036 = vsyncpa [#allocation14], 1
    %4037 = vsyncpa [#allocation17], 1
    %4038 = vsyncpa [#allocation6], 1
  %4039 = vsyncmov [#allocation3]
  %s4040 = vpop.sfrf %4039
  %p4041 = scmp.eq.s32.totalorder %s4040, 0
  %p4042 = pneg %p4041
  %4044 = shalt.err (%p4042)

// kernel: tpu_custom_call.1
$region0: #{tpu_custom_call.1}
  #allocation0 [shape = 'u32[]', space=smem, size = 0x4, offset = 0x4, fixed_abs, tag = 'smem constant byte address 0x4 - core index']
  #allocation1 [shape = 'u32[144,128]{1,0:T(1,128)}', space=vmem, size = 0x12000, scoped, tag = 'internal scratch']
  #allocation2 [shape = 'bf16[1024,896]{1,0:T(16,128)(2,1)}', space=vmem, size = 0x1c0000, scoped, tag = 'scratch operand']
  #allocation3 [shape = 's32[1]{0}', space=sflag, size = 0x4, scoped, tag = 'scratch operand']
  #allocation19 [shape = 's32[]', space=sflag, size = 0x4, offset = 0, fixed_abs, tag = 'sflag constant byte address 0x0 - dummy sync flag']
  %s0 = inlined_call_operand.hbm [shape: bf16[16,128], index: 0, kind: input, shape index: {}]
  %s1 = inlined_call_operand.hbm [shape: bf16[128,256], index: 1, kind: input, shape index: {}]
  %s2 = inlined_call_operand.hbm [shape: f32[1,256], index: 2, kind: input, shape index: {}]
  %s3 = inlined_call_operand.hbm [shape: bf16[256,512], index: 3, kind: input, shape index: {}]
  %s4 = inlined_call_operand.hbm [shape: f32[1,512], index: 4, kind: input, shape index: {}]
  %s5 = inlined_call_operand.hbm [shape: bf16[512,1024], index: 5, kind: input, shape index: {}]
  %s6 = inlined_call_operand.hbm [shape: f32[1,1024], index: 6, kind: input, shape index: {}]
  %s7 = inlined_call_operand.hbm [shape: bf16[1024,896], index: 7, kind: input, shape index: {}]
  %s8 = inlined_call_operand.hbm [shape: f32[1,896], index: 8, kind: input, shape index: {}]
  %s9 = inlined_call_operand.hbm [shape: bf16[16,896], index: 9, kind: output, shape index: {}]
  %s10 = sld [smem:[#allocation0]]
  $region74: #{tpu_custom_call.1} parent=0
    _
  %s12 = ssub.s32 1, %s10
  %s13 = scalar_select 0, %s12, %s10
  $region1: #{tpu_custom_call.1} parent=0
    #allocation4 [shape = 'u8[4096]{0}', space=vmem, size = 0x1000, scoped, tag = 'input window, operand 0, single buffered']
    #allocation5 [shape = 's32[1]{0}', space=sflag, size = 0x4, scoped, tag = 'scoped memory for tpu_custom_call.1']
    #allocation6 [shape = 's32[1]{0}', space=sflag, size = 0x4, scoped, tag = 'scoped memory for tpu_custom_call.1']
    #allocation7 [shape = 'u8[65536]{0}', space=vmem, size = 0x10000, scoped, tag = 'input window, operand 1, single buffered']
    #allocation8 [shape = 's32[1]{0}', space=sflag, size = 0x4, scoped, tag = 'scoped memory for tpu_custom_call.1']
    #allocation9 [shape = 'u8[1024]{0}', space=vmem, size = 0x400, scoped, tag = 'input window, operand 2, single buffered']
    #allocation10 [shape = 'u8[262144]{0}', space=vmem, size = 0x40000, scoped, tag = 'input window, operand 3, single buffered']
    #allocation11 [shape = 's32[1]{0}', space=sflag, size = 0x4, scoped, tag = 'scoped memory for tpu_custom_call.1']
    #allocation12 [shape = 'u8[2048]{0}', space=vmem, size = 0x800, scoped, tag = 'input window, operand 4, single buffered']
    #allocation13 [shape = 'u8[1048576]{0}', space=vmem, size = 0x100000, scoped, tag = 'input window, operand 5, single buffered']
    #allocation14 [shape = 's32[1]{0}', space=sflag, size = 0x4, scoped, tag = 'scoped memory for tpu_custom_call.1']
    #allocation15 [shape = 'u8[4096]{0}', space=vmem, size = 0x1000, scoped, tag = 'input window, operand 6, single buffered']
    #allocation16 [shape = 'u8[3584]{0}', space=vmem, size = 0x1000, scoped, tag = 'input window, operand 8, single buffered']
    #allocation17 [shape = 's32[1]{0}', space=sflag, size = 0x4, scoped, tag = 'scoped memory for tpu_custom_call.1']
    #allocation18 [shape = 'u8[28672]{0}', space=vmem, size = 0x7000, scoped, tag = 'output window, operand 0, single buffered']
    #allocation20 [shape = 'u32[9]{0}', space=smem, size = 0x24, scoped, tag = 'DMA stride descriptor']
    %14 = vsyncpa [#allocation5], 0
    %15 = vsyncpa [#allocation8], 0
    %16 = vsyncpa [#allocation11], 0
    %17 = vsyncpa [#allocation14], 0
    %18 = vsyncpa [#allocation17], 0
    %19 = vsyncpa [#allocation6], 0
    // Predicated region
    $region2: #{tpu_custom_call.1} parent=1 // pred_check
      _
    $region3: #{tpu_custom_call.1} parent=1 // pred_check_branch
      %21 = sbr.rel (0) target = $region5
    $region4: #{tpu_custom_call.1} parent=1 // pred_region
      %s23 = ssub.s32 128, 128
      %24 = vsyncadd [#allocation5], %s23
      %s25 = sshll.u32 [#allocation4], 4
      %s26 = int_to_ptr.vmem [resolvable:$true] %s25
      %31 = dma.hbm_to_vmem [thread:$0]  %s0, 128, %s26, [#allocation5], 64, 64, 4
    $region5: #{tpu_custom_call.1} parent=1 // pred_fallthru
      _
    // Predicated region
    $region6: #{tpu_custom_call.1} parent=1 // pred_check
      _
    $region7: #{tpu_custom_call.1} parent=1 // pred_check_branch
      %33 = sbr.rel (0) target = $region9
    $region8: #{tpu_custom_call.1} parent=1 // pred_region
      %s35 = ssub.s32 2048, 2048
      %36 = vsyncadd [#allocation8], %s35
      %s37 = sshll.u32 [#allocation7], 4
      %s38 = int_to_ptr.vmem [resolvable:$true] %s37
      %43 = dma.hbm_to_vmem [thread:$0]  %s1, 2048, %s38, [#allocation8], 128, 128, 8
    $region9: #{tpu_custom_call.1} parent=1 // pred_fallthru
      _
    // Predicated region
    $region10: #{tpu_custom_call.1} parent=1 // pred_check
      _
    $region11: #{tpu_custom_call.1} parent=1 // pred_check_branch
      %45 = sbr.rel (0) target = $region13
    $region12: #{tpu_custom_call.1} parent=1 // pred_region
      %s47 = ssub.s32 32, 32
      %48 = vsyncadd [#allocation8], %s47
      %s50 = sshll.u32 [#allocation9], 4
      %s51 = int_to_ptr.vmem [resolvable:$true] %s50
      %53 = dma.hbm_to_vmem [thread:$0]  %s2, 32, %s51, [#allocation8]
    $region13: #{tpu_custom_call.1} parent=1 // pred_fallthru
      _
    // Predicated region
    $region14: #{tpu_custom_call.1} parent=1 // pred_check
      _
    $region15: #{tpu_custom_call.1} parent=1 // pred_check_branch
      %55 = sbr.rel (0) target = $region17
    $region16: #{tpu_custom_call.1} parent=1 // pred_region
      %s57 = ssub.s32 8192, 8192
      %58 = vsyncadd [#allocation11], %s57
      %s59 = sshll.u32 [#allocation10], 4
      %s60 = int_to_ptr.vmem [resolvable:$true] %s59
      %65 = dma.hbm_to_vmem [thread:$0]  %s3, 8192, %s60, [#allocation11], 256, 256, 16
    $region17: #{tpu_custom_call.1} parent=1 // pred_fallthru
      _
    // Predicated region
    $region18: #{tpu_custom_call.1} parent=1 // pred_check
      _
    $region19: #{tpu_custom_call.1} parent=1 // pred_check_branch
      %67 = sbr.rel (0) target = $region21
    $region20: #{tpu_custom_call.1} parent=1 // pred_region
      %s69 = ssub.s32 64, 64
      %70 = vsyncadd [#allocation11], %s69
      %s72 = sshll.u32 [#allocation12], 4
      %s73 = int_to_ptr.vmem [resolvable:$true] %s72
      %75 = dma.hbm_to_vmem [thread:$0]  %s4, 64, %s73, [#allocation11]
    $region21: #{tpu_custom_call.1} parent=1 // pred_fallthru
      _
    // Predicated region
    $region22: #{tpu_custom_call.1} parent=1 // pred_check
      _
    $region23: #{tpu_custom_call.1} parent=1 // pred_check_branch
      %77 = sbr.rel (0) target = $region25
    $region24: #{tpu_custom_call.1} parent=1 // pred_region
      %s79 = ssub.s32 32768, 32768
      %80 = vsyncadd [#allocation14], %s79
      %s81 = sshll.u32 [#allocation13], 4
      %s82 = int_to_ptr.vmem [resolvable:$true] %s81
      %87 = dma.hbm_to_vmem [thread:$0]  %s5, 32768, %s82, [#allocation14], 512, 512, 32
    $region25: #{tpu_custom_call.1} parent=1 // pred_fallthru
      _
    // Predicated region
    $region26: #{tpu_custom_call.1} parent=1 // pred_check
      _
    $region27: #{tpu_custom_call.1} parent=1 // pred_check_branch
      %89 = sbr.rel (0) target = $region29
    $region28: #{tpu_custom_call.1} parent=1 // pred_region
      %s91 = ssub.s32 128, 128
      %92 = vsyncadd [#allocation14], %s91
      %s94 = sshll.u32 [#allocation15], 4
      %s95 = int_to_ptr.vmem [resolvable:$true] %s94
      %97 = dma.hbm_to_vmem [thread:$0]  %s6, 128, %s95, [#allocation14]
    $region29: #{tpu_custom_call.1} parent=1 // pred_fallthru
      _
    // Predicated region
    $region30: #{tpu_custom_call.1} parent=1 // pred_check
      _
    $region31: #{tpu_custom_call.1} parent=1 // pred_check_branch
      %99 = sbr.rel (0) target = $region33
    $region32: #{tpu_custom_call.1} parent=1 // pred_region
      %s101 = ssub.s32 112, 112
      %102 = vsyncadd [#allocation17], %s101
      %s104 = sshll.u32 [#allocation16], 4
      %s105 = int_to_ptr.vmem [resolvable:$true] %s104
      %107 = dma.hbm_to_vmem [thread:$0]  %s8, 112, %s105, [#allocation17]
    $region33: #{tpu_custom_call.1} parent=1 // pred_fallthru
      _
    // Predicated region
    $region34: #{tpu_custom_call.1} parent=1 // pred_check
      _
    $region35: #{tpu_custom_call.1} parent=1 // pred_check_branch
      %109 = sbr.rel (0) target = $region37
    $region36: #{tpu_custom_call.1} parent=1 // pred_region
      %110 = dma.done [#allocation5], 128
    $region37: #{tpu_custom_call.1} parent=1 // pred_fallthru
      _
    // Predicated region
    $region38: #{tpu_custom_call.1} parent=1 // pred_check
      _
    $region39: #{tpu_custom_call.1} parent=1 // pred_check_branch
      %112 = sbr.rel (0) target = $region41
    $region40: #{tpu_custom_call.1} parent=1 // pred_region
      %113 = dma.done [#allocation8], 2048
    $region41: #{tpu_custom_call.1} parent=1 // pred_fallthru
      _
    // Predicated region
    $region42: #{tpu_custom_call.1} parent=1 // pred_check
      _
    $region43: #{tpu_custom_call.1} parent=1 // pred_check_branch
      %115 = sbr.rel (0) target = $region45
    $region44: #{tpu_custom_call.1} parent=1 // pred_region
      %116 = dma.done [#allocation8], 32
    $region45: #{tpu_custom_call.1} parent=1 // pred_fallthru
      _
    // Predicated region
    $region46: #{tpu_custom_call.1} parent=1 // pred_check
      _
    $region47: #{tpu_custom_call.1} parent=1 // pred_check_branch
      %118 = sbr.rel (0) target = $region49
    $region48: #{tpu_custom_call.1} parent=1 // pred_region
      %119 = dma.done [#allocation11], 8192
    $region49: #{tpu_custom_call.1} parent=1 // pred_fallthru
      _
    // Predicated region
    $region50: #{tpu_custom_call.1} parent=1 // pred_check
      _
    $region51: #{tpu_custom_call.1} parent=1 // pred_check_branch
      %121 = sbr.rel (0) target = $region53
    $region52: #{tpu_custom_call.1} parent=1 // pred_region
      %122 = dma.done [#allocation11], 64
    $region53: #{tpu_custom_call.1} parent=1 // pred_fallthru
      _
    // Predicated region
    $region54: #{tpu_custom_call.1} parent=1 // pred_check
      _
    $region55: #{tpu_custom_call.1} parent=1 // pred_check_branch
      %124 = sbr.rel (0) target = $region57
    $region56: #{tpu_custom_call.1} parent=1 // pred_region
      %125 = dma.done [#allocation14], 32768
    $region57: #{tpu_custom_call.1} parent=1 // pred_fallthru
      _
    // Predicated region
    $region58: #{tpu_custom_call.1} parent=1 // pred_check
      _
    $region59: #{tpu_custom_call.1} parent=1 // pred_check_branch
      %127 = sbr.rel (0) target = $region61
    $region60: #{tpu_custom_call.1} parent=1 // pred_region
      %128 = dma.done [#allocation14], 128
    $region61: #{tpu_custom_call.1} parent=1 // pred_fallthru
      _
    // Predicated region
    $region62: #{tpu_custom_call.1} parent=1 // pred_check
      _
    $region63: #{tpu_custom_call.1} parent=1 // pred_check_branch
      %130 = sbr.rel (0) target = $region65
    $region64: #{tpu_custom_call.1} parent=1 // pred_region
      %131 = dma.done [#allocation17], 112
    $region65: #{tpu_custom_call.1} parent=1 // pred_fallthru
      _
    %s134 = sshll.u32 1, 14
    %s135 = sxor.u32 4294967295, %s134
    %s137 = sld [smem:[#allocation0]]
    %s138 = sadd.s32 2, %s137
    %s140 = sshll.u32 7, 26
    %s141 = sxor.u32 4294967295, %s140
    %s142 = sand.u32 0, %s141
    %s143 = sshll.u32 %s138, 26
    %s144 = sor.u32 %s142, %s143
    %s145 = sshll.u32 [#allocation2], 4
    %s146 = int_to_ptr.vmem [resolvable:$true] %s145
    %149 = sst [smem:[#allocation20]] 896
    %s150 = scalar_lea.smem [#allocation20], 1
    %151 = sst [smem:[%s150]] 896
    %s152 = scalar_lea.smem [#allocation20], 2
    %153 = sst [smem:[%s152]] 7
    %s154 = scalar_lea.smem [#allocation20], 3
    %155 = sst [smem:[%s154]] 64
    %s156 = scalar_lea.smem [#allocation20], 4
    %157 = sst [smem:[%s156]] 128
    %s158 = scalar_lea.smem [#allocation20], 5
    %159 = sst [smem:[%s158]] 2
    %s160 = scalar_lea.smem [#allocation20], 6
    %161 = sst [smem:[%s160]] 448
    %s162 = scalar_lea.smem [#allocation20], 7
    %163 = sst [smem:[%s162]] 64
    %s164 = scalar_lea.smem [#allocation20], 8
    %165 = sst [smem:[%s164]] 4
    %167 = dma.general %s7, 57344, %s146, [#allocation3], [#allocation19], [#allocation20], %s144, 0
    %v168 = vld [vmem:[#allocation4] sm:$0xf]
    %v169 = vld [vmem:[#allocation4 + $0x4] sm:$0xf]
    %v170 = vld [vmem:[#allocation7] sm:$0xff]
    %v171 = vld [vmem:[#allocation7 + $0x8] sm:$0xff]
    %v172 = vld [vmem:[#allocation7 + $0x10] sm:$0xff]
    %v173 = vld [vmem:[#allocation7 + $0x18] sm:$0xff]
    %v174 = vld [vmem:[#allocation7 + $0x20] sm:$0xff]
    %v175 = vld [vmem:[#allocation7 + $0x28] sm:$0xff]
    %v176 = vld [vmem:[#allocation7 + $0x30] sm:$0xff]
    %v177 = vld [vmem:[#allocation7 + $0x38] sm:$0xff]
    %v178 = vld [vmem:[#allocation7 + $0x40] sm:$0xff]
    %v179 = vld [vmem:[#allocation7 + $0x48] sm:$0xff]
    %v180 = vld [vmem:[#allocation7 + $0x50] sm:$0xff]
    %v181 = vld [vmem:[#allocation7 + $0x58] sm:$0xff]
    %v182 = vld [vmem:[#allocation7 + $0x60] sm:$0xff]
    %v183 = vld [vmem:[#allocation7 + $0x68] sm:$0xff]
    %v184 = vld [vmem:[#allocation7 + $0x70] sm:$0xff]
    %v185 = vld [vmem:[#allocation7 + $0x78] sm:$0xff]
    %v186 = vld [vmem:[#allocation9] sm:$0x3]
    %v188 = vlaneseq
    %v189 = vshrl.u32 %v188, 7
    %v190 = vsub.s32 0, %v189
    %v191 = vrot.slane %v186, %v190
    %v192 = vlaneseq
    %v193 = vshrl.u32 %v192, 7
    %v194 = vsub.s32 1, %v193
    %v195 = vrot.slane %v186, %v194
    %v200 = vunpack.c.l.b16 %v168
    %v201 = vunpack.c.l.b16 %v169
    %v202 = vpack.c.b16 %v201, %v200
    %v220 = vunpack.c.l.b16 %v170
    %v221 = vunpack.c.h.b16 %v170
    %v222 = vunpack.c.l.b16 %v171
    %v223 = vunpack.c.h.b16 %v171
    %v224 = vunpack.c.l.b16 %v172
    %v225 = vunpack.c.h.b16 %v172
    %v226 = vunpack.c.l.b16 %v173
    %v227 = vunpack.c.h.b16 %v173
    %v228 = vunpack.c.l.b16 %v174
    %v229 = vunpack.c.h.b16 %v174
    %v230 = vunpack.c.l.b16 %v175
    %v231 = vunpack.c.h.b16 %v175
    %v232 = vunpack.c.l.b16 %v176
    %v233 = vunpack.c.h.b16 %v176
    %v234 = vunpack.c.l.b16 %v177
    %v235 = vunpack.c.h.b16 %v177
    %v236 = vunpack.c.l.b16 %v178
    %v237 = vunpack.c.h.b16 %v178
    %v238 = vunpack.c.l.b16 %v179
    %v239 = vunpack.c.h.b16 %v179
    %v240 = vunpack.c.l.b16 %v180
    %v241 = vunpack.c.h.b16 %v180
    %v242 = vunpack.c.l.b16 %v181
    %v243 = vunpack.c.h.b16 %v181
    %v244 = vunpack.c.l.b16 %v182
    %v245 = vunpack.c.h.b16 %v182
    %v246 = vunpack.c.l.b16 %v183
    %v247 = vunpack.c.h.b16 %v183
    %v248 = vunpack.c.l.b16 %v184
    %v249 = vunpack.c.h.b16 %v184
    %v250 = vunpack.c.l.b16 %v185
    %v251 = vunpack.c.h.b16 %v185
    %v252 = vpack.c.b16 %v222, %v220
    %v253 = vpack.c.b16 %v223, %v221
    %v254 = vpack.c.b16 %v226, %v224
    %v255 = vpack.c.b16 %v227, %v225
    %v256 = vpack.c.b16 %v230, %v228
    %v257 = vpack.c.b16 %v231, %v229
    %v258 = vpack.c.b16 %v234, %v232
    %v259 = vpack.c.b16 %v235, %v233
    %v260 = vpack.c.b16 %v238, %v236
    %v261 = vpack.c.b16 %v239, %v237
    %v262 = vpack.c.b16 %v242, %v240
    %v263 = vpack.c.b16 %v243, %v241
    %v264 = vpack.c.b16 %v246, %v244
    %v265 = vpack.c.b16 %v247, %v245
    %v266 = vpack.c.b16 %v250, %v248
    %v267 = vpack.c.b16 %v251, %v249
    %284 = vmatprep.subr.bf16.mxu0 %v253
    %285 = vmatpush1.bf16.msra.mxu0 %v252
    %286 = vmatprep.subr.bf16.mxu0 %v255
    %287 = vmatpush1.bf16.msra.mxu0 %v254
    %288 = vmatprep.subr.bf16.mxu0 %v257
    %289 = vmatpush1.bf16.msra.mxu0 %v256
    %290 = vmatprep.subr.bf16.mxu0 %v259
    %291 = vmatpush1.bf16.msra.mxu0 %v258
    %292 = vmatprep.subr.bf16.mxu0 %v261
    %293 = vmatpush1.bf16.msra.mxu0 %v260
    %294 = vmatprep.subr.bf16.mxu0 %v263
    %295 = vmatpush1.bf16.msra.mxu0 %v262
    %296 = vmatprep.subr.bf16.mxu0 %v265
    %297 = vmatpush1.bf16.msra.mxu0 %v264
    %298 = vmatprep.subr.bf16.mxu0 %v267
    %299 = vmatpush1.bf16.msra.mxu0 %v266
    %300 = vmatprep.subr.bf16.mxu0 0
    %301 = vmatpush1.bf16.msra.mxu0 0
    %302 = vmatprep.subr.bf16.mxu0 0
    %303 = vmatpush1.bf16.msra.mxu0 0
    %304 = vmatprep.subr.bf16.mxu0 0
    %305 = vmatpush1.bf16.msra.mxu0 0
    %306 = vmatprep.subr.bf16.mxu0 0
    %307 = vmatpush1.bf16.msra.mxu0 0
    %308 = vmatprep.subr.bf16.mxu0 0
    %309 = vmatpush1.bf16.msra.mxu0 0
    %310 = vmatprep.subr.bf16.mxu0 0
    %311 = vmatpush1.bf16.msra.mxu0 0
    %312 = vmatprep.subr.bf16.mxu0 0
    %313 = vmatpush1.bf16.msra.mxu0 0
    %314 = vmatprep.subr.bf16.mxu0 0
    %315 = vmatpush1.bf16.msra.mxu0 0
    %316 = vmatprep.mubr.bf16.mxu0 0
    %317 = vmatmul.mubr.bf16.gmra.mrb[0].mxu0 %v202
    %v318 = vpop.f32.mrb[0].mxu0
    %v319 = vadd.f32 %v191, %v318
    %v320 = vpop.f32.mrb[0].mxu0
    %v321 = vadd.f32 %v195, %v320
    %v322 = vpop.f32.mrb[0].mxu0
    %v323 = vadd.f32 %v191, %v322
    %v324 = vpop.f32.mrb[0].mxu0
    %v325 = vadd.f32 %v195, %v324
    %326 = vdwg.mxu0
    %v327 = vmax.f32 %v319, 0.0
    %v328 = vmax.f32 %v321, 0.0
    %v329 = vmax.f32 %v323, 0.0
    %v330 = vmax.f32 %v325, 0.0
    %v331 = vpack.c.bf16 %v329, %v327
    %v332 = vpack.c.bf16 %v330, %v328
    %v333 = vld [vmem:[#allocation10] sm:$0xff]
    %v334 = vld [vmem:[#allocation10 + $0x8] sm:$0xff]
    %v335 = vld [vmem:[#allocation10 + $0x10] sm:$0xff]
    %v336 = vld [vmem:[#allocation10 + $0x18] sm:$0xff]
    %v337 = vld [vmem:[#allocation10 + $0x20] sm:$0xff]
    %v338 = vld [vmem:[#allocation10 + $0x28] sm:$0xff]
    %v339 = vld [vmem:[#allocation10 + $0x30] sm:$0xff]
    %v340 = vld [vmem:[#allocation10 + $0x38] sm:$0xff]
    %v341 = vld [vmem:[#allocation10 + $0x40] sm:$0xff]
    %v342 = vld [vmem:[#allocation10 + $0x48] sm:$0xff]
    %v343 = vld [vmem:[#allocation10 + $0x50] sm:$0xff]
    %v344 = vld [vmem:[#allocation10 + $0x58] sm:$0xff]
    %v345 = vld [vmem:[#allocation10 + $0x60] sm:$0xff]
    %v346 = vld [vmem:[#allocation10 + $0x68] sm:$0xff]
    %v347 = vld [vmem:[#allocation10 + $0x70] sm:$0xff]
    %v348 = vld [vmem:[#allocation10 + $0x78] sm:$0xff]
    %v349 = vld [vmem:[#allocation10 + $0x80] sm:$0xff]
    %v350 = vld [vmem:[#allocation10 + $0x88] sm:$0xff]
    %v351 = vld [vmem:[#allocation10 + $0x90] sm:$0xff]
    %v352 = vld [vmem:[#allocation10 + $0x98] sm:$0xff]
    %v353 = vld [vmem:[#allocation10 + $0xa0] sm:$0xff]
    %v354 = vld [vmem:[#allocation10 + $0xa8] sm:$0xff]
    %v355 = vld [vmem:[#allocation10 + $0xb0] sm:$0xff]
    %v356 = vld [vmem:[#allocation10 + $0xb8] sm:$0xff]
    %v357 = vld [vmem:[#allocation10 + $0xc0] sm:$0xff]
    %v358 = vld [vmem:[#allocation10 + $0xc8] sm:$0xff]
    %v359 = vld [vmem:[#allocation10 + $0xd0] sm:$0xff]
    %v360 = vld [vmem:[#allocation10 + $0xd8] sm:$0xff]
    %v361 = vld [vmem:[#allocation10 + $0xe0] sm:$0xff]
    %v362 = vld [vmem:[#allocation10 + $0xe8] sm:$0xff]
    %v363 = vld [vmem:[#allocation10 + $0xf0] sm:$0xff]
    %v364 = vld [vmem:[#allocation10 + $0xf8] sm:$0xff]
    %v365 = vld [vmem:[#allocation10 + $0x100] sm:$0xff]
    %v366 = vld [vmem:[#allocation10 + $0x108] sm:$0xff]
    %v367 = vld [vmem:[#allocation10 + $0x110] sm:$0xff]
    %v368 = vld [vmem:[#allocation10 + $0x118] sm:$0xff]
    %v369 = vld [vmem:[#allocation10 + $0x120] sm:$0xff]
    %v370 = vld [vmem:[#allocation10 + $0x128] sm:$0xff]
    %v371 = vld [vmem:[#allocation10 + $0x130] sm:$0xff]
    %v372 = vld [vmem:[#allocation10 + $0x138] sm:$0xff]
    %v373 = vld [vmem:[#allocation10 + $0x140] sm:$0xff]
    %v374 = vld [vmem:[#allocation10 + $0x148] sm:$0xff]
    %v375 = vld [vmem:[#allocation10 + $0x150] sm:$0xff]
    %v376 = vld [vmem:[#allocation10 + $0x158] sm:$0xff]
    %v377 = vld [vmem:[#allocation10 + $0x160] sm:$0xff]
    %v378 = vld [vmem:[#allocation10 + $0x168] sm:$0xff]
    %v379 = vld [vmem:[#allocation10 + $0x170] sm:$0xff]
    %v380 = vld [vmem:[#allocation10 + $0x178] sm:$0xff]
    %v381 = vld [vmem:[#allocation10 + $0x180] sm:$0xff]
    %v382 = vld [vmem:[#allocation10 + $0x188] sm:$0xff]
    %v383 = vld [vmem:[#allocation10 + $0x190] sm:$0xff]
    %v384 = vld [vmem:[#allocation10 + $0x198] sm:$0xff]
    %v385 = vld [vmem:[#allocation10 + $0x1a0] sm:$0xff]
    %v386 = vld [vmem:[#allocation10 + $0x1a8] sm:$0xff]
    %v387 = vld [vmem:[#allocation10 + $0x1b0] sm:$0xff]
    %v388 = vld [vmem:[#allocation10 + $0x1b8] sm:$0xff]
    %v389 = vld [vmem:[#allocation10 + $0x1c0] sm:$0xff]
    %v390 = vld [vmem:[#allocation10 + $0x1c8] sm:$0xff]
    %v391 = vld [vmem:[#allocation10 + $0x1d0] sm:$0xff]
    %v392 = vld [vmem:[#allocation10 + $0x1d8] sm:$0xff]
    %v393 = vld [vmem:[#allocation10 + $0x1e0] sm:$0xff]
    %v394 = vld [vmem:[#allocation10 + $0x1e8] sm:$0xff]
    %v395 = vld [vmem:[#allocation10 + $0x1f0] sm:$0xff]
    %v396 = vld [vmem:[#allocation10 + $0x1f8] sm:$0xff]
    %v397 = vld [vmem:[#allocation12] sm:$0xf]
    %v399 = vlaneseq
    %v400 = vshrl.u32 %v399, 7
    %v401 = vsub.s32 0, %v400
    %v402 = vrot.slane %v397, %v401
    %v403 = vlaneseq
    %v404 = vshrl.u32 %v403, 7
    %v405 = vsub.s32 1, %v404
    %v406 = vrot.slane %v397, %v405
    %v407 = vlaneseq
    %v408 = vshrl.u32 %v407, 7
    %v409 = vsub.s32 2, %v408
    %v410 = vrot.slane %v397, %v409
    %v411 = vlaneseq
    %v412 = vshrl.u32 %v411, 7
    %v413 = vsub.s32 3, %v412
    %v414 = vrot.slane %v397, %v413
    %v483 = vunpack.c.l.b16 %v333
    %v484 = vunpack.c.h.b16 %v333
    %v485 = vunpack.c.l.b16 %v334
    %v486 = vunpack.c.h.b16 %v334
    %v487 = vunpack.c.l.b16 %v335
    %v488 = vunpack.c.h.b16 %v335
    %v489 = vunpack.c.l.b16 %v336
    %v490 = vunpack.c.h.b16 %v336
    %v491 = vunpack.c.l.b16 %v337
    %v492 = vunpack.c.h.b16 %v337
    %v493 = vunpack.c.l.b16 %v338
    %v494 = vunpack.c.h.b16 %v338
    %v495 = vunpack.c.l.b16 %v339
    %v496 = vunpack.c.h.b16 %v339
    %v497 = vunpack.c.l.b16 %v340
    %v498 = vunpack.c.h.b16 %v340
    %v499 = vunpack.c.l.b16 %v341
    %v500 = vunpack.c.h.b16 %v341
    %v501 = vunpack.c.l.b16 %v342
    %v502 = vunpack.c.h.b16 %v342
    %v503 = vunpack.c.l.b16 %v343
    %v504 = vunpack.c.h.b16 %v343
    %v505 = vunpack.c.l.b16 %v344
    %v506 = vunpack.c.h.b16 %v344
    %v507 = vunpack.c.l.b16 %v345
    %v508 = vunpack.c.h.b16 %v345
    %v509 = vunpack.c.l.b16 %v346
    %v510 = vunpack.c.h.b16 %v346
    %v511 = vunpack.c.l.b16 %v347
    %v512 = vunpack.c.h.b16 %v347
    %v513 = vunpack.c.l.b16 %v348
    %v514 = vunpack.c.h.b16 %v348
    %v515 = vunpack.c.l.b16 %v349
    %v516 = vunpack.c.h.b16 %v349
    %v517 = vunpack.c.l.b16 %v350
    %v518 = vunpack.c.h.b16 %v350
    %v519 = vunpack.c.l.b16 %v351
    %v520 = vunpack.c.h.b16 %v351
    %v521 = vunpack.c.l.b16 %v352
    %v522 = vunpack.c.h.b16 %v352
    %v523 = vunpack.c.l.b16 %v353
    %v524 = vunpack.c.h.b16 %v353
    %v525 = vunpack.c.l.b16 %v354
    %v526 = vunpack.c.h.b16 %v354
    %v527 = vunpack.c.l.b16 %v355
    %v528 = vunpack.c.h.b16 %v355
    %v529 = vunpack.c.l.b16 %v356
    %v530 = vunpack.c.h.b16 %v356
    %v531 = vunpack.c.l.b16 %v357
    %v532 = vunpack.c.h.b16 %v357
    %v533 = vunpack.c.l.b16 %v358
    %v534 = vunpack.c.h.b16 %v358
    %v535 = vunpack.c.l.b16 %v359
    %v536 = vunpack.c.h.b16 %v359
    %v537 = vunpack.c.l.b16 %v360
    %v538 = vunpack.c.h.b16 %v360
    %v539 = vunpack.c.l.b16 %v361
    %v540 = vunpack.c.h.b16 %v361
    %v541 = vunpack.c.l.b16 %v362
    %v542 = vunpack.c.h.b16 %v362
    %v543 = vunpack.c.l.b16 %v363
    %v544 = vunpack.c.h.b16 %v363
    %v545 = vunpack.c.l.b16 %v364
    %v546 = vunpack.c.h.b16 %v364
    %v547 = vunpack.c.l.b16 %v365
    %v548 = vunpack.c.h.b16 %v365
    %v549 = vunpack.c.l.b16 %v366
    %v550 = vunpack.c.h.b16 %v366
    %v551 = vunpack.c.l.b16 %v367
    %v552 = vunpack.c.h.b16 %v367
    %v553 = vunpack.c.l.b16 %v368
    %v554 = vunpack.c.h.b16 %v368
    %v555 = vunpack.c.l.b16 %v369
    %v556 = vunpack.c.h.b16 %v369
    %v557 = vunpack.c.l.b16 %v370
    %v558 = vunpack.c.h.b16 %v370
    %v559 = vunpack.c.l.b16 %v371
    %v560 = vunpack.c.h.b16 %v371
    %v561 = vunpack.c.l.b16 %v372
    %v562 = vunpack.c.h.b16 %v372
    %v563 = vunpack.c.l.b16 %v373
    %v564 = vunpack.c.h.b16 %v373
    %v565 = vunpack.c.l.b16 %v374
    %v566 = vunpack.c.h.b16 %v374
    %v567 = vunpack.c.l.b16 %v375
    %v568 = vunpack.c.h.b16 %v375
    %v569 = vunpack.c.l.b16 %v376
    %v570 = vunpack.c.h.b16 %v376
    %v571 = vunpack.c.l.b16 %v377
    %v572 = vunpack.c.h.b16 %v377
    %v573 = vunpack.c.l.b16 %v378
    %v574 = vunpack.c.h.b16 %v378
    %v575 = vunpack.c.l.b16 %v379
    %v576 = vunpack.c.h.b16 %v379
    %v577 = vunpack.c.l.b16 %v380
    %v578 = vunpack.c.h.b16 %v380
    %v579 = vunpack.c.l.b16 %v381
    %v580 = vunpack.c.h.b16 %v381
    %v581 = vunpack.c.l.b16 %v382
    %v582 = vunpack.c.h.b16 %v382
    %v583 = vunpack.c.l.b16 %v383
    %v584 = vunpack.c.h.b16 %v383
    %v585 = vunpack.c.l.b16 %v384
    %v586 = vunpack.c.h.b16 %v384
    %v587 = vunpack.c.l.b16 %v385
    %v588 = vunpack.c.h.b16 %v385
    %v589 = vunpack.c.l.b16 %v386
    %v590 = vunpack.c.h.b16 %v386
    %v591 = vunpack.c.l.b16 %v387
    %v592 = vunpack.c.h.b16 %v387
    %v593 = vunpack.c.l.b16 %v388
    %v594 = vunpack.c.h.b16 %v388
    %v595 = vunpack.c.l.b16 %v389
    %v596 = vunpack.c.h.b16 %v389
    %v597 = vunpack.c.l.b16 %v390
    %v598 = vunpack.c.h.b16 %v390
    %v599 = vunpack.c.l.b16 %v391
    %v600 = vunpack.c.h.b16 %v391
    %v601 = vunpack.c.l.b16 %v392
    %v602 = vunpack.c.h.b16 %v392
    %v603 = vunpack.c.l.b16 %v393
    %v604 = vunpack.c.h.b16 %v393
    %v605 = vunpack.c.l.b16 %v394
    %v606 = vunpack.c.h.b16 %v394
    %v607 = vunpack.c.l.b16 %v395
    %v608 = vunpack.c.h.b16 %v395
    %v609 = vunpack.c.l.b16 %v396
    %v610 = vunpack.c.h.b16 %v396
    %v611 = vpack.c.b16 %v487, %v483
    %v612 = vpack.c.b16 %v488, %v484
    %v613 = vpack.c.b16 %v489, %v485
    %v614 = vpack.c.b16 %v490, %v486
    %v615 = vpack.c.b16 %v495, %v491
    %v616 = vpack.c.b16 %v496, %v492
    %v617 = vpack.c.b16 %v497, %v493
    %v618 = vpack.c.b16 %v498, %v494
    %v619 = vpack.c.b16 %v503, %v499
    %v620 = vpack.c.b16 %v504, %v500
    %v621 = vpack.c.b16 %v505, %v501
    %v622 = vpack.c.b16 %v506, %v502
    %v623 = vpack.c.b16 %v511, %v507
    %v624 = vpack.c.b16 %v512, %v508
    %v625 = vpack.c.b16 %v513, %v509
    %v626 = vpack.c.b16 %v514, %v510
    %v627 = vpack.c.b16 %v519, %v515
    %v628 = vpack.c.b16 %v520, %v516
    %v629 = vpack.c.b16 %v521, %v517
    %v630 = vpack.c.b16 %v522, %v518
    %v631 = vpack.c.b16 %v527, %v523
    %v632 = vpack.c.b16 %v528, %v524
    %v633 = vpack.c.b16 %v529, %v525
    %v634 = vpack.c.b16 %v530, %v526
    %v635 = vpack.c.b16 %v535, %v531
    %v636 = vpack.c.b16 %v536, %v532
    %v637 = vpack.c.b16 %v537, %v533
    %v638 = vpack.c.b16 %v538, %v534
    %v639 = vpack.c.b16 %v543, %v539
    %v640 = vpack.c.b16 %v544, %v540
    %v641 = vpack.c.b16 %v545, %v541
    %v642 = vpack.c.b16 %v546, %v542
    %v643 = vpack.c.b16 %v551, %v547
    %v644 = vpack.c.b16 %v552, %v548
    %v645 = vpack.c.b16 %v553, %v549
    %v646 = vpack.c.b16 %v554, %v550
    %v647 = vpack.c.b16 %v559, %v555
    %v648 = vpack.c.b16 %v560, %v556
    %v649 = vpack.c.b16 %v561, %v557
    %v650 = vpack.c.b16 %v562, %v558
    %v651 = vpack.c.b16 %v567, %v563
    %v652 = vpack.c.b16 %v568, %v564
    %v653 = vpack.c.b16 %v569, %v565
    %v654 = vpack.c.b16 %v570, %v566
    %v655 = vpack.c.b16 %v575, %v571
    %v656 = vpack.c.b16 %v576, %v572
    %v657 = vpack.c.b16 %v577, %v573
    %v658 = vpack.c.b16 %v578, %v574
    %v659 = vpack.c.b16 %v583, %v579
    %v660 = vpack.c.b16 %v584, %v580
    %v661 = vpack.c.b16 %v585, %v581
    %v662 = vpack.c.b16 %v586, %v582
    %v663 = vpack.c.b16 %v591, %v587
    %v664 = vpack.c.b16 %v592, %v588
    %v665 = vpack.c.b16 %v593, %v589
    %v666 = vpack.c.b16 %v594, %v590
    %v667 = vpack.c.b16 %v599, %v595
    %v668 = vpack.c.b16 %v600, %v596
    %v669 = vpack.c.b16 %v601, %v597
    %v670 = vpack.c.b16 %v602, %v598
    %v671 = vpack.c.b16 %v607, %v603
    %v672 = vpack.c.b16 %v608, %v604
    %v673 = vpack.c.b16 %v609, %v605
    %v674 = vpack.c.b16 %v610, %v606
    %739 = vmatprep.subr.bf16.mxu0 %v612
    %740 = vmatpush1.bf16.msra.mxu0 %v611
    %741 = vmatprep.subr.bf16.mxu0 %v616
    %742 = vmatpush1.bf16.msra.mxu0 %v615
    %743 = vmatprep.subr.bf16.mxu0 %v620
    %744 = vmatpush1.bf16.msra.mxu0 %v619
    %745 = vmatprep.subr.bf16.mxu0 %v624
    %746 = vmatpush1.bf16.msra.mxu0 %v623
    %747 = vmatprep.subr.bf16.mxu0 %v628
    %748 = vmatpush1.bf16.msra.mxu0 %v627
    %749 = vmatprep.subr.bf16.mxu0 %v632
    %750 = vmatpush1.bf16.msra.mxu0 %v631
    %751 = vmatprep.subr.bf16.mxu0 %v636
    %752 = vmatpush1.bf16.msra.mxu0 %v635
    %753 = vmatprep.subr.bf16.mxu0 %v640
    %754 = vmatpush1.bf16.msra.mxu0 %v639
    %755 = vmatprep.subr.bf16.mxu0 %v644
    %756 = vmatpush1.bf16.msra.mxu0 %v643
    %757 = vmatprep.subr.bf16.mxu0 %v648
    %758 = vmatpush1.bf16.msra.mxu0 %v647
    %759 = vmatprep.subr.bf16.mxu0 %v652
    %760 = vmatpush1.bf16.msra.mxu0 %v651
    %761 = vmatprep.subr.bf16.mxu0 %v656
    %762 = vmatpush1.bf16.msra.mxu0 %v655
    %763 = vmatprep.subr.bf16.mxu0 %v660
    %764 = vmatpush1.bf16.msra.mxu0 %v659
    %765 = vmatprep.subr.bf16.mxu0 %v664
    %766 = vmatpush1.bf16.msra.mxu0 %v663
    %767 = vmatprep.subr.bf16.mxu0 %v668
    %768 = vmatpush1.bf16.msra.mxu0 %v667
    %769 = vmatprep.subr.bf16.mxu0 %v672
    %770 = vmatpush1.bf16.msra.mxu0 %v671
    %771 = vmatprep.mubr.bf16.mxu0 %v332
    %772 = vmatmul.mubr.bf16.gmra.mrb[0].mxu0 %v331
    %v773 = vpop.f32.mrb[0].mxu0
    %v774 = vadd.f32 %v402, %v773
    %v775 = vpop.f32.mrb[0].mxu0
    %v776 = vadd.f32 %v406, %v775
    %v777 = vpop.f32.mrb[0].mxu0
    %v778 = vadd.f32 %v402, %v777
    %v779 = vpop.f32.mrb[0].mxu0
    %v780 = vadd.f32 %v406, %v779
    %781 = vdwg.mxu0
    %782 = vmatprep.subr.bf16.mxu0 %v614
    %783 = vmatpush1.bf16.msra.mxu0 %v613
    %784 = vmatprep.subr.bf16.mxu0 %v618
    %785 = vmatpush1.bf16.msra.mxu0 %v617
    %786 = vmatprep.subr.bf16.mxu0 %v622
    %787 = vmatpush1.bf16.msra.mxu0 %v621
    %788 = vmatprep.subr.bf16.mxu0 %v626
    %789 = vmatpush1.bf16.msra.mxu0 %v625
    %790 = vmatprep.subr.bf16.mxu0 %v630
    %791 = vmatpush1.bf16.msra.mxu0 %v629
    %792 = vmatprep.subr.bf16.mxu0 %v634
    %793 = vmatpush1.bf16.msra.mxu0 %v633
    %794 = vmatprep.subr.bf16.mxu0 %v638
    %795 = vmatpush1.bf16.msra.mxu0 %v637
    %796 = vmatprep.subr.bf16.mxu0 %v642
    %797 = vmatpush1.bf16.msra.mxu0 %v641
    %798 = vmatprep.subr.bf16.mxu0 %v646
    %799 = vmatpush1.bf16.msra.mxu0 %v645
    %800 = vmatprep.subr.bf16.mxu0 %v650
    %801 = vmatpush1.bf16.msra.mxu0 %v649
    %802 = vmatprep.subr.bf16.mxu0 %v654
    %803 = vmatpush1.bf16.msra.mxu0 %v653
    %804 = vmatprep.subr.bf16.mxu0 %v658
    %805 = vmatpush1.bf16.msra.mxu0 %v657
    %806 = vmatprep.subr.bf16.mxu0 %v662
    %807 = vmatpush1.bf16.msra.mxu0 %v661
    %808 = vmatprep.subr.bf16.mxu0 %v666
    %809 = vmatpush1.bf16.msra.mxu0 %v665
    %810 = vmatprep.subr.bf16.mxu0 %v670
    %811 = vmatpush1.bf16.msra.mxu0 %v669
    %812 = vmatprep.subr.bf16.mxu0 %v674
    %813 = vmatpush1.bf16.msra.mxu0 %v673
    %814 = vmatprep.mubr.bf16.mxu0 %v332
    %815 = vmatmul.mubr.bf16.gmra.mrb[0].mxu0 %v331
    %v816 = vpop.f32.mrb[0].mxu0
    %v817 = vadd.f32 %v410, %v816
    %v818 = vpop.f32.mrb[0].mxu0
    %v819 = vadd.f32 %v414, %v818
    %v820 = vpop.f32.mrb[0].mxu0
    %v821 = vadd.f32 %v410, %v820
    %v822 = vpop.f32.mrb[0].mxu0
    %v823 = vadd.f32 %v414, %v822
    %824 = vdwg.mxu0
    %v825 = vmax.f32 %v774, 0.0
    %v826 = vmax.f32 %v776, 0.0
    %v827 = vmax.f32 %v817, 0.0
    %v828 = vmax.f32 %v819, 0.0
    %v829 = vmax.f32 %v778, 0.0
    %v830 = vmax.f32 %v780, 0.0
    %v831 = vmax.f32 %v821, 0.0
    %v832 = vmax.f32 %v823, 0.0
    %v833 = vpack.c.bf16 %v829, %v825
    %v834 = vpack.c.bf16 %v830, %v826
    %v835 = vpack.c.bf16 %v831, %v827
    %v836 = vpack.c.bf16 %v832, %v828
    %v837 = vld [vmem:[#allocation13] sm:$0xff]
    %v838 = vld [vmem:[#allocation13 + $0x8] sm:$0xff]
    %v839 = vld [vmem:[#allocation13 + $0x10] sm:$0xff]
    %v840 = vld [vmem:[#allocation13 + $0x18] sm:$0xff]
    %v841 = vld [vmem:[#allocation13 + $0x20] sm:$0xff]
    %v842 = vld [vmem:[#allocation13 + $0x28] sm:$0xff]
    %v843 = vld [vmem:[#allocation13 + $0x30] sm:$0xff]
    %v844 = vld [vmem:[#allocation13 + $0x38] sm:$0xff]
    %v845 = vld [vmem:[#allocation13 + $0x40] sm:$0xff]
    %v846 = vld [vmem:[#allocation13 + $0x48] sm:$0xff]
    %v847 = vld [vmem:[#allocation13 + $0x50] sm:$0xff]
    %v848 = vld [vmem:[#allocation13 + $0x58] sm:$0xff]
    %v849 = vld [vmem:[#allocation13 + $0x60] sm:$0xff]
    %v850 = vld [vmem:[#allocation13 + $0x68] sm:$0xff]
    %v851 = vld [vmem:[#allocation13 + $0x70] sm:$0xff]
    %v852 = vld [vmem:[#allocation13 + $0x78] sm:$0xff]
    %v853 = vld [vmem:[#allocation13 + $0x80] sm:$0xff]
    %v854 = vld [vmem:[#allocation13 + $0x88] sm:$0xff]
    %v855 = vld [vmem:[#allocation13 + $0x90] sm:$0xff]
    %v856 = vld [vmem:[#allocation13 + $0x98] sm:$0xff]
    %v857 = vld [vmem:[#allocation13 + $0xa0] sm:$0xff]
    %v858 = vld [vmem:[#allocation13 + $0xa8] sm:$0xff]
    %v859 = vld [vmem:[#allocation13 + $0xb0] sm:$0xff]
    %v860 = vld [vmem:[#allocation13 + $0xb8] sm:$0xff]
    %v861 = vld [vmem:[#allocation13 + $0xc0] sm:$0xff]
    %v862 = vld [vmem:[#allocation13 + $0xc8] sm:$0xff]
    %v863 = vld [vmem:[#allocation13 + $0xd0] sm:$0xff]
    %v864 = vld [vmem:[#allocation13 + $0xd8] sm:$0xff]
    %v865 = vld [vmem:[#allocation13 + $0xe0] sm:$0xff]
    %v866 = vld [vmem:[#allocation13 + $0xe8] sm:$0xff]
    %v867 = vld [vmem:[#allocation13 + $0xf0] sm:$0xff]
    %v868 = vld [vmem:[#allocation13 + $0xf8] sm:$0xff]
    %v869 = vld [vmem:[#allocation13 + $0x100] sm:$0xff]
    %v870 = vld [vmem:[#allocation13 + $0x108] sm:$0xff]
    %v871 = vld [vmem:[#allocation13 + $0x110] sm:$0xff]
    %v872 = vld [vmem:[#allocation13 + $0x118] sm:$0xff]
    %v873 = vld [vmem:[#allocation13 + $0x120] sm:$0xff]
    %v874 = vld [vmem:[#allocation13 + $0x128] sm:$0xff]
    %v875 = vld [vmem:[#allocation13 + $0x130] sm:$0xff]
    %v876 = vld [vmem:[#allocation13 + $0x138] sm:$0xff]
    %v877 = vld [vmem:[#allocation13 + $0x140] sm:$0xff]
    %v878 = vld [vmem:[#allocation13 + $0x148] sm:$0xff]
    %v879 = vld [vmem:[#allocation13 + $0x150] sm:$0xff]
    %v880 = vld [vmem:[#allocation13 + $0x158] sm:$0xff]
    %v881 = vld [vmem:[#allocation13 + $0x160] sm:$0xff]
    %v882 = vld [vmem:[#allocation13 + $0x168] sm:$0xff]
    %v883 = vld [vmem:[#allocation13 + $0x170] sm:$0xff]
    %v884 = vld [vmem:[#allocation13 + $0x178] sm:$0xff]
    %v885 = vld [vmem:[#allocation13 + $0x180] sm:$0xff]
    %v886 = vld [vmem:[#allocation13 + $0x188] sm:$0xff]
    %v887 = vld [vmem:[#allocation13 + $0x190] sm:$0xff]
    %v888 = vld [vmem:[#allocation13 + $0x198] sm:$0xff]
    %v889 = vld [vmem:[#allocation13 + $0x1a0] sm:$0xff]
    %v890 = vld [vmem:[#allocation13 + $0x1a8] sm:$0xff]
    %v891 = vld [vmem:[#allocation13 + $0x1b0] sm:$0xff]
    %v892 = vld [vmem:[#allocation13 + $0x1b8] sm:$0xff]
    %v893 = vld [vmem:[#allocation13 + $0x1c0] sm:$0xff]
    %v894 = vld [vmem:[#allocation13 + $0x1c8] sm:$0xff]
    %v895 = vld [vmem:[#allocation13 + $0x1d0] sm:$0xff]
    %v896 = vld [vmem:[#allocation13 + $0x1d8] sm:$0xff]
    %v897 = vld [vmem:[#allocation13 + $0x1e0] sm:$0xff]
    %v898 = vld [vmem:[#allocation13 + $0x1e8] sm:$0xff]
    %v899 = vld [vmem:[#allocation13 + $0x1f0] sm:$0xff]
    %v900 = vld [vmem:[#allocation13 + $0x1f8] sm:$0xff]
    %v901 = vld [vmem:[#allocation13 + $0x200] sm:$0xff]
    %v902 = vld [vmem:[#allocation13 + $0x208] sm:$0xff]
    %v903 = vld [vmem:[#allocation13 + $0x210] sm:$0xff]
    %v904 = vld [vmem:[#allocation13 + $0x218] sm:$0xff]
    %v905 = vld [vmem:[#allocation13 + $0x220] sm:$0xff]
    %v906 = vld [vmem:[#allocation13 + $0x228] sm:$0xff]
    %v907 = vld [vmem:[#allocation13 + $0x230] sm:$0xff]
    %v908 = vld [vmem:[#allocation13 + $0x238] sm:$0xff]
    %v909 = vld [vmem:[#allocation13 + $0x240] sm:$0xff]
    %v910 = vld [vmem:[#allocation13 + $0x248] sm:$0xff]
    %v911 = vld [vmem:[#allocation13 + $0x250] sm:$0xff]
    %v912 = vld [vmem:[#allocation13 + $0x258] sm:$0xff]
    %v913 = vld [vmem:[#allocation13 + $0x260] sm:$0xff]
    %v914 = vld [vmem:[#allocation13 + $0x268] sm:$0xff]
    %v915 = vld [vmem:[#allocation13 + $0x270] sm:$0xff]
    %v916 = vld [vmem:[#allocation13 + $0x278] sm:$0xff]
    %v917 = vld [vmem:[#allocation13 + $0x280] sm:$0xff]
    %v918 = vld [vmem:[#allocation13 + $0x288] sm:$0xff]
    %v919 = vld [vmem:[#allocation13 + $0x290] sm:$0xff]
    %v920 = vld [vmem:[#allocation13 + $0x298] sm:$0xff]
    %v921 = vld [vmem:[#allocation13 + $0x2a0] sm:$0xff]
    %v922 = vld [vmem:[#allocation13 + $0x2a8] sm:$0xff]
    %v923 = vld [vmem:[#allocation13 + $0x2b0] sm:$0xff]
    %v924 = vld [vmem:[#allocation13 + $0x2b8] sm:$0xff]
    %v925 = vld [vmem:[#allocation13 + $0x2c0] sm:$0xff]
    %v926 = vld [vmem:[#allocation13 + $0x2c8] sm:$0xff]
    %v927 = vld [vmem:[#allocation13 + $0x2d0] sm:$0xff]
    %v928 = vld [vmem:[#allocation13 + $0x2d8] sm:$0xff]
    %v929 = vld [vmem:[#allocation13 + $0x2e0] sm:$0xff]
    %v930 = vld [vmem:[#allocation13 + $0x2e8] sm:$0xff]
    %v931 = vld [vmem:[#allocation13 + $0x2f0] sm:$0xff]
    %v932 = vld [vmem:[#allocation13 + $0x2f8] sm:$0xff]
    %v933 = vld [vmem:[#allocation13 + $0x300] sm:$0xff]
    %v934 = vld [vmem:[#allocation13 + $0x308] sm:$0xff]
    %v935 = vld [vmem:[#allocation13 + $0x310] sm:$0xff]
    %v936 = vld [vmem:[#allocation13 + $0x318] sm:$0xff]
    %v937 = vld [vmem:[#allocation13 + $0x320] sm:$0xff]
    %v938 = vld [vmem:[#allocation13 + $0x328] sm:$0xff]
    %v939 = vld [vmem:[#allocation13 + $0x330] sm:$0xff]
    %v940 = vld [vmem:[#allocation13 + $0x338] sm:$0xff]
    %v941 = vld [vmem:[#allocation13 + $0x340] sm:$0xff]
    %v942 = vld [vmem:[#allocation13 + $0x348] sm:$0xff]
    %v943 = vld [vmem:[#allocation13 + $0x350] sm:$0xff]
    %v944 = vld [vmem:[#allocation13 + $0x358] sm:$0xff]
    %v945 = vld [vmem:[#allocation13 + $0x360] sm:$0xff]
    %v946 = vld [vmem:[#allocation13 + $0x368] sm:$0xff]
    %v947 = vld [vmem:[#allocation13 + $0x370] sm:$0xff]
    %v948 = vld [vmem:[#allocation13 + $0x378] sm:$0xff]
    %v949 = vld [vmem:[#allocation13 + $0x380] sm:$0xff]
    %v950 = vld [vmem:[#allocation13 + $0x388] sm:$0xff]
    %v951 = vld [vmem:[#allocation13 + $0x390] sm:$0xff]
    %v952 = vld [vmem:[#allocation13 + $0x398] sm:$0xff]
    %v953 = vld [vmem:[#allocation13 + $0x3a0] sm:$0xff]
    %v954 = vld [vmem:[#allocation13 + $0x3a8] sm:$0xff]
    %v955 = vld [vmem:[#allocation13 + $0x3b0] sm:$0xff]
    %v956 = vld [vmem:[#allocation13 + $0x3b8] sm:$0xff]
    %v957 = vld [vmem:[#allocation13 + $0x3c0] sm:$0xff]
    %v958 = vld [vmem:[#allocation13 + $0x3c8] sm:$0xff]
    %v959 = vld [vmem:[#allocation13 + $0x3d0] sm:$0xff]
    %v960 = vld [vmem:[#allocation13 + $0x3d8] sm:$0xff]
    %v961 = vld [vmem:[#allocation13 + $0x3e0] sm:$0xff]
    %v962 = vld [vmem:[#allocation13 + $0x3e8] sm:$0xff]
    %v963 = vld [vmem:[#allocation13 + $0x3f0] sm:$0xff]
    %v964 = vld [vmem:[#allocation13 + $0x3f8] sm:$0xff]
    %v965 = vld [vmem:[#allocation13 + $0x400] sm:$0xff]
    %v966 = vld [vmem:[#allocation13 + $0x408] sm:$0xff]
    %v967 = vld [vmem:[#allocation13 + $0x410] sm:$0xff]
    %v968 = vld [vmem:[#allocation13 + $0x418] sm:$0xff]
    %v969 = vld [vmem:[#allocation13 + $0x420] sm:$0xff]
    %v970 = vld [vmem:[#allocation13 + $0x428] sm:$0xff]
    %v971 = vld [vmem:[#allocation13 + $0x430] sm:$0xff]
    %v972 = vld [vmem:[#allocation13 + $0x438] sm:$0xff]
    %v973 = vld [vmem:[#allocation13 + $0x440] sm:$0xff]
    %v974 = vld [vmem:[#allocation13 + $0x448] sm:$0xff]
    %v975 = vld [vmem:[#allocation13 + $0x450] sm:$0xff]
    %v976 = vld [vmem:[#allocation13 + $0x458] sm:$0xff]
    %v977 = vld [vmem:[#allocation13 + $0x460] sm:$0xff]
    %v978 = vld [vmem:[#allocation13 + $0x468] sm:$0xff]
    %v979 = vld [vmem:[#allocation13 + $0x470] sm:$0xff]
    %v980 = vld [vmem:[#allocation13 + $0x478] sm:$0xff]
    %v981 = vld [vmem:[#allocation13 + $0x480] sm:$0xff]
    %v982 = vld [vmem:[#allocation13 + $0x488] sm:$0xff]
    %v983 = vld [vmem:[#allocation13 + $0x490] sm:$0xff]
    %v984 = vld [vmem:[#allocation13 + $0x498] sm:$0xff]
    %v985 = vld [vmem:[#allocation13 + $0x4a0] sm:$0xff]
    %v986 = vld [vmem:[#allocation13 + $0x4a8] sm:$0xff]
    %v987 = vld [vmem:[#allocation13 + $0x4b0] sm:$0xff]
    %v988 = vld [vmem:[#allocation13 + $0x4b8] sm:$0xff]
    %v989 = vld [vmem:[#allocation13 + $0x4c0] sm:$0xff]
    %v990 = vld [vmem:[#allocation13 + $0x4c8] sm:$0xff]
    %v991 = vld [vmem:[#allocation13 + $0x4d0] sm:$0xff]
    %v992 = vld [vmem:[#allocation13 + $0x4d8] sm:$0xff]
    %v993 = vld [vmem:[#allocation13 + $0x4e0] sm:$0xff]
    %v994 = vld [vmem:[#allocation13 + $0x4e8] sm:$0xff]
    %v995 = vld [vmem:[#allocation13 + $0x4f0] sm:$0xff]
    %v996 = vld [vmem:[#allocation13 + $0x4f8] sm:$0xff]
    %v997 = vld [vmem:[#allocation13 + $0x500] sm:$0xff]
    %v998 = vld [vmem:[#allocation13 + $0x508] sm:$0xff]
    %v999 = vld [vmem:[#allocation13 + $0x510] sm:$0xff]
    %v1000 = vld [vmem:[#allocation13 + $0x518] sm:$0xff]
    %v1001 = vld [vmem:[#allocation13 + $0x520] sm:$0xff]
    %v1002 = vld [vmem:[#allocation13 + $0x528] sm:$0xff]
    %v1003 = vld [vmem:[#allocation13 + $0x530] sm:$0xff]
    %v1004 = vld [vmem:[#allocation13 + $0x538] sm:$0xff]
    %v1005 = vld [vmem:[#allocation13 + $0x540] sm:$0xff]
    %v1006 = vld [vmem:[#allocation13 + $0x548] sm:$0xff]
    %v1007 = vld [vmem:[#allocation13 + $0x550] sm:$0xff]
    %v1008 = vld [vmem:[#allocation13 + $0x558] sm:$0xff]
    %v1009 = vld [vmem:[#allocation13 + $0x560] sm:$0xff]
    %v1010 = vld [vmem:[#allocation13 + $0x568] sm:$0xff]
    %v1011 = vld [vmem:[#allocation13 + $0x570] sm:$0xff]
    %v1012 = vld [vmem:[#allocation13 + $0x578] sm:$0xff]
    %v1013 = vld [vmem:[#allocation13 + $0x580] sm:$0xff]
    %v1014 = vld [vmem:[#allocation13 + $0x588] sm:$0xff]
    %v1015 = vld [vmem:[#allocation13 + $0x590] sm:$0xff]
    %v1016 = vld [vmem:[#allocation13 + $0x598] sm:$0xff]
    %v1017 = vld [vmem:[#allocation13 + $0x5a0] sm:$0xff]
    %v1018 = vld [vmem:[#allocation13 + $0x5a8] sm:$0xff]
    %v1019 = vld [vmem:[#allocation13 + $0x5b0] sm:$0xff]
    %v1020 = vld [vmem:[#allocation13 + $0x5b8] sm:$0xff]
    %v1021 = vld [vmem:[#allocation13 + $0x5c0] sm:$0xff]
    %v1022 = vld [vmem:[#allocation13 + $0x5c8] sm:$0xff]
    %v1023 = vld [vmem:[#allocation13 + $0x5d0] sm:$0xff]
    %v1024 = vld [vmem:[#allocation13 + $0x5d8] sm:$0xff]
    %v1025 = vld [vmem:[#allocation13 + $0x5e0] sm:$0xff]
    %v1026 = vld [vmem:[#allocation13 + $0x5e8] sm:$0xff]
    %v1027 = vld [vmem:[#allocation13 + $0x5f0] sm:$0xff]
    %v1028 = vld [vmem:[#allocation13 + $0x5f8] sm:$0xff]
    %v1029 = vld [vmem:[#allocation13 + $0x600] sm:$0xff]
    %v1030 = vld [vmem:[#allocation13 + $0x608] sm:$0xff]
    %v1031 = vld [vmem:[#allocation13 + $0x610] sm:$0xff]
    %v1032 = vld [vmem:[#allocation13 + $0x618] sm:$0xff]
    %v1033 = vld [vmem:[#allocation13 + $0x620] sm:$0xff]
    %v1034 = vld [vmem:[#allocation13 + $0x628] sm:$0xff]
    %v1035 = vld [vmem:[#allocation13 + $0x630] sm:$0xff]
    %v1036 = vld [vmem:[#allocation13 + $0x638] sm:$0xff]
    %v1037 = vld [vmem:[#allocation13 + $0x640] sm:$0xff]
    %v1038 = vld [vmem:[#allocation13 + $0x648] sm:$0xff]
    %v1039 = vld [vmem:[#allocation13 + $0x650] sm:$0xff]
    %v1040 = vld [vmem:[#allocation13 + $0x658] sm:$0xff]
    %v1041 = vld [vmem:[#allocation13 + $0x660] sm:$0xff]
    %v1042 = vld [vmem:[#allocation13 + $0x668] sm:$0xff]
    %v1043 = vld [vmem:[#allocation13 + $0x670] sm:$0xff]
    %v1044 = vld [vmem:[#allocation13 + $0x678] sm:$0xff]
    %v1045 = vld [vmem:[#allocation13 + $0x680] sm:$0xff]
    %v1046 = vld [vmem:[#allocation13 + $0x688] sm:$0xff]
    %v1047 = vld [vmem:[#allocation13 + $0x690] sm:$0xff]
    %v1048 = vld [vmem:[#allocation13 + $0x698] sm:$0xff]
    %v1049 = vld [vmem:[#allocation13 + $0x6a0] sm:$0xff]
    %v1050 = vld [vmem:[#allocation13 + $0x6a8] sm:$0xff]
    %v1051 = vld [vmem:[#allocation13 + $0x6b0] sm:$0xff]
    %v1052 = vld [vmem:[#allocation13 + $0x6b8] sm:$0xff]
    %v1053 = vld [vmem:[#allocation13 + $0x6c0] sm:$0xff]
    %v1054 = vld [vmem:[#allocation13 + $0x6c8] sm:$0xff]
    %v1055 = vld [vmem:[#allocation13 + $0x6d0] sm:$0xff]
    %v1056 = vld [vmem:[#allocation13 + $0x6d8] sm:$0xff]
    %v1057 = vld [vmem:[#allocation13 + $0x6e0] sm:$0xff]
    %v1058 = vld [vmem:[#allocation13 + $0x6e8] sm:$0xff]
    %v1059 = vld [vmem:[#allocation13 + $0x6f0] sm:$0xff]
    %v1060 = vld [vmem:[#allocation13 + $0x6f8] sm:$0xff]
    %v1061 = vld [vmem:[#allocation13 + $0x700] sm:$0xff]
    %v1062 = vld [vmem:[#allocation13 + $0x708] sm:$0xff]
    %v1063 = vld [vmem:[#allocation13 + $0x710] sm:$0xff]
    %v1064 = vld [vmem:[#allocation13 + $0x718] sm:$0xff]
    %v1065 = vld [vmem:[#allocation13 + $0x720] sm:$0xff]
    %v1066 = vld [vmem:[#allocation13 + $0x728] sm:$0xff]
    %v1067 = vld [vmem:[#allocation13 + $0x730] sm:$0xff]
    %v1068 = vld [vmem:[#allocation13 + $0x738] sm:$0xff]
    %v1069 = vld [vmem:[#allocation13 + $0x740] sm:$0xff]
    %v1070 = vld [vmem:[#allocation13 + $0x748] sm:$0xff]
    %v1071 = vld [vmem:[#allocation13 + $0x750] sm:$0xff]
    %v1072 = vld [vmem:[#allocation13 + $0x758] sm:$0xff]
    %v1073 = vld [vmem:[#allocation13 + $0x760] sm:$0xff]
    %v1074 = vld [vmem:[#allocation13 + $0x768] sm:$0xff]
    %v1075 = vld [vmem:[#allocation13 + $0x770] sm:$0xff]
    %v1076 = vld [vmem:[#allocation13 + $0x778] sm:$0xff]
    %v1077 = vld [vmem:[#allocation13 + $0x780] sm:$0xff]
    %v1078 = vld [vmem:[#allocation13 + $0x788] sm:$0xff]
    %v1079 = vld [vmem:[#allocation13 + $0x790] sm:$0xff]
    %v1080 = vld [vmem:[#allocation13 + $0x798] sm:$0xff]
    %v1081 = vld [vmem:[#allocation13 + $0x7a0] sm:$0xff]
    %v1082 = vld [vmem:[#allocation13 + $0x7a8] sm:$0xff]
    %v1083 = vld [vmem:[#allocation13 + $0x7b0] sm:$0xff]
    %v1084 = vld [vmem:[#allocation13 + $0x7b8] sm:$0xff]
    %v1085 = vld [vmem:[#allocation13 + $0x7c0] sm:$0xff]
    %v1086 = vld [vmem:[#allocation13 + $0x7c8] sm:$0xff]
    %v1087 = vld [vmem:[#allocation13 + $0x7d0] sm:$0xff]
    %v1088 = vld [vmem:[#allocation13 + $0x7d8] sm:$0xff]
    %v1089 = vld [vmem:[#allocation13 + $0x7e0] sm:$0xff]
    %v1090 = vld [vmem:[#allocation13 + $0x7e8] sm:$0xff]
    %v1091 = vld [vmem:[#allocation13 + $0x7f0] sm:$0xff]
    %v1092 = vld [vmem:[#allocation13 + $0x7f8] sm:$0xff]
    %v1093 = vld [vmem:[#allocation15] sm:$0xff]
    %v1095 = vlaneseq
    %v1096 = vshrl.u32 %v1095, 7
    %v1097 = vsub.s32 0, %v1096
    %v1098 = vrot.slane %v1093, %v1097
    %v1099 = vlaneseq
    %v1100 = vshrl.u32 %v1099, 7
    %v1101 = vsub.s32 1, %v1100
    %v1102 = vrot.slane %v1093, %v1101
    %v1103 = vlaneseq
    %v1104 = vshrl.u32 %v1103, 7
    %v1105 = vsub.s32 2, %v1104
    %v1106 = vrot.slane %v1093, %v1105
    %v1107 = vlaneseq
    %v1108 = vshrl.u32 %v1107, 7
    %v1109 = vsub.s32 3, %v1108
    %v1110 = vrot.slane %v1093, %v1109
    %v1111 = vlaneseq
    %v1112 = vshrl.u32 %v1111, 7
    %v1113 = vsub.s32 4, %v1112
    %v1114 = vrot.slane %v1093, %v1113
    %v1115 = vlaneseq
    %v1116 = vshrl.u32 %v1115, 7
    %v1117 = vsub.s32 5, %v1116
    %v1118 = vrot.slane %v1093, %v1117
    %v1119 = vlaneseq
    %v1120 = vshrl.u32 %v1119, 7
    %v1121 = vsub.s32 6, %v1120
    %v1122 = vrot.slane %v1093, %v1121
    %v1123 = vlaneseq
    %v1124 = vshrl.u32 %v1123, 7
    %v1125 = vsub.s32 7, %v1124
    %v1126 = vrot.slane %v1093, %v1125
    %v1391 = vunpack.c.l.b16 %v837
    %v1392 = vunpack.c.h.b16 %v837
    %v1393 = vunpack.c.l.b16 %v838
    %v1394 = vunpack.c.h.b16 %v838
    %v1395 = vunpack.c.l.b16 %v839
    %v1396 = vunpack.c.h.b16 %v839
    %v1397 = vunpack.c.l.b16 %v840
    %v1398 = vunpack.c.h.b16 %v840
    %v1399 = vunpack.c.l.b16 %v841
    %v1400 = vunpack.c.h.b16 %v841
    %v1401 = vunpack.c.l.b16 %v842
    %v1402 = vunpack.c.h.b16 %v842
    %v1403 = vunpack.c.l.b16 %v843
    %v1404 = vunpack.c.h.b16 %v843
    %v1405 = vunpack.c.l.b16 %v844
    %v1406 = vunpack.c.h.b16 %v844
    %v1407 = vunpack.c.l.b16 %v845
    %v1408 = vunpack.c.h.b16 %v845
    %v1409 = vunpack.c.l.b16 %v846
    %v1410 = vunpack.c.h.b16 %v846
    %v1411 = vunpack.c.l.b16 %v847
    %v1412 = vunpack.c.h.b16 %v847
    %v1413 = vunpack.c.l.b16 %v848
    %v1414 = vunpack.c.h.b16 %v848
    %v1415 = vunpack.c.l.b16 %v849
    %v1416 = vunpack.c.h.b16 %v849
    %v1417 = vunpack.c.l.b16 %v850
    %v1418 = vunpack.c.h.b16 %v850
    %v1419 = vunpack.c.l.b16 %v851
    %v1420 = vunpack.c.h.b16 %v851
    %v1421 = vunpack.c.l.b16 %v852
    %v1422 = vunpack.c.h.b16 %v852
    %v1423 = vunpack.c.l.b16 %v853
    %v1424 = vunpack.c.h.b16 %v853
    %v1425 = vunpack.c.l.b16 %v854
    %v1426 = vunpack.c.h.b16 %v854
    %v1427 = vunpack.c.l.b16 %v855
    %v1428 = vunpack.c.h.b16 %v855
    %v1429 = vunpack.c.l.b16 %v856
    %v1430 = vunpack.c.h.b16 %v856
    %v1431 = vunpack.c.l.b16 %v857
    %v1432 = vunpack.c.h.b16 %v857
    %v1433 = vunpack.c.l.b16 %v858
    %v1434 = vunpack.c.h.b16 %v858
    %v1435 = vunpack.c.l.b16 %v859
    %v1436 = vunpack.c.h.b16 %v859
    %v1437 = vunpack.c.l.b16 %v860
    %v1438 = vunpack.c.h.b16 %v860
    %v1439 = vunpack.c.l.b16 %v861
    %v1440 = vunpack.c.h.b16 %v861
    %v1441 = vunpack.c.l.b16 %v862
    %v1442 = vunpack.c.h.b16 %v862
    %v1443 = vunpack.c.l.b16 %v863
    %v1444 = vunpack.c.h.b16 %v863
    %v1445 = vunpack.c.l.b16 %v864
    %v1446 = vunpack.c.h.b16 %v864
    %v1447 = vunpack.c.l.b16 %v865
    %v1448 = vunpack.c.h.b16 %v865
    %v1449 = vunpack.c.l.b16 %v866
    %v1450 = vunpack.c.h.b16 %v866
    %v1451 = vunpack.c.l.b16 %v867
    %v1452 = vunpack.c.h.b16 %v867
    %v1453 = vunpack.c.l.b16 %v868
    %v1454 = vunpack.c.h.b16 %v868
    %v1455 = vunpack.c.l.b16 %v869
    %v1456 = vunpack.c.h.b16 %v869
    %v1457 = vunpack.c.l.b16 %v870
    %v1458 = vunpack.c.h.b16 %v870
    %v1459 = vunpack.c.l.b16 %v871
    %v1460 = vunpack.c.h.b16 %v871
    %v1461 = vunpack.c.l.b16 %v872
    %v1462 = vunpack.c.h.b16 %v872
    %v1463 = vunpack.c.l.b16 %v873
    %v1464 = vunpack.c.h.b16 %v873
    %v1465 = vunpack.c.l.b16 %v874
    %v1466 = vunpack.c.h.b16 %v874
    %v1467 = vunpack.c.l.b16 %v875
    %v1468 = vunpack.c.h.b16 %v875
    %v1469 = vunpack.c.l.b16 %v876
    %v1470 = vunpack.c.h.b16 %v876
    %v1471 = vunpack.c.l.b16 %v877
    %v1472 = vunpack.c.h.b16 %v877
    %v1473 = vunpack.c.l.b16 %v878
    %v1474 = vunpack.c.h.b16 %v878
    %v1475 = vunpack.c.l.b16 %v879
    %v1476 = vunpack.c.h.b16 %v879
    %v1477 = vunpack.c.l.b16 %v880
    %v1478 = vunpack.c.h.b16 %v880
    %v1479 = vunpack.c.l.b16 %v881
    %v1480 = vunpack.c.h.b16 %v881
    %v1481 = vunpack.c.l.b16 %v882
    %v1482 = vunpack.c.h.b16 %v882
    %v1483 = vunpack.c.l.b16 %v883
    %v1484 = vunpack.c.h.b16 %v883
    %v1485 = vunpack.c.l.b16 %v884
    %v1486 = vunpack.c.h.b16 %v884
    %v1487 = vunpack.c.l.b16 %v885
    %v1488 = vunpack.c.h.b16 %v885
    %v1489 = vunpack.c.l.b16 %v886
    %v1490 = vunpack.c.h.b16 %v886
    %v1491 = vunpack.c.l.b16 %v887
    %v1492 = vunpack.c.h.b16 %v887
    %v1493 = vunpack.c.l.b16 %v888
    %v1494 = vunpack.c.h.b16 %v888
    %v1495 = vunpack.c.l.b16 %v889
    %v1496 = vunpack.c.h.b16 %v889
    %v1497 = vunpack.c.l.b16 %v890
    %v1498 = vunpack.c.h.b16 %v890
    %v1499 = vunpack.c.l.b16 %v891
    %v1500 = vunpack.c.h.b16 %v891
    %v1501 = vunpack.c.l.b16 %v892
    %v1502 = vunpack.c.h.b16 %v892
    %v1503 = vunpack.c.l.b16 %v893
    %v1504 = vunpack.c.h.b16 %v893
    %v1505 = vunpack.c.l.b16 %v894
    %v1506 = vunpack.c.h.b16 %v894
    %v1507 = vunpack.c.l.b16 %v895
    %v1508 = vunpack.c.h.b16 %v895
    %v1509 = vunpack.c.l.b16 %v896
    %v1510 = vunpack.c.h.b16 %v896
    %v1511 = vunpack.c.l.b16 %v897
    %v1512 = vunpack.c.h.b16 %v897
    %v1513 = vunpack.c.l.b16 %v898
    %v1514 = vunpack.c.h.b16 %v898
    %v1515 = vunpack.c.l.b16 %v899
    %v1516 = vunpack.c.h.b16 %v899
    %v1517 = vunpack.c.l.b16 %v900
    %v1518 = vunpack.c.h.b16 %v900
    %v1519 = vunpack.c.l.b16 %v901
    %v1520 = vunpack.c.h.b16 %v901
    %v1521 = vunpack.c.l.b16 %v902
    %v1522 = vunpack.c.h.b16 %v902
    %v1523 = vunpack.c.l.b16 %v903
    %v1524 = vunpack.c.h.b16 %v903
    %v1525 = vunpack.c.l.b16 %v904
    %v1526 = vunpack.c.h.b16 %v904
    %v1527 = vunpack.c.l.b16 %v905
    %v1528 = vunpack.c.h.b16 %v905
    %v1529 = vunpack.c.l.b16 %v906
    %v1530 = vunpack.c.h.b16 %v906
    %v1531 = vunpack.c.l.b16 %v907
    %v1532 = vunpack.c.h.b16 %v907
    %v1533 = vunpack.c.l.b16 %v908
    %v1534 = vunpack.c.h.b16 %v908
    %v1535 = vunpack.c.l.b16 %v909
    %v1536 = vunpack.c.h.b16 %v909
    %v1537 = vunpack.c.l.b16 %v910
    %v1538 = vunpack.c.h.b16 %v910
    %v1539 = vunpack.c.l.b16 %v911
    %v1540 = vunpack.c.h.b16 %v911
    %v1541 = vunpack.c.l.b16 %v912
    %v1542 = vunpack.c.h.b16 %v912
    %v1543 = vunpack.c.l.b16 %v913
    %v1544 = vunpack.c.h.b16 %v913
    %v1545 = vunpack.c.l.b16 %v914
    %v1546 = vunpack.c.h.b16 %v914
    %v1547 = vunpack.c.l.b16 %v915
    %v1548 = vunpack.c.h.b16 %v915
    %v1549 = vunpack.c.l.b16 %v916
    %v1550 = vunpack.c.h.b16 %v916
    %v1551 = vunpack.c.l.b16 %v917
    %v1552 = vunpack.c.h.b16 %v917
    %v1553 = vunpack.c.l.b16 %v918
    %v1554 = vunpack.c.h.b16 %v918
    %v1555 = vunpack.c.l.b16 %v919
    %v1556 = vunpack.c.h.b16 %v919
    %v1557 = vunpack.c.l.b16 %v920
    %v1558 = vunpack.c.h.b16 %v920
    %v1559 = vunpack.c.l.b16 %v921
    %v1560 = vunpack.c.h.b16 %v921
    %v1561 = vunpack.c.l.b16 %v922
    %v1562 = vunpack.c.h.b16 %v922
    %v1563 = vunpack.c.l.b16 %v923
    %v1564 = vunpack.c.h.b16 %v923
    %v1565 = vunpack.c.l.b16 %v924
    %v1566 = vunpack.c.h.b16 %v924
    %v1567 = vunpack.c.l.b16 %v925
    %v1568 = vunpack.c.h.b16 %v925
    %v1569 = vunpack.c.l.b16 %v926
    %v1570 = vunpack.c.h.b16 %v926
    %v1571 = vunpack.c.l.b16 %v927
    %v1572 = vunpack.c.h.b16 %v927
    %v1573 = vunpack.c.l.b16 %v928
    %v1574 = vunpack.c.h.b16 %v928
    %v1575 = vunpack.c.l.b16 %v929
    %v1576 = vunpack.c.h.b16 %v929
    %v1577 = vunpack.c.l.b16 %v930
    %v1578 = vunpack.c.h.b16 %v930
    %v1579 = vunpack.c.l.b16 %v931
    %v1580 = vunpack.c.h.b16 %v931
    %v1581 = vunpack.c.l.b16 %v932
    %v1582 = vunpack.c.h.b16 %v932
    %v1583 = vunpack.c.l.b16 %v933
    %v1584 = vunpack.c.h.b16 %v933
    %v1585 = vunpack.c.l.b16 %v934
    %v1586 = vunpack.c.h.b16 %v934
    %v1587 = vunpack.c.l.b16 %v935
    %v1588 = vunpack.c.h.b16 %v935
    %v1589 = vunpack.c.l.b16 %v936
    %v1590 = vunpack.c.h.b16 %v936
    %v1591 = vunpack.c.l.b16 %v937
    %v1592 = vunpack.c.h.b16 %v937
    %v1593 = vunpack.c.l.b16 %v938
    %v1594 = vunpack.c.h.b16 %v938
    %v1595 = vunpack.c.l.b16 %v939
    %v1596 = vunpack.c.h.b16 %v939
    %v1597 = vunpack.c.l.b16 %v940
    %v1598 = vunpack.c.h.b16 %v940
    %v1599 = vunpack.c.l.b16 %v941
    %v1600 = vunpack.c.h.b16 %v941
    %v1601 = vunpack.c.l.b16 %v942
    %v1602 = vunpack.c.h.b16 %v942
    %v1603 = vunpack.c.l.b16 %v943
    %v1604 = vunpack.c.h.b16 %v943
    %v1605 = vunpack.c.l.b16 %v944
    %v1606 = vunpack.c.h.b16 %v944
    %v1607 = vunpack.c.l.b16 %v945
    %v1608 = vunpack.c.h.b16 %v945
    %v1609 = vunpack.c.l.b16 %v946
    %v1610 = vunpack.c.h.b16 %v946
    %v1611 = vunpack.c.l.b16 %v947
    %v1612 = vunpack.c.h.b16 %v947
    %v1613 = vunpack.c.l.b16 %v948
    %v1614 = vunpack.c.h.b16 %v948
    %v1615 = vunpack.c.l.b16 %v949
    %v1616 = vunpack.c.h.b16 %v949
    %v1617 = vunpack.c.l.b16 %v950
    %v1618 = vunpack.c.h.b16 %v950
    %v1619 = vunpack.c.l.b16 %v951
    %v1620 = vunpack.c.h.b16 %v951
    %v1621 = vunpack.c.l.b16 %v952
    %v1622 = vunpack.c.h.b16 %v952
    %v1623 = vunpack.c.l.b16 %v953
    %v1624 = vunpack.c.h.b16 %v953
    %v1625 = vunpack.c.l.b16 %v954
    %v1626 = vunpack.c.h.b16 %v954
    %v1627 = vunpack.c.l.b16 %v955
    %v1628 = vunpack.c.h.b16 %v955
    %v1629 = vunpack.c.l.b16 %v956
    %v1630 = vunpack.c.h.b16 %v956
    %v1631 = vunpack.c.l.b16 %v957
    %v1632 = vunpack.c.h.b16 %v957
    %v1633 = vunpack.c.l.b16 %v958
    %v1634 = vunpack.c.h.b16 %v958
    %v1635 = vunpack.c.l.b16 %v959
    %v1636 = vunpack.c.h.b16 %v959
    %v1637 = vunpack.c.l.b16 %v960
    %v1638 = vunpack.c.h.b16 %v960
    %v1639 = vunpack.c.l.b16 %v961
    %v1640 = vunpack.c.h.b16 %v961
    %v1641 = vunpack.c.l.b16 %v962
    %v1642 = vunpack.c.h.b16 %v962
    %v1643 = vunpack.c.l.b16 %v963
    %v1644 = vunpack.c.h.b16 %v963
    %v1645 = vunpack.c.l.b16 %v964
    %v1646 = vunpack.c.h.b16 %v964
    %v1647 = vunpack.c.l.b16 %v965
    %v1648 = vunpack.c.h.b16 %v965
    %v1649 = vunpack.c.l.b16 %v966
    %v1650 = vunpack.c.h.b16 %v966
    %v1651 = vunpack.c.l.b16 %v967
    %v1652 = vunpack.c.h.b16 %v967
    %v1653 = vunpack.c.l.b16 %v968
    %v1654 = vunpack.c.h.b16 %v968
    %v1655 = vunpack.c.l.b16 %v969
    %v1656 = vunpack.c.h.b16 %v969
    %v1657 = vunpack.c.l.b16 %v970
    %v1658 = vunpack.c.h.b16 %v970
    %v1659 = vunpack.c.l.b16 %v971
    %v1660 = vunpack.c.h.b16 %v971
    %v1661 = vunpack.c.l.b16 %v972
    %v1662 = vunpack.c.h.b16 %v972
    %v1663 = vunpack.c.l.b16 %v973
    %v1664 = vunpack.c.h.b16 %v973
    %v1665 = vunpack.c.l.b16 %v974
    %v1666 = vunpack.c.h.b16 %v974
    %v1667 = vunpack.c.l.b16 %v975
    %v1668 = vunpack.c.h.b16 %v975
    %v1669 = vunpack.c.l.b16 %v976
    %v1670 = vunpack.c.h.b16 %v976
    %v1671 = vunpack.c.l.b16 %v977
    %v1672 = vunpack.c.h.b16 %v977
    %v1673 = vunpack.c.l.b16 %v978
    %v1674 = vunpack.c.h.b16 %v978
    %v1675 = vunpack.c.l.b16 %v979
    %v1676 = vunpack.c.h.b16 %v979
    %v1677 = vunpack.c.l.b16 %v980
    %v1678 = vunpack.c.h.b16 %v980
    %v1679 = vunpack.c.l.b16 %v981
    %v1680 = vunpack.c.h.b16 %v981
    %v1681 = vunpack.c.l.b16 %v982
    %v1682 = vunpack.c.h.b16 %v982
    %v1683 = vunpack.c.l.b16 %v983
    %v1684 = vunpack.c.h.b16 %v983
    %v1685 = vunpack.c.l.b16 %v984
    %v1686 = vunpack.c.h.b16 %v984
    %v1687 = vunpack.c.l.b16 %v985
    %v1688 = vunpack.c.h.b16 %v985
    %v1689 = vunpack.c.l.b16 %v986
    %v1690 = vunpack.c.h.b16 %v986
    %v1691 = vunpack.c.l.b16 %v987
    %v1692 = vunpack.c.h.b16 %v987
    %v1693 = vunpack.c.l.b16 %v988
    %v1694 = vunpack.c.h.b16 %v988
    %v1695 = vunpack.c.l.b16 %v989
    %v1696 = vunpack.c.h.b16 %v989
    %v1697 = vunpack.c.l.b16 %v990
    %v1698 = vunpack.c.h.b16 %v990
    %v1699 = vunpack.c.l.b16 %v991
    %v1700 = vunpack.c.h.b16 %v991
    %v1701 = vunpack.c.l.b16 %v992
    %v1702 = vunpack.c.h.b16 %v992
    %v1703 = vunpack.c.l.b16 %v993
    %v1704 = vunpack.c.h.b16 %v993
    %v1705 = vunpack.c.l.b16 %v994
    %v1706 = vunpack.c.h.b16 %v994
    %v1707 = vunpack.c.l.b16 %v995
    %v1708 = vunpack.c.h.b16 %v995
    %v1709 = vunpack.c.l.b16 %v996
    %v1710 = vunpack.c.h.b16 %v996
    %v1711 = vunpack.c.l.b16 %v997
    %v1712 = vunpack.c.h.b16 %v997
    %v1713 = vunpack.c.l.b16 %v998
    %v1714 = vunpack.c.h.b16 %v998
    %v1715 = vunpack.c.l.b16 %v999
    %v1716 = vunpack.c.h.b16 %v999
    %v1717 = vunpack.c.l.b16 %v1000
    %v1718 = vunpack.c.h.b16 %v1000
    %v1719 = vunpack.c.l.b16 %v1001
    %v1720 = vunpack.c.h.b16 %v1001
    %v1721 = vunpack.c.l.b16 %v1002
    %v1722 = vunpack.c.h.b16 %v1002
    %v1723 = vunpack.c.l.b16 %v1003
    %v1724 = vunpack.c.h.b16 %v1003
    %v1725 = vunpack.c.l.b16 %v1004
    %v1726 = vunpack.c.h.b16 %v1004
    %v1727 = vunpack.c.l.b16 %v1005
    %v1728 = vunpack.c.h.b16 %v1005
    %v1729 = vunpack.c.l.b16 %v1006
    %v1730 = vunpack.c.h.b16 %v1006
    %v1731 = vunpack.c.l.b16 %v1007
    %v1732 = vunpack.c.h.b16 %v1007
    %v1733 = vunpack.c.l.b16 %v1008
    %v1734 = vunpack.c.h.b16 %v1008
    %v1735 = vunpack.c.l.b16 %v1009
    %v1736 = vunpack.c.h.b16 %v1009
    %v1737 = vunpack.c.l.b16 %v1010
    %v1738 = vunpack.c.h.b16 %v1010
    %v1739 = vunpack.c.l.b16 %v1011
    %v1740 = vunpack.c.h.b16 %v1011
    %v1741 = vunpack.c.l.b16 %v1012
    %v1742 = vunpack.c.h.b16 %v1012
    %v1743 = vunpack.c.l.b16 %v1013
    %v1744 = vunpack.c.h.b16 %v1013
    %v1745 = vunpack.c.l.b16 %v1014
    %v1746 = vunpack.c.h.b16 %v1014
    %v1747 = vunpack.c.l.b16 %v1015
    %v1748 = vunpack.c.h.b16 %v1015
    %v1749 = vunpack.c.l.b16 %v1016
    %v1750 = vunpack.c.h.b16 %v1016
    %v1751 = vunpack.c.l.b16 %v1017
    %v1752 = vunpack.c.h.b16 %v1017
    %v1753 = vunpack.c.l.b16 %v1018
    %v1754 = vunpack.c.h.b16 %v1018
    %v1755 = vunpack.c.l.b16 %v1019
    %v1756 = vunpack.c.h.b16 %v1019
    %v1757 = vunpack.c.l.b16 %v1020
    %v1758 = vunpack.c.h.b16 %v1020
    %v1759 = vunpack.c.l.b16 %v1021
    %v1760 = vunpack.c.h.b16 %v1021
    %v1761 = vunpack.c.l.b16 %v1022
    %v1762 = vunpack.c.h.b16 %v1022
    %v1763 = vunpack.c.l.b16 %v1023
    %v1764 = vunpack.c.h.b16 %v1023
    %v1765 = vunpack.c.l.b16 %v1024
    %v1766 = vunpack.c.h.b16 %v1024
    %v1767 = vunpack.c.l.b16 %v1025
    %v1768 = vunpack.c.h.b16 %v1025
    %v1769 = vunpack.c.l.b16 %v1026
    %v1770 = vunpack.c.h.b16 %v1026
    %v1771 = vunpack.c.l.b16 %v1027
    %v1772 = vunpack.c.h.b16 %v1027
    %v1773 = vunpack.c.l.b16 %v1028
    %v1774 = vunpack.c.h.b16 %v1028
    %v1775 = vunpack.c.l.b16 %v1029
    %v1776 = vunpack.c.h.b16 %v1029
    %v1777 = vunpack.c.l.b16 %v1030
    %v1778 = vunpack.c.h.b16 %v1030
    %v1779 = vunpack.c.l.b16 %v1031
    %v1780 = vunpack.c.h.b16 %v1031
    %v1781 = vunpack.c.l.b16 %v1032
    %v1782 = vunpack.c.h.b16 %v1032
    %v1783 = vunpack.c.l.b16 %v1033
    %v1784 = vunpack.c.h.b16 %v1033
    %v1785 = vunpack.c.l.b16 %v1034
    %v1786 = vunpack.c.h.b16 %v1034
    %v1787 = vunpack.c.l.b16 %v1035
    %v1788 = vunpack.c.h.b16 %v1035
    %v1789 = vunpack.c.l.b16 %v1036
    %v1790 = vunpack.c.h.b16 %v1036
    %v1791 = vunpack.c.l.b16 %v1037
    %v1792 = vunpack.c.h.b16 %v1037
    %v1793 = vunpack.c.l.b16 %v1038
    %v1794 = vunpack.c.h.b16 %v1038
    %v1795 = vunpack.c.l.b16 %v1039
    %v1796 = vunpack.c.h.b16 %v1039
    %v1797 = vunpack.c.l.b16 %v1040
    %v1798 = vunpack.c.h.b16 %v1040
    %v1799 = vunpack.c.l.b16 %v1041
    %v1800 = vunpack.c.h.b16 %v1041
    %v1801 = vunpack.c.l.b16 %v1042
    %v1802 = vunpack.c.h.b16 %v1042
    %v1803 = vunpack.c.l.b16 %v1043
    %v1804 = vunpack.c.h.b16 %v1043
    %v1805 = vunpack.c.l.b16 %v1044
    %v1806 = vunpack.c.h.b16 %v1044
    %v1807 = vunpack.c.l.b16 %v1045
    %v1808 = vunpack.c.h.b16 %v1045
    %v1809 = vunpack.c.l.b16 %v1046
    %v1810 = vunpack.c.h.b16 %v1046
    %v1811 = vunpack.c.l.b16 %v1047
    %v1812 = vunpack.c.h.b16 %v1047
    %v1813 = vunpack.c.l.b16 %v1048
    %v1814 = vunpack.c.h.b16 %v1048
    %v1815 = vunpack.c.l.b16 %v1049
    %v1816 = vunpack.c.h.b16 %v1049
    %v1817 = vunpack.c.l.b16 %v1050
    %v1818 = vunpack.c.h.b16 %v1050
    %v1819 = vunpack.c.l.b16 %v1051
    %v1820 = vunpack.c.h.b16 %v1051
    %v1821 = vunpack.c.l.b16 %v1052
    %v1822 = vunpack.c.h.b16 %v1052
    %v1823 = vunpack.c.l.b16 %v1053
    %v1824 = vunpack.c.h.b16 %v1053
    %v1825 = vunpack.c.l.b16 %v1054
    %v1826 = vunpack.c.h.b16 %v1054
    %v1827 = vunpack.c.l.b16 %v1055
    %v1828 = vunpack.c.h.b16 %v1055
    %v1829 = vunpack.c.l.b16 %v1056
    %v1830 = vunpack.c.h.b16 %v1056
    %v1831 = vunpack.c.l.b16 %v1057
    %v1832 = vunpack.c.h.b16 %v1057
    %v1833 = vunpack.c.l.b16 %v1058
    %v1834 = vunpack.c.h.b16 %v1058
    %v1835 = vunpack.c.l.b16 %v1059
    %v1836 = vunpack.c.h.b16 %v1059
    %v1837 = vunpack.c.l.b16 %v1060
    %v1838 = vunpack.c.h.b16 %v1060
    %v1839 = vunpack.c.l.b16 %v1061
    %v1840 = vunpack.c.h.b16 %v1061
    %v1841 = vunpack.c.l.b16 %v1062
    %v1842 = vunpack.c.h.b16 %v1062
    %v1843 = vunpack.c.l.b16 %v1063
    %v1844 = vunpack.c.h.b16 %v1063
    %v1845 = vunpack.c.l.b16 %v1064
    %v1846 = vunpack.c.h.b16 %v1064
    %v1847 = vunpack.c.l.b16 %v1065
    %v1848 = vunpack.c.h.b16 %v1065
    %v1849 = vunpack.c.l.b16 %v1066
    %v1850 = vunpack.c.h.b16 %v1066
    %v1851 = vunpack.c.l.b16 %v1067
    %v1852 = vunpack.c.h.b16 %v1067
    %v1853 = vunpack.c.l.b16 %v1068
    %v1854 = vunpack.c.h.b16 %v1068
    %v1855 = vunpack.c.l.b16 %v1069
    %v1856 = vunpack.c.h.b16 %v1069
    %v1857 = vunpack.c.l.b16 %v1070
    %v1858 = vunpack.c.h.b16 %v1070
    %v1859 = vunpack.c.l.b16 %v1071
    %v1860 = vunpack.c.h.b16 %v1071
    %v1861 = vunpack.c.l.b16 %v1072
    %v1862 = vunpack.c.h.b16 %v1072
    %v1863 = vunpack.c.l.b16 %v1073
    %v1864 = vunpack.c.h.b16 %v1073
    %v1865 = vunpack.c.l.b16 %v1074
    %v1866 = vunpack.c.h.b16 %v1074
    %v1867 = vunpack.c.l.b16 %v1075
    %v1868 = vunpack.c.h.b16 %v1075
    %v1869 = vunpack.c.l.b16 %v1076
    %v1870 = vunpack.c.h.b16 %v1076
    %v1871 = vunpack.c.l.b16 %v1077
    %v1872 = vunpack.c.h.b16 %v1077
    %v1873 = vunpack.c.l.b16 %v1078
    %v1874 = vunpack.c.h.b16 %v1078
    %v1875 = vunpack.c.l.b16 %v1079
    %v1876 = vunpack.c.h.b16 %v1079
    %v1877 = vunpack.c.l.b16 %v1080
    %v1878 = vunpack.c.h.b16 %v1080
    %v1879 = vunpack.c.l.b16 %v1081
    %v1880 = vunpack.c.h.b16 %v1081
    %v1881 = vunpack.c.l.b16 %v1082
    %v1882 = vunpack.c.h.b16 %v1082
    %v1883 = vunpack.c.l.b16 %v1083
    %v1884 = vunpack.c.h.b16 %v1083
    %v1885 = vunpack.c.l.b16 %v1084
    %v1886 = vunpack.c.h.b16 %v1084
    %v1887 = vunpack.c.l.b16 %v1085
    %v1888 = vunpack.c.h.b16 %v1085
    %v1889 = vunpack.c.l.b16 %v1086
    %v1890 = vunpack.c.h.b16 %v1086
    %v1891 = vunpack.c.l.b16 %v1087
    %v1892 = vunpack.c.h.b16 %v1087
    %v1893 = vunpack.c.l.b16 %v1088
    %v1894 = vunpack.c.h.b16 %v1088
    %v1895 = vunpack.c.l.b16 %v1089
    %v1896 = vunpack.c.h.b16 %v1089
    %v1897 = vunpack.c.l.b16 %v1090
    %v1898 = vunpack.c.h.b16 %v1090
    %v1899 = vunpack.c.l.b16 %v1091
    %v1900 = vunpack.c.h.b16 %v1091
    %v1901 = vunpack.c.l.b16 %v1092
    %v1902 = vunpack.c.h.b16 %v1092
    %v1903 = vpack.c.b16 %v1399, %v1391
    %v1904 = vpack.c.b16 %v1400, %v1392
    %v1905 = vpack.c.b16 %v1401, %v1393
    %v1906 = vpack.c.b16 %v1402, %v1394
    %v1907 = vpack.c.b16 %v1403, %v1395
    %v1908 = vpack.c.b16 %v1404, %v1396
    %v1909 = vpack.c.b16 %v1405, %v1397
    %v1910 = vpack.c.b16 %v1406, %v1398
    %v1911 = vpack.c.b16 %v1415, %v1407
    %v1912 = vpack.c.b16 %v1416, %v1408
    %v1913 = vpack.c.b16 %v1417, %v1409
    %v1914 = vpack.c.b16 %v1418, %v1410
    %v1915 = vpack.c.b16 %v1419, %v1411
    %v1916 = vpack.c.b16 %v1420, %v1412
    %v1917 = vpack.c.b16 %v1421, %v1413
    %v1918 = vpack.c.b16 %v1422, %v1414
    %v1919 = vpack.c.b16 %v1431, %v1423
    %v1920 = vpack.c.b16 %v1432, %v1424
    %v1921 = vpack.c.b16 %v1433, %v1425
    %v1922 = vpack.c.b16 %v1434, %v1426
    %v1923 = vpack.c.b16 %v1435, %v1427
    %v1924 = vpack.c.b16 %v1436, %v1428
    %v1925 = vpack.c.b16 %v1437, %v1429
    %v1926 = vpack.c.b16 %v1438, %v1430
    %v1927 = vpack.c.b16 %v1447, %v1439
    %v1928 = vpack.c.b16 %v1448, %v1440
    %v1929 = vpack.c.b16 %v1449, %v1441
    %v1930 = vpack.c.b16 %v1450, %v1442
    %v1931 = vpack.c.b16 %v1451, %v1443
    %v1932 = vpack.c.b16 %v1452, %v1444
    %v1933 = vpack.c.b16 %v1453, %v1445
    %v1934 = vpack.c.b16 %v1454, %v1446
    %v1935 = vpack.c.b16 %v1463, %v1455
    %v1936 = vpack.c.b16 %v1464, %v1456
    %v1937 = vpack.c.b16 %v1465, %v1457
    %v1938 = vpack.c.b16 %v1466, %v1458
    %v1939 = vpack.c.b16 %v1467, %v1459
    %v1940 = vpack.c.b16 %v1468, %v1460
    %v1941 = vpack.c.b16 %v1469, %v1461
    %v1942 = vpack.c.b16 %v1470, %v1462
    %v1943 = vpack.c.b16 %v1479, %v1471
    %v1944 = vpack.c.b16 %v1480, %v1472
    %v1945 = vpack.c.b16 %v1481, %v1473
    %v1946 = vpack.c.b16 %v1482, %v1474
    %v1947 = vpack.c.b16 %v1483, %v1475
    %v1948 = vpack.c.b16 %v1484, %v1476
    %v1949 = vpack.c.b16 %v1485, %v1477
    %v1950 = vpack.c.b16 %v1486, %v1478
    %v1951 = vpack.c.b16 %v1495, %v1487
    %v1952 = vpack.c.b16 %v1496, %v1488
    %v1953 = vpack.c.b16 %v1497, %v1489
    %v1954 = vpack.c.b16 %v1498, %v1490
    %v1955 = vpack.c.b16 %v1499, %v1491
    %v1956 = vpack.c.b16 %v1500, %v1492
    %v1957 = vpack.c.b16 %v1501, %v1493
    %v1958 = vpack.c.b16 %v1502, %v1494
    %v1959 = vpack.c.b16 %v1511, %v1503
    %v1960 = vpack.c.b16 %v1512, %v1504
    %v1961 = vpack.c.b16 %v1513, %v1505
    %v1962 = vpack.c.b16 %v1514, %v1506
    %v1963 = vpack.c.b16 %v1515, %v1507
    %v1964 = vpack.c.b16 %v1516, %v1508
    %v1965 = vpack.c.b16 %v1517, %v1509
    %v1966 = vpack.c.b16 %v1518, %v1510
    %v1967 = vpack.c.b16 %v1527, %v1519
    %v1968 = vpack.c.b16 %v1528, %v1520
    %v1969 = vpack.c.b16 %v1529, %v1521
    %v1970 = vpack.c.b16 %v1530, %v1522
    %v1971 = vpack.c.b16 %v1531, %v1523
    %v1972 = vpack.c.b16 %v1532, %v1524
    %v1973 = vpack.c.b16 %v1533, %v1525
    %v1974 = vpack.c.b16 %v1534, %v1526
    %v1975 = vpack.c.b16 %v1543, %v1535
    %v1976 = vpack.c.b16 %v1544, %v1536
    %v1977 = vpack.c.b16 %v1545, %v1537
    %v1978 = vpack.c.b16 %v1546, %v1538
    %v1979 = vpack.c.b16 %v1547, %v1539
    %v1980 = vpack.c.b16 %v1548, %v1540
    %v1981 = vpack.c.b16 %v1549, %v1541
    %v1982 = vpack.c.b16 %v1550, %v1542
    %v1983 = vpack.c.b16 %v1559, %v1551
    %v1984 = vpack.c.b16 %v1560, %v1552
    %v1985 = vpack.c.b16 %v1561, %v1553
    %v1986 = vpack.c.b16 %v1562, %v1554
    %v1987 = vpack.c.b16 %v1563, %v1555
    %v1988 = vpack.c.b16 %v1564, %v1556
    %v1989 = vpack.c.b16 %v1565, %v1557
    %v1990 = vpack.c.b16 %v1566, %v1558
    %v1991 = vpack.c.b16 %v1575, %v1567
    %v1992 = vpack.c.b16 %v1576, %v1568
    %v1993 = vpack.c.b16 %v1577, %v1569
    %v1994 = vpack.c.b16 %v1578, %v1570
    %v1995 = vpack.c.b16 %v1579, %v1571
    %v1996 = vpack.c.b16 %v1580, %v1572
    %v1997 = vpack.c.b16 %v1581, %v1573
    %v1998 = vpack.c.b16 %v1582, %v1574
    %v1999 = vpack.c.b16 %v1591, %v1583
    %v2000 = vpack.c.b16 %v1592, %v1584
    %v2001 = vpack.c.b16 %v1593, %v1585
    %v2002 = vpack.c.b16 %v1594, %v1586
    %v2003 = vpack.c.b16 %v1595, %v1587
    %v2004 = vpack.c.b16 %v1596, %v1588
    %v2005 = vpack.c.b16 %v1597, %v1589
    %v2006 = vpack.c.b16 %v1598, %v1590
    %v2007 = vpack.c.b16 %v1607, %v1599
    %v2008 = vpack.c.b16 %v1608, %v1600
    %v2009 = vpack.c.b16 %v1609, %v1601
    %v2010 = vpack.c.b16 %v1610, %v1602
    %v2011 = vpack.c.b16 %v1611, %v1603
    %v2012 = vpack.c.b16 %v1612, %v1604
    %v2013 = vpack.c.b16 %v1613, %v1605
    %v2014 = vpack.c.b16 %v1614, %v1606
    %v2015 = vpack.c.b16 %v1623, %v1615
    %v2016 = vpack.c.b16 %v1624, %v1616
    %v2017 = vpack.c.b16 %v1625, %v1617
    %v2018 = vpack.c.b16 %v1626, %v1618
    %v2019 = vpack.c.b16 %v1627, %v1619
    %v2020 = vpack.c.b16 %v1628, %v1620
    %v2021 = vpack.c.b16 %v1629, %v1621
    %v2022 = vpack.c.b16 %v1630, %v1622
    %v2023 = vpack.c.b16 %v1639, %v1631
    %v2024 = vpack.c.b16 %v1640, %v1632
    %v2025 = vpack.c.b16 %v1641, %v1633
    %v2026 = vpack.c.b16 %v1642, %v1634
    %v2027 = vpack.c.b16 %v1643, %v1635
    %v2028 = vpack.c.b16 %v1644, %v1636
    %v2029 = vpack.c.b16 %v1645, %v1637
    %v2030 = vpack.c.b16 %v1646, %v1638
    %v2031 = vpack.c.b16 %v1655, %v1647
    %v2032 = vpack.c.b16 %v1656, %v1648
    %v2033 = vpack.c.b16 %v1657, %v1649
    %v2034 = vpack.c.b16 %v1658, %v1650
    %v2035 = vpack.c.b16 %v1659, %v1651
    %v2036 = vpack.c.b16 %v1660, %v1652
    %v2037 = vpack.c.b16 %v1661, %v1653
    %v2038 = vpack.c.b16 %v1662, %v1654
    %v2039 = vpack.c.b16 %v1671, %v1663
    %v2040 = vpack.c.b16 %v1672, %v1664
    %v2041 = vpack.c.b16 %v1673, %v1665
    %v2042 = vpack.c.b16 %v1674, %v1666
    %v2043 = vpack.c.b16 %v1675, %v1667
    %v2044 = vpack.c.b16 %v1676, %v1668
    %v2045 = vpack.c.b16 %v1677, %v1669
    %v2046 = vpack.c.b16 %v1678, %v1670
    %v2047 = vpack.c.b16 %v1687, %v1679
    %v2048 = vpack.c.b16 %v1688, %v1680
    %v2049 = vpack.c.b16 %v1689, %v1681
    %v2050 = vpack.c.b16 %v1690, %v1682
    %v2051 = vpack.c.b16 %v1691, %v1683
    %v2052 = vpack.c.b16 %v1692, %v1684
    %v2053 = vpack.c.b16 %v1693, %v1685
    %v2054 = vpack.c.b16 %v1694, %v1686
    %v2055 = vpack.c.b16 %v1703, %v1695
    %v2056 = vpack.c.b16 %v1704, %v1696
    %v2057 = vpack.c.b16 %v1705, %v1697
    %v2058 = vpack.c.b16 %v1706, %v1698
    %v2059 = vpack.c.b16 %v1707, %v1699
    %v2060 = vpack.c.b16 %v1708, %v1700
    %v2061 = vpack.c.b16 %v1709, %v1701
    %v2062 = vpack.c.b16 %v1710, %v1702
    %v2063 = vpack.c.b16 %v1719, %v1711
    %v2064 = vpack.c.b16 %v1720, %v1712
    %v2065 = vpack.c.b16 %v1721, %v1713
    %v2066 = vpack.c.b16 %v1722, %v1714
    %v2067 = vpack.c.b16 %v1723, %v1715
    %v2068 = vpack.c.b16 %v1724, %v1716
    %v2069 = vpack.c.b16 %v1725, %v1717
    %v2070 = vpack.c.b16 %v1726, %v1718
    %v2071 = vpack.c.b16 %v1735, %v1727
    %v2072 = vpack.c.b16 %v1736, %v1728
    %v2073 = vpack.c.b16 %v1737, %v1729
    %v2074 = vpack.c.b16 %v1738, %v1730
    %v2075 = vpack.c.b16 %v1739, %v1731
    %v2076 = vpack.c.b16 %v1740, %v1732
    %v2077 = vpack.c.b16 %v1741, %v1733
    %v2078 = vpack.c.b16 %v1742, %v1734
    %v2079 = vpack.c.b16 %v1751, %v1743
    %v2080 = vpack.c.b16 %v1752, %v1744
    %v2081 = vpack.c.b16 %v1753, %v1745
    %v2082 = vpack.c.b16 %v1754, %v1746
    %v2083 = vpack.c.b16 %v1755, %v1747
    %v2084 = vpack.c.b16 %v1756, %v1748
    %v2085 = vpack.c.b16 %v1757, %v1749
    %v2086 = vpack.c.b16 %v1758, %v1750
    %v2087 = vpack.c.b16 %v1767, %v1759
    %v2088 = vpack.c.b16 %v1768, %v1760
    %v2089 = vpack.c.b16 %v1769, %v1761
    %v2090 = vpack.c.b16 %v1770, %v1762
    %v2091 = vpack.c.b16 %v1771, %v1763
    %v2092 = vpack.c.b16 %v1772, %v1764
    %v2093 = vpack.c.b16 %v1773, %v1765
    %v2094 = vpack.c.b16 %v1774, %v1766
    %v2095 = vpack.c.b16 %v1783, %v1775
    %v2096 = vpack.c.b16 %v1784, %v1776
    %v2097 = vpack.c.b16 %v1785, %v1777
    %v2098 = vpack.c.b16 %v1786, %v1778
    %v2099 = vpack.c.b16 %v1787, %v1779
    %v2100 = vpack.c.b16 %v1788, %v1780
    %v2101 = vpack.c.b16 %v1789, %v1781
    %v2102 = vpack.c.b16 %v1790, %v1782
    %v2103 = vpack.c.b16 %v1799, %v1791
    %v2104 = vpack.c.b16 %v1800, %v1792
    %v2105 = vpack.c.b16 %v1801, %v1793
    %v2106 = vpack.c.b16 %v1802, %v1794
    %v2107 = vpack.c.b16 %v1803, %v1795
    %v2108 = vpack.c.b16 %v1804, %v1796
    %v2109 = vpack.c.b16 %v1805, %v1797
    %v2110 = vpack.c.b16 %v1806, %v1798
    %v2111 = vpack.c.b16 %v1815, %v1807
    %v2112 = vpack.c.b16 %v1816, %v1808
    %v2113 = vpack.c.b16 %v1817, %v1809
    %v2114 = vpack.c.b16 %v1818, %v1810
    %v2115 = vpack.c.b16 %v1819, %v1811
    %v2116 = vpack.c.b16 %v1820, %v1812
    %v2117 = vpack.c.b16 %v1821, %v1813
    %v2118 = vpack.c.b16 %v1822, %v1814
    %v2119 = vpack.c.b16 %v1831, %v1823
    %v2120 = vpack.c.b16 %v1832, %v1824
    %v2121 = vpack.c.b16 %v1833, %v1825
    %v2122 = vpack.c.b16 %v1834, %v1826
    %v2123 = vpack.c.b16 %v1835, %v1827
    %v2124 = vpack.c.b16 %v1836, %v1828
    %v2125 = vpack.c.b16 %v1837, %v1829
    %v2126 = vpack.c.b16 %v1838, %v1830
    %v2127 = vpack.c.b16 %v1847, %v1839
    %v2128 = vpack.c.b16 %v1848, %v1840
    %v2129 = vpack.c.b16 %v1849, %v1841
    %v2130 = vpack.c.b16 %v1850, %v1842
    %v2131 = vpack.c.b16 %v1851, %v1843
    %v2132 = vpack.c.b16 %v1852, %v1844
    %v2133 = vpack.c.b16 %v1853, %v1845
    %v2134 = vpack.c.b16 %v1854, %v1846
    %v2135 = vpack.c.b16 %v1863, %v1855
    %v2136 = vpack.c.b16 %v1864, %v1856
    %v2137 = vpack.c.b16 %v1865, %v1857
    %v2138 = vpack.c.b16 %v1866, %v1858
    %v2139 = vpack.c.b16 %v1867, %v1859
    %v2140 = vpack.c.b16 %v1868, %v1860
    %v2141 = vpack.c.b16 %v1869, %v1861
    %v2142 = vpack.c.b16 %v1870, %v1862
    %v2143 = vpack.c.b16 %v1879, %v1871
    %v2144 = vpack.c.b16 %v1880, %v1872
    %v2145 = vpack.c.b16 %v1881, %v1873
    %v2146 = vpack.c.b16 %v1882, %v1874
    %v2147 = vpack.c.b16 %v1883, %v1875
    %v2148 = vpack.c.b16 %v1884, %v1876
    %v2149 = vpack.c.b16 %v1885, %v1877
    %v2150 = vpack.c.b16 %v1886, %v1878
    %v2151 = vpack.c.b16 %v1895, %v1887
    %v2152 = vpack.c.b16 %v1896, %v1888
    %v2153 = vpack.c.b16 %v1897, %v1889
    %v2154 = vpack.c.b16 %v1898, %v1890
    %v2155 = vpack.c.b16 %v1899, %v1891
    %v2156 = vpack.c.b16 %v1900, %v1892
    %v2157 = vpack.c.b16 %v1901, %v1893
    %v2158 = vpack.c.b16 %v1902, %v1894
    %2415 = vmatprep.subr.bf16.mxu0 %v1904
    %2416 = vmatpush1.bf16.msra.mxu0 %v1903
    %2417 = vmatprep.subr.bf16.mxu0 %v1912
    %2418 = vmatpush1.bf16.msra.mxu0 %v1911
    %2419 = vmatprep.subr.bf16.mxu0 %v1920
    %2420 = vmatpush1.bf16.msra.mxu0 %v1919
    %2421 = vmatprep.subr.bf16.mxu0 %v1928
    %2422 = vmatpush1.bf16.msra.mxu0 %v1927
    %2423 = vmatprep.subr.bf16.mxu0 %v1936
    %2424 = vmatpush1.bf16.msra.mxu0 %v1935
    %2425 = vmatprep.subr.bf16.mxu0 %v1944
    %2426 = vmatpush1.bf16.msra.mxu0 %v1943
    %2427 = vmatprep.subr.bf16.mxu0 %v1952
    %2428 = vmatpush1.bf16.msra.mxu0 %v1951
    %2429 = vmatprep.subr.bf16.mxu0 %v1960
    %2430 = vmatpush1.bf16.msra.mxu0 %v1959
    %2431 = vmatprep.subr.bf16.mxu0 %v1968
    %2432 = vmatpush1.bf16.msra.mxu0 %v1967
    %2433 = vmatprep.subr.bf16.mxu0 %v1976
    %2434 = vmatpush1.bf16.msra.mxu0 %v1975
    %2435 = vmatprep.subr.bf16.mxu0 %v1984
    %2436 = vmatpush1.bf16.msra.mxu0 %v1983
    %2437 = vmatprep.subr.bf16.mxu0 %v1992
    %2438 = vmatpush1.bf16.msra.mxu0 %v1991
    %2439 = vmatprep.subr.bf16.mxu0 %v2000
    %2440 = vmatpush1.bf16.msra.mxu0 %v1999
    %2441 = vmatprep.subr.bf16.mxu0 %v2008
    %2442 = vmatpush1.bf16.msra.mxu0 %v2007
    %2443 = vmatprep.subr.bf16.mxu0 %v2016
    %2444 = vmatpush1.bf16.msra.mxu0 %v2015
    %2445 = vmatprep.subr.bf16.mxu0 %v2024
    %2446 = vmatpush1.bf16.msra.mxu0 %v2023
    %2447 = vmatprep.mubr.bf16.mxu0 %v834
    %2448 = vmatmul.mubr.bf16.gmra.mrb[0].mxu0 %v833
    %v2449 = vpop.f32.mrb[0].mxu0
    %v2450 = vadd.f32 %v1098, %v2449
    %v2451 = vpop.f32.mrb[0].mxu0
    %v2452 = vadd.f32 %v1102, %v2451
    %v2453 = vpop.f32.mrb[0].mxu0
    %v2454 = vadd.f32 %v1098, %v2453
    %v2455 = vpop.f32.mrb[0].mxu0
    %v2456 = vadd.f32 %v1102, %v2455
    %2457 = vdwg.mxu0
    %2458 = vmatprep.subr.bf16.mxu0 %v2032
    %2459 = vmatpush1.bf16.msra.mxu0 %v2031
    %2460 = vmatprep.subr.bf16.mxu0 %v2040
    %2461 = vmatpush1.bf16.msra.mxu0 %v2039
    %2462 = vmatprep.subr.bf16.mxu0 %v2048
    %2463 = vmatpush1.bf16.msra.mxu0 %v2047
    %2464 = vmatprep.subr.bf16.mxu0 %v2056
    %2465 = vmatpush1.bf16.msra.mxu0 %v2055
    %2466 = vmatprep.subr.bf16.mxu0 %v2064
    %2467 = vmatpush1.bf16.msra.mxu0 %v2063
    %2468 = vmatprep.subr.bf16.mxu0 %v2072
    %2469 = vmatpush1.bf16.msra.mxu0 %v2071
    %2470 = vmatprep.subr.bf16.mxu0 %v2080
    %2471 = vmatpush1.bf16.msra.mxu0 %v2079
    %2472 = vmatprep.subr.bf16.mxu0 %v2088
    %2473 = vmatpush1.bf16.msra.mxu0 %v2087
    %2474 = vmatprep.subr.bf16.mxu0 %v2096
    %2475 = vmatpush1.bf16.msra.mxu0 %v2095
    %2476 = vmatprep.subr.bf16.mxu0 %v2104
    %2477 = vmatpush1.bf16.msra.mxu0 %v2103
    %2478 = vmatprep.subr.bf16.mxu0 %v2112
    %2479 = vmatpush1.bf16.msra.mxu0 %v2111
    %2480 = vmatprep.subr.bf16.mxu0 %v2120
    %2481 = vmatpush1.bf16.msra.mxu0 %v2119
    %2482 = vmatprep.subr.bf16.mxu0 %v2128
    %2483 = vmatpush1.bf16.msra.mxu0 %v2127
    %2484 = vmatprep.subr.bf16.mxu0 %v2136
    %2485 = vmatpush1.bf16.msra.mxu0 %v2135
    %2486 = vmatprep.subr.bf16.mxu0 %v2144
    %2487 = vmatpush1.bf16.msra.mxu0 %v2143
    %2488 = vmatprep.subr.bf16.mxu0 %v2152
    %2489 = vmatpush1.bf16.msra.mxu0 %v2151
    %2490 = vmatprep.mubr.bf16.mxu0 %v836
    %2491 = vmatmul.mubr.bf16.gmra.mrb[0].mxu0 %v835
    %v2492 = vpop.f32.mrb[0].mxu0
    %v2493 = vadd.f32 %v2450, %v2492
    %v2494 = vpop.f32.mrb[0].mxu0
    %v2495 = vadd.f32 %v2452, %v2494
    %v2496 = vpop.f32.mrb[0].mxu0
    %v2497 = vadd.f32 %v2454, %v2496
    %v2498 = vpop.f32.mrb[0].mxu0
    %v2499 = vadd.f32 %v2456, %v2498
    %2500 = vdwg.mxu0
    %2501 = vmatprep.subr.bf16.mxu0 %v1906
    %2502 = vmatpush1.bf16.msra.mxu0 %v1905
    %2503 = vmatprep.subr.bf16.mxu0 %v1914
    %2504 = vmatpush1.bf16.msra.mxu0 %v1913
    %2505 = vmatprep.subr.bf16.mxu0 %v1922
    %2506 = vmatpush1.bf16.msra.mxu0 %v1921
    %2507 = vmatprep.subr.bf16.mxu0 %v1930
    %2508 = vmatpush1.bf16.msra.mxu0 %v1929
    %2509 = vmatprep.subr.bf16.mxu0 %v1938
    %2510 = vmatpush1.bf16.msra.mxu0 %v1937
    %2511 = vmatprep.subr.bf16.mxu0 %v1946
    %2512 = vmatpush1.bf16.msra.mxu0 %v1945
    %2513 = vmatprep.subr.bf16.mxu0 %v1954
    %2514 = vmatpush1.bf16.msra.mxu0 %v1953
    %2515 = vmatprep.subr.bf16.mxu0 %v1962
    %2516 = vmatpush1.bf16.msra.mxu0 %v1961
    %2517 = vmatprep.subr.bf16.mxu0 %v1970
    %2518 = vmatpush1.bf16.msra.mxu0 %v1969
    %2519 = vmatprep.subr.bf16.mxu0 %v1978
    %2520 = vmatpush1.bf16.msra.mxu0 %v1977
    %2521 = vmatprep.subr.bf16.mxu0 %v1986
    %2522 = vmatpush1.bf16.msra.mxu0 %v1985
    %2523 = vmatprep.subr.bf16.mxu0 %v1994
    %2524 = vmatpush1.bf16.msra.mxu0 %v1993
    %2525 = vmatprep.subr.bf16.mxu0 %v2002
    %2526 = vmatpush1.bf16.msra.mxu0 %v2001
    %2527 = vmatprep.subr.bf16.mxu0 %v2010
    %2528 = vmatpush1.bf16.msra.mxu0 %v2009
    %2529 = vmatprep.subr.bf16.mxu0 %v2018
    %2530 = vmatpush1.bf16.msra.mxu0 %v2017
    %2531 = vmatprep.subr.bf16.mxu0 %v2026
    %2532 = vmatpush1.bf16.msra.mxu0 %v2025
    %2533 = vmatprep.mubr.bf16.mxu0 %v834
    %2534 = vmatmul.mubr.bf16.gmra.mrb[0].mxu0 %v833
    %v2535 = vpop.f32.mrb[0].mxu0
    %v2536 = vadd.f32 %v1106, %v2535
    %v2537 = vpop.f32.mrb[0].mxu0
    %v2538 = vadd.f32 %v1110, %v2537
    %v2539 = vpop.f32.mrb[0].mxu0
    %v2540 = vadd.f32 %v1106, %v2539
    %v2541 = vpop.f32.mrb[0].mxu0
    %v2542 = vadd.f32 %v1110, %v2541
    %2543 = vdwg.mxu0
    %2544 = vmatprep.subr.bf16.mxu0 %v2034
    %2545 = vmatpush1.bf16.msra.mxu0 %v2033
    %2546 = vmatprep.subr.bf16.mxu0 %v2042
    %2547 = vmatpush1.bf16.msra.mxu0 %v2041
    %2548 = vmatprep.subr.bf16.mxu0 %v2050
    %2549 = vmatpush1.bf16.msra.mxu0 %v2049
    %2550 = vmatprep.subr.bf16.mxu0 %v2058
    %2551 = vmatpush1.bf16.msra.mxu0 %v2057
    %2552 = vmatprep.subr.bf16.mxu0 %v2066
    %2553 = vmatpush1.bf16.msra.mxu0 %v2065
    %2554 = vmatprep.subr.bf16.mxu0 %v2074
    %2555 = vmatpush1.bf16.msra.mxu0 %v2073
    %2556 = vmatprep.subr.bf16.mxu0 %v2082
    %2557 = vmatpush1.bf16.msra.mxu0 %v2081
    %2558 = vmatprep.subr.bf16.mxu0 %v2090
    %2559 = vmatpush1.bf16.msra.mxu0 %v2089
    %2560 = vmatprep.subr.bf16.mxu0 %v2098
    %2561 = vmatpush1.bf16.msra.mxu0 %v2097
    %2562 = vmatprep.subr.bf16.mxu0 %v2106
    %2563 = vmatpush1.bf16.msra.mxu0 %v2105
    %2564 = vmatprep.subr.bf16.mxu0 %v2114
    %2565 = vmatpush1.bf16.msra.mxu0 %v2113
    %2566 = vmatprep.subr.bf16.mxu0 %v2122
    %2567 = vmatpush1.bf16.msra.mxu0 %v2121
    %2568 = vmatprep.subr.bf16.mxu0 %v2130
    %2569 = vmatpush1.bf16.msra.mxu0 %v2129
    %2570 = vmatprep.subr.bf16.mxu0 %v2138
    %2571 = vmatpush1.bf16.msra.mxu0 %v2137
    %2572 = vmatprep.subr.bf16.mxu0 %v2146
    %2573 = vmatpush1.bf16.msra.mxu0 %v2145
    %2574 = vmatprep.subr.bf16.mxu0 %v2154
    %2575 = vmatpush1.bf16.msra.mxu0 %v2153
    %2576 = vmatprep.mubr.bf16.mxu0 %v836
    %2577 = vmatmul.mubr.bf16.gmra.mrb[0].mxu0 %v835
    %v2578 = vpop.f32.mrb[0].mxu0
    %v2579 = vadd.f32 %v2536, %v2578
    %v2580 = vpop.f32.mrb[0].mxu0
    %v2581 = vadd.f32 %v2538, %v2580
    %v2582 = vpop.f32.mrb[0].mxu0
    %v2583 = vadd.f32 %v2540, %v2582
    %v2584 = vpop.f32.mrb[0].mxu0
    %v2585 = vadd.f32 %v2542, %v2584
    %2586 = vdwg.mxu0
    %2587 = vmatprep.subr.bf16.mxu0 %v1908
    %2588 = vmatpush1.bf16.msra.mxu0 %v1907
    %2589 = vmatprep.subr.bf16.mxu0 %v1916
    %2590 = vmatpush1.bf16.msra.mxu0 %v1915
    %2591 = vmatprep.subr.bf16.mxu0 %v1924
    %2592 = vmatpush1.bf16.msra.mxu0 %v1923
    %2593 = vmatprep.subr.bf16.mxu0 %v1932
    %2594 = vmatpush1.bf16.msra.mxu0 %v1931
    %2595 = vmatprep.subr.bf16.mxu0 %v1940
    %2596 = vmatpush1.bf16.msra.mxu0 %v1939
    %2597 = vmatprep.subr.bf16.mxu0 %v1948
    %2598 = vmatpush1.bf16.msra.mxu0 %v1947
    %2599 = vmatprep.subr.bf16.mxu0 %v1956
    %2600 = vmatpush1.bf16.msra.mxu0 %v1955
    %2601 = vmatprep.subr.bf16.mxu0 %v1964
    %2602 = vmatpush1.bf16.msra.mxu0 %v1963
    %2603 = vmatprep.subr.bf16.mxu0 %v1972
    %2604 = vmatpush1.bf16.msra.mxu0 %v1971
    %2605 = vmatprep.subr.bf16.mxu0 %v1980
    %2606 = vmatpush1.bf16.msra.mxu0 %v1979
    %2607 = vmatprep.subr.bf16.mxu0 %v1988
    %2608 = vmatpush1.bf16.msra.mxu0 %v1987
    %2609 = vmatprep.subr.bf16.mxu0 %v1996
    %2610 = vmatpush1.bf16.msra.mxu0 %v1995
    %2611 = vmatprep.subr.bf16.mxu0 %v2004
    %2612 = vmatpush1.bf16.msra.mxu0 %v2003
    %2613 = vmatprep.subr.bf16.mxu0 %v2012
    %2614 = vmatpush1.bf16.msra.mxu0 %v2011
    %2615 = vmatprep.subr.bf16.mxu0 %v2020
    %2616 = vmatpush1.bf16.msra.mxu0 %v2019
    %2617 = vmatprep.subr.bf16.mxu0 %v2028
    %2618 = vmatpush1.bf16.msra.mxu0 %v2027
    %2619 = vmatprep.mubr.bf16.mxu0 %v834
    %2620 = vmatmul.mubr.bf16.gmra.mrb[0].mxu0 %v833
    %v2621 = vpop.f32.mrb[0].mxu0
    %v2622 = vadd.f32 %v1114, %v2621
    %v2623 = vpop.f32.mrb[0].mxu0
    %v2624 = vadd.f32 %v1118, %v2623
    %v2625 = vpop.f32.mrb[0].mxu0
    %v2626 = vadd.f32 %v1114, %v2625
    %v2627 = vpop.f32.mrb[0].mxu0
    %v2628 = vadd.f32 %v1118, %v2627
    %2629 = vdwg.mxu0
    %2630 = vmatprep.subr.bf16.mxu0 %v2036
    %2631 = vmatpush1.bf16.msra.mxu0 %v2035
    %2632 = vmatprep.subr.bf16.mxu0 %v2044
    %2633 = vmatpush1.bf16.msra.mxu0 %v2043
    %2634 = vmatprep.subr.bf16.mxu0 %v2052
    %2635 = vmatpush1.bf16.msra.mxu0 %v2051
    %2636 = vmatprep.subr.bf16.mxu0 %v2060
    %2637 = vmatpush1.bf16.msra.mxu0 %v2059
    %2638 = vmatprep.subr.bf16.mxu0 %v2068
    %2639 = vmatpush1.bf16.msra.mxu0 %v2067
    %2640 = vmatprep.subr.bf16.mxu0 %v2076
    %2641 = vmatpush1.bf16.msra.mxu0 %v2075
    %2642 = vmatprep.subr.bf16.mxu0 %v2084
    %2643 = vmatpush1.bf16.msra.mxu0 %v2083
    %2644 = vmatprep.subr.bf16.mxu0 %v2092
    %2645 = vmatpush1.bf16.msra.mxu0 %v2091
    %2646 = vmatprep.subr.bf16.mxu0 %v2100
    %2647 = vmatpush1.bf16.msra.mxu0 %v2099
    %2648 = vmatprep.subr.bf16.mxu0 %v2108
    %2649 = vmatpush1.bf16.msra.mxu0 %v2107
    %2650 = vmatprep.subr.bf16.mxu0 %v2116
    %2651 = vmatpush1.bf16.msra.mxu0 %v2115
    %2652 = vmatprep.subr.bf16.mxu0 %v2124
    %2653 = vmatpush1.bf16.msra.mxu0 %v2123
    %2654 = vmatprep.subr.bf16.mxu0 %v2132
    %2655 = vmatpush1.bf16.msra.mxu0 %v2131
    %2656 = vmatprep.subr.bf16.mxu0 %v2140
    %2657 = vmatpush1.bf16.msra.mxu0 %v2139
    %2658 = vmatprep.subr.bf16.mxu0 %v2148
    %2659 = vmatpush1.bf16.msra.mxu0 %v2147
    %2660 = vmatprep.subr.bf16.mxu0 %v2156
    %2661 = vmatpush1.bf16.msra.mxu0 %v2155
    %2662 = vmatprep.mubr.bf16.mxu0 %v836
    %2663 = vmatmul.mubr.bf16.gmra.mrb[0].mxu0 %v835
    %v2664 = vpop.f32.mrb[0].mxu0
    %v2665 = vadd.f32 %v2622, %v2664
    %v2666 = vpop.f32.mrb[0].mxu0
    %v2667 = vadd.f32 %v2624, %v2666
    %v2668 = vpop.f32.mrb[0].mxu0
    %v2669 = vadd.f32 %v2626, %v2668
    %v2670 = vpop.f32.mrb[0].mxu0
    %v2671 = vadd.f32 %v2628, %v2670
    %2672 = vdwg.mxu0
    %2673 = vmatprep.subr.bf16.mxu0 %v1910
    %2674 = vmatpush1.bf16.msra.mxu0 %v1909
    %2675 = vmatprep.subr.bf16.mxu0 %v1918
    %2676 = vmatpush1.bf16.msra.mxu0 %v1917
    %2677 = vmatprep.subr.bf16.mxu0 %v1926
    %2678 = vmatpush1.bf16.msra.mxu0 %v1925
    %2679 = vmatprep.subr.bf16.mxu0 %v1934
    %2680 = vmatpush1.bf16.msra.mxu0 %v1933
    %2681 = vmatprep.subr.bf16.mxu0 %v1942
    %2682 = vmatpush1.bf16.msra.mxu0 %v1941
    %2683 = vmatprep.subr.bf16.mxu0 %v1950
    %2684 = vmatpush1.bf16.msra.mxu0 %v1949
    %2685 = vmatprep.subr.bf16.mxu0 %v1958
    %2686 = vmatpush1.bf16.msra.mxu0 %v1957
    %2687 = vmatprep.subr.bf16.mxu0 %v1966
    %2688 = vmatpush1.bf16.msra.mxu0 %v1965
    %2689 = vmatprep.subr.bf16.mxu0 %v1974
    %2690 = vmatpush1.bf16.msra.mxu0 %v1973
    %2691 = vmatprep.subr.bf16.mxu0 %v1982
    %2692 = vmatpush1.bf16.msra.mxu0 %v1981
    %2693 = vmatprep.subr.bf16.mxu0 %v1990
    %2694 = vmatpush1.bf16.msra.mxu0 %v1989
    %2695 = vmatprep.subr.bf16.mxu0 %v1998
    %2696 = vmatpush1.bf16.msra.mxu0 %v1997
    %2697 = vmatprep.subr.bf16.mxu0 %v2006
    %2698 = vmatpush1.bf16.msra.mxu0 %v2005
    %2699 = vmatprep.subr.bf16.mxu0 %v2014
    %2700 = vmatpush1.bf16.msra.mxu0 %v2013
    %2701 = vmatprep.subr.bf16.mxu0 %v2022
    %2702 = vmatpush1.bf16.msra.mxu0 %v2021
    %2703 = vmatprep.subr.bf16.mxu0 %v2030
    %2704 = vmatpush1.bf16.msra.mxu0 %v2029
    %2705 = vmatprep.mubr.bf16.mxu0 %v834
    %2706 = vmatmul.mubr.bf16.gmra.mrb[0].mxu0 %v833
    %v2707 = vpop.f32.mrb[0].mxu0
    %v2708 = vadd.f32 %v1122, %v2707
    %v2709 = vpop.f32.mrb[0].mxu0
    %v2710 = vadd.f32 %v1126, %v2709
    %v2711 = vpop.f32.mrb[0].mxu0
    %v2712 = vadd.f32 %v1122, %v2711
    %v2713 = vpop.f32.mrb[0].mxu0
    %v2714 = vadd.f32 %v1126, %v2713
    %2715 = vdwg.mxu0
    %2716 = vmatprep.subr.bf16.mxu0 %v2038
    %2717 = vmatpush1.bf16.msra.mxu0 %v2037
    %2718 = vmatprep.subr.bf16.mxu0 %v2046
    %2719 = vmatpush1.bf16.msra.mxu0 %v2045
    %2720 = vmatprep.subr.bf16.mxu0 %v2054
    %2721 = vmatpush1.bf16.msra.mxu0 %v2053
    %2722 = vmatprep.subr.bf16.mxu0 %v2062
    %2723 = vmatpush1.bf16.msra.mxu0 %v2061
    %2724 = vmatprep.subr.bf16.mxu0 %v2070
    %2725 = vmatpush1.bf16.msra.mxu0 %v2069
    %2726 = vmatprep.subr.bf16.mxu0 %v2078
    %2727 = vmatpush1.bf16.msra.mxu0 %v2077
    %2728 = vmatprep.subr.bf16.mxu0 %v2086
    %2729 = vmatpush1.bf16.msra.mxu0 %v2085
    %2730 = vmatprep.subr.bf16.mxu0 %v2094
    %2731 = vmatpush1.bf16.msra.mxu0 %v2093
    %2732 = vmatprep.subr.bf16.mxu0 %v2102
    %2733 = vmatpush1.bf16.msra.mxu0 %v2101
    %2734 = vmatprep.subr.bf16.mxu0 %v2110
    %2735 = vmatpush1.bf16.msra.mxu0 %v2109
    %2736 = vmatprep.subr.bf16.mxu0 %v2118
    %2737 = vmatpush1.bf16.msra.mxu0 %v2117
    %2738 = vmatprep.subr.bf16.mxu0 %v2126
    %2739 = vmatpush1.bf16.msra.mxu0 %v2125
    %2740 = vmatprep.subr.bf16.mxu0 %v2134
    %2741 = vmatpush1.bf16.msra.mxu0 %v2133
    %2742 = vmatprep.subr.bf16.mxu0 %v2142
    %2743 = vmatpush1.bf16.msra.mxu0 %v2141
    %2744 = vmatprep.subr.bf16.mxu0 %v2150
    %2745 = vmatpush1.bf16.msra.mxu0 %v2149
    %2746 = vmatprep.subr.bf16.mxu0 %v2158
    %2747 = vmatpush1.bf16.msra.mxu0 %v2157
    %2748 = vmatprep.mubr.bf16.mxu0 %v836
    %2749 = vmatmul.mubr.bf16.gmra.mrb[0].mxu0 %v835
    %v2750 = vpop.f32.mrb[0].mxu0
    %v2751 = vadd.f32 %v2708, %v2750
    %v2752 = vpop.f32.mrb[0].mxu0
    %v2753 = vadd.f32 %v2710, %v2752
    %v2754 = vpop.f32.mrb[0].mxu0
    %v2755 = vadd.f32 %v2712, %v2754
    %v2756 = vpop.f32.mrb[0].mxu0
    %v2757 = vadd.f32 %v2714, %v2756
    %2758 = vdwg.mxu0
    %v2759 = vmax.f32 %v2493, 0.0
    %v2760 = vmax.f32 %v2495, 0.0
    %v2761 = vmax.f32 %v2579, 0.0
    %v2762 = vmax.f32 %v2581, 0.0
    %v2763 = vmax.f32 %v2665, 0.0
    %v2764 = vmax.f32 %v2667, 0.0
    %v2765 = vmax.f32 %v2751, 0.0
    %v2766 = vmax.f32 %v2753, 0.0
    %v2767 = vmax.f32 %v2497, 0.0
    %v2768 = vmax.f32 %v2499, 0.0
    %v2769 = vmax.f32 %v2583, 0.0
    %v2770 = vmax.f32 %v2585, 0.0
    %v2771 = vmax.f32 %v2669, 0.0
    %v2772 = vmax.f32 %v2671, 0.0
    %v2773 = vmax.f32 %v2755, 0.0
    %v2774 = vmax.f32 %v2757, 0.0
    %v2775 = vpack.c.bf16 %v2767, %v2759
    %v2776 = vpack.c.bf16 %v2768, %v2760
    %v2777 = vpack.c.bf16 %v2769, %v2761
    %v2778 = vpack.c.bf16 %v2770, %v2762
    %v2779 = vpack.c.bf16 %v2771, %v2763
    %v2780 = vpack.c.bf16 %v2772, %v2764
    %v2781 = vpack.c.bf16 %v2773, %v2765
    %v2782 = vpack.c.bf16 %v2774, %v2766
    %s2783 = smul.u32 4, 128
    %s2784 = smul.u32 %s2783, 7
    %s2785 = sshll.u32 %s2784, 4
    %2786 = dma.done [#allocation3], %s2785
    %v2787 = vld [vmem:[#allocation2] sm:$0xff]
    %v2788 = vld [vmem:[#allocation2 + $0x8] sm:$0xff]
    %v2789 = vld [vmem:[#allocation2 + $0x10] sm:$0xff]
    %v2790 = vld [vmem:[#allocation2 + $0x18] sm:$0xff]
    %v2791 = vld [vmem:[#allocation2 + $0x20] sm:$0xff]
    %v2792 = vld [vmem:[#allocation2 + $0x28] sm:$0xff]
    %v2793 = vld [vmem:[#allocation2 + $0x30] sm:$0xff]
    %v2794 = vld [vmem:[#allocation2 + $0x38] sm:$0xff]
    %v2795 = vld [vmem:[#allocation2 + $0x40] sm:$0xff]
    %v2796 = vld [vmem:[#allocation2 + $0x48] sm:$0xff]
    %v2797 = vld [vmem:[#allocation2 + $0x50] sm:$0xff]
    %v2798 = vld [vmem:[#allocation2 + $0x58] sm:$0xff]
    %v2799 = vld [vmem:[#allocation2 + $0x60] sm:$0xff]
    %v2800 = vld [vmem:[#allocation2 + $0x68] sm:$0xff]
    %v2801 = vld [vmem:[#allocation2 + $0x70] sm:$0xff]
    %v2802 = vld [vmem:[#allocation2 + $0x78] sm:$0xff]
    %v2803 = vld [vmem:[#allocation2 + $0x80] sm:$0xff]
    %v2804 = vld [vmem:[#allocation2 + $0x88] sm:$0xff]
    %v2805 = vld [vmem:[#allocation2 + $0x90] sm:$0xff]
    %v2806 = vld [vmem:[#allocation2 + $0x98] sm:$0xff]
    %v2807 = vld [vmem:[#allocation2 + $0xa0] sm:$0xff]
    %v2808 = vld [vmem:[#allocation2 + $0xa8] sm:$0xff]
    %v2809 = vld [vmem:[#allocation2 + $0xb0] sm:$0xff]
    %v2810 = vld [vmem:[#allocation2 + $0xb8] sm:$0xff]
    %v2811 = vld [vmem:[#allocation2 + $0xc0] sm:$0xff]
    %v2812 = vld [vmem:[#allocation2 + $0xc8] sm:$0xff]
    %v2813 = vld [vmem:[#allocation2 + $0xd0] sm:$0xff]
    %v2814 = vld [vmem:[#allocation2 + $0xd8] sm:$0xff]
    %v2815 = vld [vmem:[#allocation2 + $0xe0] sm:$0xff]
    %v2816 = vld [vmem:[#allocation2 + $0xe8] sm:$0xff]
    %v2817 = vld [vmem:[#allocation2 + $0xf0] sm:$0xff]
    %v2818 = vld [vmem:[#allocation2 + $0xf8] sm:$0xff]
    %v2819 = vld [vmem:[#allocation2 + $0x100] sm:$0xff]
    %v2820 = vld [vmem:[#allocation2 + $0x108] sm:$0xff]
    %v2821 = vld [vmem:[#allocation2 + $0x110] sm:$0xff]
    %v2822 = vld [vmem:[#allocation2 + $0x118] sm:$0xff]
    %v2823 = vld [vmem:[#allocation2 + $0x120] sm:$0xff]
    %v2824 = vld [vmem:[#allocation2 + $0x128] sm:$0xff]
    %v2825 = vld [vmem:[#allocation2 + $0x130] sm:$0xff]
    %v2826 = vld [vmem:[#allocation2 + $0x138] sm:$0xff]
    %v2827 = vld [vmem:[#allocation2 + $0x140] sm:$0xff]
    %v2828 = vld [vmem:[#allocation2 + $0x148] sm:$0xff]
    %v2829 = vld [vmem:[#allocation2 + $0x150] sm:$0xff]
    %v2830 = vld [vmem:[#allocation2 + $0x158] sm:$0xff]
    %v2831 = vld [vmem:[#allocation2 + $0x160] sm:$0xff]
    %v2832 = vld [vmem:[#allocation2 + $0x168] sm:$0xff]
    %v2833 = vld [vmem:[#allocation2 + $0x170] sm:$0xff]
    %v2834 = vld [vmem:[#allocation2 + $0x178] sm:$0xff]
    %v2835 = vld [vmem:[#allocation2 + $0x180] sm:$0xff]
    %v2836 = vld [vmem:[#allocation2 + $0x188] sm:$0xff]
    %v2837 = vld [vmem:[#allocation2 + $0x190] sm:$0xff]
    %v2838 = vld [vmem:[#allocation2 + $0x198] sm:$0xff]
    %v2839 = vld [vmem:[#allocation2 + $0x1a0] sm:$0xff]
    %v2840 = vld [vmem:[#allocation2 + $0x1a8] sm:$0xff]
    %v2841 = vld [vmem:[#allocation2 + $0x1b0] sm:$0xff]
    %v2842 = vld [vmem:[#allocation2 + $0x1b8] sm:$0xff]
    %v2843 = vld [vmem:[#allocation2 + $0x1c0] sm:$0xff]
    %v2844 = vld [vmem:[#allocation2 + $0x1c8] sm:$0xff]
    %v2845 = vld [vmem:[#allocation2 + $0x1d0] sm:$0xff]
    %v2846 = vld [vmem:[#allocation2 + $0x1d8] sm:$0xff]
    %v2847 = vld [vmem:[#allocation2 + $0x1e0] sm:$0xff]
    %v2848 = vld [vmem:[#allocation2 + $0x1e8] sm:$0xff]
    %v2849 = vld [vmem:[#allocation2 + $0x1f0] sm:$0xff]
    %v2850 = vld [vmem:[#allocation2 + $0x1f8] sm:$0xff]
    %v2851 = vld [vmem:[#allocation2 + $0x200] sm:$0xff]
    %v2852 = vld [vmem:[#allocation2 + $0x208] sm:$0xff]
    %v2853 = vld [vmem:[#allocation2 + $0x210] sm:$0xff]
    %v2854 = vld [vmem:[#allocation2 + $0x218] sm:$0xff]
    %v2855 = vld [vmem:[#allocation2 + $0x220] sm:$0xff]
    %v2856 = vld [vmem:[#allocation2 + $0x228] sm:$0xff]
    %v2857 = vld [vmem:[#allocation2 + $0x230] sm:$0xff]
    %v2858 = vld [vmem:[#allocation2 + $0x238] sm:$0xff]
    %v2859 = vld [vmem:[#allocation2 + $0x240] sm:$0xff]
    %v2860 = vld [vmem:[#allocation2 + $0x248] sm:$0xff]
    %v2861 = vld [vmem:[#allocation2 + $0x250] sm:$0xff]
    %v2862 = vld [vmem:[#allocation2 + $0x258] sm:$0xff]
    %v2863 = vld [vmem:[#allocation2 + $0x260] sm:$0xff]
    %v2864 = vld [vmem:[#allocation2 + $0x268] sm:$0xff]
    %v2865 = vld [vmem:[#allocation2 + $0x270] sm:$0xff]
    %v2866 = vld [vmem:[#allocation2 + $0x278] sm:$0xff]
    %v2867 = vld [vmem:[#allocation2 + $0x280] sm:$0xff]
    %v2868 = vld [vmem:[#allocation2 + $0x288] sm:$0xff]
    %v2869 = vld [vmem:[#allocation2 + $0x290] sm:$0xff]
    %v2870 = vld [vmem:[#allocation2 + $0x298] sm:$0xff]
    %v2871 = vld [vmem:[#allocation2 + $0x2a0] sm:$0xff]
    %v2872 = vld [vmem:[#allocation2 + $0x2a8] sm:$0xff]
    %v2873 = vld [vmem:[#allocation2 + $0x2b0] sm:$0xff]
    %v2874 = vld [vmem:[#allocation2 + $0x2b8] sm:$0xff]
    %v2875 = vld [vmem:[#allocation2 + $0x2c0] sm:$0xff]
    %v2876 = vld [vmem:[#allocation2 + $0x2c8] sm:$0xff]
    %v2877 = vld [vmem:[#allocation2 + $0x2d0] sm:$0xff]
    %v2878 = vld [vmem:[#allocation2 + $0x2d8] sm:$0xff]
    %v2879 = vld [vmem:[#allocation2 + $0x2e0] sm:$0xff]
    %v2880 = vld [vmem:[#allocation2 + $0x2e8] sm:$0xff]
    %v2881 = vld [vmem:[#allocation2 + $0x2f0] sm:$0xff]
    %v2882 = vld [vmem:[#allocation2 + $0x2f8] sm:$0xff]
    %v2883 = vld [vmem:[#allocation2 + $0x300] sm:$0xff]
    %v2884 = vld [vmem:[#allocation2 + $0x308] sm:$0xff]
    %v2885 = vld [vmem:[#allocation2 + $0x310] sm:$0xff]
    %v2886 = vld [vmem:[#allocation2 + $0x318] sm:$0xff]
    %v2887 = vld [vmem:[#allocation2 + $0x320] sm:$0xff]
    %v2888 = vld [vmem:[#allocation2 + $0x328] sm:$0xff]
    %v2889 = vld [vmem:[#allocation2 + $0x330] sm:$0xff]
    %v2890 = vld [vmem:[#allocation2 + $0x338] sm:$0xff]
    %v2891 = vld [vmem:[#allocation2 + $0x340] sm:$0xff]
    %v2892 = vld [vmem:[#allocation2 + $0x348] sm:$0xff]
    %v2893 = vld [vmem:[#allocation2 + $0x350] sm:$0xff]
    %v2894 = vld [vmem:[#allocation2 + $0x358] sm:$0xff]
    %v2895 = vld [vmem:[#allocation2 + $0x360] sm:$0xff]
    %v2896 = vld [vmem:[#allocation2 + $0x368] sm:$0xff]
    %v2897 = vld [vmem:[#allocation2 + $0x370] sm:$0xff]
    %v2898 = vld [vmem:[#allocation2 + $0x378] sm:$0xff]
    %v2899 = vld [vmem:[#allocation2 + $0x380] sm:$0xff]
    %v2900 = vld [vmem:[#allocation2 + $0x388] sm:$0xff]
    %v2901 = vld [vmem:[#allocation2 + $0x390] sm:$0xff]
    %v2902 = vld [vmem:[#allocation2 + $0x398] sm:$0xff]
    %v2903 = vld [vmem:[#allocation2 + $0x3a0] sm:$0xff]
    %v2904 = vld [vmem:[#allocation2 + $0x3a8] sm:$0xff]
    %v2905 = vld [vmem:[#allocation2 + $0x3b0] sm:$0xff]
    %v2906 = vld [vmem:[#allocation2 + $0x3b8] sm:$0xff]
    %v2907 = vld [vmem:[#allocation2 + $0x3c0] sm:$0xff]
    %v2908 = vld [vmem:[#allocation2 + $0x3c8] sm:$0xff]
    %v2909 = vld [vmem:[#allocation2 + $0x3d0] sm:$0xff]
    %v2910 = vld [vmem:[#allocation2 + $0x3d8] sm:$0xff]
    %v2911 = vld [vmem:[#allocation2 + $0x3e0] sm:$0xff]
    %v2912 = vld [vmem:[#allocation2 + $0x3e8] sm:$0xff]
    %v2913 = vld [vmem:[#allocation2 + $0x3f0] sm:$0xff]
    %v2914 = vld [vmem:[#allocation2 + $0x3f8] sm:$0xff]
    %v2915 = vld [vmem:[#allocation2 + $0x400] sm:$0xff]
    %v2916 = vld [vmem:[#allocation2 + $0x408] sm:$0xff]
    %v2917 = vld [vmem:[#allocation2 + $0x410] sm:$0xff]
    %v2918 = vld [vmem:[#allocation2 + $0x418] sm:$0xff]
    %v2919 = vld [vmem:[#allocation2 + $0x420] sm:$0xff]
    %v2920 = vld [vmem:[#allocation2 + $0x428] sm:$0xff]
    %v2921 = vld [vmem:[#allocation2 + $0x430] sm:$0xff]
    %v2922 = vld [vmem:[#allocation2 + $0x438] sm:$0xff]
    %v2923 = vld [vmem:[#allocation2 + $0x440] sm:$0xff]
    %v2924 = vld [vmem:[#allocation2 + $0x448] sm:$0xff]
    %v2925 = vld [vmem:[#allocation2 + $0x450] sm:$0xff]
    %v2926 = vld [vmem:[#allocation2 + $0x458] sm:$0xff]
    %v2927 = vld [vmem:[#allocation2 + $0x460] sm:$0xff]
    %v2928 = vld [vmem:[#allocation2 + $0x468] sm:$0xff]
    %v2929 = vld [vmem:[#allocation2 + $0x470] sm:$0xff]
    %v2930 = vld [vmem:[#allocation2 + $0x478] sm:$0xff]
    %v2931 = vld [vmem:[#allocation2 + $0x480] sm:$0xff]
    %v2932 = vld [vmem:[#allocation2 + $0x488] sm:$0xff]
    %v2933 = vld [vmem:[#allocation2 + $0x490] sm:$0xff]
    %v2934 = vld [vmem:[#allocation2 + $0x498] sm:$0xff]
    %v2935 = vld [vmem:[#allocation2 + $0x4a0] sm:$0xff]
    %v2936 = vld [vmem:[#allocation2 + $0x4a8] sm:$0xff]
    %v2937 = vld [vmem:[#allocation2 + $0x4b0] sm:$0xff]
    %v2938 = vld [vmem:[#allocation2 + $0x4b8] sm:$0xff]
    %v2939 = vld [vmem:[#allocation2 + $0x4c0] sm:$0xff]
    %v2940 = vld [vmem:[#allocation2 + $0x4c8] sm:$0xff]
    %v2941 = vld [vmem:[#allocation2 + $0x4d0] sm:$0xff]
    %v2942 = vld [vmem:[#allocation2 + $0x4d8] sm:$0xff]
    %v2943 = vld [vmem:[#allocation2 + $0x4e0] sm:$0xff]
    %v2944 = vld [vmem:[#allocation2 + $0x4e8] sm:$0xff]
    %v2945 = vld [vmem:[#allocation2 + $0x4f0] sm:$0xff]
    %v2946 = vld [vmem:[#allocation2 + $0x4f8] sm:$0xff]
    %v2947 = vld [vmem:[#allocation2 + $0x500] sm:$0xff]
    %v2948 = vld [vmem:[#allocation2 + $0x508] sm:$0xff]
    %v2949 = vld [vmem:[#allocation2 + $0x510] sm:$0xff]
    %v2950 = vld [vmem:[#allocation2 + $0x518] sm:$0xff]
    %v2951 = vld [vmem:[#allocation2 + $0x520] sm:$0xff]
    %v2952 = vld [vmem:[#allocation2 + $0x528] sm:$0xff]
    %v2953 = vld [vmem:[#allocation2 + $0x530] sm:$0xff]
    %v2954 = vld [vmem:[#allocation2 + $0x538] sm:$0xff]
    %v2955 = vld [vmem:[#allocation2 + $0x540] sm:$0xff]
    %v2956 = vld [vmem:[#allocation2 + $0x548] sm:$0xff]
    %v2957 = vld [vmem:[#allocation2 + $0x550] sm:$0xff]
    %v2958 = vld [vmem:[#allocation2 + $0x558] sm:$0xff]
    %v2959 = vld [vmem:[#allocation2 + $0x560] sm:$0xff]
    %v2960 = vld [vmem:[#allocation2 + $0x568] sm:$0xff]
    %v2961 = vld [vmem:[#allocation2 + $0x570] sm:$0xff]
    %v2962 = vld [vmem:[#allocation2 + $0x578] sm:$0xff]
    %v2963 = vld [vmem:[#allocation2 + $0x580] sm:$0xff]
    %v2964 = vld [vmem:[#allocation2 + $0x588] sm:$0xff]
    %v2965 = vld [vmem:[#allocation2 + $0x590] sm:$0xff]
    %v2966 = vld [vmem:[#allocation2 + $0x598] sm:$0xff]
    %v2967 = vld [vmem:[#allocation2 + $0x5a0] sm:$0xff]
    %v2968 = vld [vmem:[#allocation2 + $0x5a8] sm:$0xff]
    %v2969 = vld [vmem:[#allocation2 + $0x5b0] sm:$0xff]
    %v2970 = vld [vmem:[#allocation2 + $0x5b8] sm:$0xff]
    %v2971 = vld [vmem:[#allocation2 + $0x5c0] sm:$0xff]
    %v2972 = vld [vmem:[#allocation2 + $0x5c8] sm:$0xff]
    %v2973 = vld [vmem:[#allocation2 + $0x5d0] sm:$0xff]
    %v2974 = vld [vmem:[#allocation2 + $0x5d8] sm:$0xff]
    %v2975 = vld [vmem:[#allocation2 + $0x5e0] sm:$0xff]
    %v2976 = vld [vmem:[#allocation2 + $0x5e8] sm:$0xff]
    %v2977 = vld [vmem:[#allocation2 + $0x5f0] sm:$0xff]
    %v2978 = vld [vmem:[#allocation2 + $0x5f8] sm:$0xff]
    %v2979 = vld [vmem:[#allocation2 + $0x600] sm:$0xff]
    %v2980 = vld [vmem:[#allocation2 + $0x608] sm:$0xff]
    %v2981 = vld [vmem:[#allocation2 + $0x610] sm:$0xff]
    %v2982 = vld [vmem:[#allocation2 + $0x618] sm:$0xff]
    %v2983 = vld [vmem:[#allocation2 + $0x620] sm:$0xff]
    %v2984 = vld [vmem:[#allocation2 + $0x628] sm:$0xff]
    %v2985 = vld [vmem:[#allocation2 + $0x630] sm:$0xff]
    %v2986 = vld [vmem:[#allocation2 + $0x638] sm:$0xff]
    %v2987 = vld [vmem:[#allocation2 + $0x640] sm:$0xff]
    %v2988 = vld [vmem:[#allocation2 + $0x648] sm:$0xff]
    %v2989 = vld [vmem:[#allocation2 + $0x650] sm:$0xff]
    %v2990 = vld [vmem:[#allocation2 + $0x658] sm:$0xff]
    %v2991 = vld [vmem:[#allocation2 + $0x660] sm:$0xff]
    %v2992 = vld [vmem:[#allocation2 + $0x668] sm:$0xff]
    %v2993 = vld [vmem:[#allocation2 + $0x670] sm:$0xff]
    %v2994 = vld [vmem:[#allocation2 + $0x678] sm:$0xff]
    %v2995 = vld [vmem:[#allocation2 + $0x680] sm:$0xff]
    %v2996 = vld [vmem:[#allocation2 + $0x688] sm:$0xff]
    %v2997 = vld [vmem:[#allocation2 + $0x690] sm:$0xff]
    %v2998 = vld [vmem:[#allocation2 + $0x698] sm:$0xff]
    %v2999 = vld [vmem:[#allocation2 + $0x6a0] sm:$0xff]
    %v3000 = vld [vmem:[#allocation2 + $0x6a8] sm:$0xff]
    %v3001 = vld [vmem:[#allocation2 + $0x6b0] sm:$0xff]
    %v3002 = vld [vmem:[#allocation2 + $0x6b8] sm:$0xff]
    %v3003 = vld [vmem:[#allocation2 + $0x6c0] sm:$0xff]
    %v3004 = vld [vmem:[#allocation2 + $0x6c8] sm:$0xff]
    %v3005 = vld [vmem:[#allocation2 + $0x6d0] sm:$0xff]
    %v3006 = vld [vmem:[#allocation2 + $0x6d8] sm:$0xff]
    %v3007 = vld [vmem:[#allocation2 + $0x6e0] sm:$0xff]
    %v3008 = vld [vmem:[#allocation2 + $0x6e8] sm:$0xff]
    %v3009 = vld [vmem:[#allocation2 + $0x6f0] sm:$0xff]
    %v3010 = vld [vmem:[#allocation2 + $0x6f8] sm:$0xff]
    %v3011 = vld [vmem:[#allocation2 + $0x700] sm:$0xff]
    %v3012 = vld [vmem:[#allocation2 + $0x708] sm:$0xff]
    %v3013 = vld [vmem:[#allocation2 + $0x710] sm:$0xff]
    %v3014 = vld [vmem:[#allocation2 + $0x718] sm:$0xff]
    %v3015 = vld [vmem:[#allocation2 + $0x720] sm:$0xff]
    %v3016 = vld [vmem:[#allocation2 + $0x728] sm:$0xff]
    %v3017 = vld [vmem:[#allocation2 + $0x730] sm:$0xff]
    %v3018 = vld [vmem:[#allocation2 + $0x738] sm:$0xff]
    %v3019 = vld [vmem:[#allocation2 + $0x740] sm:$0xff]
    %v3020 = vld [vmem:[#allocation2 + $0x748] sm:$0xff]
    %v3021 = vld [vmem:[#allocation2 + $0x750] sm:$0xff]
    %v3022 = vld [vmem:[#allocation2 + $0x758] sm:$0xff]
    %v3023 = vld [vmem:[#allocation2 + $0x760] sm:$0xff]
    %v3024 = vld [vmem:[#allocation2 + $0x768] sm:$0xff]
    %v3025 = vld [vmem:[#allocation2 + $0x770] sm:$0xff]
    %v3026 = vld [vmem:[#allocation2 + $0x778] sm:$0xff]
    %v3027 = vld [vmem:[#allocation2 + $0x780] sm:$0xff]
    %v3028 = vld [vmem:[#allocation2 + $0x788] sm:$0xff]
    %v3029 = vld [vmem:[#allocation2 + $0x790] sm:$0xff]
    %v3030 = vld [vmem:[#allocation2 + $0x798] sm:$0xff]
    %v3031 = vld [vmem:[#allocation2 + $0x7a0] sm:$0xff]
    %v3032 = vld [vmem:[#allocation2 + $0x7a8] sm:$0xff]
    %v3033 = vld [vmem:[#allocation2 + $0x7b0] sm:$0xff]
    %v3034 = vld [vmem:[#allocation2 + $0x7b8] sm:$0xff]
    %v3035 = vld [vmem:[#allocation2 + $0x7c0] sm:$0xff]
    %v3036 = vld [vmem:[#allocation2 + $0x7c8] sm:$0xff]
    %v3037 = vld [vmem:[#allocation2 + $0x7d0] sm:$0xff]
    %v3038 = vld [vmem:[#allocation2 + $0x7d8] sm:$0xff]
    %v3039 = vld [vmem:[#allocation2 + $0x7e0] sm:$0xff]
    %v3040 = vld [vmem:[#allocation2 + $0x7e8] sm:$0xff]
    %v3041 = vld [vmem:[#allocation2 + $0x7f0] sm:$0xff]
    %v3042 = vld [vmem:[#allocation2 + $0x7f8] sm:$0xff]
    %v3043 = vld [vmem:[#allocation2 + $0x800] sm:$0xff]
    %v3044 = vld [vmem:[#allocation2 + $0x808] sm:$0xff]
    %v3045 = vld [vmem:[#allocation2 + $0x810] sm:$0xff]
    %v3046 = vld [vmem:[#allocation2 + $0x818] sm:$0xff]
    %v3047 = vld [vmem:[#allocation2 + $0x820] sm:$0xff]
    %v3048 = vld [vmem:[#allocation2 + $0x828] sm:$0xff]
    %v3049 = vld [vmem:[#allocation2 + $0x830] sm:$0xff]
    %v3050 = vld [vmem:[#allocation2 + $0x838] sm:$0xff]
    %v3051 = vld [vmem:[#allocation2 + $0x840] sm:$0xff]
    %v3052 = vld [vmem:[#allocation2 + $0x848] sm:$0xff]
    %v3053 = vld [vmem:[#allocation2 + $0x850] sm:$0xff]
    %v3054 = vld [vmem:[#allocation2 + $0x858] sm:$0xff]
    %v3055 = vld [vmem:[#allocation2 + $0x860] sm:$0xff]
    %v3056 = vld [vmem:[#allocation2 + $0x868] sm:$0xff]
    %v3057 = vld [vmem:[#allocation2 + $0x870] sm:$0xff]
    %v3058 = vld [vmem:[#allocation2 + $0x878] sm:$0xff]
    %v3059 = vld [vmem:[#allocation2 + $0x880] sm:$0xff]
    %v3060 = vld [vmem:[#allocation2 + $0x888] sm:$0xff]
    %v3061 = vld [vmem:[#allocation2 + $0x890] sm:$0xff]
    %v3062 = vld [vmem:[#allocation2 + $0x898] sm:$0xff]
    %v3063 = vld [vmem:[#allocation2 + $0x8a0] sm:$0xff]
    %v3064 = vld [vmem:[#allocation2 + $0x8a8] sm:$0xff]
    %v3065 = vld [vmem:[#allocation2 + $0x8b0] sm:$0xff]
    %v3066 = vld [vmem:[#allocation2 + $0x8b8] sm:$0xff]
    %v3067 = vld [vmem:[#allocation2 + $0x8c0] sm:$0xff]
    %v3068 = vld [vmem:[#allocation2 + $0x8c8] sm:$0xff]
    %v3069 = vld [vmem:[#allocation2 + $0x8d0] sm:$0xff]
    %v3070 = vld [vmem:[#allocation2 + $0x8d8] sm:$0xff]
    %v3071 = vld [vmem:[#allocation2 + $0x8e0] sm:$0xff]
    %v3072 = vld [vmem:[#allocation2 + $0x8e8] sm:$0xff]
    %v3073 = vld [vmem:[#allocation2 + $0x8f0] sm:$0xff]
    %v3074 = vld [vmem:[#allocation2 + $0x8f8] sm:$0xff]
    %v3075 = vld [vmem:[#allocation2 + $0x900] sm:$0xff]
    %v3076 = vld [vmem:[#allocation2 + $0x908] sm:$0xff]
    %v3077 = vld [vmem:[#allocation2 + $0x910] sm:$0xff]
    %v3078 = vld [vmem:[#allocation2 + $0x918] sm:$0xff]
    %v3079 = vld [vmem:[#allocation2 + $0x920] sm:$0xff]
    %v3080 = vld [vmem:[#allocation2 + $0x928] sm:$0xff]
    %v3081 = vld [vmem:[#allocation2 + $0x930] sm:$0xff]
    %v3082 = vld [vmem:[#allocation2 + $0x938] sm:$0xff]
    %v3083 = vld [vmem:[#allocation2 + $0x940] sm:$0xff]
    %v3084 = vld [vmem:[#allocation2 + $0x948] sm:$0xff]
    %v3085 = vld [vmem:[#allocation2 + $0x950] sm:$0xff]
    %v3086 = vld [vmem:[#allocation2 + $0x958] sm:$0xff]
    %v3087 = vld [vmem:[#allocation2 + $0x960] sm:$0xff]
    %v3088 = vld [vmem:[#allocation2 + $0x968] sm:$0xff]
    %v3089 = vld [vmem:[#allocation2 + $0x970] sm:$0xff]
    %v3090 = vld [vmem:[#allocation2 + $0x978] sm:$0xff]
    %v3091 = vld [vmem:[#allocation2 + $0x980] sm:$0xff]
    %v3092 = vld [vmem:[#allocation2 + $0x988] sm:$0xff]
    %v3093 = vld [vmem:[#allocation2 + $0x990] sm:$0xff]
    %v3094 = vld [vmem:[#allocation2 + $0x998] sm:$0xff]
    %v3095 = vld [vmem:[#allocation2 + $0x9a0] sm:$0xff]
    %v3096 = vld [vmem:[#allocation2 + $0x9a8] sm:$0xff]
    %v3097 = vld [vmem:[#allocation2 + $0x9b0] sm:$0xff]
    %v3098 = vld [vmem:[#allocation2 + $0x9b8] sm:$0xff]
    %v3099 = vld [vmem:[#allocation2 + $0x9c0] sm:$0xff]
    %v3100 = vld [vmem:[#allocation2 + $0x9c8] sm:$0xff]
    %v3101 = vld [vmem:[#allocation2 + $0x9d0] sm:$0xff]
    %v3102 = vld [vmem:[#allocation2 + $0x9d8] sm:$0xff]
    %v3103 = vld [vmem:[#allocation2 + $0x9e0] sm:$0xff]
    %v3104 = vld [vmem:[#allocation2 + $0x9e8] sm:$0xff]
    %v3105 = vld [vmem:[#allocation2 + $0x9f0] sm:$0xff]
    %v3106 = vld [vmem:[#allocation2 + $0x9f8] sm:$0xff]
    %v3107 = vld [vmem:[#allocation2 + $0xa00] sm:$0xff]
    %v3108 = vld [vmem:[#allocation2 + $0xa08] sm:$0xff]
    %v3109 = vld [vmem:[#allocation2 + $0xa10] sm:$0xff]
    %v3110 = vld [vmem:[#allocation2 + $0xa18] sm:$0xff]
    %v3111 = vld [vmem:[#allocation2 + $0xa20] sm:$0xff]
    %v3112 = vld [vmem:[#allocation2 + $0xa28] sm:$0xff]
    %v3113 = vld [vmem:[#allocation2 + $0xa30] sm:$0xff]
    %v3114 = vld [vmem:[#allocation2 + $0xa38] sm:$0xff]
    %v3115 = vld [vmem:[#allocation2 + $0xa40] sm:$0xff]
    %v3116 = vld [vmem:[#allocation2 + $0xa48] sm:$0xff]
    %v3117 = vld [vmem:[#allocation2 + $0xa50] sm:$0xff]
    %v3118 = vld [vmem:[#allocation2 + $0xa58] sm:$0xff]
    %v3119 = vld [vmem:[#allocation2 + $0xa60] sm:$0xff]
    %v3120 = vld [vmem:[#allocation2 + $0xa68] sm:$0xff]
    %v3121 = vld [vmem:[#allocation2 + $0xa70] sm:$0xff]
    %v3122 = vld [vmem:[#allocation2 + $0xa78] sm:$0xff]
    %v3123 = vld [vmem:[#allocation2 + $0xa80] sm:$0xff]
    %v3124 = vld [vmem:[#allocation2 + $0xa88] sm:$0xff]
    %v3125 = vld [vmem:[#allocation2 + $0xa90] sm:$0xff]
    %v3126 = vld [vmem:[#allocation2 + $0xa98] sm:$0xff]
    %v3127 = vld [vmem:[#allocation2 + $0xaa0] sm:$0xff]
    %v3128 = vld [vmem:[#allocation2 + $0xaa8] sm:$0xff]
    %v3129 = vld [vmem:[#allocation2 + $0xab0] sm:$0xff]
    %v3130 = vld [vmem:[#allocation2 + $0xab8] sm:$0xff]
    %v3131 = vld [vmem:[#allocation2 + $0xac0] sm:$0xff]
    %v3132 = vld [vmem:[#allocation2 + $0xac8] sm:$0xff]
    %v3133 = vld [vmem:[#allocation2 + $0xad0] sm:$0xff]
    %v3134 = vld [vmem:[#allocation2 + $0xad8] sm:$0xff]
    %v3135 = vld [vmem:[#allocation2 + $0xae0] sm:$0xff]
    %v3136 = vld [vmem:[#allocation2 + $0xae8] sm:$0xff]
    %v3137 = vld [vmem:[#allocation2 + $0xaf0] sm:$0xff]
    %v3138 = vld [vmem:[#allocation2 + $0xaf8] sm:$0xff]
    %v3139 = vld [vmem:[#allocation2 + $0xb00] sm:$0xff]
    %v3140 = vld [vmem:[#allocation2 + $0xb08] sm:$0xff]
    %v3141 = vld [vmem:[#allocation2 + $0xb10] sm:$0xff]
    %v3142 = vld [vmem:[#allocation2 + $0xb18] sm:$0xff]
    %v3143 = vld [vmem:[#allocation2 + $0xb20] sm:$0xff]
    %v3144 = vld [vmem:[#allocation2 + $0xb28] sm:$0xff]
    %v3145 = vld [vmem:[#allocation2 + $0xb30] sm:$0xff]
    %v3146 = vld [vmem:[#allocation2 + $0xb38] sm:$0xff]
    %v3147 = vld [vmem:[#allocation2 + $0xb40] sm:$0xff]
    %v3148 = vld [vmem:[#allocation2 + $0xb48] sm:$0xff]
    %v3149 = vld [vmem:[#allocation2 + $0xb50] sm:$0xff]
    %v3150 = vld [vmem:[#allocation2 + $0xb58] sm:$0xff]
    %v3151 = vld [vmem:[#allocation2 + $0xb60] sm:$0xff]
    %v3152 = vld [vmem:[#allocation2 + $0xb68] sm:$0xff]
    %v3153 = vld [vmem:[#allocation2 + $0xb70] sm:$0xff]
    %v3154 = vld [vmem:[#allocation2 + $0xb78] sm:$0xff]
    %v3155 = vld [vmem:[#allocation2 + $0xb80] sm:$0xff]
    %v3156 = vld [vmem:[#allocation2 + $0xb88] sm:$0xff]
    %v3157 = vld [vmem:[#allocation2 + $0xb90] sm:$0xff]
    %v3158 = vld [vmem:[#allocation2 + $0xb98] sm:$0xff]
    %v3159 = vld [vmem:[#allocation2 + $0xba0] sm:$0xff]
    %v3160 = vld [vmem:[#allocation2 + $0xba8] sm:$0xff]
    %v3161 = vld [vmem:[#allocation2 + $0xbb0] sm:$0xff]
    %v3162 = vld [vmem:[#allocation2 + $0xbb8] sm:$0xff]
    %v3163 = vld [vmem:[#allocation2 + $0xbc0] sm:$0xff]
    %v3164 = vld [vmem:[#allocation2 + $0xbc8] sm:$0xff]
    %v3165 = vld [vmem:[#allocation2 + $0xbd0] sm:$0xff]
    %v3166 = vld [vmem:[#allocation2 + $0xbd8] sm:$0xff]
    %v3167 = vld [vmem:[#allocation2 + $0xbe0] sm:$0xff]
    %v3168 = vld [vmem:[#allocation2 + $0xbe8] sm:$0xff]
    %v3169 = vld [vmem:[#allocation2 + $0xbf0] sm:$0xff]
    %v3170 = vld [vmem:[#allocation2 + $0xbf8] sm:$0xff]
    %v3171 = vld [vmem:[#allocation2 + $0xc00] sm:$0xff]
    %v3172 = vld [vmem:[#allocation2 + $0xc08] sm:$0xff]
    %v3173 = vld [vmem:[#allocation2 + $0xc10] sm:$0xff]
    %v3174 = vld [vmem:[#allocation2 + $0xc18] sm:$0xff]
    %v3175 = vld [vmem:[#allocation2 + $0xc20] sm:$0xff]
    %v3176 = vld [vmem:[#allocation2 + $0xc28] sm:$0xff]
    %v3177 = vld [vmem:[#allocation2 + $0xc30] sm:$0xff]
    %v3178 = vld [vmem:[#allocation2 + $0xc38] sm:$0xff]
    %v3179 = vld [vmem:[#allocation2 + $0xc40] sm:$0xff]
    %v3180 = vld [vmem:[#allocation2 + $0xc48] sm:$0xff]
    %v3181 = vld [vmem:[#allocation2 + $0xc50] sm:$0xff]
    %v3182 = vld [vmem:[#allocation2 + $0xc58] sm:$0xff]
    %v3183 = vld [vmem:[#allocation2 + $0xc60] sm:$0xff]
    %v3184 = vld [vmem:[#allocation2 + $0xc68] sm:$0xff]
    %v3185 = vld [vmem:[#allocation2 + $0xc70] sm:$0xff]
    %v3186 = vld [vmem:[#allocation2 + $0xc78] sm:$0xff]
    %v3187 = vld [vmem:[#allocation2 + $0xc80] sm:$0xff]
    %v3188 = vld [vmem:[#allocation2 + $0xc88] sm:$0xff]
    %v3189 = vld [vmem:[#allocation2 + $0xc90] sm:$0xff]
    %v3190 = vld [vmem:[#allocation2 + $0xc98] sm:$0xff]
    %v3191 = vld [vmem:[#allocation2 + $0xca0] sm:$0xff]
    %v3192 = vld [vmem:[#allocation2 + $0xca8] sm:$0xff]
    %v3193 = vld [vmem:[#allocation2 + $0xcb0] sm:$0xff]
    %v3194 = vld [vmem:[#allocation2 + $0xcb8] sm:$0xff]
    %v3195 = vld [vmem:[#allocation2 + $0xcc0] sm:$0xff]
    %v3196 = vld [vmem:[#allocation2 + $0xcc8] sm:$0xff]
    %v3197 = vld [vmem:[#allocation2 + $0xcd0] sm:$0xff]
    %v3198 = vld [vmem:[#allocation2 + $0xcd8] sm:$0xff]
    %v3199 = vld [vmem:[#allocation2 + $0xce0] sm:$0xff]
    %v3200 = vld [vmem:[#allocation2 + $0xce8] sm:$0xff]
    %v3201 = vld [vmem:[#allocation2 + $0xcf0] sm:$0xff]
    %v3202 = vld [vmem:[#allocation2 + $0xcf8] sm:$0xff]
    %v3203 = vld [vmem:[#allocation2 + $0xd00] sm:$0xff]
    %v3204 = vld [vmem:[#allocation2 + $0xd08] sm:$0xff]
    %v3205 = vld [vmem:[#allocation2 + $0xd10] sm:$0xff]
    %v3206 = vld [vmem:[#allocation2 + $0xd18] sm:$0xff]
    %v3207 = vld [vmem:[#allocation2 + $0xd20] sm:$0xff]
    %v3208 = vld [vmem:[#allocation2 + $0xd28] sm:$0xff]
    %v3209 = vld [vmem:[#allocation2 + $0xd30] sm:$0xff]
    %v3210 = vld [vmem:[#allocation2 + $0xd38] sm:$0xff]
    %v3211 = vld [vmem:[#allocation2 + $0xd40] sm:$0xff]
    %v3212 = vld [vmem:[#allocation2 + $0xd48] sm:$0xff]
    %v3213 = vld [vmem:[#allocation2 + $0xd50] sm:$0xff]
    %v3214 = vld [vmem:[#allocation2 + $0xd58] sm:$0xff]
    %v3215 = vld [vmem:[#allocation2 + $0xd60] sm:$0xff]
    %v3216 = vld [vmem:[#allocation2 + $0xd68] sm:$0xff]
    %v3217 = vld [vmem:[#allocation2 + $0xd70] sm:$0xff]
    %v3218 = vld [vmem:[#allocation2 + $0xd78] sm:$0xff]
    %v3219 = vld [vmem:[#allocation2 + $0xd80] sm:$0xff]
    %v3220 = vld [vmem:[#allocation2 + $0xd88] sm:$0xff]
    %v3221 = vld [vmem:[#allocation2 + $0xd90] sm:$0xff]
    %v3222 = vld [vmem:[#allocation2 + $0xd98] sm:$0xff]
    %v3223 = vld [vmem:[#allocation2 + $0xda0] sm:$0xff]
    %v3224 = vld [vmem:[#allocation2 + $0xda8] sm:$0xff]
    %v3225 = vld [vmem:[#allocation2 + $0xdb0] sm:$0xff]
    %v3226 = vld [vmem:[#allocation2 + $0xdb8] sm:$0xff]
    %v3227 = vld [vmem:[#allocation2 + $0xdc0] sm:$0xff]
    %v3228 = vld [vmem:[#allocation2 + $0xdc8] sm:$0xff]
    %v3229 = vld [vmem:[#allocation2 + $0xdd0] sm:$0xff]
    %v3230 = vld [vmem:[#allocation2 + $0xdd8] sm:$0xff]
    %v3231 = vld [vmem:[#allocation2 + $0xde0] sm:$0xff]
    %v3232 = vld [vmem:[#allocation2 + $0xde8] sm:$0xff]
    %v3233 = vld [vmem:[#allocation2 + $0xdf0] sm:$0xff]
    %v3234 = vld [vmem:[#allocation2 + $0xdf8] sm:$0xff]
    %v3235 = vld [vmem:[#allocation16] sm:$0xff]
    %v3237 = vlaneseq
    %v3238 = vshrl.u32 %v3237, 7
    %v3239 = vsub.s32 0, %v3238
    %v3240 = vrot.slane %v3235, %v3239
    %v3241 = vlaneseq
    %v3242 = vshrl.u32 %v3241, 7
    %v3243 = vsub.s32 1, %v3242
    %v3244 = vrot.slane %v3235, %v3243
    %v3245 = vlaneseq
    %v3246 = vshrl.u32 %v3245, 7
    %v3247 = vsub.s32 2, %v3246
    %v3248 = vrot.slane %v3235, %v3247
    %v3249 = vlaneseq
    %v3250 = vshrl.u32 %v3249, 7
    %v3251 = vsub.s32 3, %v3250
    %v3252 = vrot.slane %v3235, %v3251
    %v3253 = vlaneseq
    %v3254 = vshrl.u32 %v3253, 7
    %v3255 = vsub.s32 4, %v3254
    %v3256 = vrot.slane %v3235, %v3255
    %v3257 = vlaneseq
    %v3258 = vshrl.u32 %v3257, 7
    %v3259 = vsub.s32 5, %v3258
    %v3260 = vrot.slane %v3235, %v3259
    %v3261 = vlaneseq
    %v3262 = vshrl.u32 %v3261, 7
    %v3263 = vsub.s32 6, %v3262
    %v3264 = vrot.slane %v3235, %v3263
    %3272 = vmatprep.subr.bf16.mxu0 %v2788
    %3273 = vmatpush1.bf16.msra.mxu0 %v2787
    %3274 = vmatprep.subr.bf16.mxu0 %v2795
    %3275 = vmatpush1.bf16.msra.mxu0 %v2794
    %3276 = vmatprep.subr.bf16.mxu0 %v2802
    %3277 = vmatpush1.bf16.msra.mxu0 %v2801
    %3278 = vmatprep.subr.bf16.mxu0 %v2809
    %3279 = vmatpush1.bf16.msra.mxu0 %v2808
    %3280 = vmatprep.subr.bf16.mxu0 %v2816
    %3281 = vmatpush1.bf16.msra.mxu0 %v2815
    %3282 = vmatprep.subr.bf16.mxu0 %v2823
    %3283 = vmatpush1.bf16.msra.mxu0 %v2822
    %3284 = vmatprep.subr.bf16.mxu0 %v2830
    %3285 = vmatpush1.bf16.msra.mxu0 %v2829
    %3286 = vmatprep.subr.bf16.mxu0 %v2837
    %3287 = vmatpush1.bf16.msra.mxu0 %v2836
    %3288 = vmatprep.subr.bf16.mxu0 %v2844
    %3289 = vmatpush1.bf16.msra.mxu0 %v2843
    %3290 = vmatprep.subr.bf16.mxu0 %v2851
    %3291 = vmatpush1.bf16.msra.mxu0 %v2850
    %3292 = vmatprep.subr.bf16.mxu0 %v2858
    %3293 = vmatpush1.bf16.msra.mxu0 %v2857
    %3294 = vmatprep.subr.bf16.mxu0 %v2865
    %3295 = vmatpush1.bf16.msra.mxu0 %v2864
    %3296 = vmatprep.subr.bf16.mxu0 %v2872
    %3297 = vmatpush1.bf16.msra.mxu0 %v2871
    %3298 = vmatprep.subr.bf16.mxu0 %v2879
    %3299 = vmatpush1.bf16.msra.mxu0 %v2878
    %3300 = vmatprep.subr.bf16.mxu0 %v2886
    %3301 = vmatpush1.bf16.msra.mxu0 %v2885
    %3302 = vmatprep.subr.bf16.mxu0 %v2893
    %3303 = vmatpush1.bf16.msra.mxu0 %v2892
    %3304 = vmatprep.mubr.bf16.mxu0 %v2776
    %3305 = vmatmul.mubr.bf16.gmra.mrb[0].mxu0 %v2775
    %v3306 = vpop.f32.mrb[0].mxu0
    %v3307 = vadd.f32 %v3240, %v3306
    %v3308 = vpop.f32.mrb[0].mxu0
    %v3309 = vadd.f32 %v3244, %v3308
    %v3310 = vpop.f32.mrb[0].mxu0
    %v3311 = vadd.f32 %v3240, %v3310
    %v3312 = vpop.f32.mrb[0].mxu0
    %v3313 = vadd.f32 %v3244, %v3312
    %3314 = vdwg.mxu0
    %3315 = vmatprep.subr.bf16.mxu0 %v2900
    %3316 = vmatpush1.bf16.msra.mxu0 %v2899
    %3317 = vmatprep.subr.bf16.mxu0 %v2907
    %3318 = vmatpush1.bf16.msra.mxu0 %v2906
    %3319 = vmatprep.subr.bf16.mxu0 %v2914
    %3320 = vmatpush1.bf16.msra.mxu0 %v2913
    %3321 = vmatprep.subr.bf16.mxu0 %v2921
    %3322 = vmatpush1.bf16.msra.mxu0 %v2920
    %3323 = vmatprep.subr.bf16.mxu0 %v2928
    %3324 = vmatpush1.bf16.msra.mxu0 %v2927
    %3325 = vmatprep.subr.bf16.mxu0 %v2935
    %3326 = vmatpush1.bf16.msra.mxu0 %v2934
    %3327 = vmatprep.subr.bf16.mxu0 %v2942
    %3328 = vmatpush1.bf16.msra.mxu0 %v2941
    %3329 = vmatprep.subr.bf16.mxu0 %v2949
    %3330 = vmatpush1.bf16.msra.mxu0 %v2948
    %3331 = vmatprep.subr.bf16.mxu0 %v2956
    %3332 = vmatpush1.bf16.msra.mxu0 %v2955
    %3333 = vmatprep.subr.bf16.mxu0 %v2963
    %3334 = vmatpush1.bf16.msra.mxu0 %v2962
    %3335 = vmatprep.subr.bf16.mxu0 %v2970
    %3336 = vmatpush1.bf16.msra.mxu0 %v2969
    %3337 = vmatprep.subr.bf16.mxu0 %v2977
    %3338 = vmatpush1.bf16.msra.mxu0 %v2976
    %3339 = vmatprep.subr.bf16.mxu0 %v2984
    %3340 = vmatpush1.bf16.msra.mxu0 %v2983
    %3341 = vmatprep.subr.bf16.mxu0 %v2991
    %3342 = vmatpush1.bf16.msra.mxu0 %v2990
    %3343 = vmatprep.subr.bf16.mxu0 %v2998
    %3344 = vmatpush1.bf16.msra.mxu0 %v2997
    %3345 = vmatprep.subr.bf16.mxu0 %v3005
    %3346 = vmatpush1.bf16.msra.mxu0 %v3004
    %3347 = vmatprep.mubr.bf16.mxu0 %v2778
    %3348 = vmatmul.mubr.bf16.gmra.mrb[0].mxu0 %v2777
    %v3349 = vpop.f32.mrb[0].mxu0
    %v3350 = vadd.f32 %v3307, %v3349
    %v3351 = vpop.f32.mrb[0].mxu0
    %v3352 = vadd.f32 %v3309, %v3351
    %v3353 = vpop.f32.mrb[0].mxu0
    %v3354 = vadd.f32 %v3311, %v3353
    %v3355 = vpop.f32.mrb[0].mxu0
    %v3356 = vadd.f32 %v3313, %v3355
    %3357 = vdwg.mxu0
    %3358 = vmatprep.subr.bf16.mxu0 %v3012
    %3359 = vmatpush1.bf16.msra.mxu0 %v3011
    %3360 = vmatprep.subr.bf16.mxu0 %v3019
    %3361 = vmatpush1.bf16.msra.mxu0 %v3018
    %3362 = vmatprep.subr.bf16.mxu0 %v3026
    %3363 = vmatpush1.bf16.msra.mxu0 %v3025
    %3364 = vmatprep.subr.bf16.mxu0 %v3033
    %3365 = vmatpush1.bf16.msra.mxu0 %v3032
    %3366 = vmatprep.subr.bf16.mxu0 %v3040
    %3367 = vmatpush1.bf16.msra.mxu0 %v3039
    %3368 = vmatprep.subr.bf16.mxu0 %v3047
    %3369 = vmatpush1.bf16.msra.mxu0 %v3046
    %3370 = vmatprep.subr.bf16.mxu0 %v3054
    %3371 = vmatpush1.bf16.msra.mxu0 %v3053
    %3372 = vmatprep.subr.bf16.mxu0 %v3061
    %3373 = vmatpush1.bf16.msra.mxu0 %v3060
    %3374 = vmatprep.subr.bf16.mxu0 %v3068
    %3375 = vmatpush1.bf16.msra.mxu0 %v3067
    %3376 = vmatprep.subr.bf16.mxu0 %v3075
    %3377 = vmatpush1.bf16.msra.mxu0 %v3074
    %3378 = vmatprep.subr.bf16.mxu0 %v3082
    %3379 = vmatpush1.bf16.msra.mxu0 %v3081
    %3380 = vmatprep.subr.bf16.mxu0 %v3089
    %3381 = vmatpush1.bf16.msra.mxu0 %v3088
    %3382 = vmatprep.subr.bf16.mxu0 %v3096
    %3383 = vmatpush1.bf16.msra.mxu0 %v3095
    %3384 = vmatprep.subr.bf16.mxu0 %v3103
    %3385 = vmatpush1.bf16.msra.mxu0 %v3102
    %3386 = vmatprep.subr.bf16.mxu0 %v3110
    %3387 = vmatpush1.bf16.msra.mxu0 %v3109
    %3388 = vmatprep.subr.bf16.mxu0 %v3117
    %3389 = vmatpush1.bf16.msra.mxu0 %v3116
    %3390 = vmatprep.mubr.bf16.mxu0 %v2780
    %3391 = vmatmul.mubr.bf16.gmra.mrb[0].mxu0 %v2779
    %v3392 = vpop.f32.mrb[0].mxu0
    %v3393 = vadd.f32 %v3350, %v3392
    %v3394 = vpop.f32.mrb[0].mxu0
    %v3395 = vadd.f32 %v3352, %v3394
    %v3396 = vpop.f32.mrb[0].mxu0
    %v3397 = vadd.f32 %v3354, %v3396
    %v3398 = vpop.f32.mrb[0].mxu0
    %v3399 = vadd.f32 %v3356, %v3398
    %3400 = vdwg.mxu0
    %3401 = vmatprep.subr.bf16.mxu0 %v3124
    %3402 = vmatpush1.bf16.msra.mxu0 %v3123
    %3403 = vmatprep.subr.bf16.mxu0 %v3131
    %3404 = vmatpush1.bf16.msra.mxu0 %v3130
    %3405 = vmatprep.subr.bf16.mxu0 %v3138
    %3406 = vmatpush1.bf16.msra.mxu0 %v3137
    %3407 = vmatprep.subr.bf16.mxu0 %v3145
    %3408 = vmatpush1.bf16.msra.mxu0 %v3144
    %3409 = vmatprep.subr.bf16.mxu0 %v3152
    %3410 = vmatpush1.bf16.msra.mxu0 %v3151
    %3411 = vmatprep.subr.bf16.mxu0 %v3159
    %3412 = vmatpush1.bf16.msra.mxu0 %v3158
    %3413 = vmatprep.subr.bf16.mxu0 %v3166
    %3414 = vmatpush1.bf16.msra.mxu0 %v3165
    %3415 = vmatprep.subr.bf16.mxu0 %v3173
    %3416 = vmatpush1.bf16.msra.mxu0 %v3172
    %3417 = vmatprep.subr.bf16.mxu0 %v3180
    %3418 = vmatpush1.bf16.msra.mxu0 %v3179
    %3419 = vmatprep.subr.bf16.mxu0 %v3187
    %3420 = vmatpush1.bf16.msra.mxu0 %v3186
    %3421 = vmatprep.subr.bf16.mxu0 %v3194
    %3422 = vmatpush1.bf16.msra.mxu0 %v3193
    %3423 = vmatprep.subr.bf16.mxu0 %v3201
    %3424 = vmatpush1.bf16.msra.mxu0 %v3200
    %3425 = vmatprep.subr.bf16.mxu0 %v3208
    %3426 = vmatpush1.bf16.msra.mxu0 %v3207
    %3427 = vmatprep.subr.bf16.mxu0 %v3215
    %3428 = vmatpush1.bf16.msra.mxu0 %v3214
    %3429 = vmatprep.subr.bf16.mxu0 %v3222
    %3430 = vmatpush1.bf16.msra.mxu0 %v3221
    %3431 = vmatprep.subr.bf16.mxu0 %v3229
    %3432 = vmatpush1.bf16.msra.mxu0 %v3228
    %3433 = vmatprep.mubr.bf16.mxu0 %v2782
    %3434 = vmatmul.mubr.bf16.gmra.mrb[0].mxu0 %v2781
    %v3435 = vpop.f32.mrb[0].mxu0
    %v3436 = vadd.f32 %v3393, %v3435
    %v3437 = vpop.f32.mrb[0].mxu0
    %v3438 = vadd.f32 %v3395, %v3437
    %v3439 = vpop.f32.mrb[0].mxu0
    %v3440 = vadd.f32 %v3397, %v3439
    %v3441 = vpop.f32.mrb[0].mxu0
    %v3442 = vadd.f32 %v3399, %v3441
    %3443 = vdwg.mxu0
    %3444 = vmatprep.subr.bf16.mxu0 %v2790
    %3445 = vmatpush1.bf16.msra.mxu0 %v2789
    %3446 = vmatprep.subr.bf16.mxu0 %v2797
    %3447 = vmatpush1.bf16.msra.mxu0 %v2796
    %3448 = vmatprep.subr.bf16.mxu0 %v2804
    %3449 = vmatpush1.bf16.msra.mxu0 %v2803
    %3450 = vmatprep.subr.bf16.mxu0 %v2811
    %3451 = vmatpush1.bf16.msra.mxu0 %v2810
    %3452 = vmatprep.subr.bf16.mxu0 %v2818
    %3453 = vmatpush1.bf16.msra.mxu0 %v2817
    %3454 = vmatprep.subr.bf16.mxu0 %v2825
    %3455 = vmatpush1.bf16.msra.mxu0 %v2824
    %3456 = vmatprep.subr.bf16.mxu0 %v2832
    %3457 = vmatpush1.bf16.msra.mxu0 %v2831
    %3458 = vmatprep.subr.bf16.mxu0 %v2839
    %3459 = vmatpush1.bf16.msra.mxu0 %v2838
    %3460 = vmatprep.subr.bf16.mxu0 %v2846
    %3461 = vmatpush1.bf16.msra.mxu0 %v2845
    %3462 = vmatprep.subr.bf16.mxu0 %v2853
    %3463 = vmatpush1.bf16.msra.mxu0 %v2852
    %3464 = vmatprep.subr.bf16.mxu0 %v2860
    %3465 = vmatpush1.bf16.msra.mxu0 %v2859
    %3466 = vmatprep.subr.bf16.mxu0 %v2867
    %3467 = vmatpush1.bf16.msra.mxu0 %v2866
    %3468 = vmatprep.subr.bf16.mxu0 %v2874
    %3469 = vmatpush1.bf16.msra.mxu0 %v2873
    %3470 = vmatprep.subr.bf16.mxu0 %v2881
    %3471 = vmatpush1.bf16.msra.mxu0 %v2880
    %3472 = vmatprep.subr.bf16.mxu0 %v2888
    %3473 = vmatpush1.bf16.msra.mxu0 %v2887
    %3474 = vmatprep.subr.bf16.mxu0 %v2895
    %3475 = vmatpush1.bf16.msra.mxu0 %v2894
    %3476 = vmatprep.mubr.bf16.mxu0 %v2776
    %3477 = vmatmul.mubr.bf16.gmra.mrb[0].mxu0 %v2775
    %v3478 = vpop.f32.mrb[0].mxu0
    %v3479 = vadd.f32 %v3248, %v3478
    %v3480 = vpop.f32.mrb[0].mxu0
    %v3481 = vadd.f32 %v3252, %v3480
    %v3482 = vpop.f32.mrb[0].mxu0
    %v3483 = vadd.f32 %v3248, %v3482
    %v3484 = vpop.f32.mrb[0].mxu0
    %v3485 = vadd.f32 %v3252, %v3484
    %3486 = vdwg.mxu0
    %3487 = vmatprep.subr.bf16.mxu0 %v2902
    %3488 = vmatpush1.bf16.msra.mxu0 %v2901
    %3489 = vmatprep.subr.bf16.mxu0 %v2909
    %3490 = vmatpush1.bf16.msra.mxu0 %v2908
    %3491 = vmatprep.subr.bf16.mxu0 %v2916
    %3492 = vmatpush1.bf16.msra.mxu0 %v2915
    %3493 = vmatprep.subr.bf16.mxu0 %v2923
    %3494 = vmatpush1.bf16.msra.mxu0 %v2922
    %3495 = vmatprep.subr.bf16.mxu0 %v2930
    %3496 = vmatpush1.bf16.msra.mxu0 %v2929
    %3497 = vmatprep.subr.bf16.mxu0 %v2937
    %3498 = vmatpush1.bf16.msra.mxu0 %v2936
    %3499 = vmatprep.subr.bf16.mxu0 %v2944
    %3500 = vmatpush1.bf16.msra.mxu0 %v2943
    %3501 = vmatprep.subr.bf16.mxu0 %v2951
    %3502 = vmatpush1.bf16.msra.mxu0 %v2950
    %3503 = vmatprep.subr.bf16.mxu0 %v2958
    %3504 = vmatpush1.bf16.msra.mxu0 %v2957
    %3505 = vmatprep.subr.bf16.mxu0 %v2965
    %3506 = vmatpush1.bf16.msra.mxu0 %v2964
    %3507 = vmatprep.subr.bf16.mxu0 %v2972
    %3508 = vmatpush1.bf16.msra.mxu0 %v2971
    %3509 = vmatprep.subr.bf16.mxu0 %v2979
    %3510 = vmatpush1.bf16.msra.mxu0 %v2978
    %3511 = vmatprep.subr.bf16.mxu0 %v2986
    %3512 = vmatpush1.bf16.msra.mxu0 %v2985
    %3513 = vmatprep.subr.bf16.mxu0 %v2993
    %3514 = vmatpush1.bf16.msra.mxu0 %v2992
    %3515 = vmatprep.subr.bf16.mxu0 %v3000
    %3516 = vmatpush1.bf16.msra.mxu0 %v2999
    %3517 = vmatprep.subr.bf16.mxu0 %v3007
    %3518 = vmatpush1.bf16.msra.mxu0 %v3006
    %3519 = vmatprep.mubr.bf16.mxu0 %v2778
    %3520 = vmatmul.mubr.bf16.gmra.mrb[0].mxu0 %v2777
    %v3521 = vpop.f32.mrb[0].mxu0
    %v3522 = vadd.f32 %v3479, %v3521
    %v3523 = vpop.f32.mrb[0].mxu0
    %v3524 = vadd.f32 %v3481, %v3523
    %v3525 = vpop.f32.mrb[0].mxu0
    %v3526 = vadd.f32 %v3483, %v3525
    %v3527 = vpop.f32.mrb[0].mxu0
    %v3528 = vadd.f32 %v3485, %v3527
    %3529 = vdwg.mxu0
    %3530 = vmatprep.subr.bf16.mxu0 %v3014
    %3531 = vmatpush1.bf16.msra.mxu0 %v3013
    %3532 = vmatprep.subr.bf16.mxu0 %v3021
    %3533 = vmatpush1.bf16.msra.mxu0 %v3020
    %3534 = vmatprep.subr.bf16.mxu0 %v3028
    %3535 = vmatpush1.bf16.msra.mxu0 %v3027
    %3536 = vmatprep.subr.bf16.mxu0 %v3035
    %3537 = vmatpush1.bf16.msra.mxu0 %v3034
    %3538 = vmatprep.subr.bf16.mxu0 %v3042
    %3539 = vmatpush1.bf16.msra.mxu0 %v3041
    %3540 = vmatprep.subr.bf16.mxu0 %v3049
    %3541 = vmatpush1.bf16.msra.mxu0 %v3048
    %3542 = vmatprep.subr.bf16.mxu0 %v3056
    %3543 = vmatpush1.bf16.msra.mxu0 %v3055
    %3544 = vmatprep.subr.bf16.mxu0 %v3063
    %3545 = vmatpush1.bf16.msra.mxu0 %v3062
    %3546 = vmatprep.subr.bf16.mxu0 %v3070
    %3547 = vmatpush1.bf16.msra.mxu0 %v3069
    %3548 = vmatprep.subr.bf16.mxu0 %v3077
    %3549 = vmatpush1.bf16.msra.mxu0 %v3076
    %3550 = vmatprep.subr.bf16.mxu0 %v3084
    %3551 = vmatpush1.bf16.msra.mxu0 %v3083
    %3552 = vmatprep.subr.bf16.mxu0 %v3091
    %3553 = vmatpush1.bf16.msra.mxu0 %v3090
    %3554 = vmatprep.subr.bf16.mxu0 %v3098
    %3555 = vmatpush1.bf16.msra.mxu0 %v3097
    %3556 = vmatprep.subr.bf16.mxu0 %v3105
    %3557 = vmatpush1.bf16.msra.mxu0 %v3104
    %3558 = vmatprep.subr.bf16.mxu0 %v3112
    %3559 = vmatpush1.bf16.msra.mxu0 %v3111
    %3560 = vmatprep.subr.bf16.mxu0 %v3119
    %3561 = vmatpush1.bf16.msra.mxu0 %v3118
    %3562 = vmatprep.mubr.bf16.mxu0 %v2780
    %3563 = vmatmul.mubr.bf16.gmra.mrb[0].mxu0 %v2779
    %v3564 = vpop.f32.mrb[0].mxu0
    %v3565 = vadd.f32 %v3522, %v3564
    %v3566 = vpop.f32.mrb[0].mxu0
    %v3567 = vadd.f32 %v3524, %v3566
    %v3568 = vpop.f32.mrb[0].mxu0
    %v3569 = vadd.f32 %v3526, %v3568
    %v3570 = vpop.f32.mrb[0].mxu0
    %v3571 = vadd.f32 %v3528, %v3570
    %3572 = vdwg.mxu0
    %3573 = vmatprep.subr.bf16.mxu0 %v3126
    %3574 = vmatpush1.bf16.msra.mxu0 %v3125
    %3575 = vmatprep.subr.bf16.mxu0 %v3133
    %3576 = vmatpush1.bf16.msra.mxu0 %v3132
    %3577 = vmatprep.subr.bf16.mxu0 %v3140
    %3578 = vmatpush1.bf16.msra.mxu0 %v3139
    %3579 = vmatprep.subr.bf16.mxu0 %v3147
    %3580 = vmatpush1.bf16.msra.mxu0 %v3146
    %3581 = vmatprep.subr.bf16.mxu0 %v3154
    %3582 = vmatpush1.bf16.msra.mxu0 %v3153
    %3583 = vmatprep.subr.bf16.mxu0 %v3161
    %3584 = vmatpush1.bf16.msra.mxu0 %v3160
    %3585 = vmatprep.subr.bf16.mxu0 %v3168
    %3586 = vmatpush1.bf16.msra.mxu0 %v3167
    %3587 = vmatprep.subr.bf16.mxu0 %v3175
    %3588 = vmatpush1.bf16.msra.mxu0 %v3174
    %3589 = vmatprep.subr.bf16.mxu0 %v3182
    %3590 = vmatpush1.bf16.msra.mxu0 %v3181
    %3591 = vmatprep.subr.bf16.mxu0 %v3189
    %3592 = vmatpush1.bf16.msra.mxu0 %v3188
    %3593 = vmatprep.subr.bf16.mxu0 %v3196
    %3594 = vmatpush1.bf16.msra.mxu0 %v3195
    %3595 = vmatprep.subr.bf16.mxu0 %v3203
    %3596 = vmatpush1.bf16.msra.mxu0 %v3202
    %3597 = vmatprep.subr.bf16.mxu0 %v3210
    %3598 = vmatpush1.bf16.msra.mxu0 %v3209
    %3599 = vmatprep.subr.bf16.mxu0 %v3217
    %3600 = vmatpush1.bf16.msra.mxu0 %v3216
    %3601 = vmatprep.subr.bf16.mxu0 %v3224
    %3602 = vmatpush1.bf16.msra.mxu0 %v3223
    %3603 = vmatprep.subr.bf16.mxu0 %v3231
    %3604 = vmatpush1.bf16.msra.mxu0 %v3230
    %3605 = vmatprep.mubr.bf16.mxu0 %v2782
    %3606 = vmatmul.mubr.bf16.gmra.mrb[0].mxu0 %v2781
    %v3607 = vpop.f32.mrb[0].mxu0
    %v3608 = vadd.f32 %v3565, %v3607
    %v3609 = vpop.f32.mrb[0].mxu0
    %v3610 = vadd.f32 %v3567, %v3609
    %v3611 = vpop.f32.mrb[0].mxu0
    %v3612 = vadd.f32 %v3569, %v3611
    %v3613 = vpop.f32.mrb[0].mxu0
    %v3614 = vadd.f32 %v3571, %v3613
    %3615 = vdwg.mxu0
    %3616 = vmatprep.subr.bf16.mxu0 %v2792
    %3617 = vmatpush1.bf16.msra.mxu0 %v2791
    %3618 = vmatprep.subr.bf16.mxu0 %v2799
    %3619 = vmatpush1.bf16.msra.mxu0 %v2798
    %3620 = vmatprep.subr.bf16.mxu0 %v2806
    %3621 = vmatpush1.bf16.msra.mxu0 %v2805
    %3622 = vmatprep.subr.bf16.mxu0 %v2813
    %3623 = vmatpush1.bf16.msra.mxu0 %v2812
    %3624 = vmatprep.subr.bf16.mxu0 %v2820
    %3625 = vmatpush1.bf16.msra.mxu0 %v2819
    %3626 = vmatprep.subr.bf16.mxu0 %v2827
    %3627 = vmatpush1.bf16.msra.mxu0 %v2826
    %3628 = vmatprep.subr.bf16.mxu0 %v2834
    %3629 = vmatpush1.bf16.msra.mxu0 %v2833
    %3630 = vmatprep.subr.bf16.mxu0 %v2841
    %3631 = vmatpush1.bf16.msra.mxu0 %v2840
    %3632 = vmatprep.subr.bf16.mxu0 %v2848
    %3633 = vmatpush1.bf16.msra.mxu0 %v2847
    %3634 = vmatprep.subr.bf16.mxu0 %v2855
    %3635 = vmatpush1.bf16.msra.mxu0 %v2854
    %3636 = vmatprep.subr.bf16.mxu0 %v2862
    %3637 = vmatpush1.bf16.msra.mxu0 %v2861
    %3638 = vmatprep.subr.bf16.mxu0 %v2869
    %3639 = vmatpush1.bf16.msra.mxu0 %v2868
    %3640 = vmatprep.subr.bf16.mxu0 %v2876
    %3641 = vmatpush1.bf16.msra.mxu0 %v2875
    %3642 = vmatprep.subr.bf16.mxu0 %v2883
    %3643 = vmatpush1.bf16.msra.mxu0 %v2882
    %3644 = vmatprep.subr.bf16.mxu0 %v2890
    %3645 = vmatpush1.bf16.msra.mxu0 %v2889
    %3646 = vmatprep.subr.bf16.mxu0 %v2897
    %3647 = vmatpush1.bf16.msra.mxu0 %v2896
    %3648 = vmatprep.mubr.bf16.mxu0 %v2776
    %3649 = vmatmul.mubr.bf16.gmra.mrb[0].mxu0 %v2775
    %v3650 = vpop.f32.mrb[0].mxu0
    %v3651 = vadd.f32 %v3256, %v3650
    %v3652 = vpop.f32.mrb[0].mxu0
    %v3653 = vadd.f32 %v3260, %v3652
    %v3654 = vpop.f32.mrb[0].mxu0
    %v3655 = vadd.f32 %v3256, %v3654
    %v3656 = vpop.f32.mrb[0].mxu0
    %v3657 = vadd.f32 %v3260, %v3656
    %3658 = vdwg.mxu0
    %3659 = vmatprep.subr.bf16.mxu0 %v2904
    %3660 = vmatpush1.bf16.msra.mxu0 %v2903
    %3661 = vmatprep.subr.bf16.mxu0 %v2911
    %3662 = vmatpush1.bf16.msra.mxu0 %v2910
    %3663 = vmatprep.subr.bf16.mxu0 %v2918
    %3664 = vmatpush1.bf16.msra.mxu0 %v2917
    %3665 = vmatprep.subr.bf16.mxu0 %v2925
    %3666 = vmatpush1.bf16.msra.mxu0 %v2924
    %3667 = vmatprep.subr.bf16.mxu0 %v2932
    %3668 = vmatpush1.bf16.msra.mxu0 %v2931
    %3669 = vmatprep.subr.bf16.mxu0 %v2939
    %3670 = vmatpush1.bf16.msra.mxu0 %v2938
    %3671 = vmatprep.subr.bf16.mxu0 %v2946
    %3672 = vmatpush1.bf16.msra.mxu0 %v2945
    %3673 = vmatprep.subr.bf16.mxu0 %v2953
    %3674 = vmatpush1.bf16.msra.mxu0 %v2952
    %3675 = vmatprep.subr.bf16.mxu0 %v2960
    %3676 = vmatpush1.bf16.msra.mxu0 %v2959
    %3677 = vmatprep.subr.bf16.mxu0 %v2967
    %3678 = vmatpush1.bf16.msra.mxu0 %v2966
    %3679 = vmatprep.subr.bf16.mxu0 %v2974
    %3680 = vmatpush1.bf16.msra.mxu0 %v2973
    %3681 = vmatprep.subr.bf16.mxu0 %v2981
    %3682 = vmatpush1.bf16.msra.mxu0 %v2980
    %3683 = vmatprep.subr.bf16.mxu0 %v2988
    %3684 = vmatpush1.bf16.msra.mxu0 %v2987
    %3685 = vmatprep.subr.bf16.mxu0 %v2995
    %3686 = vmatpush1.bf16.msra.mxu0 %v2994
    %3687 = vmatprep.subr.bf16.mxu0 %v3002
    %3688 = vmatpush1.bf16.msra.mxu0 %v3001
    %3689 = vmatprep.subr.bf16.mxu0 %v3009
    %3690 = vmatpush1.bf16.msra.mxu0 %v3008
    %3691 = vmatprep.mubr.bf16.mxu0 %v2778
    %3692 = vmatmul.mubr.bf16.gmra.mrb[0].mxu0 %v2777
    %v3693 = vpop.f32.mrb[0].mxu0
    %v3694 = vadd.f32 %v3651, %v3693
    %v3695 = vpop.f32.mrb[0].mxu0
    %v3696 = vadd.f32 %v3653, %v3695
    %v3697 = vpop.f32.mrb[0].mxu0
    %v3698 = vadd.f32 %v3655, %v3697
    %v3699 = vpop.f32.mrb[0].mxu0
    %v3700 = vadd.f32 %v3657, %v3699
    %3701 = vdwg.mxu0
    %3702 = vmatprep.subr.bf16.mxu0 %v3016
    %3703 = vmatpush1.bf16.msra.mxu0 %v3015
    %3704 = vmatprep.subr.bf16.mxu0 %v3023
    %3705 = vmatpush1.bf16.msra.mxu0 %v3022
    %3706 = vmatprep.subr.bf16.mxu0 %v3030
    %3707 = vmatpush1.bf16.msra.mxu0 %v3029
    %3708 = vmatprep.subr.bf16.mxu0 %v3037
    %3709 = vmatpush1.bf16.msra.mxu0 %v3036
    %3710 = vmatprep.subr.bf16.mxu0 %v3044
    %3711 = vmatpush1.bf16.msra.mxu0 %v3043
    %3712 = vmatprep.subr.bf16.mxu0 %v3051
    %3713 = vmatpush1.bf16.msra.mxu0 %v3050
    %3714 = vmatprep.subr.bf16.mxu0 %v3058
    %3715 = vmatpush1.bf16.msra.mxu0 %v3057
    %3716 = vmatprep.subr.bf16.mxu0 %v3065
    %3717 = vmatpush1.bf16.msra.mxu0 %v3064
    %3718 = vmatprep.subr.bf16.mxu0 %v3072
    %3719 = vmatpush1.bf16.msra.mxu0 %v3071
    %3720 = vmatprep.subr.bf16.mxu0 %v3079
    %3721 = vmatpush1.bf16.msra.mxu0 %v3078
    %3722 = vmatprep.subr.bf16.mxu0 %v3086
    %3723 = vmatpush1.bf16.msra.mxu0 %v3085
    %3724 = vmatprep.subr.bf16.mxu0 %v3093
    %3725 = vmatpush1.bf16.msra.mxu0 %v3092
    %3726 = vmatprep.subr.bf16.mxu0 %v3100
    %3727 = vmatpush1.bf16.msra.mxu0 %v3099
    %3728 = vmatprep.subr.bf16.mxu0 %v3107
    %3729 = vmatpush1.bf16.msra.mxu0 %v3106
    %3730 = vmatprep.subr.bf16.mxu0 %v3114
    %3731 = vmatpush1.bf16.msra.mxu0 %v3113
    %3732 = vmatprep.subr.bf16.mxu0 %v3121
    %3733 = vmatpush1.bf16.msra.mxu0 %v3120
    %3734 = vmatprep.mubr.bf16.mxu0 %v2780
    %3735 = vmatmul.mubr.bf16.gmra.mrb[0].mxu0 %v2779
    %v3736 = vpop.f32.mrb[0].mxu0
    %v3737 = vadd.f32 %v3694, %v3736
    %v3738 = vpop.f32.mrb[0].mxu0
    %v3739 = vadd.f32 %v3696, %v3738
    %v3740 = vpop.f32.mrb[0].mxu0
    %v3741 = vadd.f32 %v3698, %v3740
    %v3742 = vpop.f32.mrb[0].mxu0
    %v3743 = vadd.f32 %v3700, %v3742
    %3744 = vdwg.mxu0
    %3745 = vmatprep.subr.bf16.mxu0 %v3128
    %3746 = vmatpush1.bf16.msra.mxu0 %v3127
    %3747 = vmatprep.subr.bf16.mxu0 %v3135
    %3748 = vmatpush1.bf16.msra.mxu0 %v3134
    %3749 = vmatprep.subr.bf16.mxu0 %v3142
    %3750 = vmatpush1.bf16.msra.mxu0 %v3141
    %3751 = vmatprep.subr.bf16.mxu0 %v3149
    %3752 = vmatpush1.bf16.msra.mxu0 %v3148
    %3753 = vmatprep.subr.bf16.mxu0 %v3156
    %3754 = vmatpush1.bf16.msra.mxu0 %v3155
    %3755 = vmatprep.subr.bf16.mxu0 %v3163
    %3756 = vmatpush1.bf16.msra.mxu0 %v3162
    %3757 = vmatprep.subr.bf16.mxu0 %v3170
    %3758 = vmatpush1.bf16.msra.mxu0 %v3169
    %3759 = vmatprep.subr.bf16.mxu0 %v3177
    %3760 = vmatpush1.bf16.msra.mxu0 %v3176
    %3761 = vmatprep.subr.bf16.mxu0 %v3184
    %3762 = vmatpush1.bf16.msra.mxu0 %v3183
    %3763 = vmatprep.subr.bf16.mxu0 %v3191
    %3764 = vmatpush1.bf16.msra.mxu0 %v3190
    %3765 = vmatprep.subr.bf16.mxu0 %v3198
    %3766 = vmatpush1.bf16.msra.mxu0 %v3197
    %3767 = vmatprep.subr.bf16.mxu0 %v3205
    %3768 = vmatpush1.bf16.msra.mxu0 %v3204
    %3769 = vmatprep.subr.bf16.mxu0 %v3212
    %3770 = vmatpush1.bf16.msra.mxu0 %v3211
    %3771 = vmatprep.subr.bf16.mxu0 %v3219
    %3772 = vmatpush1.bf16.msra.mxu0 %v3218
    %3773 = vmatprep.subr.bf16.mxu0 %v3226
    %3774 = vmatpush1.bf16.msra.mxu0 %v3225
    %3775 = vmatprep.subr.bf16.mxu0 %v3233
    %3776 = vmatpush1.bf16.msra.mxu0 %v3232
    %3777 = vmatprep.mubr.bf16.mxu0 %v2782
    %3778 = vmatmul.mubr.bf16.gmra.mrb[0].mxu0 %v2781
    %v3779 = vpop.f32.mrb[0].mxu0
    %v3780 = vadd.f32 %v3737, %v3779
    %v3781 = vpop.f32.mrb[0].mxu0
    %v3782 = vadd.f32 %v3739, %v3781
    %v3783 = vpop.f32.mrb[0].mxu0
    %v3784 = vadd.f32 %v3741, %v3783
    %v3785 = vpop.f32.mrb[0].mxu0
    %v3786 = vadd.f32 %v3743, %v3785
    %3787 = vdwg.mxu0
    %3788 = vmatprep.subr.bf16.mxu0 0
    %3789 = vmatpush1.bf16.msra.mxu0 %v2793
    %3790 = vmatprep.subr.bf16.mxu0 0
    %3791 = vmatpush1.bf16.msra.mxu0 %v2800
    %3792 = vmatprep.subr.bf16.mxu0 0
    %3793 = vmatpush1.bf16.msra.mxu0 %v2807
    %3794 = vmatprep.subr.bf16.mxu0 0
    %3795 = vmatpush1.bf16.msra.mxu0 %v2814
    %3796 = vmatprep.subr.bf16.mxu0 0
    %3797 = vmatpush1.bf16.msra.mxu0 %v2821
    %3798 = vmatprep.subr.bf16.mxu0 0
    %3799 = vmatpush1.bf16.msra.mxu0 %v2828
    %3800 = vmatprep.subr.bf16.mxu0 0
    %3801 = vmatpush1.bf16.msra.mxu0 %v2835
    %3802 = vmatprep.subr.bf16.mxu0 0
    %3803 = vmatpush1.bf16.msra.mxu0 %v2842
    %3804 = vmatprep.subr.bf16.mxu0 0
    %3805 = vmatpush1.bf16.msra.mxu0 %v2849
    %3806 = vmatprep.subr.bf16.mxu0 0
    %3807 = vmatpush1.bf16.msra.mxu0 %v2856
    %3808 = vmatprep.subr.bf16.mxu0 0
    %3809 = vmatpush1.bf16.msra.mxu0 %v2863
    %3810 = vmatprep.subr.bf16.mxu0 0
    %3811 = vmatpush1.bf16.msra.mxu0 %v2870
    %3812 = vmatprep.subr.bf16.mxu0 0
    %3813 = vmatpush1.bf16.msra.mxu0 %v2877
    %3814 = vmatprep.subr.bf16.mxu0 0
    %3815 = vmatpush1.bf16.msra.mxu0 %v2884
    %3816 = vmatprep.subr.bf16.mxu0 0
    %3817 = vmatpush1.bf16.msra.mxu0 %v2891
    %3818 = vmatprep.subr.bf16.mxu0 0
    %3819 = vmatpush1.bf16.msra.mxu0 %v2898
    %3820 = vmatprep.mubr.bf16.mxu0 %v2776
    %3821 = vmatmul.mubr.bf16.gmra.mrb[0].mxu0 %v2775
    %v3822 = vpop.f32.mrb[0].mxu0
    %v3823 = vadd.f32 %v3264, %v3822
    %v3824 = vpop.f32.mrb[0].mxu0
    %v3825 = vpop.f32.mrb[0].mxu0
    %v3826 = vadd.f32 %v3264, %v3825
    %v3827 = vpop.f32.mrb[0].mxu0
    %3828 = vdwg.mxu0
    %3829 = vmatprep.subr.bf16.mxu0 0
    %3830 = vmatpush1.bf16.msra.mxu0 %v2905
    %3831 = vmatprep.subr.bf16.mxu0 0
    %3832 = vmatpush1.bf16.msra.mxu0 %v2912
    %3833 = vmatprep.subr.bf16.mxu0 0
    %3834 = vmatpush1.bf16.msra.mxu0 %v2919
    %3835 = vmatprep.subr.bf16.mxu0 0
    %3836 = vmatpush1.bf16.msra.mxu0 %v2926
    %3837 = vmatprep.subr.bf16.mxu0 0
    %3838 = vmatpush1.bf16.msra.mxu0 %v2933
    %3839 = vmatprep.subr.bf16.mxu0 0
    %3840 = vmatpush1.bf16.msra.mxu0 %v2940
    %3841 = vmatprep.subr.bf16.mxu0 0
    %3842 = vmatpush1.bf16.msra.mxu0 %v2947
    %3843 = vmatprep.subr.bf16.mxu0 0
    %3844 = vmatpush1.bf16.msra.mxu0 %v2954
    %3845 = vmatprep.subr.bf16.mxu0 0
    %3846 = vmatpush1.bf16.msra.mxu0 %v2961
    %3847 = vmatprep.subr.bf16.mxu0 0
    %3848 = vmatpush1.bf16.msra.mxu0 %v2968
    %3849 = vmatprep.subr.bf16.mxu0 0
    %3850 = vmatpush1.bf16.msra.mxu0 %v2975
    %3851 = vmatprep.subr.bf16.mxu0 0
    %3852 = vmatpush1.bf16.msra.mxu0 %v2982
    %3853 = vmatprep.subr.bf16.mxu0 0
    %3854 = vmatpush1.bf16.msra.mxu0 %v2989
    %3855 = vmatprep.subr.bf16.mxu0 0
    %3856 = vmatpush1.bf16.msra.mxu0 %v2996
    %3857 = vmatprep.subr.bf16.mxu0 0
    %3858 = vmatpush1.bf16.msra.mxu0 %v3003
    %3859 = vmatprep.subr.bf16.mxu0 0
    %3860 = vmatpush1.bf16.msra.mxu0 %v3010
    %3861 = vmatprep.mubr.bf16.mxu0 %v2778
    %3862 = vmatmul.mubr.bf16.gmra.mrb[0].mxu0 %v2777
    %v3863 = vpop.f32.mrb[0].mxu0
    %v3864 = vadd.f32 %v3823, %v3863
    %v3865 = vpop.f32.mrb[0].mxu0
    %v3866 = vpop.f32.mrb[0].mxu0
    %v3867 = vadd.f32 %v3826, %v3866
    %v3868 = vpop.f32.mrb[0].mxu0
    %3869 = vdwg.mxu0
    %3870 = vmatprep.subr.bf16.mxu0 0
    %3871 = vmatpush1.bf16.msra.mxu0 %v3017
    %3872 = vmatprep.subr.bf16.mxu0 0
    %3873 = vmatpush1.bf16.msra.mxu0 %v3024
    %3874 = vmatprep.subr.bf16.mxu0 0
    %3875 = vmatpush1.bf16.msra.mxu0 %v3031
    %3876 = vmatprep.subr.bf16.mxu0 0
    %3877 = vmatpush1.bf16.msra.mxu0 %v3038
    %3878 = vmatprep.subr.bf16.mxu0 0
    %3879 = vmatpush1.bf16.msra.mxu0 %v3045
    %3880 = vmatprep.subr.bf16.mxu0 0
    %3881 = vmatpush1.bf16.msra.mxu0 %v3052
    %3882 = vmatprep.subr.bf16.mxu0 0
    %3883 = vmatpush1.bf16.msra.mxu0 %v3059
    %3884 = vmatprep.subr.bf16.mxu0 0
    %3885 = vmatpush1.bf16.msra.mxu0 %v3066
    %3886 = vmatprep.subr.bf16.mxu0 0
    %3887 = vmatpush1.bf16.msra.mxu0 %v3073
    %3888 = vmatprep.subr.bf16.mxu0 0
    %3889 = vmatpush1.bf16.msra.mxu0 %v3080
    %3890 = vmatprep.subr.bf16.mxu0 0
    %3891 = vmatpush1.bf16.msra.mxu0 %v3087
    %3892 = vmatprep.subr.bf16.mxu0 0
    %3893 = vmatpush1.bf16.msra.mxu0 %v3094
    %3894 = vmatprep.subr.bf16.mxu0 0
    %3895 = vmatpush1.bf16.msra.mxu0 %v3101
    %3896 = vmatprep.subr.bf16.mxu0 0
    %3897 = vmatpush1.bf16.msra.mxu0 %v3108
    %3898 = vmatprep.subr.bf16.mxu0 0
    %3899 = vmatpush1.bf16.msra.mxu0 %v3115
    %3900 = vmatprep.subr.bf16.mxu0 0
    %3901 = vmatpush1.bf16.msra.mxu0 %v3122
    %3902 = vmatprep.mubr.bf16.mxu0 %v2780
    %3903 = vmatmul.mubr.bf16.gmra.mrb[0].mxu0 %v2779
    %v3904 = vpop.f32.mrb[0].mxu0
    %v3905 = vadd.f32 %v3864, %v3904
    %v3906 = vpop.f32.mrb[0].mxu0
    %v3907 = vpop.f32.mrb[0].mxu0
    %v3908 = vadd.f32 %v3867, %v3907
    %v3909 = vpop.f32.mrb[0].mxu0
    %3910 = vdwg.mxu0
    %3911 = vmatprep.subr.bf16.mxu0 0
    %3912 = vmatpush1.bf16.msra.mxu0 %v3129
    %3913 = vmatprep.subr.bf16.mxu0 0
    %3914 = vmatpush1.bf16.msra.mxu0 %v3136
    %3915 = vmatprep.subr.bf16.mxu0 0
    %3916 = vmatpush1.bf16.msra.mxu0 %v3143
    %3917 = vmatprep.subr.bf16.mxu0 0
    %3918 = vmatpush1.bf16.msra.mxu0 %v3150
    %3919 = vmatprep.subr.bf16.mxu0 0
    %3920 = vmatpush1.bf16.msra.mxu0 %v3157
    %3921 = vmatprep.subr.bf16.mxu0 0
    %3922 = vmatpush1.bf16.msra.mxu0 %v3164
    %3923 = vmatprep.subr.bf16.mxu0 0
    %3924 = vmatpush1.bf16.msra.mxu0 %v3171
    %3925 = vmatprep.subr.bf16.mxu0 0
    %3926 = vmatpush1.bf16.msra.mxu0 %v3178
    %3927 = vmatprep.subr.bf16.mxu0 0
    %3928 = vmatpush1.bf16.msra.mxu0 %v3185
    %3929 = vmatprep.subr.bf16.mxu0 0
    %3930 = vmatpush1.bf16.msra.mxu0 %v3192
    %3931 = vmatprep.subr.bf16.mxu0 0
    %3932 = vmatpush1.bf16.msra.mxu0 %v3199
    %3933 = vmatprep.subr.bf16.mxu0 0
    %3934 = vmatpush1.bf16.msra.mxu0 %v3206
    %3935 = vmatprep.subr.bf16.mxu0 0
    %3936 = vmatpush1.bf16.msra.mxu0 %v3213
    %3937 = vmatprep.subr.bf16.mxu0 0
    %3938 = vmatpush1.bf16.msra.mxu0 %v3220
    %3939 = vmatprep.subr.bf16.mxu0 0
    %3940 = vmatpush1.bf16.msra.mxu0 %v3227
    %3941 = vmatprep.subr.bf16.mxu0 0
    %3942 = vmatpush1.bf16.msra.mxu0 %v3234
    %3943 = vmatprep.mubr.bf16.mxu0 %v2782
    %3944 = vmatmul.mubr.bf16.gmra.mrb[0].mxu0 %v2781
    %v3945 = vpop.f32.mrb[0].mxu0
    %v3946 = vadd.f32 %v3905, %v3945
    %v3947 = vpop.f32.mrb[0].mxu0
    %v3948 = vpop.f32.mrb[0].mxu0
    %v3949 = vadd.f32 %v3908, %v3948
    %v3950 = vpop.f32.mrb[0].mxu0
    %3951 = vdwg.mxu0
    %v3952 = vtanh.pop %v3436
    %v3953 = vtanh.pop %v3438
    %v3954 = vtanh.pop %v3608
    %v3955 = vtanh.pop %v3610
    %v3956 = vtanh.pop %v3780
    %v3957 = vtanh.pop %v3782
    %v3958 = vtanh.pop %v3946
    %v3959 = vtanh.pop %v3440
    %v3960 = vtanh.pop %v3442
    %v3961 = vtanh.pop %v3612
    %v3962 = vtanh.pop %v3614
    %v3963 = vtanh.pop %v3784
    %v3964 = vtanh.pop %v3786
    %v3965 = vtanh.pop %v3949
    %v3966 = vpack.c.bf16 %v3959, %v3952
    %v3967 = vpack.c.bf16 %v3960, %v3953
    %v3968 = vpack.c.bf16 %v3961, %v3954
    %v3969 = vpack.c.bf16 %v3962, %v3955
    %v3970 = vpack.c.bf16 %v3963, %v3956
    %v3971 = vpack.c.bf16 %v3964, %v3957
    %v3972 = vpack.c.bf16 %v3965, %v3958
    %v3980 = vunpack.c.l.b16 %v3966
    %v3981 = vunpack.c.l.b16 %v3967
    %v3982 = vunpack.c.l.b16 %v3968
    %v3983 = vunpack.c.l.b16 %v3969
    %v3984 = vunpack.c.l.b16 %v3970
    %v3985 = vunpack.c.l.b16 %v3971
    %v3986 = vunpack.c.l.b16 %v3972
    %v3987 = vunpack.c.h.b16 %v3966
    %v3988 = vunpack.c.h.b16 %v3967
    %v3989 = vunpack.c.h.b16 %v3968
    %v3990 = vunpack.c.h.b16 %v3969
    %v3991 = vunpack.c.h.b16 %v3970
    %v3992 = vunpack.c.h.b16 %v3971
    %v3993 = vunpack.c.h.b16 %v3972
    %v3994 = vpack.c.b16 %v3981, %v3980
    %v3995 = vpack.c.b16 %v3983, %v3982
    %v3996 = vpack.c.b16 %v3985, %v3984
    %v3997 = vpack.c.b16 %v3986, %v3986
    %v3998 = vpack.c.b16 %v3988, %v3987
    %v3999 = vpack.c.b16 %v3990, %v3989
    %v4000 = vpack.c.b16 %v3992, %v3991
    %v4001 = vpack.c.b16 %v3993, %v3993
    %4010 = vst [vmem:[#allocation18] sm:$0xff] %v3994
    %4011 = vst [vmem:[#allocation18 + $0x8] sm:$0xff] %v3995
    %4012 = vst [vmem:[#allocation18 + $0x10] sm:$0xff] %v3996
    %4013 = vst [vmem:[#allocation18 + $0x18] sm:$0xf] %v3997
    %4014 = vst [vmem:[#allocation18 + $0x1c] sm:$0xff] %v3998
    %4015 = vst [vmem:[#allocation18 + $0x24] sm:$0xff] %v3999
    %4016 = vst [vmem:[#allocation18 + $0x2c] sm:$0xff] %v4000
    %4017 = vst [vmem:[#allocation18 + $0x34] sm:$0xf] %v4001
    // Predicated region
    $region66: #{tpu_custom_call.1} parent=1 // pred_check
      _
    $region67: #{tpu_custom_call.1} parent=1 // pred_check_branch
      %4019 = sbr.rel (0) target = $region69
    $region68: #{tpu_custom_call.1} parent=1 // pred_region
      %s4021 = ssub.s32 896, 896
      %4022 = vsyncadd [#allocation6], %s4021
      %s4023 = sshll.u32 [#allocation18], 4
      %s4024 = int_to_ptr.vmem [resolvable:$true] %s4023
      %4029 = dma.vmem_to_hbm [thread:$0]  %s4024, 896, %s9, [#allocation6], 448, 448, 28
    $region69: #{tpu_custom_call.1} parent=1 // pred_fallthru
      _
    // Predicated region
    $region70: #{tpu_custom_call.1} parent=1 // pred_check
      _
    $region71: #{tpu_custom_call.1} parent=1 // pred_check_branch
      %4031 = sbr.rel (0) target = $region73
    $region72: #{tpu_custom_call.1} parent=1 // pred_region
      %4032 = dma.done [#allocation6], 896
    $region73: #{tpu_custom_call.1} parent=1 // pred_fallthru
      _
    %4033 = vsyncpa [#allocation5], 1
    %4034 = vsyncpa [#allocation8], 1
    %4035 = vsyncpa [#allocation11], 1
    %4036 = vsyncpa [#allocation14], 1
    %4037 = vsyncpa [#allocation17], 1
    %4038 = vsyncpa [#allocation6], 1
  %4039 = vsyncmov [#allocation3]
  %s4040 = vpop.sfrf %4039
  %p4041 = scmp.eq.s32.totalorder %s4040, 0
  %p4042 = pneg %p4041
  %4044 = shalt.err (%p4042)

</llo_original>
